<compile_context>
chip_gen: v6e
topology: v6e:2x2x1
jax: 0.10.0
libtpu: 0.0.40
codegen_flags: <defaults>
</compile_context>

<pallas_src>
import jax
import jax.numpy as jnp
from jax import lax
from jax.experimental import pallas as pl
from jax.experimental.pallas import tpu as pltpu

NEG_INF = -1e30
FP = 128  # per-head padded feature width (lane-aligned)

# (heads, fout) for gcn1..gcn5
LAYERS = ((5, 100), (5, 50), (4, 32), (4, 8), (1, 1))


# --------------------------------- fused kernel ------------------------------------
def _mm_gnn_kernel(*refs):
    (x_ref, adj_ref, ew_ref,
     w1, s1, d1, b1, c1,
     w2, s2, d2, b2, c2,
     w3, s3, d3, b3, c3,
     w4, s4, d4, b4, c4,
     w5, s5, d5, b5, c5,
     g1, be1, g2, be2, g3, be3,
     out_ref) = refs

    adj = adj_ref[...]                                    # (N, N)
    ew = ew_ref[...]                                      # (N, N)
    # additive mask, computed once and reused by every head of every layer
    mask_bias = jnp.where(adj > 0, 0.0, NEG_INF)          # (N, N)

    def gat(x, w_ref, sp_ref, dp_ref, bias_ref, ce_ref, heads):
        # x: (N, Cin_pad); w: (Cin_pad, heads*FP)
        h = jnp.dot(x, w_ref[...], preferred_element_type=jnp.float32)     # (N, H*FP)
        # packed attention-score projections (2 matmuls for all heads)
        sdst = jnp.dot(h, dp_ref[...], preferred_element_type=jnp.float32)  # (N, H)
        ssrc = lax.dot_general(sp_ref[...], h, (((1,), (1,)), ((), ())),
                               preferred_element_type=jnp.float32)          # (H, N)
        ce = [ce_ref[0, i] for i in range(heads)]          # SMEM scalars, read up front
        head_outs = []
        for hd in range(heads):                            # static unroll
            logits = sdst[:, hd:hd + 1] + ssrc[hd:hd + 1, :] + ce[hd] * ew  # (N, N)
            logits = jnp.maximum(logits, 0.2 * logits) + mask_bias          # LeakyReLU + mask
            m = jnp.max(logits, axis=1, keepdims=True)
            p = jnp.exp(logits - m)                        # masked entries underflow to 0
            denom = jnp.sum(p, axis=1, keepdims=True)
            hh = h[:, hd * FP:(hd + 1) * FP]               # lane-aligned head slice
            num = jnp.dot(p, hh, preferred_element_type=jnp.float32)        # (N, FP)
            head_outs.append(num * pl.reciprocal(denom, approx=True))       # deferred softmax div
        return jnp.concatenate(head_outs, axis=1) + bias_ref[...]           # (N, H*FP)

    def bn_relu(x, gamma_ref, beta_ref):
        mean = jnp.mean(x, axis=0, keepdims=True)
        var = jnp.mean((x - mean) ** 2, axis=0, keepdims=True)              # biased var
        y = (x - mean) * lax.rsqrt(var + 1e-5) * gamma_ref[...] + beta_ref[...]
        return jnp.maximum(y, 0.0)

    x = x_ref[...]
    x = gat(x, w1, s1, d1, b1, c1, heads=5)    # -> (N, 640)  [real 500]
    x = bn_relu(x, g1, be1)
    x = gat(x, w2, s2, d2, b2, c2, heads=5)    # -> (N, 640)  [real 250]
    x = bn_relu(x, g2, be2)
    x = gat(x, w3, s3, d3, b3, c3, heads=4)    # -> (N, 512)  [real 128]
    x = bn_relu(x, g3, be3)
    x = gat(x, w4, s4, d4, b4, c4, heads=4)    # -> (N, 512)  [real 32]
    x = jnp.maximum(x, 0.0)                    # bare ReLU (no BN)
    x = gat(x, w5, s5, d5, b5, c5, heads=1)    # -> (N, 128)  [real 1]
    out_ref[...] = x


def mm_gnn_forward(x, adj, ew, gat_params, bn_params):
    n = x.shape[0]
    vm = pl.BlockSpec(memory_space=pltpu.MemorySpace.VMEM)
    sm = pl.BlockSpec(memory_space=pltpu.MemorySpace.SMEM)

    args = [x, adj, ew]
    specs = [vm, vm, vm]
    for (wp, sp, dp, bp, ce) in gat_params:
        args += [wp, sp, dp, bp, ce]
        specs += [vm, vm, vm, vm, sm]
    for (gp, bep) in bn_params:
        args += [gp, bep]
        specs += [vm, vm]

    out = pl.pallas_call(
        _mm_gnn_kernel,
        out_shape=jax.ShapeDtypeStruct((n, FP), jnp.float32),
        in_specs=specs,
        out_specs=vm,
    )(*args)
    return out[:, :1]                                     # real output column only


# ------------------------------- parameter setup -----------------------------------
def init_gat_params(key, cin, heads, fout):
    k1, k2, k3, k4, k5 = jax.random.split(key, 5)
    w = jax.random.normal(k1, (cin, heads * fout), jnp.float32) / jnp.sqrt(
        jnp.float32(cin))
    asrc = 0.1 * jax.random.normal(k2, (heads, fout), jnp.float32)
    adst = 0.1 * jax.random.normal(k3, (heads, fout), jnp.float32)
    w_edge = 0.1 * jax.random.normal(k4, (1, heads * fout), jnp.float32)
    a_edge = 0.1 * jax.random.normal(k5, (heads, fout), jnp.float32)
    # edge_dim == 1  =>  a_edge . (W_e * w_ij) == w_ij * c_h  with constant c_h
    ce = jnp.sum(w_edge.reshape(heads, fout) * a_edge, axis=1).reshape(1, heads)
    bias = jnp.zeros((1, heads * fout), jnp.float32)       # torch init: zeros
    return w, asrc, adst, bias, ce


def pack_gat_params(raw, in_heads, in_fout, in_fp, heads, fout):
    """Repack real-width params into the per-head 128-lane-padded layout."""
    w, asrc, adst, bias, ce = raw
    wp = jnp.zeros((in_heads * in_fp, heads * FP), jnp.float32)
    for ih in range(in_heads):
        for oh in range(heads):
            blk = w[ih * in_fout:(ih + 1) * in_fout, oh * fout:(oh + 1) * fout]
            wp = wp.at[ih * in_fp:ih * in_fp + in_fout,
                       oh * FP:oh * FP + fout].set(blk)
    sp = jnp.zeros((heads, heads * FP), jnp.float32)        # packed a_src (block rows)
    dp = jnp.zeros((heads * FP, heads), jnp.float32)        # packed a_dst (block cols)
    bp = jnp.zeros((1, heads * FP), jnp.float32)
    for oh in range(heads):
        sp = sp.at[oh, oh * FP:oh * FP + fout].set(asrc[oh])
        dp = dp.at[oh * FP:oh * FP + fout, oh].set(adst[oh])
        bp = bp.at[:, oh * FP:oh * FP + fout].set(bias[:, oh * fout:(oh + 1) * fout])
    return wp, sp, dp, bp, ce


def pack_bn_params(gamma, beta, heads, fout):
    gp = jnp.ones((1, heads * FP), jnp.float32)
    bp = jnp.zeros((1, heads * FP), jnp.float32)            # padded beta must stay 0
    for h in range(heads):
        gp = gp.at[:, h * FP:h * FP + fout].set(gamma[:, h * fout:(h + 1) * fout])
        bp = bp.at[:, h * FP:h * FP + fout].set(beta[:, h * fout:(h + 1) * fout])
    return gp, bp


def build_graph(key, n):
    # bidirectional ring with random positive edge weights
    src = jnp.arange(n)
    dst = (src + 1) % n
    e_src = jnp.concatenate([src, dst])
    e_dst = jnp.concatenate([dst, src])
    e_w = jax.random.uniform(key, (2 * n,), jnp.float32)
    adj = jnp.zeros((n, n), jnp.float32).at[e_dst, e_src].set(1.0)
    ew = jnp.zeros((n, n), jnp.float32).at[e_dst, e_src].set(e_w)
    # add_self_loops with fill_value='mean': self-loop weight = mean incoming weight
    deg = jnp.sum(adj, axis=1)
    mean_in = jnp.where(deg > 0, jnp.sum(ew, axis=1) / jnp.maximum(deg, 1.0), 0.0)
    idx = jnp.arange(n)
    adj = adj.at[idx, idx].set(1.0)
    ew = ew.at[idx, idx].set(mean_in)
    return adj, ew


# ------------------------------------- main -----------------------------------------
if __name__ == "__main__":
    N, C_IN = 16, 32
    key = jax.random.PRNGKey(0)
    kx, kg, k1, k2, k3, k4, k5 = jax.random.split(key, 7)

    x = jax.random.normal(kx, (N, C_IN), jnp.float32)
    adj, ew = build_graph(kg, N)

    raw = (
        init_gat_params(k1, C_IN, heads=5, fout=100),       # gcn1 -> 500
        init_gat_params(k2, 500, heads=5, fout=50),          # gcn2 -> 250
        init_gat_params(k3, 250, heads=4, fout=32),          # gcn3 -> 128
        init_gat_params(k4, 128, heads=4, fout=8),           # gcn4 -> 32
        init_gat_params(k5, 32, heads=1, fout=1),            # gcn5 -> 1
    )
    gat_params = (
        pack_gat_params(raw[0], in_heads=1, in_fout=C_IN, in_fp=C_IN, heads=5, fout=100),
        pack_gat_params(raw[1], in_heads=5, in_fout=100, in_fp=FP, heads=5, fout=50),
        pack_gat_params(raw[2], in_heads=5, in_fout=50, in_fp=FP, heads=4, fout=32),
        pack_gat_params(raw[3], in_heads=4, in_fout=32, in_fp=FP, heads=4, fout=8),
        pack_gat_params(raw[4], in_heads=4, in_fout=8, in_fp=FP, heads=1, fout=1),
    )
    bn_params = (
        pack_bn_params(jnp.ones((1, 500), jnp.float32), jnp.zeros((1, 500), jnp.float32), 5, 100),
        pack_bn_params(jnp.ones((1, 250), jnp.float32), jnp.zeros((1, 250), jnp.float32), 5, 50),
        pack_bn_params(jnp.ones((1, 128), jnp.float32), jnp.zeros((1, 128), jnp.float32), 4, 32),
    )

    out = mm_gnn_forward(x, adj, ew, gat_params, bn_params)
    jax.block_until_ready(out)
    assert out.shape == (N, 1) and out.dtype == jnp.float32
    print("KERNEL_OK")
</pallas_src>

<mosaic_0001>
module attributes {stable_mosaic.version = 11 : i64} {
  func.func @_mm_gnn_kernel(%arg0: memref<16x32xf32, #tpu.memory_space<vmem>>, %arg1: memref<16x16xf32, #tpu.memory_space<vmem>>, %arg2: memref<16x16xf32, #tpu.memory_space<vmem>>, %arg3: memref<32x640xf32, #tpu.memory_space<vmem>>, %arg4: memref<5x640xf32, #tpu.memory_space<vmem>>, %arg5: memref<640x5xf32, #tpu.memory_space<vmem>>, %arg6: memref<1x640xf32, #tpu.memory_space<vmem>>, %arg7: memref<1x5xf32, #tpu.memory_space<smem>>, %arg8: memref<640x640xf32, #tpu.memory_space<vmem>>, %arg9: memref<5x640xf32, #tpu.memory_space<vmem>>, %arg10: memref<640x5xf32, #tpu.memory_space<vmem>>, %arg11: memref<1x640xf32, #tpu.memory_space<vmem>>, %arg12: memref<1x5xf32, #tpu.memory_space<smem>>, %arg13: memref<640x512xf32, #tpu.memory_space<vmem>>, %arg14: memref<4x512xf32, #tpu.memory_space<vmem>>, %arg15: memref<512x4xf32, #tpu.memory_space<vmem>>, %arg16: memref<1x512xf32, #tpu.memory_space<vmem>>, %arg17: memref<1x4xf32, #tpu.memory_space<smem>>, %arg18: memref<512x512xf32, #tpu.memory_space<vmem>>, %arg19: memref<4x512xf32, #tpu.memory_space<vmem>>, %arg20: memref<512x4xf32, #tpu.memory_space<vmem>>, %arg21: memref<1x512xf32, #tpu.memory_space<vmem>>, %arg22: memref<1x4xf32, #tpu.memory_space<smem>>, %arg23: memref<512x128xf32, #tpu.memory_space<vmem>>, %arg24: memref<1x128xf32, #tpu.memory_space<vmem>>, %arg25: memref<128x1xf32, #tpu.memory_space<vmem>>, %arg26: memref<1x128xf32, #tpu.memory_space<vmem>>, %arg27: memref<1x1xf32, #tpu.memory_space<smem>>, %arg28: memref<1x640xf32, #tpu.memory_space<vmem>>, %arg29: memref<1x640xf32, #tpu.memory_space<vmem>>, %arg30: memref<1x640xf32, #tpu.memory_space<vmem>>, %arg31: memref<1x640xf32, #tpu.memory_space<vmem>>, %arg32: memref<1x512xf32, #tpu.memory_space<vmem>>, %arg33: memref<1x512xf32, #tpu.memory_space<vmem>>, %arg34: memref<16x128xf32, #tpu.memory_space<vmem>>) attributes {dimension_semantics = [], scalar_prefetch = 0 : i64, scratch_operands = 0 : i64, tpu.core_type = #tpu.core_type<tc>} {
    %c0 = arith.constant 0 : index
    %c0_0 = arith.constant 0 : index
    %0 = vector.load %arg1[%c0, %c0_0] : memref<16x16xf32, #tpu.memory_space<vmem>>, vector<16x16xf32>
    %c0_1 = arith.constant 0 : index
    %c0_2 = arith.constant 0 : index
    %1 = vector.load %arg2[%c0_1, %c0_2] : memref<16x16xf32, #tpu.memory_space<vmem>>, vector<16x16xf32>
    %cst = arith.constant 0.000000e+00 : f32
    %2 = vector.broadcast %cst : f32 to vector<16x16xf32>
    %3 = arith.cmpf ogt, %0, %2 : vector<16x16xf32>
    %cst_3 = arith.constant 0.000000e+00 : f32
    %cst_4 = arith.constant -1.000000e+30 : f32
    %4 = vector.broadcast %cst_3 : f32 to vector<16x16xf32>
    %5 = vector.broadcast %cst_4 : f32 to vector<16x16xf32>
    %6 = arith.select %3, %4, %5 : vector<16x16xi1>, vector<16x16xf32>
    %c0_5 = arith.constant 0 : index
    %c0_6 = arith.constant 0 : index
    %7 = vector.load %arg0[%c0_5, %c0_6] : memref<16x32xf32, #tpu.memory_space<vmem>>, vector<16x32xf32>
    %c0_7 = arith.constant 0 : index
    %c0_8 = arith.constant 0 : index
    %8 = vector.load %arg3[%c0_7, %c0_8] : memref<32x640xf32, #tpu.memory_space<vmem>>, vector<32x640xf32>
    %cst_9 = arith.constant dense<0.000000e+00> : vector<16x640xf32>
    %9 = tpu.matmul %7, %8, %cst_9 {dimension_numbers = #tpu.dot_dimension_numbers<[1], [0], [0], [1], [0, 0, 1, 1], [], []>} : vector<16x32xf32>, vector<32x640xf32>, vector<16x640xf32> -> vector<16x640xf32>
    %c0_10 = arith.constant 0 : index
    %c0_11 = arith.constant 0 : index
    %10 = vector.load %arg5[%c0_10, %c0_11] : memref<640x5xf32, #tpu.memory_space<vmem>>, vector<640x5xf32>
    %cst_12 = arith.constant dense<0.000000e+00> : vector<16x5xf32>
    %11 = tpu.matmul %9, %10, %cst_12 {dimension_numbers = #tpu.dot_dimension_numbers<[1], [0], [0], [1], [0, 0, 1, 1], [], []>} : vector<16x640xf32>, vector<640x5xf32>, vector<16x5xf32> -> vector<16x5xf32>
    %c0_13 = arith.constant 0 : index
    %c0_14 = arith.constant 0 : index
    %12 = vector.load %arg4[%c0_13, %c0_14] : memref<5x640xf32, #tpu.memory_space<vmem>>, vector<5x640xf32>
    %cst_15 = arith.constant dense<0.000000e+00> : vector<5x16xf32>
    %13 = tpu.matmul %12, %9, %cst_15 {dimension_numbers = #tpu.dot_dimension_numbers<[1], [1], [0], [0], [0, 0, 1, 0], [], []>} : vector<5x640xf32>, vector<16x640xf32>, vector<5x16xf32> -> vector<5x16xf32>
    %c0_16 = arith.constant 0 : index
    %c0_17 = arith.constant 0 : index
    %14 = memref.load %arg7[%c0_16, %c0_17] : memref<1x5xf32, #tpu.memory_space<smem>>
    %c0_18 = arith.constant 0 : index
    %c1 = arith.constant 1 : index
    %15 = memref.load %arg7[%c0_18, %c1] : memref<1x5xf32, #tpu.memory_space<smem>>
    %c0_19 = arith.constant 0 : index
    %c2 = arith.constant 2 : index
    %16 = memref.load %arg7[%c0_19, %c2] : memref<1x5xf32, #tpu.memory_space<smem>>
    %c0_20 = arith.constant 0 : index
    %c3 = arith.constant 3 : index
    %17 = memref.load %arg7[%c0_20, %c3] : memref<1x5xf32, #tpu.memory_space<smem>>
    %c0_21 = arith.constant 0 : index
    %c4 = arith.constant 4 : index
    %18 = memref.load %arg7[%c0_21, %c4] : memref<1x5xf32, #tpu.memory_space<smem>>
    %19 = vector.extract_strided_slice %11 {offsets = [0, 0], sizes = [16, 1], strides = [1, 1]} : vector<16x5xf32> to vector<16x1xf32>
    %20 = vector.extract_strided_slice %13 {offsets = [0, 0], sizes = [1, 16], strides = [1, 1]} : vector<5x16xf32> to vector<1x16xf32>
    %21 = vector.broadcast %19 : vector<16x1xf32> to vector<16x16xf32>
    %22 = vector.broadcast %20 : vector<1x16xf32> to vector<16x16xf32>
    %23 = arith.addf %21, %22 : vector<16x16xf32>
    %24 = vector.broadcast %14 : f32 to vector<16x16xf32>
    %25 = arith.mulf %24, %1 : vector<16x16xf32>
    %26 = arith.addf %23, %25 : vector<16x16xf32>
    %cst_22 = arith.constant 2.000000e-01 : f32
    %27 = vector.broadcast %cst_22 : f32 to vector<16x16xf32>
    %28 = arith.mulf %27, %26 : vector<16x16xf32>
    %29 = arith.maximumf %26, %28 : vector<16x16xf32>
    %30 = arith.addf %29, %6 : vector<16x16xf32>
    %cst_23 = arith.constant dense<0xFF800000> : vector<16xf32>
    %31 = vector.multi_reduction <maximumf>, %30, %cst_23 [1] : vector<16x16xf32> to vector<16xf32>
    %32 = vector.shape_cast %31 : vector<16xf32> to vector<16x1xf32>
    %33 = vector.broadcast %32 : vector<16x1xf32> to vector<16x16xf32>
    %34 = arith.subf %30, %33 : vector<16x16xf32>
    %35 = math.exp %34 : vector<16x16xf32>
    %cst_24 = arith.constant dense<0.000000e+00> : vector<16xf32>
    %36 = vector.multi_reduction <add>, %35, %cst_24 [1] : vector<16x16xf32> to vector<16xf32>
    %37 = vector.shape_cast %36 : vector<16xf32> to vector<16x1xf32>
    %38 = vector.extract_strided_slice %9 {offsets = [0, 0], sizes = [16, 128], strides = [1, 1]} : vector<16x640xf32> to vector<16x128xf32>
    %cst_25 = arith.constant dense<0.000000e+00> : vector<16x128xf32>
    %39 = tpu.matmul %35, %38, %cst_25 {dimension_numbers = #tpu.dot_dimension_numbers<[1], [0], [0], [1], [0, 0, 1, 1], [], []>} : vector<16x16xf32>, vector<16x128xf32>, vector<16x128xf32> -> vector<16x128xf32>
    %40 = tpu.reciprocal %37 {approx = true} : vector<16x1xf32> -> vector<16x1xf32>
    %41 = vector.broadcast %40 : vector<16x1xf32> to vector<16x128xf32>
    %42 = arith.mulf %39, %41 : vector<16x128xf32>
    %43 = vector.extract_strided_slice %11 {offsets = [0, 1], sizes = [16, 1], strides = [1, 1]} : vector<16x5xf32> to vector<16x1xf32>
    %44 = vector.extract_strided_slice %13 {offsets = [1, 0], sizes = [1, 16], strides = [1, 1]} : vector<5x16xf32> to vector<1x16xf32>
    %45 = vector.broadcast %43 : vector<16x1xf32> to vector<16x16xf32>
    %46 = vector.broadcast %44 : vector<1x16xf32> to vector<16x16xf32>
    %47 = arith.addf %45, %46 : vector<16x16xf32>
    %48 = vector.broadcast %15 : f32 to vector<16x16xf32>
    %49 = arith.mulf %48, %1 : vector<16x16xf32>
    %50 = arith.addf %47, %49 : vector<16x16xf32>
    %cst_26 = arith.constant 2.000000e-01 : f32
    %51 = vector.broadcast %cst_26 : f32 to vector<16x16xf32>
    %52 = arith.mulf %51, %50 : vector<16x16xf32>
    %53 = arith.maximumf %50, %52 : vector<16x16xf32>
    %54 = arith.addf %53, %6 : vector<16x16xf32>
    %cst_27 = arith.constant dense<0xFF800000> : vector<16xf32>
    %55 = vector.multi_reduction <maximumf>, %54, %cst_27 [1] : vector<16x16xf32> to vector<16xf32>
    %56 = vector.shape_cast %55 : vector<16xf32> to vector<16x1xf32>
    %57 = vector.broadcast %56 : vector<16x1xf32> to vector<16x16xf32>
    %58 = arith.subf %54, %57 : vector<16x16xf32>
    %59 = math.exp %58 : vector<16x16xf32>
    %cst_28 = arith.constant dense<0.000000e+00> : vector<16xf32>
    %60 = vector.multi_reduction <add>, %59, %cst_28 [1] : vector<16x16xf32> to vector<16xf32>
    %61 = vector.shape_cast %60 : vector<16xf32> to vector<16x1xf32>
    %62 = vector.extract_strided_slice %9 {offsets = [0, 128], sizes = [16, 128], strides = [1, 1]} : vector<16x640xf32> to vector<16x128xf32>
    %cst_29 = arith.constant dense<0.000000e+00> : vector<16x128xf32>
    %63 = tpu.matmul %59, %62, %cst_29 {dimension_numbers = #tpu.dot_dimension_numbers<[1], [0], [0], [1], [0, 0, 1, 1], [], []>} : vector<16x16xf32>, vector<16x128xf32>, vector<16x128xf32> -> vector<16x128xf32>
    %64 = tpu.reciprocal %61 {approx = true} : vector<16x1xf32> -> vector<16x1xf32>
    %65 = vector.broadcast %64 : vector<16x1xf32> to vector<16x128xf32>
    %66 = arith.mulf %63, %65 : vector<16x128xf32>
    %67 = vector.extract_strided_slice %11 {offsets = [0, 2], sizes = [16, 1], strides = [1, 1]} : vector<16x5xf32> to vector<16x1xf32>
    %68 = vector.extract_strided_slice %13 {offsets = [2, 0], sizes = [1, 16], strides = [1, 1]} : vector<5x16xf32> to vector<1x16xf32>
    %69 = vector.broadcast %67 : vector<16x1xf32> to vector<16x16xf32>
    %70 = vector.broadcast %68 : vector<1x16xf32> to vector<16x16xf32>
    %71 = arith.addf %69, %70 : vector<16x16xf32>
    %72 = vector.broadcast %16 : f32 to vector<16x16xf32>
    %73 = arith.mulf %72, %1 : vector<16x16xf32>
    %74 = arith.addf %71, %73 : vector<16x16xf32>
    %cst_30 = arith.constant 2.000000e-01 : f32
    %75 = vector.broadcast %cst_30 : f32 to vector<16x16xf32>
    %76 = arith.mulf %75, %74 : vector<16x16xf32>
    %77 = arith.maximumf %74, %76 : vector<16x16xf32>
    %78 = arith.addf %77, %6 : vector<16x16xf32>
    %cst_31 = arith.constant dense<0xFF800000> : vector<16xf32>
    %79 = vector.multi_reduction <maximumf>, %78, %cst_31 [1] : vector<16x16xf32> to vector<16xf32>
    %80 = vector.shape_cast %79 : vector<16xf32> to vector<16x1xf32>
    %81 = vector.broadcast %80 : vector<16x1xf32> to vector<16x16xf32>
    %82 = arith.subf %78, %81 : vector<16x16xf32>
    %83 = math.exp %82 : vector<16x16xf32>
    %cst_32 = arith.constant dense<0.000000e+00> : vector<16xf32>
    %84 = vector.multi_reduction <add>, %83, %cst_32 [1] : vector<16x16xf32> to vector<16xf32>
    %85 = vector.shape_cast %84 : vector<16xf32> to vector<16x1xf32>
    %86 = vector.extract_strided_slice %9 {offsets = [0, 256], sizes = [16, 128], strides = [1, 1]} : vector<16x640xf32> to vector<16x128xf32>
    %cst_33 = arith.constant dense<0.000000e+00> : vector<16x128xf32>
    %87 = tpu.matmul %83, %86, %cst_33 {dimension_numbers = #tpu.dot_dimension_numbers<[1], [0], [0], [1], [0, 0, 1, 1], [], []>} : vector<16x16xf32>, vector<16x128xf32>, vector<16x128xf32> -> vector<16x128xf32>
    %88 = tpu.reciprocal %85 {approx = true} : vector<16x1xf32> -> vector<16x1xf32>
    %89 = vector.broadcast %88 : vector<16x1xf32> to vector<16x128xf32>
    %90 = arith.mulf %87, %89 : vector<16x128xf32>
    %91 = vector.extract_strided_slice %11 {offsets = [0, 3], sizes = [16, 1], strides = [1, 1]} : vector<16x5xf32> to vector<16x1xf32>
    %92 = vector.extract_strided_slice %13 {offsets = [3, 0], sizes = [1, 16], strides = [1, 1]} : vector<5x16xf32> to vector<1x16xf32>
    %93 = vector.broadcast %91 : vector<16x1xf32> to vector<16x16xf32>
    %94 = vector.broadcast %92 : vector<1x16xf32> to vector<16x16xf32>
    %95 = arith.addf %93, %94 : vector<16x16xf32>
    %96 = vector.broadcast %17 : f32 to vector<16x16xf32>
    %97 = arith.mulf %96, %1 : vector<16x16xf32>
    %98 = arith.addf %95, %97 : vector<16x16xf32>
    %cst_34 = arith.constant 2.000000e-01 : f32
    %99 = vector.broadcast %cst_34 : f32 to vector<16x16xf32>
    %100 = arith.mulf %99, %98 : vector<16x16xf32>
    %101 = arith.maximumf %98, %100 : vector<16x16xf32>
    %102 = arith.addf %101, %6 : vector<16x16xf32>
    %cst_35 = arith.constant dense<0xFF800000> : vector<16xf32>
    %103 = vector.multi_reduction <maximumf>, %102, %cst_35 [1] : vector<16x16xf32> to vector<16xf32>
    %104 = vector.shape_cast %103 : vector<16xf32> to vector<16x1xf32>
    %105 = vector.broadcast %104 : vector<16x1xf32> to vector<16x16xf32>
    %106 = arith.subf %102, %105 : vector<16x16xf32>
    %107 = math.exp %106 : vector<16x16xf32>
    %cst_36 = arith.constant dense<0.000000e+00> : vector<16xf32>
    %108 = vector.multi_reduction <add>, %107, %cst_36 [1] : vector<16x16xf32> to vector<16xf32>
    %109 = vector.shape_cast %108 : vector<16xf32> to vector<16x1xf32>
    %110 = vector.extract_strided_slice %9 {offsets = [0, 384], sizes = [16, 128], strides = [1, 1]} : vector<16x640xf32> to vector<16x128xf32>
    %cst_37 = arith.constant dense<0.000000e+00> : vector<16x128xf32>
    %111 = tpu.matmul %107, %110, %cst_37 {dimension_numbers = #tpu.dot_dimension_numbers<[1], [0], [0], [1], [0, 0, 1, 1], [], []>} : vector<16x16xf32>, vector<16x128xf32>, vector<16x128xf32> -> vector<16x128xf32>
    %112 = tpu.reciprocal %109 {approx = true} : vector<16x1xf32> -> vector<16x1xf32>
    %113 = vector.broadcast %112 : vector<16x1xf32> to vector<16x128xf32>
    %114 = arith.mulf %111, %113 : vector<16x128xf32>
    %115 = vector.extract_strided_slice %11 {offsets = [0, 4], sizes = [16, 1], strides = [1, 1]} : vector<16x5xf32> to vector<16x1xf32>
    %116 = vector.extract_strided_slice %13 {offsets = [4, 0], sizes = [1, 16], strides = [1, 1]} : vector<5x16xf32> to vector<1x16xf32>
    %117 = vector.broadcast %115 : vector<16x1xf32> to vector<16x16xf32>
    %118 = vector.broadcast %116 : vector<1x16xf32> to vector<16x16xf32>
    %119 = arith.addf %117, %118 : vector<16x16xf32>
    %120 = vector.broadcast %18 : f32 to vector<16x16xf32>
    %121 = arith.mulf %120, %1 : vector<16x16xf32>
    %122 = arith.addf %119, %121 : vector<16x16xf32>
    %cst_38 = arith.constant 2.000000e-01 : f32
    %123 = vector.broadcast %cst_38 : f32 to vector<16x16xf32>
    %124 = arith.mulf %123, %122 : vector<16x16xf32>
    %125 = arith.maximumf %122, %124 : vector<16x16xf32>
    %126 = arith.addf %125, %6 : vector<16x16xf32>
    %cst_39 = arith.constant dense<0xFF800000> : vector<16xf32>
    %127 = vector.multi_reduction <maximumf>, %126, %cst_39 [1] : vector<16x16xf32> to vector<16xf32>
    %128 = vector.shape_cast %127 : vector<16xf32> to vector<16x1xf32>
    %129 = vector.broadcast %128 : vector<16x1xf32> to vector<16x16xf32>
    %130 = arith.subf %126, %129 : vector<16x16xf32>
    %131 = math.exp %130 : vector<16x16xf32>
    %cst_40 = arith.constant dense<0.000000e+00> : vector<16xf32>
    %132 = vector.multi_reduction <add>, %131, %cst_40 [1] : vector<16x16xf32> to vector<16xf32>
    %133 = vector.shape_cast %132 : vector<16xf32> to vector<16x1xf32>
    %134 = vector.extract_strided_slice %9 {offsets = [0, 512], sizes = [16, 128], strides = [1, 1]} : vector<16x640xf32> to vector<16x128xf32>
    %cst_41 = arith.constant dense<0.000000e+00> : vector<16x128xf32>
    %135 = tpu.matmul %131, %134, %cst_41 {dimension_numbers = #tpu.dot_dimension_numbers<[1], [0], [0], [1], [0, 0, 1, 1], [], []>} : vector<16x16xf32>, vector<16x128xf32>, vector<16x128xf32> -> vector<16x128xf32>
    %136 = tpu.reciprocal %133 {approx = true} : vector<16x1xf32> -> vector<16x1xf32>
    %137 = vector.broadcast %136 : vector<16x1xf32> to vector<16x128xf32>
    %138 = arith.mulf %135, %137 : vector<16x128xf32>
    %139 = tpu.concatenate %42, %66, %90, %114, %138 in 1 : vector<16x128xf32>, vector<16x128xf32>, vector<16x128xf32>, vector<16x128xf32>, vector<16x128xf32> -> vector<16x640xf32>
    %c0_42 = arith.constant 0 : index
    %c0_43 = arith.constant 0 : index
    %140 = vector.load %arg6[%c0_42, %c0_43] : memref<1x640xf32, #tpu.memory_space<vmem>>, vector<1x640xf32>
    %141 = vector.broadcast %140 : vector<1x640xf32> to vector<16x640xf32>
    %142 = arith.addf %139, %141 : vector<16x640xf32>
    %cst_44 = arith.constant dense<0.000000e+00> : vector<640xf32>
    %143 = vector.multi_reduction <add>, %142, %cst_44 [0] : vector<16x640xf32> to vector<640xf32>
    %144 = vector.shape_cast %143 : vector<640xf32> to vector<1x640xf32>
    %cst_45 = arith.constant 1.600000e+01 : f32
    %145 = vector.broadcast %cst_45 : f32 to vector<1x640xf32>
    %146 = arith.divf %144, %145 : vector<1x640xf32>
    %147 = vector.broadcast %146 : vector<1x640xf32> to vector<16x640xf32>
    %148 = arith.subf %142, %147 : vector<16x640xf32>
    %149 = arith.mulf %148, %148 : vector<16x640xf32>
    %cst_46 = arith.constant dense<0.000000e+00> : vector<640xf32>
    %150 = vector.multi_reduction <add>, %149, %cst_46 [0] : vector<16x640xf32> to vector<640xf32>
    %151 = vector.shape_cast %150 : vector<640xf32> to vector<1x640xf32>
    %cst_47 = arith.constant 1.600000e+01 : f32
    %152 = vector.broadcast %cst_47 : f32 to vector<1x640xf32>
    %153 = arith.divf %151, %152 : vector<1x640xf32>
    %154 = vector.broadcast %146 : vector<1x640xf32> to vector<16x640xf32>
    %155 = arith.subf %142, %154 : vector<16x640xf32>
    %cst_48 = arith.constant 9.99999974E-6 : f32
    %156 = vector.broadcast %cst_48 : f32 to vector<1x640xf32>
    %157 = arith.addf %153, %156 : vector<1x640xf32>
    %158 = math.rsqrt %157 : vector<1x640xf32>
    %159 = vector.broadcast %158 : vector<1x640xf32> to vector<16x640xf32>
    %160 = arith.mulf %155, %159 : vector<16x640xf32>
    %c0_49 = arith.constant 0 : index
    %c0_50 = arith.constant 0 : index
    %161 = vector.load %arg28[%c0_49, %c0_50] : memref<1x640xf32, #tpu.memory_space<vmem>>, vector<1x640xf32>
    %162 = vector.broadcast %161 : vector<1x640xf32> to vector<16x640xf32>
    %163 = arith.mulf %160, %162 : vector<16x640xf32>
    %c0_51 = arith.constant 0 : index
    %c0_52 = arith.constant 0 : index
    %164 = vector.load %arg29[%c0_51, %c0_52] : memref<1x640xf32, #tpu.memory_space<vmem>>, vector<1x640xf32>
    %165 = vector.broadcast %164 : vector<1x640xf32> to vector<16x640xf32>
    %166 = arith.addf %163, %165 : vector<16x640xf32>
    %cst_53 = arith.constant 0.000000e+00 : f32
    %167 = vector.broadcast %cst_53 : f32 to vector<16x640xf32>
    %168 = arith.maximumf %166, %167 : vector<16x640xf32>
    %c0_54 = arith.constant 0 : index
    %c0_55 = arith.constant 0 : index
    %169 = vector.load %arg8[%c0_54, %c0_55] : memref<640x640xf32, #tpu.memory_space<vmem>>, vector<640x640xf32>
    %cst_56 = arith.constant dense<0.000000e+00> : vector<16x640xf32>
    %170 = tpu.matmul %168, %169, %cst_56 {dimension_numbers = #tpu.dot_dimension_numbers<[1], [0], [0], [1], [0, 0, 1, 1], [], []>} : vector<16x640xf32>, vector<640x640xf32>, vector<16x640xf32> -> vector<16x640xf32>
    %c0_57 = arith.constant 0 : index
    %c0_58 = arith.constant 0 : index
    %171 = vector.load %arg10[%c0_57, %c0_58] : memref<640x5xf32, #tpu.memory_space<vmem>>, vector<640x5xf32>
    %cst_59 = arith.constant dense<0.000000e+00> : vector<16x5xf32>
    %172 = tpu.matmul %170, %171, %cst_59 {dimension_numbers = #tpu.dot_dimension_numbers<[1], [0], [0], [1], [0, 0, 1, 1], [], []>} : vector<16x640xf32>, vector<640x5xf32>, vector<16x5xf32> -> vector<16x5xf32>
    %c0_60 = arith.constant 0 : index
    %c0_61 = arith.constant 0 : index
    %173 = vector.load %arg9[%c0_60, %c0_61] : memref<5x640xf32, #tpu.memory_space<vmem>>, vector<5x640xf32>
    %cst_62 = arith.constant dense<0.000000e+00> : vector<5x16xf32>
    %174 = tpu.matmul %173, %170, %cst_62 {dimension_numbers = #tpu.dot_dimension_numbers<[1], [1], [0], [0], [0, 0, 1, 0], [], []>} : vector<5x640xf32>, vector<16x640xf32>, vector<5x16xf32> -> vector<5x16xf32>
    %c0_63 = arith.constant 0 : index
    %c0_64 = arith.constant 0 : index
    %175 = memref.load %arg12[%c0_63, %c0_64] : memref<1x5xf32, #tpu.memory_space<smem>>
    %c0_65 = arith.constant 0 : index
    %c1_66 = arith.constant 1 : index
    %176 = memref.load %arg12[%c0_65, %c1_66] : memref<1x5xf32, #tpu.memory_space<smem>>
    %c0_67 = arith.constant 0 : index
    %c2_68 = arith.constant 2 : index
    %177 = memref.load %arg12[%c0_67, %c2_68] : memref<1x5xf32, #tpu.memory_space<smem>>
    %c0_69 = arith.constant 0 : index
    %c3_70 = arith.constant 3 : index
    %178 = memref.load %arg12[%c0_69, %c3_70] : memref<1x5xf32, #tpu.memory_space<smem>>
    %c0_71 = arith.constant 0 : index
    %c4_72 = arith.constant 4 : index
    %179 = memref.load %arg12[%c0_71, %c4_72] : memref<1x5xf32, #tpu.memory_space<smem>>
    %180 = vector.extract_strided_slice %172 {offsets = [0, 0], sizes = [16, 1], strides = [1, 1]} : vector<16x5xf32> to vector<16x1xf32>
    %181 = vector.extract_strided_slice %174 {offsets = [0, 0], sizes = [1, 16], strides = [1, 1]} : vector<5x16xf32> to vector<1x16xf32>
    %182 = vector.broadcast %180 : vector<16x1xf32> to vector<16x16xf32>
    %183 = vector.broadcast %181 : vector<1x16xf32> to vector<16x16xf32>
    %184 = arith.addf %182, %183 : vector<16x16xf32>
    %185 = vector.broadcast %175 : f32 to vector<16x16xf32>
    %186 = arith.mulf %185, %1 : vector<16x16xf32>
    %187 = arith.addf %184, %186 : vector<16x16xf32>
    %cst_73 = arith.constant 2.000000e-01 : f32
    %188 = vector.broadcast %cst_73 : f32 to vector<16x16xf32>
    %189 = arith.mulf %188, %187 : vector<16x16xf32>
    %190 = arith.maximumf %187, %189 : vector<16x16xf32>
    %191 = arith.addf %190, %6 : vector<16x16xf32>
    %cst_74 = arith.constant dense<0xFF800000> : vector<16xf32>
    %192 = vector.multi_reduction <maximumf>, %191, %cst_74 [1] : vector<16x16xf32> to vector<16xf32>
    %193 = vector.shape_cast %192 : vector<16xf32> to vector<16x1xf32>
    %194 = vector.broadcast %193 : vector<16x1xf32> to vector<16x16xf32>
    %195 = arith.subf %191, %194 : vector<16x16xf32>
    %196 = math.exp %195 : vector<16x16xf32>
    %cst_75 = arith.constant dense<0.000000e+00> : vector<16xf32>
    %197 = vector.multi_reduction <add>, %196, %cst_75 [1] : vector<16x16xf32> to vector<16xf32>
    %198 = vector.shape_cast %197 : vector<16xf32> to vector<16x1xf32>
    %199 = vector.extract_strided_slice %170 {offsets = [0, 0], sizes = [16, 128], strides = [1, 1]} : vector<16x640xf32> to vector<16x128xf32>
    %cst_76 = arith.constant dense<0.000000e+00> : vector<16x128xf32>
    %200 = tpu.matmul %196, %199, %cst_76 {dimension_numbers = #tpu.dot_dimension_numbers<[1], [0], [0], [1], [0, 0, 1, 1], [], []>} : vector<16x16xf32>, vector<16x128xf32>, vector<16x128xf32> -> vector<16x128xf32>
    %201 = tpu.reciprocal %198 {approx = true} : vector<16x1xf32> -> vector<16x1xf32>
    %202 = vector.broadcast %201 : vector<16x1xf32> to vector<16x128xf32>
    %203 = arith.mulf %200, %202 : vector<16x128xf32>
    %204 = vector.extract_strided_slice %172 {offsets = [0, 1], sizes = [16, 1], strides = [1, 1]} : vector<16x5xf32> to vector<16x1xf32>
    %205 = vector.extract_strided_slice %174 {offsets = [1, 0], sizes = [1, 16], strides = [1, 1]} : vector<5x16xf32> to vector<1x16xf32>
    %206 = vector.broadcast %204 : vector<16x1xf32> to vector<16x16xf32>
    %207 = vector.broadcast %205 : vector<1x16xf32> to vector<16x16xf32>
    %208 = arith.addf %206, %207 : vector<16x16xf32>
    %209 = vector.broadcast %176 : f32 to vector<16x16xf32>
    %210 = arith.mulf %209, %1 : vector<16x16xf32>
    %211 = arith.addf %208, %210 : vector<16x16xf32>
    %cst_77 = arith.constant 2.000000e-01 : f32
    %212 = vector.broadcast %cst_77 : f32 to vector<16x16xf32>
    %213 = arith.mulf %212, %211 : vector<16x16xf32>
    %214 = arith.maximumf %211, %213 : vector<16x16xf32>
    %215 = arith.addf %214, %6 : vector<16x16xf32>
    %cst_78 = arith.constant dense<0xFF800000> : vector<16xf32>
    %216 = vector.multi_reduction <maximumf>, %215, %cst_78 [1] : vector<16x16xf32> to vector<16xf32>
    %217 = vector.shape_cast %216 : vector<16xf32> to vector<16x1xf32>
    %218 = vector.broadcast %217 : vector<16x1xf32> to vector<16x16xf32>
    %219 = arith.subf %215, %218 : vector<16x16xf32>
    %220 = math.exp %219 : vector<16x16xf32>
    %cst_79 = arith.constant dense<0.000000e+00> : vector<16xf32>
    %221 = vector.multi_reduction <add>, %220, %cst_79 [1] : vector<16x16xf32> to vector<16xf32>
    %222 = vector.shape_cast %221 : vector<16xf32> to vector<16x1xf32>
    %223 = vector.extract_strided_slice %170 {offsets = [0, 128], sizes = [16, 128], strides = [1, 1]} : vector<16x640xf32> to vector<16x128xf32>
    %cst_80 = arith.constant dense<0.000000e+00> : vector<16x128xf32>
    %224 = tpu.matmul %220, %223, %cst_80 {dimension_numbers = #tpu.dot_dimension_numbers<[1], [0], [0], [1], [0, 0, 1, 1], [], []>} : vector<16x16xf32>, vector<16x128xf32>, vector<16x128xf32> -> vector<16x128xf32>
    %225 = tpu.reciprocal %222 {approx = true} : vector<16x1xf32> -> vector<16x1xf32>
    %226 = vector.broadcast %225 : vector<16x1xf32> to vector<16x128xf32>
    %227 = arith.mulf %224, %226 : vector<16x128xf32>
    %228 = vector.extract_strided_slice %172 {offsets = [0, 2], sizes = [16, 1], strides = [1, 1]} : vector<16x5xf32> to vector<16x1xf32>
    %229 = vector.extract_strided_slice %174 {offsets = [2, 0], sizes = [1, 16], strides = [1, 1]} : vector<5x16xf32> to vector<1x16xf32>
    %230 = vector.broadcast %228 : vector<16x1xf32> to vector<16x16xf32>
    %231 = vector.broadcast %229 : vector<1x16xf32> to vector<16x16xf32>
    %232 = arith.addf %230, %231 : vector<16x16xf32>
    %233 = vector.broadcast %177 : f32 to vector<16x16xf32>
    %234 = arith.mulf %233, %1 : vector<16x16xf32>
    %235 = arith.addf %232, %234 : vector<16x16xf32>
    %cst_81 = arith.constant 2.000000e-01 : f32
    %236 = vector.broadcast %cst_81 : f32 to vector<16x16xf32>
    %237 = arith.mulf %236, %235 : vector<16x16xf32>
    %238 = arith.maximumf %235, %237 : vector<16x16xf32>
    %239 = arith.addf %238, %6 : vector<16x16xf32>
    %cst_82 = arith.constant dense<0xFF800000> : vector<16xf32>
    %240 = vector.multi_reduction <maximumf>, %239, %cst_82 [1] : vector<16x16xf32> to vector<16xf32>
    %241 = vector.shape_cast %240 : vector<16xf32> to vector<16x1xf32>
    %242 = vector.broadcast %241 : vector<16x1xf32> to vector<16x16xf32>
    %243 = arith.subf %239, %242 : vector<16x16xf32>
    %244 = math.exp %243 : vector<16x16xf32>
    %cst_83 = arith.constant dense<0.000000e+00> : vector<16xf32>
    %245 = vector.multi_reduction <add>, %244, %cst_83 [1] : vector<16x16xf32> to vector<16xf32>
    %246 = vector.shape_cast %245 : vector<16xf32> to vector<16x1xf32>
    %247 = vector.extract_strided_slice %170 {offsets = [0, 256], sizes = [16, 128], strides = [1, 1]} : vector<16x640xf32> to vector<16x128xf32>
    %cst_84 = arith.constant dense<0.000000e+00> : vector<16x128xf32>
    %248 = tpu.matmul %244, %247, %cst_84 {dimension_numbers = #tpu.dot_dimension_numbers<[1], [0], [0], [1], [0, 0, 1, 1], [], []>} : vector<16x16xf32>, vector<16x128xf32>, vector<16x128xf32> -> vector<16x128xf32>
    %249 = tpu.reciprocal %246 {approx = true} : vector<16x1xf32> -> vector<16x1xf32>
    %250 = vector.broadcast %249 : vector<16x1xf32> to vector<16x128xf32>
    %251 = arith.mulf %248, %250 : vector<16x128xf32>
    %252 = vector.extract_strided_slice %172 {offsets = [0, 3], sizes = [16, 1], strides = [1, 1]} : vector<16x5xf32> to vector<16x1xf32>
    %253 = vector.extract_strided_slice %174 {offsets = [3, 0], sizes = [1, 16], strides = [1, 1]} : vector<5x16xf32> to vector<1x16xf32>
    %254 = vector.broadcast %252 : vector<16x1xf32> to vector<16x16xf32>
    %255 = vector.broadcast %253 : vector<1x16xf32> to vector<16x16xf32>
    %256 = arith.addf %254, %255 : vector<16x16xf32>
    %257 = vector.broadcast %178 : f32 to vector<16x16xf32>
    %258 = arith.mulf %257, %1 : vector<16x16xf32>
    %259 = arith.addf %256, %258 : vector<16x16xf32>
    %cst_85 = arith.constant 2.000000e-01 : f32
    %260 = vector.broadcast %cst_85 : f32 to vector<16x16xf32>
    %261 = arith.mulf %260, %259 : vector<16x16xf32>
    %262 = arith.maximumf %259, %261 : vector<16x16xf32>
    %263 = arith.addf %262, %6 : vector<16x16xf32>
    %cst_86 = arith.constant dense<0xFF800000> : vector<16xf32>
    %264 = vector.multi_reduction <maximumf>, %263, %cst_86 [1] : vector<16x16xf32> to vector<16xf32>
    %265 = vector.shape_cast %264 : vector<16xf32> to vector<16x1xf32>
    %266 = vector.broadcast %265 : vector<16x1xf32> to vector<16x16xf32>
    %267 = arith.subf %263, %266 : vector<16x16xf32>
    %268 = math.exp %267 : vector<16x16xf32>
    %cst_87 = arith.constant dense<0.000000e+00> : vector<16xf32>
    %269 = vector.multi_reduction <add>, %268, %cst_87 [1] : vector<16x16xf32> to vector<16xf32>
    %270 = vector.shape_cast %269 : vector<16xf32> to vector<16x1xf32>
    %271 = vector.extract_strided_slice %170 {offsets = [0, 384], sizes = [16, 128], strides = [1, 1]} : vector<16x640xf32> to vector<16x128xf32>
    %cst_88 = arith.constant dense<0.000000e+00> : vector<16x128xf32>
    %272 = tpu.matmul %268, %271, %cst_88 {dimension_numbers = #tpu.dot_dimension_numbers<[1], [0], [0], [1], [0, 0, 1, 1], [], []>} : vector<16x16xf32>, vector<16x128xf32>, vector<16x128xf32> -> vector<16x128xf32>
    %273 = tpu.reciprocal %270 {approx = true} : vector<16x1xf32> -> vector<16x1xf32>
    %274 = vector.broadcast %273 : vector<16x1xf32> to vector<16x128xf32>
    %275 = arith.mulf %272, %274 : vector<16x128xf32>
    %276 = vector.extract_strided_slice %172 {offsets = [0, 4], sizes = [16, 1], strides = [1, 1]} : vector<16x5xf32> to vector<16x1xf32>
    %277 = vector.extract_strided_slice %174 {offsets = [4, 0], sizes = [1, 16], strides = [1, 1]} : vector<5x16xf32> to vector<1x16xf32>
    %278 = vector.broadcast %276 : vector<16x1xf32> to vector<16x16xf32>
    %279 = vector.broadcast %277 : vector<1x16xf32> to vector<16x16xf32>
    %280 = arith.addf %278, %279 : vector<16x16xf32>
    %281 = vector.broadcast %179 : f32 to vector<16x16xf32>
    %282 = arith.mulf %281, %1 : vector<16x16xf32>
    %283 = arith.addf %280, %282 : vector<16x16xf32>
    %cst_89 = arith.constant 2.000000e-01 : f32
    %284 = vector.broadcast %cst_89 : f32 to vector<16x16xf32>
    %285 = arith.mulf %284, %283 : vector<16x16xf32>
    %286 = arith.maximumf %283, %285 : vector<16x16xf32>
    %287 = arith.addf %286, %6 : vector<16x16xf32>
    %cst_90 = arith.constant dense<0xFF800000> : vector<16xf32>
    %288 = vector.multi_reduction <maximumf>, %287, %cst_90 [1] : vector<16x16xf32> to vector<16xf32>
    %289 = vector.shape_cast %288 : vector<16xf32> to vector<16x1xf32>
    %290 = vector.broadcast %289 : vector<16x1xf32> to vector<16x16xf32>
    %291 = arith.subf %287, %290 : vector<16x16xf32>
    %292 = math.exp %291 : vector<16x16xf32>
    %cst_91 = arith.constant dense<0.000000e+00> : vector<16xf32>
    %293 = vector.multi_reduction <add>, %292, %cst_91 [1] : vector<16x16xf32> to vector<16xf32>
    %294 = vector.shape_cast %293 : vector<16xf32> to vector<16x1xf32>
    %295 = vector.extract_strided_slice %170 {offsets = [0, 512], sizes = [16, 128], strides = [1, 1]} : vector<16x640xf32> to vector<16x128xf32>
    %cst_92 = arith.constant dense<0.000000e+00> : vector<16x128xf32>
    %296 = tpu.matmul %292, %295, %cst_92 {dimension_numbers = #tpu.dot_dimension_numbers<[1], [0], [0], [1], [0, 0, 1, 1], [], []>} : vector<16x16xf32>, vector<16x128xf32>, vector<16x128xf32> -> vector<16x128xf32>
    %297 = tpu.reciprocal %294 {approx = true} : vector<16x1xf32> -> vector<16x1xf32>
    %298 = vector.broadcast %297 : vector<16x1xf32> to vector<16x128xf32>
    %299 = arith.mulf %296, %298 : vector<16x128xf32>
    %300 = tpu.concatenate %203, %227, %251, %275, %299 in 1 : vector<16x128xf32>, vector<16x128xf32>, vector<16x128xf32>, vector<16x128xf32>, vector<16x128xf32> -> vector<16x640xf32>
    %c0_93 = arith.constant 0 : index
    %c0_94 = arith.constant 0 : index
    %301 = vector.load %arg11[%c0_93, %c0_94] : memref<1x640xf32, #tpu.memory_space<vmem>>, vector<1x640xf32>
    %302 = vector.broadcast %301 : vector<1x640xf32> to vector<16x640xf32>
    %303 = arith.addf %300, %302 : vector<16x640xf32>
    %cst_95 = arith.constant dense<0.000000e+00> : vector<640xf32>
    %304 = vector.multi_reduction <add>, %303, %cst_95 [0] : vector<16x640xf32> to vector<640xf32>
    %305 = vector.shape_cast %304 : vector<640xf32> to vector<1x640xf32>
    %cst_96 = arith.constant 1.600000e+01 : f32
    %306 = vector.broadcast %cst_96 : f32 to vector<1x640xf32>
    %307 = arith.divf %305, %306 : vector<1x640xf32>
    %308 = vector.broadcast %307 : vector<1x640xf32> to vector<16x640xf32>
    %309 = arith.subf %303, %308 : vector<16x640xf32>
    %310 = arith.mulf %309, %309 : vector<16x640xf32>
    %cst_97 = arith.constant dense<0.000000e+00> : vector<640xf32>
    %311 = vector.multi_reduction <add>, %310, %cst_97 [0] : vector<16x640xf32> to vector<640xf32>
    %312 = vector.shape_cast %311 : vector<640xf32> to vector<1x640xf32>
    %cst_98 = arith.constant 1.600000e+01 : f32
    %313 = vector.broadcast %cst_98 : f32 to vector<1x640xf32>
    %314 = arith.divf %312, %313 : vector<1x640xf32>
    %315 = vector.broadcast %307 : vector<1x640xf32> to vector<16x640xf32>
    %316 = arith.subf %303, %315 : vector<16x640xf32>
    %cst_99 = arith.constant 9.99999974E-6 : f32
    %317 = vector.broadcast %cst_99 : f32 to vector<1x640xf32>
    %318 = arith.addf %314, %317 : vector<1x640xf32>
    %319 = math.rsqrt %318 : vector<1x640xf32>
    %320 = vector.broadcast %319 : vector<1x640xf32> to vector<16x640xf32>
    %321 = arith.mulf %316, %320 : vector<16x640xf32>
    %c0_100 = arith.constant 0 : index
    %c0_101 = arith.constant 0 : index
    %322 = vector.load %arg30[%c0_100, %c0_101] : memref<1x640xf32, #tpu.memory_space<vmem>>, vector<1x640xf32>
    %323 = vector.broadcast %322 : vector<1x640xf32> to vector<16x640xf32>
    %324 = arith.mulf %321, %323 : vector<16x640xf32>
    %c0_102 = arith.constant 0 : index
    %c0_103 = arith.constant 0 : index
    %325 = vector.load %arg31[%c0_102, %c0_103] : memref<1x640xf32, #tpu.memory_space<vmem>>, vector<1x640xf32>
    %326 = vector.broadcast %325 : vector<1x640xf32> to vector<16x640xf32>
    %327 = arith.addf %324, %326 : vector<16x640xf32>
    %cst_104 = arith.constant 0.000000e+00 : f32
    %328 = vector.broadcast %cst_104 : f32 to vector<16x640xf32>
    %329 = arith.maximumf %327, %328 : vector<16x640xf32>
    %c0_105 = arith.constant 0 : index
    %c0_106 = arith.constant 0 : index
    %330 = vector.load %arg13[%c0_105, %c0_106] : memref<640x512xf32, #tpu.memory_space<vmem>>, vector<640x512xf32>
    %cst_107 = arith.constant dense<0.000000e+00> : vector<16x512xf32>
    %331 = tpu.matmul %329, %330, %cst_107 {dimension_numbers = #tpu.dot_dimension_numbers<[1], [0], [0], [1], [0, 0, 1, 1], [], []>} : vector<16x640xf32>, vector<640x512xf32>, vector<16x512xf32> -> vector<16x512xf32>
    %c0_108 = arith.constant 0 : index
    %c0_109 = arith.constant 0 : index
    %332 = vector.load %arg15[%c0_108, %c0_109] : memref<512x4xf32, #tpu.memory_space<vmem>>, vector<512x4xf32>
    %cst_110 = arith.constant dense<0.000000e+00> : vector<16x4xf32>
    %333 = tpu.matmul %331, %332, %cst_110 {dimension_numbers = #tpu.dot_dimension_numbers<[1], [0], [0], [1], [0, 0, 1, 1], [], []>} : vector<16x512xf32>, vector<512x4xf32>, vector<16x4xf32> -> vector<16x4xf32>
    %c0_111 = arith.constant 0 : index
    %c0_112 = arith.constant 0 : index
    %334 = vector.load %arg14[%c0_111, %c0_112] : memref<4x512xf32, #tpu.memory_space<vmem>>, vector<4x512xf32>
    %cst_113 = arith.constant dense<0.000000e+00> : vector<4x16xf32>
    %335 = tpu.matmul %334, %331, %cst_113 {dimension_numbers = #tpu.dot_dimension_numbers<[1], [1], [0], [0], [0, 0, 1, 0], [], []>} : vector<4x512xf32>, vector<16x512xf32>, vector<4x16xf32> -> vector<4x16xf32>
    %c0_114 = arith.constant 0 : index
    %c0_115 = arith.constant 0 : index
    %336 = memref.load %arg17[%c0_114, %c0_115] : memref<1x4xf32, #tpu.memory_space<smem>>
    %c0_116 = arith.constant 0 : index
    %c1_117 = arith.constant 1 : index
    %337 = memref.load %arg17[%c0_116, %c1_117] : memref<1x4xf32, #tpu.memory_space<smem>>
    %c0_118 = arith.constant 0 : index
    %c2_119 = arith.constant 2 : index
    %338 = memref.load %arg17[%c0_118, %c2_119] : memref<1x4xf32, #tpu.memory_space<smem>>
    %c0_120 = arith.constant 0 : index
    %c3_121 = arith.constant 3 : index
    %339 = memref.load %arg17[%c0_120, %c3_121] : memref<1x4xf32, #tpu.memory_space<smem>>
    %340 = vector.extract_strided_slice %333 {offsets = [0, 0], sizes = [16, 1], strides = [1, 1]} : vector<16x4xf32> to vector<16x1xf32>
    %341 = vector.extract_strided_slice %335 {offsets = [0, 0], sizes = [1, 16], strides = [1, 1]} : vector<4x16xf32> to vector<1x16xf32>
    %342 = vector.broadcast %340 : vector<16x1xf32> to vector<16x16xf32>
    %343 = vector.broadcast %341 : vector<1x16xf32> to vector<16x16xf32>
    %344 = arith.addf %342, %343 : vector<16x16xf32>
    %345 = vector.broadcast %336 : f32 to vector<16x16xf32>
    %346 = arith.mulf %345, %1 : vector<16x16xf32>
    %347 = arith.addf %344, %346 : vector<16x16xf32>
    %cst_122 = arith.constant 2.000000e-01 : f32
    %348 = vector.broadcast %cst_122 : f32 to vector<16x16xf32>
    %349 = arith.mulf %348, %347 : vector<16x16xf32>
    %350 = arith.maximumf %347, %349 : vector<16x16xf32>
    %351 = arith.addf %350, %6 : vector<16x16xf32>
    %cst_123 = arith.constant dense<0xFF800000> : vector<16xf32>
    %352 = vector.multi_reduction <maximumf>, %351, %cst_123 [1] : vector<16x16xf32> to vector<16xf32>
    %353 = vector.shape_cast %352 : vector<16xf32> to vector<16x1xf32>
    %354 = vector.broadcast %353 : vector<16x1xf32> to vector<16x16xf32>
    %355 = arith.subf %351, %354 : vector<16x16xf32>
    %356 = math.exp %355 : vector<16x16xf32>
    %cst_124 = arith.constant dense<0.000000e+00> : vector<16xf32>
    %357 = vector.multi_reduction <add>, %356, %cst_124 [1] : vector<16x16xf32> to vector<16xf32>
    %358 = vector.shape_cast %357 : vector<16xf32> to vector<16x1xf32>
    %359 = vector.extract_strided_slice %331 {offsets = [0, 0], sizes = [16, 128], strides = [1, 1]} : vector<16x512xf32> to vector<16x128xf32>
    %cst_125 = arith.constant dense<0.000000e+00> : vector<16x128xf32>
    %360 = tpu.matmul %356, %359, %cst_125 {dimension_numbers = #tpu.dot_dimension_numbers<[1], [0], [0], [1], [0, 0, 1, 1], [], []>} : vector<16x16xf32>, vector<16x128xf32>, vector<16x128xf32> -> vector<16x128xf32>
    %361 = tpu.reciprocal %358 {approx = true} : vector<16x1xf32> -> vector<16x1xf32>
    %362 = vector.broadcast %361 : vector<16x1xf32> to vector<16x128xf32>
    %363 = arith.mulf %360, %362 : vector<16x128xf32>
    %364 = vector.extract_strided_slice %333 {offsets = [0, 1], sizes = [16, 1], strides = [1, 1]} : vector<16x4xf32> to vector<16x1xf32>
    %365 = vector.extract_strided_slice %335 {offsets = [1, 0], sizes = [1, 16], strides = [1, 1]} : vector<4x16xf32> to vector<1x16xf32>
    %366 = vector.broadcast %364 : vector<16x1xf32> to vector<16x16xf32>
    %367 = vector.broadcast %365 : vector<1x16xf32> to vector<16x16xf32>
    %368 = arith.addf %366, %367 : vector<16x16xf32>
    %369 = vector.broadcast %337 : f32 to vector<16x16xf32>
    %370 = arith.mulf %369, %1 : vector<16x16xf32>
    %371 = arith.addf %368, %370 : vector<16x16xf32>
    %cst_126 = arith.constant 2.000000e-01 : f32
    %372 = vector.broadcast %cst_126 : f32 to vector<16x16xf32>
    %373 = arith.mulf %372, %371 : vector<16x16xf32>
    %374 = arith.maximumf %371, %373 : vector<16x16xf32>
    %375 = arith.addf %374, %6 : vector<16x16xf32>
    %cst_127 = arith.constant dense<0xFF800000> : vector<16xf32>
    %376 = vector.multi_reduction <maximumf>, %375, %cst_127 [1] : vector<16x16xf32> to vector<16xf32>
    %377 = vector.shape_cast %376 : vector<16xf32> to vector<16x1xf32>
    %378 = vector.broadcast %377 : vector<16x1xf32> to vector<16x16xf32>
    %379 = arith.subf %375, %378 : vector<16x16xf32>
    %380 = math.exp %379 : vector<16x16xf32>
    %cst_128 = arith.constant dense<0.000000e+00> : vector<16xf32>
    %381 = vector.multi_reduction <add>, %380, %cst_128 [1] : vector<16x16xf32> to vector<16xf32>
    %382 = vector.shape_cast %381 : vector<16xf32> to vector<16x1xf32>
    %383 = vector.extract_strided_slice %331 {offsets = [0, 128], sizes = [16, 128], strides = [1, 1]} : vector<16x512xf32> to vector<16x128xf32>
    %cst_129 = arith.constant dense<0.000000e+00> : vector<16x128xf32>
    %384 = tpu.matmul %380, %383, %cst_129 {dimension_numbers = #tpu.dot_dimension_numbers<[1], [0], [0], [1], [0, 0, 1, 1], [], []>} : vector<16x16xf32>, vector<16x128xf32>, vector<16x128xf32> -> vector<16x128xf32>
    %385 = tpu.reciprocal %382 {approx = true} : vector<16x1xf32> -> vector<16x1xf32>
    %386 = vector.broadcast %385 : vector<16x1xf32> to vector<16x128xf32>
    %387 = arith.mulf %384, %386 : vector<16x128xf32>
    %388 = vector.extract_strided_slice %333 {offsets = [0, 2], sizes = [16, 1], strides = [1, 1]} : vector<16x4xf32> to vector<16x1xf32>
    %389 = vector.extract_strided_slice %335 {offsets = [2, 0], sizes = [1, 16], strides = [1, 1]} : vector<4x16xf32> to vector<1x16xf32>
    %390 = vector.broadcast %388 : vector<16x1xf32> to vector<16x16xf32>
    %391 = vector.broadcast %389 : vector<1x16xf32> to vector<16x16xf32>
    %392 = arith.addf %390, %391 : vector<16x16xf32>
    %393 = vector.broadcast %338 : f32 to vector<16x16xf32>
    %394 = arith.mulf %393, %1 : vector<16x16xf32>
    %395 = arith.addf %392, %394 : vector<16x16xf32>
    %cst_130 = arith.constant 2.000000e-01 : f32
    %396 = vector.broadcast %cst_130 : f32 to vector<16x16xf32>
    %397 = arith.mulf %396, %395 : vector<16x16xf32>
    %398 = arith.maximumf %395, %397 : vector<16x16xf32>
    %399 = arith.addf %398, %6 : vector<16x16xf32>
    %cst_131 = arith.constant dense<0xFF800000> : vector<16xf32>
    %400 = vector.multi_reduction <maximumf>, %399, %cst_131 [1] : vector<16x16xf32> to vector<16xf32>
    %401 = vector.shape_cast %400 : vector<16xf32> to vector<16x1xf32>
    %402 = vector.broadcast %401 : vector<16x1xf32> to vector<16x16xf32>
    %403 = arith.subf %399, %402 : vector<16x16xf32>
    %404 = math.exp %403 : vector<16x16xf32>
    %cst_132 = arith.constant dense<0.000000e+00> : vector<16xf32>
    %405 = vector.multi_reduction <add>, %404, %cst_132 [1] : vector<16x16xf32> to vector<16xf32>
    %406 = vector.shape_cast %405 : vector<16xf32> to vector<16x1xf32>
    %407 = vector.extract_strided_slice %331 {offsets = [0, 256], sizes = [16, 128], strides = [1, 1]} : vector<16x512xf32> to vector<16x128xf32>
    %cst_133 = arith.constant dense<0.000000e+00> : vector<16x128xf32>
    %408 = tpu.matmul %404, %407, %cst_133 {dimension_numbers = #tpu.dot_dimension_numbers<[1], [0], [0], [1], [0, 0, 1, 1], [], []>} : vector<16x16xf32>, vector<16x128xf32>, vector<16x128xf32> -> vector<16x128xf32>
    %409 = tpu.reciprocal %406 {approx = true} : vector<16x1xf32> -> vector<16x1xf32>
    %410 = vector.broadcast %409 : vector<16x1xf32> to vector<16x128xf32>
    %411 = arith.mulf %408, %410 : vector<16x128xf32>
    %412 = vector.extract_strided_slice %333 {offsets = [0, 3], sizes = [16, 1], strides = [1, 1]} : vector<16x4xf32> to vector<16x1xf32>
    %413 = vector.extract_strided_slice %335 {offsets = [3, 0], sizes = [1, 16], strides = [1, 1]} : vector<4x16xf32> to vector<1x16xf32>
    %414 = vector.broadcast %412 : vector<16x1xf32> to vector<16x16xf32>
    %415 = vector.broadcast %413 : vector<1x16xf32> to vector<16x16xf32>
    %416 = arith.addf %414, %415 : vector<16x16xf32>
    %417 = vector.broadcast %339 : f32 to vector<16x16xf32>
    %418 = arith.mulf %417, %1 : vector<16x16xf32>
    %419 = arith.addf %416, %418 : vector<16x16xf32>
    %cst_134 = arith.constant 2.000000e-01 : f32
    %420 = vector.broadcast %cst_134 : f32 to vector<16x16xf32>
    %421 = arith.mulf %420, %419 : vector<16x16xf32>
    %422 = arith.maximumf %419, %421 : vector<16x16xf32>
    %423 = arith.addf %422, %6 : vector<16x16xf32>
    %cst_135 = arith.constant dense<0xFF800000> : vector<16xf32>
    %424 = vector.multi_reduction <maximumf>, %423, %cst_135 [1] : vector<16x16xf32> to vector<16xf32>
    %425 = vector.shape_cast %424 : vector<16xf32> to vector<16x1xf32>
    %426 = vector.broadcast %425 : vector<16x1xf32> to vector<16x16xf32>
    %427 = arith.subf %423, %426 : vector<16x16xf32>
    %428 = math.exp %427 : vector<16x16xf32>
    %cst_136 = arith.constant dense<0.000000e+00> : vector<16xf32>
    %429 = vector.multi_reduction <add>, %428, %cst_136 [1] : vector<16x16xf32> to vector<16xf32>
    %430 = vector.shape_cast %429 : vector<16xf32> to vector<16x1xf32>
    %431 = vector.extract_strided_slice %331 {offsets = [0, 384], sizes = [16, 128], strides = [1, 1]} : vector<16x512xf32> to vector<16x128xf32>
    %cst_137 = arith.constant dense<0.000000e+00> : vector<16x128xf32>
    %432 = tpu.matmul %428, %431, %cst_137 {dimension_numbers = #tpu.dot_dimension_numbers<[1], [0], [0], [1], [0, 0, 1, 1], [], []>} : vector<16x16xf32>, vector<16x128xf32>, vector<16x128xf32> -> vector<16x128xf32>
    %433 = tpu.reciprocal %430 {approx = true} : vector<16x1xf32> -> vector<16x1xf32>
    %434 = vector.broadcast %433 : vector<16x1xf32> to vector<16x128xf32>
    %435 = arith.mulf %432, %434 : vector<16x128xf32>
    %436 = tpu.concatenate %363, %387, %411, %435 in 1 : vector<16x128xf32>, vector<16x128xf32>, vector<16x128xf32>, vector<16x128xf32> -> vector<16x512xf32>
    %c0_138 = arith.constant 0 : index
    %c0_139 = arith.constant 0 : index
    %437 = vector.load %arg16[%c0_138, %c0_139] : memref<1x512xf32, #tpu.memory_space<vmem>>, vector<1x512xf32>
    %438 = vector.broadcast %437 : vector<1x512xf32> to vector<16x512xf32>
    %439 = arith.addf %436, %438 : vector<16x512xf32>
    %cst_140 = arith.constant dense<0.000000e+00> : vector<512xf32>
    %440 = vector.multi_reduction <add>, %439, %cst_140 [0] : vector<16x512xf32> to vector<512xf32>
    %441 = vector.shape_cast %440 : vector<512xf32> to vector<1x512xf32>
    %cst_141 = arith.constant 1.600000e+01 : f32
    %442 = vector.broadcast %cst_141 : f32 to vector<1x512xf32>
    %443 = arith.divf %441, %442 : vector<1x512xf32>
    %444 = vector.broadcast %443 : vector<1x512xf32> to vector<16x512xf32>
    %445 = arith.subf %439, %444 : vector<16x512xf32>
    %446 = arith.mulf %445, %445 : vector<16x512xf32>
    %cst_142 = arith.constant dense<0.000000e+00> : vector<512xf32>
    %447 = vector.multi_reduction <add>, %446, %cst_142 [0] : vector<16x512xf32> to vector<512xf32>
    %448 = vector.shape_cast %447 : vector<512xf32> to vector<1x512xf32>
    %cst_143 = arith.constant 1.600000e+01 : f32
    %449 = vector.broadcast %cst_143 : f32 to vector<1x512xf32>
    %450 = arith.divf %448, %449 : vector<1x512xf32>
    %451 = vector.broadcast %443 : vector<1x512xf32> to vector<16x512xf32>
    %452 = arith.subf %439, %451 : vector<16x512xf32>
    %cst_144 = arith.constant 9.99999974E-6 : f32
    %453 = vector.broadcast %cst_144 : f32 to vector<1x512xf32>
    %454 = arith.addf %450, %453 : vector<1x512xf32>
    %455 = math.rsqrt %454 : vector<1x512xf32>
    %456 = vector.broadcast %455 : vector<1x512xf32> to vector<16x512xf32>
    %457 = arith.mulf %452, %456 : vector<16x512xf32>
    %c0_145 = arith.constant 0 : index
    %c0_146 = arith.constant 0 : index
    %458 = vector.load %arg32[%c0_145, %c0_146] : memref<1x512xf32, #tpu.memory_space<vmem>>, vector<1x512xf32>
    %459 = vector.broadcast %458 : vector<1x512xf32> to vector<16x512xf32>
    %460 = arith.mulf %457, %459 : vector<16x512xf32>
    %c0_147 = arith.constant 0 : index
    %c0_148 = arith.constant 0 : index
    %461 = vector.load %arg33[%c0_147, %c0_148] : memref<1x512xf32, #tpu.memory_space<vmem>>, vector<1x512xf32>
    %462 = vector.broadcast %461 : vector<1x512xf32> to vector<16x512xf32>
    %463 = arith.addf %460, %462 : vector<16x512xf32>
    %cst_149 = arith.constant 0.000000e+00 : f32
    %464 = vector.broadcast %cst_149 : f32 to vector<16x512xf32>
    %465 = arith.maximumf %463, %464 : vector<16x512xf32>
    %c0_150 = arith.constant 0 : index
    %c0_151 = arith.constant 0 : index
    %466 = vector.load %arg18[%c0_150, %c0_151] : memref<512x512xf32, #tpu.memory_space<vmem>>, vector<512x512xf32>
    %cst_152 = arith.constant dense<0.000000e+00> : vector<16x512xf32>
    %467 = tpu.matmul %465, %466, %cst_152 {dimension_numbers = #tpu.dot_dimension_numbers<[1], [0], [0], [1], [0, 0, 1, 1], [], []>} : vector<16x512xf32>, vector<512x512xf32>, vector<16x512xf32> -> vector<16x512xf32>
    %c0_153 = arith.constant 0 : index
    %c0_154 = arith.constant 0 : index
    %468 = vector.load %arg20[%c0_153, %c0_154] : memref<512x4xf32, #tpu.memory_space<vmem>>, vector<512x4xf32>
    %cst_155 = arith.constant dense<0.000000e+00> : vector<16x4xf32>
    %469 = tpu.matmul %467, %468, %cst_155 {dimension_numbers = #tpu.dot_dimension_numbers<[1], [0], [0], [1], [0, 0, 1, 1], [], []>} : vector<16x512xf32>, vector<512x4xf32>, vector<16x4xf32> -> vector<16x4xf32>
    %c0_156 = arith.constant 0 : index
    %c0_157 = arith.constant 0 : index
    %470 = vector.load %arg19[%c0_156, %c0_157] : memref<4x512xf32, #tpu.memory_space<vmem>>, vector<4x512xf32>
    %cst_158 = arith.constant dense<0.000000e+00> : vector<4x16xf32>
    %471 = tpu.matmul %470, %467, %cst_158 {dimension_numbers = #tpu.dot_dimension_numbers<[1], [1], [0], [0], [0, 0, 1, 0], [], []>} : vector<4x512xf32>, vector<16x512xf32>, vector<4x16xf32> -> vector<4x16xf32>
    %c0_159 = arith.constant 0 : index
    %c0_160 = arith.constant 0 : index
    %472 = memref.load %arg22[%c0_159, %c0_160] : memref<1x4xf32, #tpu.memory_space<smem>>
    %c0_161 = arith.constant 0 : index
    %c1_162 = arith.constant 1 : index
    %473 = memref.load %arg22[%c0_161, %c1_162] : memref<1x4xf32, #tpu.memory_space<smem>>
    %c0_163 = arith.constant 0 : index
    %c2_164 = arith.constant 2 : index
    %474 = memref.load %arg22[%c0_163, %c2_164] : memref<1x4xf32, #tpu.memory_space<smem>>
    %c0_165 = arith.constant 0 : index
    %c3_166 = arith.constant 3 : index
    %475 = memref.load %arg22[%c0_165, %c3_166] : memref<1x4xf32, #tpu.memory_space<smem>>
    %476 = vector.extract_strided_slice %469 {offsets = [0, 0], sizes = [16, 1], strides = [1, 1]} : vector<16x4xf32> to vector<16x1xf32>
    %477 = vector.extract_strided_slice %471 {offsets = [0, 0], sizes = [1, 16], strides = [1, 1]} : vector<4x16xf32> to vector<1x16xf32>
    %478 = vector.broadcast %476 : vector<16x1xf32> to vector<16x16xf32>
    %479 = vector.broadcast %477 : vector<1x16xf32> to vector<16x16xf32>
    %480 = arith.addf %478, %479 : vector<16x16xf32>
    %481 = vector.broadcast %472 : f32 to vector<16x16xf32>
    %482 = arith.mulf %481, %1 : vector<16x16xf32>
    %483 = arith.addf %480, %482 : vector<16x16xf32>
    %cst_167 = arith.constant 2.000000e-01 : f32
    %484 = vector.broadcast %cst_167 : f32 to vector<16x16xf32>
    %485 = arith.mulf %484, %483 : vector<16x16xf32>
    %486 = arith.maximumf %483, %485 : vector<16x16xf32>
    %487 = arith.addf %486, %6 : vector<16x16xf32>
    %cst_168 = arith.constant dense<0xFF800000> : vector<16xf32>
    %488 = vector.multi_reduction <maximumf>, %487, %cst_168 [1] : vector<16x16xf32> to vector<16xf32>
    %489 = vector.shape_cast %488 : vector<16xf32> to vector<16x1xf32>
    %490 = vector.broadcast %489 : vector<16x1xf32> to vector<16x16xf32>
    %491 = arith.subf %487, %490 : vector<16x16xf32>
    %492 = math.exp %491 : vector<16x16xf32>
    %cst_169 = arith.constant dense<0.000000e+00> : vector<16xf32>
    %493 = vector.multi_reduction <add>, %492, %cst_169 [1] : vector<16x16xf32> to vector<16xf32>
    %494 = vector.shape_cast %493 : vector<16xf32> to vector<16x1xf32>
    %495 = vector.extract_strided_slice %467 {offsets = [0, 0], sizes = [16, 128], strides = [1, 1]} : vector<16x512xf32> to vector<16x128xf32>
    %cst_170 = arith.constant dense<0.000000e+00> : vector<16x128xf32>
    %496 = tpu.matmul %492, %495, %cst_170 {dimension_numbers = #tpu.dot_dimension_numbers<[1], [0], [0], [1], [0, 0, 1, 1], [], []>} : vector<16x16xf32>, vector<16x128xf32>, vector<16x128xf32> -> vector<16x128xf32>
    %497 = tpu.reciprocal %494 {approx = true} : vector<16x1xf32> -> vector<16x1xf32>
    %498 = vector.broadcast %497 : vector<16x1xf32> to vector<16x128xf32>
    %499 = arith.mulf %496, %498 : vector<16x128xf32>
    %500 = vector.extract_strided_slice %469 {offsets = [0, 1], sizes = [16, 1], strides = [1, 1]} : vector<16x4xf32> to vector<16x1xf32>
    %501 = vector.extract_strided_slice %471 {offsets = [1, 0], sizes = [1, 16], strides = [1, 1]} : vector<4x16xf32> to vector<1x16xf32>
    %502 = vector.broadcast %500 : vector<16x1xf32> to vector<16x16xf32>
    %503 = vector.broadcast %501 : vector<1x16xf32> to vector<16x16xf32>
    %504 = arith.addf %502, %503 : vector<16x16xf32>
    %505 = vector.broadcast %473 : f32 to vector<16x16xf32>
    %506 = arith.mulf %505, %1 : vector<16x16xf32>
    %507 = arith.addf %504, %506 : vector<16x16xf32>
    %cst_171 = arith.constant 2.000000e-01 : f32
    %508 = vector.broadcast %cst_171 : f32 to vector<16x16xf32>
    %509 = arith.mulf %508, %507 : vector<16x16xf32>
    %510 = arith.maximumf %507, %509 : vector<16x16xf32>
    %511 = arith.addf %510, %6 : vector<16x16xf32>
    %cst_172 = arith.constant dense<0xFF800000> : vector<16xf32>
    %512 = vector.multi_reduction <maximumf>, %511, %cst_172 [1] : vector<16x16xf32> to vector<16xf32>
    %513 = vector.shape_cast %512 : vector<16xf32> to vector<16x1xf32>
    %514 = vector.broadcast %513 : vector<16x1xf32> to vector<16x16xf32>
    %515 = arith.subf %511, %514 : vector<16x16xf32>
    %516 = math.exp %515 : vector<16x16xf32>
    %cst_173 = arith.constant dense<0.000000e+00> : vector<16xf32>
    %517 = vector.multi_reduction <add>, %516, %cst_173 [1] : vector<16x16xf32> to vector<16xf32>
    %518 = vector.shape_cast %517 : vector<16xf32> to vector<16x1xf32>
    %519 = vector.extract_strided_slice %467 {offsets = [0, 128], sizes = [16, 128], strides = [1, 1]} : vector<16x512xf32> to vector<16x128xf32>
    %cst_174 = arith.constant dense<0.000000e+00> : vector<16x128xf32>
    %520 = tpu.matmul %516, %519, %cst_174 {dimension_numbers = #tpu.dot_dimension_numbers<[1], [0], [0], [1], [0, 0, 1, 1], [], []>} : vector<16x16xf32>, vector<16x128xf32>, vector<16x128xf32> -> vector<16x128xf32>
    %521 = tpu.reciprocal %518 {approx = true} : vector<16x1xf32> -> vector<16x1xf32>
    %522 = vector.broadcast %521 : vector<16x1xf32> to vector<16x128xf32>
    %523 = arith.mulf %520, %522 : vector<16x128xf32>
    %524 = vector.extract_strided_slice %469 {offsets = [0, 2], sizes = [16, 1], strides = [1, 1]} : vector<16x4xf32> to vector<16x1xf32>
    %525 = vector.extract_strided_slice %471 {offsets = [2, 0], sizes = [1, 16], strides = [1, 1]} : vector<4x16xf32> to vector<1x16xf32>
    %526 = vector.broadcast %524 : vector<16x1xf32> to vector<16x16xf32>
    %527 = vector.broadcast %525 : vector<1x16xf32> to vector<16x16xf32>
    %528 = arith.addf %526, %527 : vector<16x16xf32>
    %529 = vector.broadcast %474 : f32 to vector<16x16xf32>
    %530 = arith.mulf %529, %1 : vector<16x16xf32>
    %531 = arith.addf %528, %530 : vector<16x16xf32>
    %cst_175 = arith.constant 2.000000e-01 : f32
    %532 = vector.broadcast %cst_175 : f32 to vector<16x16xf32>
    %533 = arith.mulf %532, %531 : vector<16x16xf32>
    %534 = arith.maximumf %531, %533 : vector<16x16xf32>
    %535 = arith.addf %534, %6 : vector<16x16xf32>
    %cst_176 = arith.constant dense<0xFF800000> : vector<16xf32>
    %536 = vector.multi_reduction <maximumf>, %535, %cst_176 [1] : vector<16x16xf32> to vector<16xf32>
    %537 = vector.shape_cast %536 : vector<16xf32> to vector<16x1xf32>
    %538 = vector.broadcast %537 : vector<16x1xf32> to vector<16x16xf32>
    %539 = arith.subf %535, %538 : vector<16x16xf32>
    %540 = math.exp %539 : vector<16x16xf32>
    %cst_177 = arith.constant dense<0.000000e+00> : vector<16xf32>
    %541 = vector.multi_reduction <add>, %540, %cst_177 [1] : vector<16x16xf32> to vector<16xf32>
    %542 = vector.shape_cast %541 : vector<16xf32> to vector<16x1xf32>
    %543 = vector.extract_strided_slice %467 {offsets = [0, 256], sizes = [16, 128], strides = [1, 1]} : vector<16x512xf32> to vector<16x128xf32>
    %cst_178 = arith.constant dense<0.000000e+00> : vector<16x128xf32>
    %544 = tpu.matmul %540, %543, %cst_178 {dimension_numbers = #tpu.dot_dimension_numbers<[1], [0], [0], [1], [0, 0, 1, 1], [], []>} : vector<16x16xf32>, vector<16x128xf32>, vector<16x128xf32> -> vector<16x128xf32>
    %545 = tpu.reciprocal %542 {approx = true} : vector<16x1xf32> -> vector<16x1xf32>
    %546 = vector.broadcast %545 : vector<16x1xf32> to vector<16x128xf32>
    %547 = arith.mulf %544, %546 : vector<16x128xf32>
    %548 = vector.extract_strided_slice %469 {offsets = [0, 3], sizes = [16, 1], strides = [1, 1]} : vector<16x4xf32> to vector<16x1xf32>
    %549 = vector.extract_strided_slice %471 {offsets = [3, 0], sizes = [1, 16], strides = [1, 1]} : vector<4x16xf32> to vector<1x16xf32>
    %550 = vector.broadcast %548 : vector<16x1xf32> to vector<16x16xf32>
    %551 = vector.broadcast %549 : vector<1x16xf32> to vector<16x16xf32>
    %552 = arith.addf %550, %551 : vector<16x16xf32>
    %553 = vector.broadcast %475 : f32 to vector<16x16xf32>
    %554 = arith.mulf %553, %1 : vector<16x16xf32>
    %555 = arith.addf %552, %554 : vector<16x16xf32>
    %cst_179 = arith.constant 2.000000e-01 : f32
    %556 = vector.broadcast %cst_179 : f32 to vector<16x16xf32>
    %557 = arith.mulf %556, %555 : vector<16x16xf32>
    %558 = arith.maximumf %555, %557 : vector<16x16xf32>
    %559 = arith.addf %558, %6 : vector<16x16xf32>
    %cst_180 = arith.constant dense<0xFF800000> : vector<16xf32>
    %560 = vector.multi_reduction <maximumf>, %559, %cst_180 [1] : vector<16x16xf32> to vector<16xf32>
    %561 = vector.shape_cast %560 : vector<16xf32> to vector<16x1xf32>
    %562 = vector.broadcast %561 : vector<16x1xf32> to vector<16x16xf32>
    %563 = arith.subf %559, %562 : vector<16x16xf32>
    %564 = math.exp %563 : vector<16x16xf32>
    %cst_181 = arith.constant dense<0.000000e+00> : vector<16xf32>
    %565 = vector.multi_reduction <add>, %564, %cst_181 [1] : vector<16x16xf32> to vector<16xf32>
    %566 = vector.shape_cast %565 : vector<16xf32> to vector<16x1xf32>
    %567 = vector.extract_strided_slice %467 {offsets = [0, 384], sizes = [16, 128], strides = [1, 1]} : vector<16x512xf32> to vector<16x128xf32>
    %cst_182 = arith.constant dense<0.000000e+00> : vector<16x128xf32>
    %568 = tpu.matmul %564, %567, %cst_182 {dimension_numbers = #tpu.dot_dimension_numbers<[1], [0], [0], [1], [0, 0, 1, 1], [], []>} : vector<16x16xf32>, vector<16x128xf32>, vector<16x128xf32> -> vector<16x128xf32>
    %569 = tpu.reciprocal %566 {approx = true} : vector<16x1xf32> -> vector<16x1xf32>
    %570 = vector.broadcast %569 : vector<16x1xf32> to vector<16x128xf32>
    %571 = arith.mulf %568, %570 : vector<16x128xf32>
    %572 = tpu.concatenate %499, %523, %547, %571 in 1 : vector<16x128xf32>, vector<16x128xf32>, vector<16x128xf32>, vector<16x128xf32> -> vector<16x512xf32>
    %c0_183 = arith.constant 0 : index
    %c0_184 = arith.constant 0 : index
    %573 = vector.load %arg21[%c0_183, %c0_184] : memref<1x512xf32, #tpu.memory_space<vmem>>, vector<1x512xf32>
    %574 = vector.broadcast %573 : vector<1x512xf32> to vector<16x512xf32>
    %575 = arith.addf %572, %574 : vector<16x512xf32>
    %cst_185 = arith.constant 0.000000e+00 : f32
    %576 = vector.broadcast %cst_185 : f32 to vector<16x512xf32>
    %577 = arith.maximumf %575, %576 : vector<16x512xf32>
    %c0_186 = arith.constant 0 : index
    %c0_187 = arith.constant 0 : index
    %578 = vector.load %arg23[%c0_186, %c0_187] : memref<512x128xf32, #tpu.memory_space<vmem>>, vector<512x128xf32>
    %cst_188 = arith.constant dense<0.000000e+00> : vector<16x128xf32>
    %579 = tpu.matmul %577, %578, %cst_188 {dimension_numbers = #tpu.dot_dimension_numbers<[1], [0], [0], [1], [0, 0, 1, 1], [], []>} : vector<16x512xf32>, vector<512x128xf32>, vector<16x128xf32> -> vector<16x128xf32>
    %c0_189 = arith.constant 0 : index
    %c0_190 = arith.constant 0 : index
    %580 = vector.load %arg25[%c0_189, %c0_190] : memref<128x1xf32, #tpu.memory_space<vmem>>, vector<128x1xf32>
    %cst_191 = arith.constant dense<0.000000e+00> : vector<16x1xf32>
    %581 = tpu.matmul %579, %580, %cst_191 {dimension_numbers = #tpu.dot_dimension_numbers<[1], [0], [0], [1], [0, 0, 1, 1], [], []>} : vector<16x128xf32>, vector<128x1xf32>, vector<16x1xf32> -> vector<16x1xf32>
    %c0_192 = arith.constant 0 : index
    %c0_193 = arith.constant 0 : index
    %582 = vector.load %arg24[%c0_192, %c0_193] : memref<1x128xf32, #tpu.memory_space<vmem>>, vector<1x128xf32>
    %cst_194 = arith.constant dense<0.000000e+00> : vector<1x16xf32>
    %583 = tpu.matmul %582, %579, %cst_194 {dimension_numbers = #tpu.dot_dimension_numbers<[1], [1], [0], [0], [0, 0, 1, 0], [], []>} : vector<1x128xf32>, vector<16x128xf32>, vector<1x16xf32> -> vector<1x16xf32>
    %c0_195 = arith.constant 0 : index
    %c0_196 = arith.constant 0 : index
    %584 = memref.load %arg27[%c0_195, %c0_196] : memref<1x1xf32, #tpu.memory_space<smem>>
    %585 = vector.broadcast %581 : vector<16x1xf32> to vector<16x16xf32>
    %586 = vector.broadcast %583 : vector<1x16xf32> to vector<16x16xf32>
    %587 = arith.addf %585, %586 : vector<16x16xf32>
    %588 = vector.broadcast %584 : f32 to vector<16x16xf32>
    %589 = arith.mulf %588, %1 : vector<16x16xf32>
    %590 = arith.addf %587, %589 : vector<16x16xf32>
    %cst_197 = arith.constant 2.000000e-01 : f32
    %591 = vector.broadcast %cst_197 : f32 to vector<16x16xf32>
    %592 = arith.mulf %591, %590 : vector<16x16xf32>
    %593 = arith.maximumf %590, %592 : vector<16x16xf32>
    %594 = arith.addf %593, %6 : vector<16x16xf32>
    %cst_198 = arith.constant dense<0xFF800000> : vector<16xf32>
    %595 = vector.multi_reduction <maximumf>, %594, %cst_198 [1] : vector<16x16xf32> to vector<16xf32>
    %596 = vector.shape_cast %595 : vector<16xf32> to vector<16x1xf32>
    %597 = vector.broadcast %596 : vector<16x1xf32> to vector<16x16xf32>
    %598 = arith.subf %594, %597 : vector<16x16xf32>
    %599 = math.exp %598 : vector<16x16xf32>
    %cst_199 = arith.constant dense<0.000000e+00> : vector<16xf32>
    %600 = vector.multi_reduction <add>, %599, %cst_199 [1] : vector<16x16xf32> to vector<16xf32>
    %601 = vector.shape_cast %600 : vector<16xf32> to vector<16x1xf32>
    %cst_200 = arith.constant dense<0.000000e+00> : vector<16x128xf32>
    %602 = tpu.matmul %599, %579, %cst_200 {dimension_numbers = #tpu.dot_dimension_numbers<[1], [0], [0], [1], [0, 0, 1, 1], [], []>} : vector<16x16xf32>, vector<16x128xf32>, vector<16x128xf32> -> vector<16x128xf32>
    %603 = tpu.reciprocal %601 {approx = true} : vector<16x1xf32> -> vector<16x1xf32>
    %604 = vector.broadcast %603 : vector<16x1xf32> to vector<16x128xf32>
    %605 = arith.mulf %602, %604 : vector<16x128xf32>
    %c0_201 = arith.constant 0 : index
    %c0_202 = arith.constant 0 : index
    %606 = vector.load %arg26[%c0_201, %c0_202] : memref<1x128xf32, #tpu.memory_space<vmem>>, vector<1x128xf32>
    %607 = vector.broadcast %606 : vector<1x128xf32> to vector<16x128xf32>
    %608 = arith.addf %605, %607 : vector<16x128xf32>
    %c0_203 = arith.constant 0 : index
    %c0_204 = arith.constant 0 : index
    %609 = vector.load %arg34[%c0_203, %c0_204] : memref<16x128xf32, #tpu.memory_space<vmem>>, vector<16x128xf32>
    tpu.vector_store %arg34[%c0_203, %c0_204], %608 {strides = array<i32>} : memref<16x128xf32, #tpu.memory_space<vmem>>, vector<16x128xf32>,
    return
  }
}

</mosaic_0001>

<llo_original>
// kernel: tpu_custom_call.1
$region0: #{tpu_custom_call.1}
  #allocation0 [shape = 'u32[]', space=smem, size = 0x4, offset = 0x4, fixed_abs, tag = 'smem constant byte address 0x4 - core index']
  #allocation1 [shape = 'u32[144,128]{1,0:T(1,128)}', space=vmem, size = 0x12000, scoped, tag = 'internal scratch']
  #allocation2 [shape = 'f32[1,1]{1,0:T(1,128)S(6)}', space=smem, size = 0x200, scoped, tag = 'scoped memory for tpu_custom_call.1']
  %s0 = inlined_call_operand.smem [shape: u32[35], index: -1, kind: input, shape index: {}]
  %s1 = sld [smem:[%s0]]
  %s2 = scalar_lea.smem %s0, 1
  %s3 = sld [smem:[%s2]]
  %s4 = scalar_lea.smem %s0, 2
  %s5 = sld [smem:[%s4]]
  %s6 = scalar_lea.smem %s0, 3
  %s7 = sld [smem:[%s6]]
  %s8 = scalar_lea.smem %s0, 4
  %s9 = sld [smem:[%s8]]
  %s10 = scalar_lea.smem %s0, 5
  %s11 = sld [smem:[%s10]]
  %s12 = scalar_lea.smem %s0, 6
  %s13 = sld [smem:[%s12]]
  %s14 = scalar_lea.smem %s0, 7
  %s15 = sld [smem:[%s14]]
  %s16 = scalar_lea.smem %s0, 8
  %s17 = sld [smem:[%s16]]
  %s18 = scalar_lea.smem %s0, 9
  %s19 = sld [smem:[%s18]]
  %s20 = scalar_lea.smem %s0, 10
  %s21 = sld [smem:[%s20]]
  %s22 = scalar_lea.smem %s0, 11
  %s23 = sld [smem:[%s22]]
  %s24 = scalar_lea.smem %s0, 12
  %s25 = sld [smem:[%s24]]
  %s26 = scalar_lea.smem %s0, 13
  %s27 = sld [smem:[%s26]]
  %s28 = scalar_lea.smem %s0, 14
  %s29 = sld [smem:[%s28]]
  %s30 = scalar_lea.smem %s0, 15
  %s31 = sld [smem:[%s30]]
  %s32 = scalar_lea.smem %s0, 16
  %s33 = sld [smem:[%s32]]
  %s34 = scalar_lea.smem %s0, 17
  %s35 = sld [smem:[%s34]]
  %s36 = scalar_lea.smem %s0, 18
  %s37 = sld [smem:[%s36]]
  %s38 = scalar_lea.smem %s0, 19
  %s39 = sld [smem:[%s38]]
  %s40 = scalar_lea.smem %s0, 20
  %s41 = sld [smem:[%s40]]
  %s42 = scalar_lea.smem %s0, 21
  %s43 = sld [smem:[%s42]]
  %s44 = scalar_lea.smem %s0, 22
  %s45 = sld [smem:[%s44]]
  %s46 = scalar_lea.smem %s0, 23
  %s47 = sld [smem:[%s46]]
  %s48 = scalar_lea.smem %s0, 24
  %s49 = sld [smem:[%s48]]
  %s50 = scalar_lea.smem %s0, 25
  %s51 = sld [smem:[%s50]]
  %s52 = scalar_lea.smem %s0, 26
  %s53 = sld [smem:[%s52]]
  %s54 = scalar_lea.smem %s0, 27
  %s55 = sld [smem:[%s54]]
  %s56 = scalar_lea.smem %s0, 28
  %s57 = sld [smem:[%s56]]
  %s58 = scalar_lea.smem %s0, 29
  %s59 = sld [smem:[%s58]]
  %s60 = scalar_lea.smem %s0, 30
  %s61 = sld [smem:[%s60]]
  %s62 = scalar_lea.smem %s0, 31
  %s63 = sld [smem:[%s62]]
  %s64 = scalar_lea.smem %s0, 32
  %s65 = sld [smem:[%s64]]
  %s66 = scalar_lea.smem %s0, 33
  %s67 = sld [smem:[%s66]]
  %s68 = scalar_lea.smem %s0, 34
  %s69 = sld [smem:[%s68]]
  %s70 = sld [smem:[#allocation0]]
  $region254: #{tpu_custom_call.1} parent=0
    _
  %s72 = ssub.s32 1, %s70
  %s73 = scalar_select 0, %s72, %s70
  %74 = sst [smem:[#allocation2]] %s55
  $region1: #{tpu_custom_call.1} parent=0
    #allocation3 [shape = 'u8[8192]{0}', space=vmem, size = 0x2000, scoped, tag = 'input window, operand 0, single buffered']
    #allocation4 [shape = 's32[1]{0}', space=sflag, size = 0x4, scoped, tag = 'scoped memory for tpu_custom_call.1']
    #allocation5 [shape = 's32[1]{0}', space=sflag, size = 0x4, scoped, tag = 'scoped memory for tpu_custom_call.1']
    #allocation6 [shape = 's32[1]{0}', space=sflag, size = 0x4, scoped, tag = 'scoped memory for tpu_custom_call.1']
    #allocation7 [shape = 'u8[8192]{0}', space=vmem, size = 0x2000, scoped, tag = 'input window, operand 1, single buffered']
    #allocation8 [shape = 's32[1]{0}', space=sflag, size = 0x4, scoped, tag = 'scoped memory for tpu_custom_call.1']
    #allocation9 [shape = 'u8[8192]{0}', space=vmem, size = 0x2000, scoped, tag = 'input window, operand 2, single buffered']
    #allocation10 [shape = 'u8[81920]{0}', space=vmem, size = 0x14000, scoped, tag = 'input window, operand 3, single buffered']
    #allocation11 [shape = 's32[1]{0}', space=sflag, size = 0x4, scoped, tag = 'scoped memory for tpu_custom_call.1']
    #allocation12 [shape = 'u8[20480]{0}', space=vmem, size = 0x5000, scoped, tag = 'input window, operand 4, single buffered']
    #allocation13 [shape = 'u8[2560]{0}', space=vmem, size = 0xc00, scoped, tag = 'input window, operand 6, single buffered']
    #allocation14 [shape = 's32[1]{0}', space=sflag, size = 0x4, scoped, tag = 'scoped memory for tpu_custom_call.1']
    #allocation15 [shape = 'u8[512]{0}', space=smem, size = 0x200, scoped, tag = 'input window, operand 7, single buffered']
    #allocation16 [shape = 'u8[1638400]{0}', space=vmem, size = 0x190000, scoped, tag = 'input window, operand 8, single buffered']
    #allocation17 [shape = 'u8[20480]{0}', space=vmem, size = 0x5000, scoped, tag = 'input window, operand 9, single buffered']
    #allocation18 [shape = 's32[1]{0}', space=sflag, size = 0x4, scoped, tag = 'scoped memory for tpu_custom_call.1']
    #allocation19 [shape = 'u8[2560]{0}', space=vmem, size = 0xc00, scoped, tag = 'input window, operand 11, single buffered']
    #allocation20 [shape = 'u8[512]{0}', space=smem, size = 0x200, scoped, tag = 'input window, operand 12, single buffered']
    #allocation21 [shape = 's32[1]{0}', space=sflag, size = 0x4, scoped, tag = 'scoped memory for tpu_custom_call.1']
    #allocation22 [shape = 'u8[8192]{0}', space=vmem, size = 0x2000, scoped, tag = 'input window, operand 14, single buffered']
    #allocation23 [shape = 's32[1]{0}', space=sflag, size = 0x4, scoped, tag = 'scoped memory for tpu_custom_call.1']
    #allocation24 [shape = 'u8[2048]{0}', space=vmem, size = 0x800, scoped, tag = 'input window, operand 16, single buffered']
    #allocation25 [shape = 'u8[512]{0}', space=smem, size = 0x200, scoped, tag = 'input window, operand 17, single buffered']
    #allocation26 [shape = 'u8[1048576]{0}', space=vmem, size = 0x100000, scoped, tag = 'input window, operand 18, single buffered']
    #allocation27 [shape = 's32[1]{0}', space=sflag, size = 0x4, scoped, tag = 'scoped memory for tpu_custom_call.1']
    #allocation28 [shape = 'u8[8192]{0}', space=vmem, size = 0x2000, scoped, tag = 'input window, operand 19, single buffered']
    #allocation29 [shape = 'u8[2048]{0}', space=vmem, size = 0x800, scoped, tag = 'input window, operand 21, single buffered']
    #allocation30 [shape = 's32[1]{0}', space=sflag, size = 0x4, scoped, tag = 'scoped memory for tpu_custom_call.1']
    #allocation31 [shape = 'u8[512]{0}', space=smem, size = 0x200, scoped, tag = 'input window, operand 22, single buffered']
    #allocation32 [shape = 's32[1]{0}', space=sflag, size = 0x4, scoped, tag = 'scoped memory for tpu_custom_call.1']
    #allocation33 [shape = 'u8[262144]{0}', space=vmem, size = 0x40000, scoped, tag = 'input window, operand 23, single buffered']
    #allocation34 [shape = 'u8[512]{0}', space=vmem, size = 0x400, scoped, tag = 'input window, operand 24, single buffered']
    #allocation35 [shape = 's32[1]{0}', space=sflag, size = 0x4, scoped, tag = 'scoped memory for tpu_custom_call.1']
    #allocation36 [shape = 'u8[512]{0}', space=vmem, size = 0x400, scoped, tag = 'input window, operand 26, single buffered']
    #allocation37 [shape = 'u8[2560]{0}', space=vmem, size = 0xc00, scoped, tag = 'input window, operand 28, single buffered']
    #allocation38 [shape = 's32[1]{0}', space=sflag, size = 0x4, scoped, tag = 'scoped memory for tpu_custom_call.1']
    #allocation39 [shape = 'u8[2560]{0}', space=vmem, size = 0xc00, scoped, tag = 'input window, operand 29, single buffered']
    #allocation40 [shape = 'u8[2560]{0}', space=vmem, size = 0xc00, scoped, tag = 'input window, operand 30, single buffered']
    #allocation41 [shape = 's32[1]{0}', space=sflag, size = 0x4, scoped, tag = 'scoped memory for tpu_custom_call.1']
    #allocation42 [shape = 'u8[2560]{0}', space=vmem, size = 0xc00, scoped, tag = 'input window, operand 31, single buffered']
    #allocation43 [shape = 'u8[2048]{0}', space=vmem, size = 0x800, scoped, tag = 'input window, operand 32, single buffered']
    #allocation44 [shape = 's32[1]{0}', space=sflag, size = 0x4, scoped, tag = 'scoped memory for tpu_custom_call.1']
    #allocation45 [shape = 'u8[2048]{0}', space=vmem, size = 0x800, scoped, tag = 'input window, operand 33, single buffered']
    #allocation46 [shape = 'u8[8192]{0}', space=vmem, size = 0x2000, scoped, tag = 'output window, operand 0, single buffered']
    %75 = vsyncpa [#allocation4], 0
    %76 = vsyncpa [#allocation8], 0
    %77 = vsyncpa [#allocation11], 0
    %78 = vsyncpa [#allocation14], 0
    %79 = vsyncpa [#allocation6], 0
    %80 = vsyncpa [#allocation18], 0
    %81 = vsyncpa [#allocation21], 0
    %82 = vsyncpa [#allocation23], 0
    %83 = vsyncpa [#allocation27], 0
    %84 = vsyncpa [#allocation30], 0
    %85 = vsyncpa [#allocation32], 0
    %86 = vsyncpa [#allocation35], 0
    %87 = vsyncpa [#allocation38], 0
    %88 = vsyncpa [#allocation41], 0
    %89 = vsyncpa [#allocation44], 0
    %90 = vsyncpa [#allocation5], 0
    // Predicated region
    $region2: #{tpu_custom_call.1} parent=1 // pred_check
      _
    $region3: #{tpu_custom_call.1} parent=1 // pred_check_branch
      %92 = sbr.rel (0) target = $region5
    $region4: #{tpu_custom_call.1} parent=1 // pred_region
      %s94 = ssub.s32 256, 256
      %95 = vsyncadd [#allocation4], %s94
      %s96 = sshll.u32 [#allocation3], 4
      %s97 = int_to_ptr.vmem [resolvable:$true] %s96
      %102 = dma.hbm_to_vmem [thread:$0]  %s1, 256, %s97, [#allocation4], 128, 128, 8
    $region5: #{tpu_custom_call.1} parent=1 // pred_fallthru
      _
    // Predicated region
    $region6: #{tpu_custom_call.1} parent=1 // pred_check
      _
    $region7: #{tpu_custom_call.1} parent=1 // pred_check_branch
      %104 = sbr.rel (0) target = $region9
    $region8: #{tpu_custom_call.1} parent=1 // pred_region
      %s106 = ssub.s32 256, 256
      %107 = vsyncadd [#allocation8], %s106
      %s108 = sshll.u32 [#allocation7], 4
      %s109 = int_to_ptr.vmem [resolvable:$true] %s108
      %114 = dma.hbm_to_vmem [thread:$0]  %s3, 256, %s109, [#allocation8], 128, 128, 8
    $region9: #{tpu_custom_call.1} parent=1 // pred_fallthru
      _
    // Predicated region
    $region10: #{tpu_custom_call.1} parent=1 // pred_check
      _
    $region11: #{tpu_custom_call.1} parent=1 // pred_check_branch
      %116 = sbr.rel (0) target = $region13
    $region12: #{tpu_custom_call.1} parent=1 // pred_region
      %s118 = ssub.s32 256, 256
      %119 = vsyncadd [#allocation8], %s118
      %s120 = sshll.u32 [#allocation9], 4
      %s121 = int_to_ptr.vmem [resolvable:$true] %s120
      %126 = dma.hbm_to_vmem [thread:$0]  %s5, 256, %s121, [#allocation8], 128, 128, 8
    $region13: #{tpu_custom_call.1} parent=1 // pred_fallthru
      _
    // Predicated region
    $region14: #{tpu_custom_call.1} parent=1 // pred_check
      _
    $region15: #{tpu_custom_call.1} parent=1 // pred_check_branch
      %128 = sbr.rel (0) target = $region17
    $region16: #{tpu_custom_call.1} parent=1 // pred_region
      %s130 = ssub.s32 2560, 2560
      %131 = vsyncadd [#allocation11], %s130
      %s132 = sshll.u32 [#allocation10], 4
      %s133 = int_to_ptr.vmem [resolvable:$true] %s132
      %138 = dma.hbm_to_vmem [thread:$0]  %s7, 2560, %s133, [#allocation11], 640, 640, 40
    $region17: #{tpu_custom_call.1} parent=1 // pred_fallthru
      _
    // Predicated region
    $region18: #{tpu_custom_call.1} parent=1 // pred_check
      _
    $region19: #{tpu_custom_call.1} parent=1 // pred_check_branch
      %140 = sbr.rel (0) target = $region21
    $region20: #{tpu_custom_call.1} parent=1 // pred_region
      %s142 = ssub.s32 640, 640
      %143 = vsyncadd [#allocation11], %s142
      %s145 = sshll.u32 [#allocation12], 4
      %s146 = int_to_ptr.vmem [resolvable:$true] %s145
      %148 = dma.hbm_to_vmem [thread:$0]  %s9, 640, %s146, [#allocation11]
    $region21: #{tpu_custom_call.1} parent=1 // pred_fallthru
      _
    // Predicated region
    $region22: #{tpu_custom_call.1} parent=1 // pred_check
      _
    $region23: #{tpu_custom_call.1} parent=1 // pred_check_branch
      %150 = sbr.rel (0) target = $region25
    $region24: #{tpu_custom_call.1} parent=1 // pred_region
      _
    $region25: #{tpu_custom_call.1} parent=1 // pred_fallthru
      _
    // Predicated region
    $region26: #{tpu_custom_call.1} parent=1 // pred_check
      _
    $region27: #{tpu_custom_call.1} parent=1 // pred_check_branch
      %152 = sbr.rel (0) target = $region29
    $region28: #{tpu_custom_call.1} parent=1 // pred_region
      %s154 = ssub.s32 80, 80
      %155 = vsyncadd [#allocation14], %s154
      %s157 = sshll.u32 [#allocation13], 4
      %s158 = int_to_ptr.vmem [resolvable:$true] %s157
      %160 = dma.hbm_to_vmem [thread:$0]  %s13, 80, %s158, [#allocation14]
    $region29: #{tpu_custom_call.1} parent=1 // pred_fallthru
      _
    // Predicated region
    $region30: #{tpu_custom_call.1} parent=1 // pred_check
      _
    $region31: #{tpu_custom_call.1} parent=1 // pred_check_branch
      %162 = sbr.rel (0) target = $region33
    $region32: #{tpu_custom_call.1} parent=1 // pred_region
      %s164 = ssub.s32 16, 16
      %165 = vsyncadd [#allocation6], %s164
      %168 = dma.hbm_to_smem %s15, 16, [#allocation15], [#allocation6]
    $region33: #{tpu_custom_call.1} parent=1 // pred_fallthru
      _
    // Predicated region
    $region34: #{tpu_custom_call.1} parent=1 // pred_check
      _
    $region35: #{tpu_custom_call.1} parent=1 // pred_check_branch
      %170 = sbr.rel (0) target = $region37
    $region36: #{tpu_custom_call.1} parent=1 // pred_region
      %s172 = ssub.s32 51200, 51200
      %173 = vsyncadd [#allocation14], %s172
      %s174 = sshll.u32 [#allocation16], 4
      %s175 = int_to_ptr.vmem [resolvable:$true] %s174
      %180 = dma.hbm_to_vmem [thread:$0]  %s17, 51200, %s175, [#allocation14], 640, 640, 40
    $region37: #{tpu_custom_call.1} parent=1 // pred_fallthru
      _
    // Predicated region
    $region38: #{tpu_custom_call.1} parent=1 // pred_check
      _
    $region39: #{tpu_custom_call.1} parent=1 // pred_check_branch
      %182 = sbr.rel (0) target = $region41
    $region40: #{tpu_custom_call.1} parent=1 // pred_region
      %s184 = ssub.s32 640, 640
      %185 = vsyncadd [#allocation18], %s184
      %s187 = sshll.u32 [#allocation17], 4
      %s188 = int_to_ptr.vmem [resolvable:$true] %s187
      %190 = dma.hbm_to_vmem [thread:$0]  %s19, 640, %s188, [#allocation18]
    $region41: #{tpu_custom_call.1} parent=1 // pred_fallthru
      _
    // Predicated region
    $region42: #{tpu_custom_call.1} parent=1 // pred_check
      _
    $region43: #{tpu_custom_call.1} parent=1 // pred_check_branch
      %192 = sbr.rel (0) target = $region45
    $region44: #{tpu_custom_call.1} parent=1 // pred_region
      _
    $region45: #{tpu_custom_call.1} parent=1 // pred_fallthru
      _
    // Predicated region
    $region46: #{tpu_custom_call.1} parent=1 // pred_check
      _
    $region47: #{tpu_custom_call.1} parent=1 // pred_check_branch
      %194 = sbr.rel (0) target = $region49
    $region48: #{tpu_custom_call.1} parent=1 // pred_region
      %s196 = ssub.s32 80, 80
      %197 = vsyncadd [#allocation18], %s196
      %s199 = sshll.u32 [#allocation19], 4
      %s200 = int_to_ptr.vmem [resolvable:$true] %s199
      %202 = dma.hbm_to_vmem [thread:$0]  %s23, 80, %s200, [#allocation18]
    $region49: #{tpu_custom_call.1} parent=1 // pred_fallthru
      _
    // Predicated region
    $region50: #{tpu_custom_call.1} parent=1 // pred_check
      _
    $region51: #{tpu_custom_call.1} parent=1 // pred_check_branch
      %204 = sbr.rel (0) target = $region53
    $region52: #{tpu_custom_call.1} parent=1 // pred_region
      %s206 = ssub.s32 16, 16
      %207 = vsyncadd [#allocation21], %s206
      %210 = dma.hbm_to_smem %s25, 16, [#allocation20], [#allocation21]
    $region53: #{tpu_custom_call.1} parent=1 // pred_fallthru
      _
    // Predicated region
    $region54: #{tpu_custom_call.1} parent=1 // pred_check
      _
    $region55: #{tpu_custom_call.1} parent=1 // pred_check_branch
      %212 = sbr.rel (0) target = $region57
    $region56: #{tpu_custom_call.1} parent=1 // pred_region
      _
    $region57: #{tpu_custom_call.1} parent=1 // pred_fallthru
      _
    // Predicated region
    $region58: #{tpu_custom_call.1} parent=1 // pred_check
      _
    $region59: #{tpu_custom_call.1} parent=1 // pred_check_branch
      %214 = sbr.rel (0) target = $region61
    $region60: #{tpu_custom_call.1} parent=1 // pred_region
      %s216 = ssub.s32 256, 256
      %217 = vsyncadd [#allocation23], %s216
      %s219 = sshll.u32 [#allocation22], 4
      %s220 = int_to_ptr.vmem [resolvable:$true] %s219
      %222 = dma.hbm_to_vmem [thread:$0]  %s29, 256, %s220, [#allocation23]
    $region61: #{tpu_custom_call.1} parent=1 // pred_fallthru
      _
    // Predicated region
    $region62: #{tpu_custom_call.1} parent=1 // pred_check
      _
    $region63: #{tpu_custom_call.1} parent=1 // pred_check_branch
      %224 = sbr.rel (0) target = $region65
    $region64: #{tpu_custom_call.1} parent=1 // pred_region
      _
    $region65: #{tpu_custom_call.1} parent=1 // pred_fallthru
      _
    // Predicated region
    $region66: #{tpu_custom_call.1} parent=1 // pred_check
      _
    $region67: #{tpu_custom_call.1} parent=1 // pred_check_branch
      %226 = sbr.rel (0) target = $region69
    $region68: #{tpu_custom_call.1} parent=1 // pred_region
      %s228 = ssub.s32 64, 64
      %229 = vsyncadd [#allocation23], %s228
      %s231 = sshll.u32 [#allocation24], 4
      %s232 = int_to_ptr.vmem [resolvable:$true] %s231
      %234 = dma.hbm_to_vmem [thread:$0]  %s33, 64, %s232, [#allocation23]
    $region69: #{tpu_custom_call.1} parent=1 // pred_fallthru
      _
    // Predicated region
    $region70: #{tpu_custom_call.1} parent=1 // pred_check
      _
    $region71: #{tpu_custom_call.1} parent=1 // pred_check_branch
      %236 = sbr.rel (0) target = $region73
    $region72: #{tpu_custom_call.1} parent=1 // pred_region
      %s238 = ssub.s32 16, 16
      %239 = vsyncadd [#allocation21], %s238
      %242 = dma.hbm_to_smem %s35, 16, [#allocation25], [#allocation21]
    $region73: #{tpu_custom_call.1} parent=1 // pred_fallthru
      _
    // Predicated region
    $region74: #{tpu_custom_call.1} parent=1 // pred_check
      _
    $region75: #{tpu_custom_call.1} parent=1 // pred_check_branch
      %244 = sbr.rel (0) target = $region77
    $region76: #{tpu_custom_call.1} parent=1 // pred_region
      %s246 = ssub.s32 32768, 32768
      %247 = vsyncadd [#allocation27], %s246
      %s248 = sshll.u32 [#allocation26], 4
      %s249 = int_to_ptr.vmem [resolvable:$true] %s248
      %254 = dma.hbm_to_vmem [thread:$0]  %s37, 32768, %s249, [#allocation27], 512, 512, 32
    $region77: #{tpu_custom_call.1} parent=1 // pred_fallthru
      _
    // Predicated region
    $region78: #{tpu_custom_call.1} parent=1 // pred_check
      _
    $region79: #{tpu_custom_call.1} parent=1 // pred_check_branch
      %256 = sbr.rel (0) target = $region81
    $region80: #{tpu_custom_call.1} parent=1 // pred_region
      %s258 = ssub.s32 256, 256
      %259 = vsyncadd [#allocation27], %s258
      %s261 = sshll.u32 [#allocation28], 4
      %s262 = int_to_ptr.vmem [resolvable:$true] %s261
      %264 = dma.hbm_to_vmem [thread:$0]  %s39, 256, %s262, [#allocation27]
    $region81: #{tpu_custom_call.1} parent=1 // pred_fallthru
      _
    // Predicated region
    $region82: #{tpu_custom_call.1} parent=1 // pred_check
      _
    $region83: #{tpu_custom_call.1} parent=1 // pred_check_branch
      %266 = sbr.rel (0) target = $region85
    $region84: #{tpu_custom_call.1} parent=1 // pred_region
      _
    $region85: #{tpu_custom_call.1} parent=1 // pred_fallthru
      _
    // Predicated region
    $region86: #{tpu_custom_call.1} parent=1 // pred_check
      _
    $region87: #{tpu_custom_call.1} parent=1 // pred_check_branch
      %268 = sbr.rel (0) target = $region89
    $region88: #{tpu_custom_call.1} parent=1 // pred_region
      %s270 = ssub.s32 64, 64
      %271 = vsyncadd [#allocation30], %s270
      %s273 = sshll.u32 [#allocation29], 4
      %s274 = int_to_ptr.vmem [resolvable:$true] %s273
      %276 = dma.hbm_to_vmem [thread:$0]  %s43, 64, %s274, [#allocation30]
    $region89: #{tpu_custom_call.1} parent=1 // pred_fallthru
      _
    // Predicated region
    $region90: #{tpu_custom_call.1} parent=1 // pred_check
      _
    $region91: #{tpu_custom_call.1} parent=1 // pred_check_branch
      %278 = sbr.rel (0) target = $region93
    $region92: #{tpu_custom_call.1} parent=1 // pred_region
      %s280 = ssub.s32 16, 16
      %281 = vsyncadd [#allocation32], %s280
      %284 = dma.hbm_to_smem %s45, 16, [#allocation31], [#allocation32]
    $region93: #{tpu_custom_call.1} parent=1 // pred_fallthru
      _
    // Predicated region
    $region94: #{tpu_custom_call.1} parent=1 // pred_check
      _
    $region95: #{tpu_custom_call.1} parent=1 // pred_check_branch
      %286 = sbr.rel (0) target = $region97
    $region96: #{tpu_custom_call.1} parent=1 // pred_region
      %s288 = ssub.s32 8192, 8192
      %289 = vsyncadd [#allocation30], %s288
      %s290 = sshll.u32 [#allocation33], 4
      %s291 = int_to_ptr.vmem [resolvable:$true] %s290
      %296 = dma.hbm_to_vmem [thread:$0]  %s47, 8192, %s291, [#allocation30], 128, 128, 8
    $region97: #{tpu_custom_call.1} parent=1 // pred_fallthru
      _
    // Predicated region
    $region98: #{tpu_custom_call.1} parent=1 // pred_check
      _
    $region99: #{tpu_custom_call.1} parent=1 // pred_check_branch
      %298 = sbr.rel (0) target = $region101
    $region100: #{tpu_custom_call.1} parent=1 // pred_region
      %s300 = ssub.s32 16, 16
      %301 = vsyncadd [#allocation35], %s300
      %s303 = sshll.u32 [#allocation34], 4
      %s304 = int_to_ptr.vmem [resolvable:$true] %s303
      %306 = dma.hbm_to_vmem [thread:$0]  %s49, 16, %s304, [#allocation35]
    $region101: #{tpu_custom_call.1} parent=1 // pred_fallthru
      _
    // Predicated region
    $region102: #{tpu_custom_call.1} parent=1 // pred_check
      _
    $region103: #{tpu_custom_call.1} parent=1 // pred_check_branch
      %308 = sbr.rel (0) target = $region105
    $region104: #{tpu_custom_call.1} parent=1 // pred_region
      _
    $region105: #{tpu_custom_call.1} parent=1 // pred_fallthru
      _
    // Predicated region
    $region106: #{tpu_custom_call.1} parent=1 // pred_check
      _
    $region107: #{tpu_custom_call.1} parent=1 // pred_check_branch
      %310 = sbr.rel (0) target = $region109
    $region108: #{tpu_custom_call.1} parent=1 // pred_region
      %s312 = ssub.s32 16, 16
      %313 = vsyncadd [#allocation35], %s312
      %s315 = sshll.u32 [#allocation36], 4
      %s316 = int_to_ptr.vmem [resolvable:$true] %s315
      %318 = dma.hbm_to_vmem [thread:$0]  %s53, 16, %s316, [#allocation35]
    $region109: #{tpu_custom_call.1} parent=1 // pred_fallthru
      _
    // Predicated region
    $region110: #{tpu_custom_call.1} parent=1 // pred_check
      _
    $region111: #{tpu_custom_call.1} parent=1 // pred_check_branch
      %320 = sbr.rel (0) target = $region113
    $region112: #{tpu_custom_call.1} parent=1 // pred_region
      _
    $region113: #{tpu_custom_call.1} parent=1 // pred_fallthru
      _
    // Predicated region
    $region114: #{tpu_custom_call.1} parent=1 // pred_check
      _
    $region115: #{tpu_custom_call.1} parent=1 // pred_check_branch
      %322 = sbr.rel (0) target = $region117
    $region116: #{tpu_custom_call.1} parent=1 // pred_region
      %s324 = ssub.s32 80, 80
      %325 = vsyncadd [#allocation38], %s324
      %s327 = sshll.u32 [#allocation37], 4
      %s328 = int_to_ptr.vmem [resolvable:$true] %s327
      %330 = dma.hbm_to_vmem [thread:$0]  %s57, 80, %s328, [#allocation38]
    $region117: #{tpu_custom_call.1} parent=1 // pred_fallthru
      _
    // Predicated region
    $region118: #{tpu_custom_call.1} parent=1 // pred_check
      _
    $region119: #{tpu_custom_call.1} parent=1 // pred_check_branch
      %332 = sbr.rel (0) target = $region121
    $region120: #{tpu_custom_call.1} parent=1 // pred_region
      %s334 = ssub.s32 80, 80
      %335 = vsyncadd [#allocation38], %s334
      %s337 = sshll.u32 [#allocation39], 4
      %s338 = int_to_ptr.vmem [resolvable:$true] %s337
      %340 = dma.hbm_to_vmem [thread:$0]  %s59, 80, %s338, [#allocation38]
    $region121: #{tpu_custom_call.1} parent=1 // pred_fallthru
      _
    // Predicated region
    $region122: #{tpu_custom_call.1} parent=1 // pred_check
      _
    $region123: #{tpu_custom_call.1} parent=1 // pred_check_branch
      %342 = sbr.rel (0) target = $region125
    $region124: #{tpu_custom_call.1} parent=1 // pred_region
      %s344 = ssub.s32 80, 80
      %345 = vsyncadd [#allocation41], %s344
      %s347 = sshll.u32 [#allocation40], 4
      %s348 = int_to_ptr.vmem [resolvable:$true] %s347
      %350 = dma.hbm_to_vmem [thread:$0]  %s61, 80, %s348, [#allocation41]
    $region125: #{tpu_custom_call.1} parent=1 // pred_fallthru
      _
    // Predicated region
    $region126: #{tpu_custom_call.1} parent=1 // pred_check
      _
    $region127: #{tpu_custom_call.1} parent=1 // pred_check_branch
      %352 = sbr.rel (0) target = $region129
    $region128: #{tpu_custom_call.1} parent=1 // pred_region
      %s354 = ssub.s32 80, 80
      %355 = vsyncadd [#allocation41], %s354
      %s357 = sshll.u32 [#allocation42], 4
      %s358 = int_to_ptr.vmem [resolvable:$true] %s357
      %360 = dma.hbm_to_vmem [thread:$0]  %s63, 80, %s358, [#allocation41]
    $region129: #{tpu_custom_call.1} parent=1 // pred_fallthru
      _
    // Predicated region
    $region130: #{tpu_custom_call.1} parent=1 // pred_check
      _
    $region131: #{tpu_custom_call.1} parent=1 // pred_check_branch
      %362 = sbr.rel (0) target = $region133
    $region132: #{tpu_custom_call.1} parent=1 // pred_region
      %s364 = ssub.s32 64, 64
      %365 = vsyncadd [#allocation44], %s364
      %s367 = sshll.u32 [#allocation43], 4
      %s368 = int_to_ptr.vmem [resolvable:$true] %s367
      %370 = dma.hbm_to_vmem [thread:$0]  %s65, 64, %s368, [#allocation44]
    $region133: #{tpu_custom_call.1} parent=1 // pred_fallthru
      _
    // Predicated region
    $region134: #{tpu_custom_call.1} parent=1 // pred_check
      _
    $region135: #{tpu_custom_call.1} parent=1 // pred_check_branch
      %372 = sbr.rel (0) target = $region137
    $region136: #{tpu_custom_call.1} parent=1 // pred_region
      %s374 = ssub.s32 64, 64
      %375 = vsyncadd [#allocation44], %s374
      %s377 = sshll.u32 [#allocation45], 4
      %s378 = int_to_ptr.vmem [resolvable:$true] %s377
      %380 = dma.hbm_to_vmem [thread:$0]  %s67, 64, %s378, [#allocation44]
    $region137: #{tpu_custom_call.1} parent=1 // pred_fallthru
      _
    // Predicated region
    $region138: #{tpu_custom_call.1} parent=1 // pred_check
      _
    $region139: #{tpu_custom_call.1} parent=1 // pred_check_branch
      %382 = sbr.rel (0) target = $region141
    $region140: #{tpu_custom_call.1} parent=1 // pred_region
      %383 = dma.done [#allocation4], 256
    $region141: #{tpu_custom_call.1} parent=1 // pred_fallthru
      _
    // Predicated region
    $region142: #{tpu_custom_call.1} parent=1 // pred_check
      _
    $region143: #{tpu_custom_call.1} parent=1 // pred_check_branch
      %385 = sbr.rel (0) target = $region145
    $region144: #{tpu_custom_call.1} parent=1 // pred_region
      %386 = dma.done [#allocation8], 256
    $region145: #{tpu_custom_call.1} parent=1 // pred_fallthru
      _
    // Predicated region
    $region146: #{tpu_custom_call.1} parent=1 // pred_check
      _
    $region147: #{tpu_custom_call.1} parent=1 // pred_check_branch
      %388 = sbr.rel (0) target = $region149
    $region148: #{tpu_custom_call.1} parent=1 // pred_region
      %389 = dma.done [#allocation8], 256
    $region149: #{tpu_custom_call.1} parent=1 // pred_fallthru
      _
    // Predicated region
    $region150: #{tpu_custom_call.1} parent=1 // pred_check
      _
    $region151: #{tpu_custom_call.1} parent=1 // pred_check_branch
      %391 = sbr.rel (0) target = $region153
    $region152: #{tpu_custom_call.1} parent=1 // pred_region
      %392 = dma.done [#allocation11], 2560
    $region153: #{tpu_custom_call.1} parent=1 // pred_fallthru
      _
    // Predicated region
    $region154: #{tpu_custom_call.1} parent=1 // pred_check
      _
    $region155: #{tpu_custom_call.1} parent=1 // pred_check_branch
      %394 = sbr.rel (0) target = $region157
    $region156: #{tpu_custom_call.1} parent=1 // pred_region
      %395 = dma.done [#allocation11], 640
    $region157: #{tpu_custom_call.1} parent=1 // pred_fallthru
      _
    // Predicated region
    $region158: #{tpu_custom_call.1} parent=1 // pred_check
      _
    $region159: #{tpu_custom_call.1} parent=1 // pred_check_branch
      %397 = sbr.rel (0) target = $region161
    $region160: #{tpu_custom_call.1} parent=1 // pred_region
      %398 = dma.done [#allocation14], 80
    $region161: #{tpu_custom_call.1} parent=1 // pred_fallthru
      _
    // Predicated region
    $region162: #{tpu_custom_call.1} parent=1 // pred_check
      _
    $region163: #{tpu_custom_call.1} parent=1 // pred_check_branch
      %400 = sbr.rel (0) target = $region165
    $region164: #{tpu_custom_call.1} parent=1 // pred_region
      %401 = dma.done [#allocation6], 16
    $region165: #{tpu_custom_call.1} parent=1 // pred_fallthru
      _
    // Predicated region
    $region166: #{tpu_custom_call.1} parent=1 // pred_check
      _
    $region167: #{tpu_custom_call.1} parent=1 // pred_check_branch
      %403 = sbr.rel (0) target = $region169
    $region168: #{tpu_custom_call.1} parent=1 // pred_region
      %404 = dma.done [#allocation14], 51200
    $region169: #{tpu_custom_call.1} parent=1 // pred_fallthru
      _
    // Predicated region
    $region170: #{tpu_custom_call.1} parent=1 // pred_check
      _
    $region171: #{tpu_custom_call.1} parent=1 // pred_check_branch
      %406 = sbr.rel (0) target = $region173
    $region172: #{tpu_custom_call.1} parent=1 // pred_region
      %407 = dma.done [#allocation18], 640
    $region173: #{tpu_custom_call.1} parent=1 // pred_fallthru
      _
    // Predicated region
    $region174: #{tpu_custom_call.1} parent=1 // pred_check
      _
    $region175: #{tpu_custom_call.1} parent=1 // pred_check_branch
      %409 = sbr.rel (0) target = $region177
    $region176: #{tpu_custom_call.1} parent=1 // pred_region
      %410 = dma.done [#allocation18], 80
    $region177: #{tpu_custom_call.1} parent=1 // pred_fallthru
      _
    // Predicated region
    $region178: #{tpu_custom_call.1} parent=1 // pred_check
      _
    $region179: #{tpu_custom_call.1} parent=1 // pred_check_branch
      %412 = sbr.rel (0) target = $region181
    $region180: #{tpu_custom_call.1} parent=1 // pred_region
      %413 = dma.done [#allocation21], 16
    $region181: #{tpu_custom_call.1} parent=1 // pred_fallthru
      _
    // Predicated region
    $region182: #{tpu_custom_call.1} parent=1 // pred_check
      _
    $region183: #{tpu_custom_call.1} parent=1 // pred_check_branch
      %415 = sbr.rel (0) target = $region185
    $region184: #{tpu_custom_call.1} parent=1 // pred_region
      %416 = dma.done [#allocation23], 256
    $region185: #{tpu_custom_call.1} parent=1 // pred_fallthru
      _
    // Predicated region
    $region186: #{tpu_custom_call.1} parent=1 // pred_check
      _
    $region187: #{tpu_custom_call.1} parent=1 // pred_check_branch
      %418 = sbr.rel (0) target = $region189
    $region188: #{tpu_custom_call.1} parent=1 // pred_region
      %419 = dma.done [#allocation23], 64
    $region189: #{tpu_custom_call.1} parent=1 // pred_fallthru
      _
    // Predicated region
    $region190: #{tpu_custom_call.1} parent=1 // pred_check
      _
    $region191: #{tpu_custom_call.1} parent=1 // pred_check_branch
      %421 = sbr.rel (0) target = $region193
    $region192: #{tpu_custom_call.1} parent=1 // pred_region
      %422 = dma.done [#allocation21], 16
    $region193: #{tpu_custom_call.1} parent=1 // pred_fallthru
      _
    // Predicated region
    $region194: #{tpu_custom_call.1} parent=1 // pred_check
      _
    $region195: #{tpu_custom_call.1} parent=1 // pred_check_branch
      %424 = sbr.rel (0) target = $region197
    $region196: #{tpu_custom_call.1} parent=1 // pred_region
      %425 = dma.done [#allocation27], 32768
    $region197: #{tpu_custom_call.1} parent=1 // pred_fallthru
      _
    // Predicated region
    $region198: #{tpu_custom_call.1} parent=1 // pred_check
      _
    $region199: #{tpu_custom_call.1} parent=1 // pred_check_branch
      %427 = sbr.rel (0) target = $region201
    $region200: #{tpu_custom_call.1} parent=1 // pred_region
      %428 = dma.done [#allocation27], 256
    $region201: #{tpu_custom_call.1} parent=1 // pred_fallthru
      _
    // Predicated region
    $region202: #{tpu_custom_call.1} parent=1 // pred_check
      _
    $region203: #{tpu_custom_call.1} parent=1 // pred_check_branch
      %430 = sbr.rel (0) target = $region205
    $region204: #{tpu_custom_call.1} parent=1 // pred_region
      %431 = dma.done [#allocation30], 64
    $region205: #{tpu_custom_call.1} parent=1 // pred_fallthru
      _
    // Predicated region
    $region206: #{tpu_custom_call.1} parent=1 // pred_check
      _
    $region207: #{tpu_custom_call.1} parent=1 // pred_check_branch
      %433 = sbr.rel (0) target = $region209
    $region208: #{tpu_custom_call.1} parent=1 // pred_region
      %434 = dma.done [#allocation32], 16
    $region209: #{tpu_custom_call.1} parent=1 // pred_fallthru
      _
    // Predicated region
    $region210: #{tpu_custom_call.1} parent=1 // pred_check
      _
    $region211: #{tpu_custom_call.1} parent=1 // pred_check_branch
      %436 = sbr.rel (0) target = $region213
    $region212: #{tpu_custom_call.1} parent=1 // pred_region
      %437 = dma.done [#allocation30], 8192
    $region213: #{tpu_custom_call.1} parent=1 // pred_fallthru
      _
    // Predicated region
    $region214: #{tpu_custom_call.1} parent=1 // pred_check
      _
    $region215: #{tpu_custom_call.1} parent=1 // pred_check_branch
      %439 = sbr.rel (0) target = $region217
    $region216: #{tpu_custom_call.1} parent=1 // pred_region
      %440 = dma.done [#allocation35], 16
    $region217: #{tpu_custom_call.1} parent=1 // pred_fallthru
      _
    // Predicated region
    $region218: #{tpu_custom_call.1} parent=1 // pred_check
      _
    $region219: #{tpu_custom_call.1} parent=1 // pred_check_branch
      %442 = sbr.rel (0) target = $region221
    $region220: #{tpu_custom_call.1} parent=1 // pred_region
      %443 = dma.done [#allocation35], 16
    $region221: #{tpu_custom_call.1} parent=1 // pred_fallthru
      _
    // Predicated region
    $region222: #{tpu_custom_call.1} parent=1 // pred_check
      _
    $region223: #{tpu_custom_call.1} parent=1 // pred_check_branch
      %445 = sbr.rel (0) target = $region225
    $region224: #{tpu_custom_call.1} parent=1 // pred_region
      %446 = dma.done [#allocation38], 80
    $region225: #{tpu_custom_call.1} parent=1 // pred_fallthru
      _
    // Predicated region
    $region226: #{tpu_custom_call.1} parent=1 // pred_check
      _
    $region227: #{tpu_custom_call.1} parent=1 // pred_check_branch
      %448 = sbr.rel (0) target = $region229
    $region228: #{tpu_custom_call.1} parent=1 // pred_region
      %449 = dma.done [#allocation38], 80
    $region229: #{tpu_custom_call.1} parent=1 // pred_fallthru
      _
    // Predicated region
    $region230: #{tpu_custom_call.1} parent=1 // pred_check
      _
    $region231: #{tpu_custom_call.1} parent=1 // pred_check_branch
      %451 = sbr.rel (0) target = $region233
    $region232: #{tpu_custom_call.1} parent=1 // pred_region
      %452 = dma.done [#allocation41], 80
    $region233: #{tpu_custom_call.1} parent=1 // pred_fallthru
      _
    // Predicated region
    $region234: #{tpu_custom_call.1} parent=1 // pred_check
      _
    $region235: #{tpu_custom_call.1} parent=1 // pred_check_branch
      %454 = sbr.rel (0) target = $region237
    $region236: #{tpu_custom_call.1} parent=1 // pred_region
      %455 = dma.done [#allocation41], 80
    $region237: #{tpu_custom_call.1} parent=1 // pred_fallthru
      _
    // Predicated region
    $region238: #{tpu_custom_call.1} parent=1 // pred_check
      _
    $region239: #{tpu_custom_call.1} parent=1 // pred_check_branch
      %457 = sbr.rel (0) target = $region241
    $region240: #{tpu_custom_call.1} parent=1 // pred_region
      %458 = dma.done [#allocation44], 64
    $region241: #{tpu_custom_call.1} parent=1 // pred_fallthru
      _
    // Predicated region
    $region242: #{tpu_custom_call.1} parent=1 // pred_check
      _
    $region243: #{tpu_custom_call.1} parent=1 // pred_check_branch
      %460 = sbr.rel (0) target = $region245
    $region244: #{tpu_custom_call.1} parent=1 // pred_region
      %461 = dma.done [#allocation44], 64
    $region245: #{tpu_custom_call.1} parent=1 // pred_fallthru
      _
    %462 = sfence
    %v463 = vld [vmem:[#allocation7] sm:$0xff]
    %v464 = vld [vmem:[#allocation7 + $0x8] sm:$0xff]
    %v465 = vld [vmem:[#allocation9] sm:$0xff]
    %v466 = vld [vmem:[#allocation9 + $0x8] sm:$0xff]
    %vm467 = vcmp.gt.f32.partialorder %v463, 0.0
    %vm468 = vcmp.gt.f32.partialorder %v464, 0.0
    %v469 = vsel %vm467, 0.0, -1e+30
    %v470 = vsel %vm468, 0.0, -1e+30
    %v471 = vld [vmem:[#allocation3] sm:$0xff]
    %v472 = vld [vmem:[#allocation3 + $0x8] sm:$0xff]
    %v473 = vld [vmem:[#allocation10] sm:$0xff]
    %v474 = vld [vmem:[#allocation10 + $0x8] sm:$0xff]
    %v475 = vld [vmem:[#allocation10 + $0x10] sm:$0xff]
    %v476 = vld [vmem:[#allocation10 + $0x18] sm:$0xff]
    %v477 = vld [vmem:[#allocation10 + $0x20] sm:$0xff]
    %v478 = vld [vmem:[#allocation10 + $0x28] sm:$0xff]
    %v479 = vld [vmem:[#allocation10 + $0x30] sm:$0xff]
    %v480 = vld [vmem:[#allocation10 + $0x38] sm:$0xff]
    %v481 = vld [vmem:[#allocation10 + $0x40] sm:$0xff]
    %v482 = vld [vmem:[#allocation10 + $0x48] sm:$0xff]
    %v483 = vld [vmem:[#allocation10 + $0x50] sm:$0xff]
    %v484 = vld [vmem:[#allocation10 + $0x58] sm:$0xff]
    %v485 = vld [vmem:[#allocation10 + $0x60] sm:$0xff]
    %v486 = vld [vmem:[#allocation10 + $0x68] sm:$0xff]
    %v487 = vld [vmem:[#allocation10 + $0x70] sm:$0xff]
    %v488 = vld [vmem:[#allocation10 + $0x78] sm:$0xff]
    %v489 = vld [vmem:[#allocation10 + $0x80] sm:$0xff]
    %v490 = vld [vmem:[#allocation10 + $0x88] sm:$0xff]
    %v491 = vld [vmem:[#allocation10 + $0x90] sm:$0xff]
    %v492 = vld [vmem:[#allocation10 + $0x98] sm:$0xff]
    %vm493 = vcmask 261120
    %v495 = vsel %vm493, %v471, 0
    %v498 = vsel %vm493, %v472, 0
    %500 = vmatprep.subr.mxu0 0.0
    %501 = vmatpush1.msra.mxu0 0.0
    %502 = vmatprep.subr.mxu0 0.0
    %503 = vmatpush1.msra.mxu0 0.0
    %504 = vmatprep.subr.mxu0 0.0
    %505 = vmatpush1.msra.mxu0 0.0
    %506 = vmatprep.subr.mxu0 0.0
    %507 = vmatpush1.msra.mxu0 0.0
    %508 = vmatprep.subr.mxu0 0.0
    %509 = vmatpush1.msra.mxu0 0.0
    %510 = vmatprep.subr.mxu0 0.0
    %511 = vmatpush1.msra.mxu0 0.0
    %512 = vmatprep.subr.mxu0 0.0
    %513 = vmatpush1.msra.mxu0 0.0
    %514 = vmatprep.subr.mxu0 0.0
    %515 = vmatpush1.msra.mxu0 0.0
    %516 = vmatprep.subr.mxu0 0.0
    %517 = vmatpush1.msra.mxu0 0.0
    %518 = vmatprep.subr.mxu0 0.0
    %519 = vmatpush1.msra.mxu0 0.0
    %520 = vmatprep.subr.mxu0 0.0
    %521 = vmatpush1.msra.mxu0 0.0
    %522 = vmatprep.subr.mxu0 0.0
    %523 = vmatpush1.msra.mxu0 0.0
    %524 = vmatprep.subr.mxu0 %v489
    %525 = vmatpush1.msra.mxu0 %v488
    %526 = vmatprep.subr.mxu0 %v484
    %527 = vmatpush1.msra.mxu0 %v483
    %528 = vmatprep.subr.mxu0 %v479
    %529 = vmatpush1.msra.mxu0 %v478
    %530 = vmatprep.subr.mxu0 %v474
    %531 = vmatpush1.msra.mxu0 %v473
    %532 = vmatprep.subr.mxu0 0.0
    %533 = vmatpush2.msra.mxu0 0.0
    %534 = vmatprep.subr.mxu0 0.0
    %535 = vmatpush2.msra.mxu0 0.0
    %536 = vmatprep.subr.mxu0 0.0
    %537 = vmatpush2.msra.mxu0 0.0
    %538 = vmatprep.subr.mxu0 0.0
    %539 = vmatpush2.msra.mxu0 0.0
    %540 = vmatprep.subr.mxu0 0.0
    %541 = vmatpush2.msra.mxu0 0.0
    %542 = vmatprep.subr.mxu0 0.0
    %543 = vmatpush2.msra.mxu0 0.0
    %544 = vmatprep.subr.mxu0 0.0
    %545 = vmatpush2.msra.mxu0 0.0
    %546 = vmatprep.subr.mxu0 0.0
    %547 = vmatpush2.msra.mxu0 0.0
    %548 = vmatprep.subr.mxu0 0.0
    %549 = vmatpush2.msra.mxu0 0.0
    %550 = vmatprep.subr.mxu0 0.0
    %551 = vmatpush2.msra.mxu0 0.0
    %552 = vmatprep.subr.mxu0 0.0
    %553 = vmatpush2.msra.mxu0 0.0
    %554 = vmatprep.subr.mxu0 0.0
    %555 = vmatpush2.msra.mxu0 0.0
    %556 = vmatprep.subr.mxu0 0.0
    %557 = vmatpush2.msra.mxu0 0.0
    %558 = vmatprep.subr.mxu0 0.0
    %559 = vmatpush2.msra.mxu0 0.0
    %560 = vmatprep.subr.mxu0 0.0
    %561 = vmatpush2.msra.mxu0 0.0
    %562 = vmatprep.subr.mxu0 0.0
    %563 = vmatpush2.msra.mxu0 0.0
    %564 = vmatprep.mubr.f32.mxu0 0.0
    %565 = vmatmul.mubr.f32.gmra.mxu0 %v495
    %v566 = vpop.f32.mrf.mxu0
    %v567 = vadd.f32 0.0, %v566
    %v568 = vpop.f32.mrf.mxu0
    %v569 = vadd.f32 0.0, %v568
    %570 = vmatprep.mubr.f32.mxu0 0.0
    %571 = vmatmul.mubr.f32.gmra.mxu0 %v498
    %v572 = vpop.f32.mrf.mxu0
    %v573 = vadd.f32 0.0, %v572
    %v574 = vpop.f32.mrf.mxu0
    %v575 = vadd.f32 0.0, %v574
    %576 = vdwg.mxu0
    %577 = vmatprep.subr.mxu0 0.0
    %578 = vmatpush1.msra.mxu0 0.0
    %579 = vmatprep.subr.mxu0 0.0
    %580 = vmatpush1.msra.mxu0 0.0
    %581 = vmatprep.subr.mxu0 0.0
    %582 = vmatpush1.msra.mxu0 0.0
    %583 = vmatprep.subr.mxu0 0.0
    %584 = vmatpush1.msra.mxu0 0.0
    %585 = vmatprep.subr.mxu0 0.0
    %586 = vmatpush1.msra.mxu0 0.0
    %587 = vmatprep.subr.mxu0 0.0
    %588 = vmatpush1.msra.mxu0 0.0
    %589 = vmatprep.subr.mxu0 0.0
    %590 = vmatpush1.msra.mxu0 0.0
    %591 = vmatprep.subr.mxu0 0.0
    %592 = vmatpush1.msra.mxu0 0.0
    %593 = vmatprep.subr.mxu0 0.0
    %594 = vmatpush1.msra.mxu0 0.0
    %595 = vmatprep.subr.mxu0 0.0
    %596 = vmatpush1.msra.mxu0 0.0
    %597 = vmatprep.subr.mxu0 0.0
    %598 = vmatpush1.msra.mxu0 0.0
    %599 = vmatprep.subr.mxu0 0.0
    %600 = vmatpush1.msra.mxu0 0.0
    %601 = vmatprep.subr.mxu0 %v491
    %602 = vmatpush1.msra.mxu0 %v490
    %603 = vmatprep.subr.mxu0 %v486
    %604 = vmatpush1.msra.mxu0 %v485
    %605 = vmatprep.subr.mxu0 %v481
    %606 = vmatpush1.msra.mxu0 %v480
    %607 = vmatprep.subr.mxu0 %v476
    %608 = vmatpush1.msra.mxu0 %v475
    %609 = vmatprep.subr.mxu0 0.0
    %610 = vmatpush2.msra.mxu0 0.0
    %611 = vmatprep.subr.mxu0 0.0
    %612 = vmatpush2.msra.mxu0 0.0
    %613 = vmatprep.subr.mxu0 0.0
    %614 = vmatpush2.msra.mxu0 0.0
    %615 = vmatprep.subr.mxu0 0.0
    %616 = vmatpush2.msra.mxu0 0.0
    %617 = vmatprep.subr.mxu0 0.0
    %618 = vmatpush2.msra.mxu0 0.0
    %619 = vmatprep.subr.mxu0 0.0
    %620 = vmatpush2.msra.mxu0 0.0
    %621 = vmatprep.subr.mxu0 0.0
    %622 = vmatpush2.msra.mxu0 0.0
    %623 = vmatprep.subr.mxu0 0.0
    %624 = vmatpush2.msra.mxu0 0.0
    %625 = vmatprep.subr.mxu0 0.0
    %626 = vmatpush2.msra.mxu0 0.0
    %627 = vmatprep.subr.mxu0 0.0
    %628 = vmatpush2.msra.mxu0 0.0
    %629 = vmatprep.subr.mxu0 0.0
    %630 = vmatpush2.msra.mxu0 0.0
    %631 = vmatprep.subr.mxu0 0.0
    %632 = vmatpush2.msra.mxu0 0.0
    %633 = vmatprep.subr.mxu0 0.0
    %634 = vmatpush2.msra.mxu0 0.0
    %635 = vmatprep.subr.mxu0 0.0
    %636 = vmatpush2.msra.mxu0 0.0
    %637 = vmatprep.subr.mxu0 0.0
    %638 = vmatpush2.msra.mxu0 0.0
    %639 = vmatprep.subr.mxu0 0.0
    %640 = vmatpush2.msra.mxu0 0.0
    %641 = vmatprep.mubr.f32.mxu0 0.0
    %642 = vmatmul.mubr.f32.gmra.mxu0 %v495
    %v643 = vpop.f32.mrf.mxu0
    %v644 = vadd.f32 0.0, %v643
    %v645 = vpop.f32.mrf.mxu0
    %v646 = vadd.f32 0.0, %v645
    %647 = vmatprep.mubr.f32.mxu0 0.0
    %648 = vmatmul.mubr.f32.gmra.mxu0 %v498
    %v649 = vpop.f32.mrf.mxu0
    %v650 = vadd.f32 0.0, %v649
    %v651 = vpop.f32.mrf.mxu0
    %v652 = vadd.f32 0.0, %v651
    %653 = vdwg.mxu0
    %654 = vmatprep.subr.mxu0 0.0
    %655 = vmatpush1.msra.mxu0 0.0
    %656 = vmatprep.subr.mxu0 0.0
    %657 = vmatpush1.msra.mxu0 0.0
    %658 = vmatprep.subr.mxu0 0.0
    %659 = vmatpush1.msra.mxu0 0.0
    %660 = vmatprep.subr.mxu0 0.0
    %661 = vmatpush1.msra.mxu0 0.0
    %662 = vmatprep.subr.mxu0 0.0
    %663 = vmatpush1.msra.mxu0 0.0
    %664 = vmatprep.subr.mxu0 0.0
    %665 = vmatpush1.msra.mxu0 0.0
    %666 = vmatprep.subr.mxu0 0.0
    %667 = vmatpush1.msra.mxu0 0.0
    %668 = vmatprep.subr.mxu0 0.0
    %669 = vmatpush1.msra.mxu0 0.0
    %670 = vmatprep.subr.mxu0 0.0
    %671 = vmatpush1.msra.mxu0 0.0
    %672 = vmatprep.subr.mxu0 0.0
    %673 = vmatpush1.msra.mxu0 0.0
    %674 = vmatprep.subr.mxu0 0.0
    %675 = vmatpush1.msra.mxu0 0.0
    %676 = vmatprep.subr.mxu0 0.0
    %677 = vmatpush1.msra.mxu0 0.0
    %678 = vmatprep.subr.mxu0 0.0
    %679 = vmatpush1.msra.mxu0 %v492
    %680 = vmatprep.subr.mxu0 0.0
    %681 = vmatpush1.msra.mxu0 %v487
    %682 = vmatprep.subr.mxu0 0.0
    %683 = vmatpush1.msra.mxu0 %v482
    %684 = vmatprep.subr.mxu0 0.0
    %685 = vmatpush1.msra.mxu0 %v477
    %686 = vmatprep.subr.mxu0 0.0
    %687 = vmatpush2.msra.mxu0 0.0
    %688 = vmatprep.subr.mxu0 0.0
    %689 = vmatpush2.msra.mxu0 0.0
    %690 = vmatprep.subr.mxu0 0.0
    %691 = vmatpush2.msra.mxu0 0.0
    %692 = vmatprep.subr.mxu0 0.0
    %693 = vmatpush2.msra.mxu0 0.0
    %694 = vmatprep.subr.mxu0 0.0
    %695 = vmatpush2.msra.mxu0 0.0
    %696 = vmatprep.subr.mxu0 0.0
    %697 = vmatpush2.msra.mxu0 0.0
    %698 = vmatprep.subr.mxu0 0.0
    %699 = vmatpush2.msra.mxu0 0.0
    %700 = vmatprep.subr.mxu0 0.0
    %701 = vmatpush2.msra.mxu0 0.0
    %702 = vmatprep.subr.mxu0 0.0
    %703 = vmatpush2.msra.mxu0 0.0
    %704 = vmatprep.subr.mxu0 0.0
    %705 = vmatpush2.msra.mxu0 0.0
    %706 = vmatprep.subr.mxu0 0.0
    %707 = vmatpush2.msra.mxu0 0.0
    %708 = vmatprep.subr.mxu0 0.0
    %709 = vmatpush2.msra.mxu0 0.0
    %710 = vmatprep.subr.mxu0 0.0
    %711 = vmatpush2.msra.mxu0 0.0
    %712 = vmatprep.subr.mxu0 0.0
    %713 = vmatpush2.msra.mxu0 0.0
    %714 = vmatprep.subr.mxu0 0.0
    %715 = vmatpush2.msra.mxu0 0.0
    %716 = vmatprep.subr.mxu0 0.0
    %717 = vmatpush2.msra.mxu0 0.0
    %718 = vmatprep.mubr.f32.mxu0 0.0
    %719 = vmatmul.mubr.f32.gmra.mxu0 %v495
    %v720 = vpop.f32.mrf.mxu0
    %v721 = vadd.f32 0.0, %v720
    %v722 = vpop.f32.mrf.mxu0
    %723 = vmatprep.mubr.f32.mxu0 0.0
    %724 = vmatmul.mubr.f32.gmra.mxu0 %v498
    %v725 = vpop.f32.mrf.mxu0
    %v726 = vadd.f32 0.0, %v725
    %v727 = vpop.f32.mrf.mxu0
    %728 = vdwg.mxu0
    %v729 = vld [vmem:[%s11] sm:$0xff]
    %v730 = vld [vmem:[%s11 + $0x8] sm:$0xff]
    %v731 = vld [vmem:[%s11 + $0x10] sm:$0xff]
    %v732 = vld [vmem:[%s11 + $0x18] sm:$0xff]
    %v733 = vld [vmem:[%s11 + $0x20] sm:$0xff]
    %v734 = vld [vmem:[%s11 + $0x28] sm:$0xff]
    %v735 = vld [vmem:[%s11 + $0x30] sm:$0xff]
    %v736 = vld [vmem:[%s11 + $0x38] sm:$0xff]
    %v737 = vld [vmem:[%s11 + $0x40] sm:$0xff]
    %v738 = vld [vmem:[%s11 + $0x48] sm:$0xff]
    %v739 = vld [vmem:[%s11 + $0x50] sm:$0xff]
    %v740 = vld [vmem:[%s11 + $0x58] sm:$0xff]
    %v741 = vld [vmem:[%s11 + $0x60] sm:$0xff]
    %v742 = vld [vmem:[%s11 + $0x68] sm:$0xff]
    %v743 = vld [vmem:[%s11 + $0x70] sm:$0xff]
    %v744 = vld [vmem:[%s11 + $0x78] sm:$0xff]
    %v745 = vld [vmem:[%s11 + $0x80] sm:$0xff]
    %v746 = vld [vmem:[%s11 + $0x88] sm:$0xff]
    %v747 = vld [vmem:[%s11 + $0x90] sm:$0xff]
    %v748 = vld [vmem:[%s11 + $0x98] sm:$0xff]
    %v749 = vld [vmem:[%s11 + $0xa0] sm:$0xff]
    %v750 = vld [vmem:[%s11 + $0xa8] sm:$0xff]
    %v751 = vld [vmem:[%s11 + $0xb0] sm:$0xff]
    %v752 = vld [vmem:[%s11 + $0xb8] sm:$0xff]
    %v753 = vld [vmem:[%s11 + $0xc0] sm:$0xff]
    %v754 = vld [vmem:[%s11 + $0xc8] sm:$0xff]
    %v755 = vld [vmem:[%s11 + $0xd0] sm:$0xff]
    %v756 = vld [vmem:[%s11 + $0xd8] sm:$0xff]
    %v757 = vld [vmem:[%s11 + $0xe0] sm:$0xff]
    %v758 = vld [vmem:[%s11 + $0xe8] sm:$0xff]
    %v759 = vld [vmem:[%s11 + $0xf0] sm:$0xff]
    %v760 = vld [vmem:[%s11 + $0xf8] sm:$0xff]
    %v761 = vld [vmem:[%s11 + $0x100] sm:$0xff]
    %v762 = vld [vmem:[%s11 + $0x108] sm:$0xff]
    %v763 = vld [vmem:[%s11 + $0x110] sm:$0xff]
    %v764 = vld [vmem:[%s11 + $0x118] sm:$0xff]
    %v765 = vld [vmem:[%s11 + $0x120] sm:$0xff]
    %v766 = vld [vmem:[%s11 + $0x128] sm:$0xff]
    %v767 = vld [vmem:[%s11 + $0x130] sm:$0xff]
    %v768 = vld [vmem:[%s11 + $0x138] sm:$0xff]
    %v769 = vld [vmem:[%s11 + $0x140] sm:$0xff]
    %v770 = vld [vmem:[%s11 + $0x148] sm:$0xff]
    %v771 = vld [vmem:[%s11 + $0x150] sm:$0xff]
    %v772 = vld [vmem:[%s11 + $0x158] sm:$0xff]
    %v773 = vld [vmem:[%s11 + $0x160] sm:$0xff]
    %v774 = vld [vmem:[%s11 + $0x168] sm:$0xff]
    %v775 = vld [vmem:[%s11 + $0x170] sm:$0xff]
    %v776 = vld [vmem:[%s11 + $0x178] sm:$0xff]
    %v777 = vld [vmem:[%s11 + $0x180] sm:$0xff]
    %v778 = vld [vmem:[%s11 + $0x188] sm:$0xff]
    %v779 = vld [vmem:[%s11 + $0x190] sm:$0xff]
    %v780 = vld [vmem:[%s11 + $0x198] sm:$0xff]
    %v781 = vld [vmem:[%s11 + $0x1a0] sm:$0xff]
    %v782 = vld [vmem:[%s11 + $0x1a8] sm:$0xff]
    %v783 = vld [vmem:[%s11 + $0x1b0] sm:$0xff]
    %v784 = vld [vmem:[%s11 + $0x1b8] sm:$0xff]
    %v785 = vld [vmem:[%s11 + $0x1c0] sm:$0xff]
    %v786 = vld [vmem:[%s11 + $0x1c8] sm:$0xff]
    %v787 = vld [vmem:[%s11 + $0x1d0] sm:$0xff]
    %v788 = vld [vmem:[%s11 + $0x1d8] sm:$0xff]
    %v789 = vld [vmem:[%s11 + $0x1e0] sm:$0xff]
    %v790 = vld [vmem:[%s11 + $0x1e8] sm:$0xff]
    %v791 = vld [vmem:[%s11 + $0x1f0] sm:$0xff]
    %v792 = vld [vmem:[%s11 + $0x1f8] sm:$0xff]
    %v793 = vld [vmem:[%s11 + $0x200] sm:$0xff]
    %v794 = vld [vmem:[%s11 + $0x208] sm:$0xff]
    %v795 = vld [vmem:[%s11 + $0x210] sm:$0xff]
    %v796 = vld [vmem:[%s11 + $0x218] sm:$0xff]
    %v797 = vld [vmem:[%s11 + $0x220] sm:$0xff]
    %v798 = vld [vmem:[%s11 + $0x228] sm:$0xff]
    %v799 = vld [vmem:[%s11 + $0x230] sm:$0xff]
    %v800 = vld [vmem:[%s11 + $0x238] sm:$0xff]
    %v801 = vld [vmem:[%s11 + $0x240] sm:$0xff]
    %v802 = vld [vmem:[%s11 + $0x248] sm:$0xff]
    %v803 = vld [vmem:[%s11 + $0x250] sm:$0xff]
    %v804 = vld [vmem:[%s11 + $0x258] sm:$0xff]
    %v805 = vld [vmem:[%s11 + $0x260] sm:$0xff]
    %v806 = vld [vmem:[%s11 + $0x268] sm:$0xff]
    %v807 = vld [vmem:[%s11 + $0x270] sm:$0xff]
    %v808 = vld [vmem:[%s11 + $0x278] sm:$0xff]
    %809 = vmatprep.subr.mxu0 0.0
    %810 = vmatpush1.msra.mxu0 %v744
    %811 = vmatprep.subr.mxu0 0.0
    %812 = vmatpush1.msra.mxu0 %v743
    %813 = vmatprep.subr.mxu0 0.0
    %814 = vmatpush1.msra.mxu0 %v742
    %815 = vmatprep.subr.mxu0 0.0
    %816 = vmatpush1.msra.mxu0 %v741
    %817 = vmatprep.subr.mxu0 0.0
    %818 = vmatpush1.msra.mxu0 %v740
    %819 = vmatprep.subr.mxu0 0.0
    %820 = vmatpush1.msra.mxu0 %v739
    %821 = vmatprep.subr.mxu0 0.0
    %822 = vmatpush1.msra.mxu0 %v738
    %823 = vmatprep.subr.mxu0 0.0
    %824 = vmatpush1.msra.mxu0 %v737
    %825 = vmatprep.subr.mxu0 0.0
    %826 = vmatpush1.msra.mxu0 %v736
    %827 = vmatprep.subr.mxu0 0.0
    %828 = vmatpush1.msra.mxu0 %v735
    %829 = vmatprep.subr.mxu0 0.0
    %830 = vmatpush1.msra.mxu0 %v734
    %831 = vmatprep.subr.mxu0 0.0
    %832 = vmatpush1.msra.mxu0 %v733
    %833 = vmatprep.subr.mxu0 0.0
    %834 = vmatpush1.msra.mxu0 %v732
    %835 = vmatprep.subr.mxu0 0.0
    %836 = vmatpush1.msra.mxu0 %v731
    %837 = vmatprep.subr.mxu0 0.0
    %838 = vmatpush1.msra.mxu0 %v730
    %839 = vmatprep.subr.mxu0 0.0
    %840 = vmatpush1.msra.mxu0 %v729
    %841 = vmatprep.subr.mxu0 0.0
    %842 = vmatpush2.msra.mxu0 %v760
    %843 = vmatprep.subr.mxu0 0.0
    %844 = vmatpush2.msra.mxu0 %v759
    %845 = vmatprep.subr.mxu0 0.0
    %846 = vmatpush2.msra.mxu0 %v758
    %847 = vmatprep.subr.mxu0 0.0
    %848 = vmatpush2.msra.mxu0 %v757
    %849 = vmatprep.subr.mxu0 0.0
    %850 = vmatpush2.msra.mxu0 %v756
    %851 = vmatprep.subr.mxu0 0.0
    %852 = vmatpush2.msra.mxu0 %v755
    %853 = vmatprep.subr.mxu0 0.0
    %854 = vmatpush2.msra.mxu0 %v754
    %855 = vmatprep.subr.mxu0 0.0
    %856 = vmatpush2.msra.mxu0 %v753
    %857 = vmatprep.subr.mxu0 0.0
    %858 = vmatpush2.msra.mxu0 %v752
    %859 = vmatprep.subr.mxu0 0.0
    %860 = vmatpush2.msra.mxu0 %v751
    %861 = vmatprep.subr.mxu0 0.0
    %862 = vmatpush2.msra.mxu0 %v750
    %863 = vmatprep.subr.mxu0 0.0
    %864 = vmatpush2.msra.mxu0 %v749
    %865 = vmatprep.subr.mxu0 0.0
    %866 = vmatpush2.msra.mxu0 %v748
    %867 = vmatprep.subr.mxu0 0.0
    %868 = vmatpush2.msra.mxu0 %v747
    %869 = vmatprep.subr.mxu0 0.0
    %870 = vmatpush2.msra.mxu0 %v746
    %871 = vmatprep.subr.mxu0 0.0
    %872 = vmatpush2.msra.mxu0 %v745
    %873 = vmatprep.mubr.f32.mxu0 %v569
    %874 = vmatmul.mubr.f32.gmra.mxu0 %v567
    %v875 = vpop.f32.mrf.mxu0
    %v876 = vadd.f32 0.0, %v875
    %v877 = vpop.f32.mrf.mxu0
    %878 = vmatprep.mubr.f32.mxu0 %v575
    %879 = vmatmul.mubr.f32.gmra.mxu0 %v573
    %v880 = vpop.f32.mrf.mxu0
    %v881 = vadd.f32 0.0, %v880
    %v882 = vpop.f32.mrf.mxu0
    %883 = vdwg.mxu0
    %884 = vmatprep.subr.mxu0 0.0
    %885 = vmatpush1.msra.mxu0 %v776
    %886 = vmatprep.subr.mxu0 0.0
    %887 = vmatpush1.msra.mxu0 %v775
    %888 = vmatprep.subr.mxu0 0.0
    %889 = vmatpush1.msra.mxu0 %v774
    %890 = vmatprep.subr.mxu0 0.0
    %891 = vmatpush1.msra.mxu0 %v773
    %892 = vmatprep.subr.mxu0 0.0
    %893 = vmatpush1.msra.mxu0 %v772
    %894 = vmatprep.subr.mxu0 0.0
    %895 = vmatpush1.msra.mxu0 %v771
    %896 = vmatprep.subr.mxu0 0.0
    %897 = vmatpush1.msra.mxu0 %v770
    %898 = vmatprep.subr.mxu0 0.0
    %899 = vmatpush1.msra.mxu0 %v769
    %900 = vmatprep.subr.mxu0 0.0
    %901 = vmatpush1.msra.mxu0 %v768
    %902 = vmatprep.subr.mxu0 0.0
    %903 = vmatpush1.msra.mxu0 %v767
    %904 = vmatprep.subr.mxu0 0.0
    %905 = vmatpush1.msra.mxu0 %v766
    %906 = vmatprep.subr.mxu0 0.0
    %907 = vmatpush1.msra.mxu0 %v765
    %908 = vmatprep.subr.mxu0 0.0
    %909 = vmatpush1.msra.mxu0 %v764
    %910 = vmatprep.subr.mxu0 0.0
    %911 = vmatpush1.msra.mxu0 %v763
    %912 = vmatprep.subr.mxu0 0.0
    %913 = vmatpush1.msra.mxu0 %v762
    %914 = vmatprep.subr.mxu0 0.0
    %915 = vmatpush1.msra.mxu0 %v761
    %916 = vmatprep.subr.mxu0 0.0
    %917 = vmatpush2.msra.mxu0 %v792
    %918 = vmatprep.subr.mxu0 0.0
    %919 = vmatpush2.msra.mxu0 %v791
    %920 = vmatprep.subr.mxu0 0.0
    %921 = vmatpush2.msra.mxu0 %v790
    %922 = vmatprep.subr.mxu0 0.0
    %923 = vmatpush2.msra.mxu0 %v789
    %924 = vmatprep.subr.mxu0 0.0
    %925 = vmatpush2.msra.mxu0 %v788
    %926 = vmatprep.subr.mxu0 0.0
    %927 = vmatpush2.msra.mxu0 %v787
    %928 = vmatprep.subr.mxu0 0.0
    %929 = vmatpush2.msra.mxu0 %v786
    %930 = vmatprep.subr.mxu0 0.0
    %931 = vmatpush2.msra.mxu0 %v785
    %932 = vmatprep.subr.mxu0 0.0
    %933 = vmatpush2.msra.mxu0 %v784
    %934 = vmatprep.subr.mxu0 0.0
    %935 = vmatpush2.msra.mxu0 %v783
    %936 = vmatprep.subr.mxu0 0.0
    %937 = vmatpush2.msra.mxu0 %v782
    %938 = vmatprep.subr.mxu0 0.0
    %939 = vmatpush2.msra.mxu0 %v781
    %940 = vmatprep.subr.mxu0 0.0
    %941 = vmatpush2.msra.mxu0 %v780
    %942 = vmatprep.subr.mxu0 0.0
    %943 = vmatpush2.msra.mxu0 %v779
    %944 = vmatprep.subr.mxu0 0.0
    %945 = vmatpush2.msra.mxu0 %v778
    %946 = vmatprep.subr.mxu0 0.0
    %947 = vmatpush2.msra.mxu0 %v777
    %948 = vmatprep.mubr.f32.mxu0 %v646
    %949 = vmatmul.mubr.f32.gmra.mxu0 %v644
    %v950 = vpop.f32.mrf.mxu0
    %v951 = vadd.f32 %v876, %v950
    %v952 = vpop.f32.mrf.mxu0
    %953 = vmatprep.mubr.f32.mxu0 %v652
    %954 = vmatmul.mubr.f32.gmra.mxu0 %v650
    %v955 = vpop.f32.mrf.mxu0
    %v956 = vadd.f32 %v881, %v955
    %v957 = vpop.f32.mrf.mxu0
    %958 = vdwg.mxu0
    %959 = vmatprep.subr.mxu0 0.0
    %960 = vmatpush1.msra.mxu0 %v808
    %961 = vmatprep.subr.mxu0 0.0
    %962 = vmatpush1.msra.mxu0 %v807
    %963 = vmatprep.subr.mxu0 0.0
    %964 = vmatpush1.msra.mxu0 %v806
    %965 = vmatprep.subr.mxu0 0.0
    %966 = vmatpush1.msra.mxu0 %v805
    %967 = vmatprep.subr.mxu0 0.0
    %968 = vmatpush1.msra.mxu0 %v804
    %969 = vmatprep.subr.mxu0 0.0
    %970 = vmatpush1.msra.mxu0 %v803
    %971 = vmatprep.subr.mxu0 0.0
    %972 = vmatpush1.msra.mxu0 %v802
    %973 = vmatprep.subr.mxu0 0.0
    %974 = vmatpush1.msra.mxu0 %v801
    %975 = vmatprep.subr.mxu0 0.0
    %976 = vmatpush1.msra.mxu0 %v800
    %977 = vmatprep.subr.mxu0 0.0
    %978 = vmatpush1.msra.mxu0 %v799
    %979 = vmatprep.subr.mxu0 0.0
    %980 = vmatpush1.msra.mxu0 %v798
    %981 = vmatprep.subr.mxu0 0.0
    %982 = vmatpush1.msra.mxu0 %v797
    %983 = vmatprep.subr.mxu0 0.0
    %984 = vmatpush1.msra.mxu0 %v796
    %985 = vmatprep.subr.mxu0 0.0
    %986 = vmatpush1.msra.mxu0 %v795
    %987 = vmatprep.subr.mxu0 0.0
    %988 = vmatpush1.msra.mxu0 %v794
    %989 = vmatprep.subr.mxu0 0.0
    %990 = vmatpush1.msra.mxu0 %v793
    %991 = vmatprep.subr.mxu0 0.0
    %992 = vmatpush2.msra.mxu0 0.0
    %993 = vmatprep.subr.mxu0 0.0
    %994 = vmatpush2.msra.mxu0 0.0
    %995 = vmatprep.subr.mxu0 0.0
    %996 = vmatpush2.msra.mxu0 0.0
    %997 = vmatprep.subr.mxu0 0.0
    %998 = vmatpush2.msra.mxu0 0.0
    %999 = vmatprep.subr.mxu0 0.0
    %1000 = vmatpush2.msra.mxu0 0.0
    %1001 = vmatprep.subr.mxu0 0.0
    %1002 = vmatpush2.msra.mxu0 0.0
    %1003 = vmatprep.subr.mxu0 0.0
    %1004 = vmatpush2.msra.mxu0 0.0
    %1005 = vmatprep.subr.mxu0 0.0
    %1006 = vmatpush2.msra.mxu0 0.0
    %1007 = vmatprep.subr.mxu0 0.0
    %1008 = vmatpush2.msra.mxu0 0.0
    %1009 = vmatprep.subr.mxu0 0.0
    %1010 = vmatpush2.msra.mxu0 0.0
    %1011 = vmatprep.subr.mxu0 0.0
    %1012 = vmatpush2.msra.mxu0 0.0
    %1013 = vmatprep.subr.mxu0 0.0
    %1014 = vmatpush2.msra.mxu0 0.0
    %1015 = vmatprep.subr.mxu0 0.0
    %1016 = vmatpush2.msra.mxu0 0.0
    %1017 = vmatprep.subr.mxu0 0.0
    %1018 = vmatpush2.msra.mxu0 0.0
    %1019 = vmatprep.subr.mxu0 0.0
    %1020 = vmatpush2.msra.mxu0 0.0
    %1021 = vmatprep.subr.mxu0 0.0
    %1022 = vmatpush2.msra.mxu0 0.0
    %1023 = vmatprep.mubr.f32.mxu0 0.0
    %1024 = vmatmul.mubr.f32.gmra.mxu0 %v721
    %v1025 = vpop.f32.mrf.mxu0
    %v1026 = vadd.f32 %v951, %v1025
    %v1027 = vpop.f32.mrf.mxu0
    %1028 = vmatprep.mubr.f32.mxu0 0.0
    %1029 = vmatmul.mubr.f32.gmra.mxu0 %v726
    %v1030 = vpop.f32.mrf.mxu0
    %v1031 = vadd.f32 %v956, %v1030
    %v1032 = vpop.f32.mrf.mxu0
    %1033 = vdwg.mxu0
    %v1034 = vld [vmem:[#allocation12] sm:$0x1f]
    %v1035 = vld [vmem:[#allocation12 + $0x8] sm:$0x1f]
    %v1036 = vld [vmem:[#allocation12 + $0x10] sm:$0x1f]
    %v1037 = vld [vmem:[#allocation12 + $0x18] sm:$0x1f]
    %v1038 = vld [vmem:[#allocation12 + $0x20] sm:$0x1f]
    %1039 = vmatprep.subr.mxu0 0.0
    %1040 = vmatpush1.xpose.msra.mxu0 0.0
    %1041 = vmatprep.subr.mxu0 0.0
    %1042 = vmatpush1.xpose.msra.mxu0 0.0
    %1043 = vmatprep.subr.mxu0 0.0
    %1044 = vmatpush1.xpose.msra.mxu0 0.0
    %1045 = vmatprep.subr.mxu0 0.0
    %1046 = vmatpush1.xpose.msra.mxu0 0.0
    %1047 = vmatprep.subr.mxu0 0.0
    %1048 = vmatpush1.xpose.msra.mxu0 0.0
    %1049 = vmatprep.subr.mxu0 0.0
    %1050 = vmatpush1.xpose.msra.mxu0 0.0
    %1051 = vmatprep.subr.mxu0 0.0
    %1052 = vmatpush1.xpose.msra.mxu0 0.0
    %1053 = vmatprep.subr.mxu0 0.0
    %1054 = vmatpush1.xpose.msra.mxu0 0.0
    %1055 = vmatprep.subr.mxu0 0.0
    %1056 = vmatpush1.xpose.msra.mxu0 0.0
    %1057 = vmatprep.subr.mxu0 0.0
    %1058 = vmatpush1.xpose.msra.mxu0 0.0
    %1059 = vmatprep.subr.mxu0 0.0
    %1060 = vmatpush1.xpose.msra.mxu0 0.0
    %1061 = vmatprep.subr.mxu0 0.0
    %1062 = vmatpush1.xpose.msra.mxu0 0.0
    %1063 = vmatprep.subr.mxu0 0.0
    %1064 = vmatpush1.xpose.msra.mxu0 0.0
    %1065 = vmatprep.subr.mxu0 0.0
    %1066 = vmatpush1.xpose.msra.mxu0 0.0
    %1067 = vmatprep.subr.mxu0 %v575
    %1068 = vmatpush1.xpose.msra.mxu0 %v573
    %1069 = vmatprep.subr.mxu0 %v569
    %1070 = vmatpush1.xpose.msra.mxu0 %v567
    %1071 = vmatprep.subr.mxu0 0.0
    %1072 = vmatpush2.xpose.msra.mxu0 0.0
    %1073 = vmatprep.subr.mxu0 0.0
    %1074 = vmatpush2.xpose.msra.mxu0 0.0
    %1075 = vmatprep.subr.mxu0 0.0
    %1076 = vmatpush2.xpose.msra.mxu0 0.0
    %1077 = vmatprep.subr.mxu0 0.0
    %1078 = vmatpush2.xpose.msra.mxu0 0.0
    %1079 = vmatprep.subr.mxu0 0.0
    %1080 = vmatpush2.xpose.msra.mxu0 0.0
    %1081 = vmatprep.subr.mxu0 0.0
    %1082 = vmatpush2.xpose.msra.mxu0 0.0
    %1083 = vmatprep.subr.mxu0 0.0
    %1084 = vmatpush2.xpose.msra.mxu0 0.0
    %1085 = vmatprep.subr.mxu0 0.0
    %1086 = vmatpush2.xpose.msra.mxu0 0.0
    %1087 = vmatprep.subr.mxu0 0.0
    %1088 = vmatpush2.xpose.msra.mxu0 0.0
    %1089 = vmatprep.subr.mxu0 0.0
    %1090 = vmatpush2.xpose.msra.mxu0 0.0
    %1091 = vmatprep.subr.mxu0 0.0
    %1092 = vmatpush2.xpose.msra.mxu0 0.0
    %1093 = vmatprep.subr.mxu0 0.0
    %1094 = vmatpush2.xpose.msra.mxu0 0.0
    %1095 = vmatprep.subr.mxu0 0.0
    %1096 = vmatpush2.xpose.msra.mxu0 0.0
    %1097 = vmatprep.subr.mxu0 0.0
    %1098 = vmatpush2.xpose.msra.mxu0 0.0
    %1099 = vmatprep.subr.mxu0 0.0
    %1100 = vmatpush2.xpose.msra.mxu0 0.0
    %1101 = vmatprep.subr.mxu0 0.0
    %1102 = vmatpush2.xpose.msra.mxu0 0.0
    %1103 = vmatprep.mubr.f32.mxu0 %v1035
    %1104 = vmatmul.mubr.f32.gmra.mxu0 %v1034
    %v1105 = vpop.f32.mrf.mxu0
    %v1106 = vadd.f32 0.0, %v1105
    %v1107 = vpop.f32.mrf.mxu0
    %1108 = vdwg.mxu0
    %1109 = vmatprep.subr.mxu0 0.0
    %1110 = vmatpush1.xpose.msra.mxu0 0.0
    %1111 = vmatprep.subr.mxu0 0.0
    %1112 = vmatpush1.xpose.msra.mxu0 0.0
    %1113 = vmatprep.subr.mxu0 0.0
    %1114 = vmatpush1.xpose.msra.mxu0 0.0
    %1115 = vmatprep.subr.mxu0 0.0
    %1116 = vmatpush1.xpose.msra.mxu0 0.0
    %1117 = vmatprep.subr.mxu0 0.0
    %1118 = vmatpush1.xpose.msra.mxu0 0.0
    %1119 = vmatprep.subr.mxu0 0.0
    %1120 = vmatpush1.xpose.msra.mxu0 0.0
    %1121 = vmatprep.subr.mxu0 0.0
    %1122 = vmatpush1.xpose.msra.mxu0 0.0
    %1123 = vmatprep.subr.mxu0 0.0
    %1124 = vmatpush1.xpose.msra.mxu0 0.0
    %1125 = vmatprep.subr.mxu0 0.0
    %1126 = vmatpush1.xpose.msra.mxu0 0.0
    %1127 = vmatprep.subr.mxu0 0.0
    %1128 = vmatpush1.xpose.msra.mxu0 0.0
    %1129 = vmatprep.subr.mxu0 0.0
    %1130 = vmatpush1.xpose.msra.mxu0 0.0
    %1131 = vmatprep.subr.mxu0 0.0
    %1132 = vmatpush1.xpose.msra.mxu0 0.0
    %1133 = vmatprep.subr.mxu0 0.0
    %1134 = vmatpush1.xpose.msra.mxu0 0.0
    %1135 = vmatprep.subr.mxu0 0.0
    %1136 = vmatpush1.xpose.msra.mxu0 0.0
    %1137 = vmatprep.subr.mxu0 %v652
    %1138 = vmatpush1.xpose.msra.mxu0 %v650
    %1139 = vmatprep.subr.mxu0 %v646
    %1140 = vmatpush1.xpose.msra.mxu0 %v644
    %1141 = vmatprep.subr.mxu0 0.0
    %1142 = vmatpush2.xpose.msra.mxu0 0.0
    %1143 = vmatprep.subr.mxu0 0.0
    %1144 = vmatpush2.xpose.msra.mxu0 0.0
    %1145 = vmatprep.subr.mxu0 0.0
    %1146 = vmatpush2.xpose.msra.mxu0 0.0
    %1147 = vmatprep.subr.mxu0 0.0
    %1148 = vmatpush2.xpose.msra.mxu0 0.0
    %1149 = vmatprep.subr.mxu0 0.0
    %1150 = vmatpush2.xpose.msra.mxu0 0.0
    %1151 = vmatprep.subr.mxu0 0.0
    %1152 = vmatpush2.xpose.msra.mxu0 0.0
    %1153 = vmatprep.subr.mxu0 0.0
    %1154 = vmatpush2.xpose.msra.mxu0 0.0
    %1155 = vmatprep.subr.mxu0 0.0
    %1156 = vmatpush2.xpose.msra.mxu0 0.0
    %1157 = vmatprep.subr.mxu0 0.0
    %1158 = vmatpush2.xpose.msra.mxu0 0.0
    %1159 = vmatprep.subr.mxu0 0.0
    %1160 = vmatpush2.xpose.msra.mxu0 0.0
    %1161 = vmatprep.subr.mxu0 0.0
    %1162 = vmatpush2.xpose.msra.mxu0 0.0
    %1163 = vmatprep.subr.mxu0 0.0
    %1164 = vmatpush2.xpose.msra.mxu0 0.0
    %1165 = vmatprep.subr.mxu0 0.0
    %1166 = vmatpush2.xpose.msra.mxu0 0.0
    %1167 = vmatprep.subr.mxu0 0.0
    %1168 = vmatpush2.xpose.msra.mxu0 0.0
    %1169 = vmatprep.subr.mxu0 0.0
    %1170 = vmatpush2.xpose.msra.mxu0 0.0
    %1171 = vmatprep.subr.mxu0 0.0
    %1172 = vmatpush2.xpose.msra.mxu0 0.0
    %1173 = vmatprep.mubr.f32.mxu0 %v1037
    %1174 = vmatmul.mubr.f32.gmra.mxu0 %v1036
    %v1175 = vpop.f32.mrf.mxu0
    %v1176 = vadd.f32 %v1106, %v1175
    %v1177 = vpop.f32.mrf.mxu0
    %1178 = vdwg.mxu0
    %1179 = vmatprep.subr.mxu0 0.0
    %1180 = vmatpush1.xpose.msra.mxu0 0.0
    %1181 = vmatprep.subr.mxu0 0.0
    %1182 = vmatpush1.xpose.msra.mxu0 0.0
    %1183 = vmatprep.subr.mxu0 0.0
    %1184 = vmatpush1.xpose.msra.mxu0 0.0
    %1185 = vmatprep.subr.mxu0 0.0
    %1186 = vmatpush1.xpose.msra.mxu0 0.0
    %1187 = vmatprep.subr.mxu0 0.0
    %1188 = vmatpush1.xpose.msra.mxu0 0.0
    %1189 = vmatprep.subr.mxu0 0.0
    %1190 = vmatpush1.xpose.msra.mxu0 0.0
    %1191 = vmatprep.subr.mxu0 0.0
    %1192 = vmatpush1.xpose.msra.mxu0 0.0
    %1193 = vmatprep.subr.mxu0 0.0
    %1194 = vmatpush1.xpose.msra.mxu0 0.0
    %1195 = vmatprep.subr.mxu0 0.0
    %1196 = vmatpush1.xpose.msra.mxu0 0.0
    %1197 = vmatprep.subr.mxu0 0.0
    %1198 = vmatpush1.xpose.msra.mxu0 0.0
    %1199 = vmatprep.subr.mxu0 0.0
    %1200 = vmatpush1.xpose.msra.mxu0 0.0
    %1201 = vmatprep.subr.mxu0 0.0
    %1202 = vmatpush1.xpose.msra.mxu0 0.0
    %1203 = vmatprep.subr.mxu0 0.0
    %1204 = vmatpush1.xpose.msra.mxu0 0.0
    %1205 = vmatprep.subr.mxu0 0.0
    %1206 = vmatpush1.xpose.msra.mxu0 0.0
    %1207 = vmatprep.subr.mxu0 0.0
    %1208 = vmatpush1.xpose.msra.mxu0 %v726
    %1209 = vmatprep.subr.mxu0 0.0
    %1210 = vmatpush1.xpose.msra.mxu0 %v721
    %1211 = vmatprep.subr.mxu0 0.0
    %1212 = vmatpush2.xpose.msra.mxu0 0.0
    %1213 = vmatprep.subr.mxu0 0.0
    %1214 = vmatpush2.xpose.msra.mxu0 0.0
    %1215 = vmatprep.subr.mxu0 0.0
    %1216 = vmatpush2.xpose.msra.mxu0 0.0
    %1217 = vmatprep.subr.mxu0 0.0
    %1218 = vmatpush2.xpose.msra.mxu0 0.0
    %1219 = vmatprep.subr.mxu0 0.0
    %1220 = vmatpush2.xpose.msra.mxu0 0.0
    %1221 = vmatprep.subr.mxu0 0.0
    %1222 = vmatpush2.xpose.msra.mxu0 0.0
    %1223 = vmatprep.subr.mxu0 0.0
    %1224 = vmatpush2.xpose.msra.mxu0 0.0
    %1225 = vmatprep.subr.mxu0 0.0
    %1226 = vmatpush2.xpose.msra.mxu0 0.0
    %1227 = vmatprep.subr.mxu0 0.0
    %1228 = vmatpush2.xpose.msra.mxu0 0.0
    %1229 = vmatprep.subr.mxu0 0.0
    %1230 = vmatpush2.xpose.msra.mxu0 0.0
    %1231 = vmatprep.subr.mxu0 0.0
    %1232 = vmatpush2.xpose.msra.mxu0 0.0
    %1233 = vmatprep.subr.mxu0 0.0
    %1234 = vmatpush2.xpose.msra.mxu0 0.0
    %1235 = vmatprep.subr.mxu0 0.0
    %1236 = vmatpush2.xpose.msra.mxu0 0.0
    %1237 = vmatprep.subr.mxu0 0.0
    %1238 = vmatpush2.xpose.msra.mxu0 0.0
    %1239 = vmatprep.subr.mxu0 0.0
    %1240 = vmatpush2.xpose.msra.mxu0 0.0
    %1241 = vmatprep.subr.mxu0 0.0
    %1242 = vmatpush2.xpose.msra.mxu0 0.0
    %1243 = vmatprep.mubr.f32.mxu0 0.0
    %1244 = vmatmul.mubr.f32.gmra.mxu0 %v1038
    %v1245 = vpop.f32.mrf.mxu0
    %v1246 = vadd.f32 %v1176, %v1245
    %v1247 = vpop.f32.mrf.mxu0
    %1248 = vdwg.mxu0
    %s1249 = sld [smem:[#allocation15]]
    %s1250 = sld [smem:[#allocation15 + $0x1]]
    %s1251 = sld [smem:[#allocation15 + $0x2]]
    %s1252 = sld [smem:[#allocation15 + $0x3]]
    %s1253 = sld [smem:[#allocation15 + $0x4]]
    %1255 = vset.pattern.permute.xlu0 0
    %1256 = vperm.xlu0 %1255, %v1026
    %v1257 = vpop.permute.xlu0 %1256
    %1260 = vset.pattern.permute.xlu0 0
    %1261 = vperm.xlu0 %1260, %v1031
    %v1262 = vpop.permute.xlu0 %1261
    %v1264 = vlaneseq
    %v1265 = vshrl.u32 %v1264, 7
    %v1266 = vsub.s32 0, %v1265
    %v1267 = vrot.slane %v1246, %v1266
    %v1268 = vadd.f32 %v1257, %v1267
    %v1269 = vadd.f32 %v1262, %v1267
    %v1270 = vstv %s1249
    %v1271 = vmul.f32 %v1270, %v465
    %v1272 = vmul.f32 %v1270, %v466
    %v1273 = vadd.f32 %v1268, %v1271
    %v1274 = vadd.f32 %v1269, %v1272
    %v1275 = vmul.f32 %v1273, 0.2
    %v1276 = vmul.f32 %v1274, 0.2
    %v1277 = vmax.f32 %v1273, %v1275
    %v1278 = vmax.f32 %v1274, %v1276
    %v1279 = vadd.f32 %v1277, %v469
    %v1280 = vadd.f32 %v1278, %v470
    %vm1281 = vcmask 130048
    %v1282 = vsel %vm1281, %v1279, -inf
    %1283 = vmax.xlane.f32.xlu0 %v1282
    %v1284 = vpop.xlane.xlu0 %1283
    %v1285 = vsel %vm1281, %v1280, -inf
    %1286 = vmax.xlane.f32.xlu0 %v1285
    %v1287 = vpop.xlane.xlu0 %1286
    %v1288 = vsub.f32 %v1279, %v1284
    %v1289 = vsub.f32 %v1280, %v1287
    %v1290 = vmul.f32 %v1288, 1.442695
    %v1291 = vpow.pop %v1290
    %v1292 = vmul.f32 %v1289, 1.442695
    %v1293 = vpow.pop %v1292
    %v1294 = vsel %vm1281, %v1291, 0.0
    %1295 = vadd.xlane.f32.xlu0 %v1294
    %v1296 = vpop.xlane.xlu0 %1295
    %v1297 = vsel %vm1281, %v1293, 0.0
    %1298 = vadd.xlane.f32.xlu0 %v1297
    %v1299 = vpop.xlane.xlu0 %1298
    %v1301 = vsel %vm1281, %v1291, 0
    %v1304 = vsel %vm1281, %v1293, 0
    %1306 = vmatprep.subr.mxu0 0.0
    %1307 = vmatpush1.msra.mxu0 0.0
    %1308 = vmatprep.subr.mxu0 0.0
    %1309 = vmatpush1.msra.mxu0 0.0
    %1310 = vmatprep.subr.mxu0 0.0
    %1311 = vmatpush1.msra.mxu0 0.0
    %1312 = vmatprep.subr.mxu0 0.0
    %1313 = vmatpush1.msra.mxu0 0.0
    %1314 = vmatprep.subr.mxu0 0.0
    %1315 = vmatpush1.msra.mxu0 0.0
    %1316 = vmatprep.subr.mxu0 0.0
    %1317 = vmatpush1.msra.mxu0 0.0
    %1318 = vmatprep.subr.mxu0 0.0
    %1319 = vmatpush1.msra.mxu0 0.0
    %1320 = vmatprep.subr.mxu0 0.0
    %1321 = vmatpush1.msra.mxu0 0.0
    %1322 = vmatprep.subr.mxu0 0.0
    %1323 = vmatpush1.msra.mxu0 0.0
    %1324 = vmatprep.subr.mxu0 0.0
    %1325 = vmatpush1.msra.mxu0 0.0
    %1326 = vmatprep.subr.mxu0 0.0
    %1327 = vmatpush1.msra.mxu0 0.0
    %1328 = vmatprep.subr.mxu0 0.0
    %1329 = vmatpush1.msra.mxu0 0.0
    %1330 = vmatprep.subr.mxu0 0.0
    %1331 = vmatpush1.msra.mxu0 0.0
    %1332 = vmatprep.subr.mxu0 0.0
    %1333 = vmatpush1.msra.mxu0 0.0
    %1334 = vmatprep.subr.mxu0 0.0
    %1335 = vmatpush1.msra.mxu0 %v573
    %1336 = vmatprep.subr.mxu0 0.0
    %1337 = vmatpush1.msra.mxu0 %v567
    %1338 = vmatprep.subr.mxu0 0.0
    %1339 = vmatpush2.msra.mxu0 0.0
    %1340 = vmatprep.subr.mxu0 0.0
    %1341 = vmatpush2.msra.mxu0 0.0
    %1342 = vmatprep.subr.mxu0 0.0
    %1343 = vmatpush2.msra.mxu0 0.0
    %1344 = vmatprep.subr.mxu0 0.0
    %1345 = vmatpush2.msra.mxu0 0.0
    %1346 = vmatprep.subr.mxu0 0.0
    %1347 = vmatpush2.msra.mxu0 0.0
    %1348 = vmatprep.subr.mxu0 0.0
    %1349 = vmatpush2.msra.mxu0 0.0
    %1350 = vmatprep.subr.mxu0 0.0
    %1351 = vmatpush2.msra.mxu0 0.0
    %1352 = vmatprep.subr.mxu0 0.0
    %1353 = vmatpush2.msra.mxu0 0.0
    %1354 = vmatprep.subr.mxu0 0.0
    %1355 = vmatpush2.msra.mxu0 0.0
    %1356 = vmatprep.subr.mxu0 0.0
    %1357 = vmatpush2.msra.mxu0 0.0
    %1358 = vmatprep.subr.mxu0 0.0
    %1359 = vmatpush2.msra.mxu0 0.0
    %1360 = vmatprep.subr.mxu0 0.0
    %1361 = vmatpush2.msra.mxu0 0.0
    %1362 = vmatprep.subr.mxu0 0.0
    %1363 = vmatpush2.msra.mxu0 0.0
    %1364 = vmatprep.subr.mxu0 0.0
    %1365 = vmatpush2.msra.mxu0 0.0
    %1366 = vmatprep.subr.mxu0 0.0
    %1367 = vmatpush2.msra.mxu0 0.0
    %1368 = vmatprep.subr.mxu0 0.0
    %1369 = vmatpush2.msra.mxu0 0.0
    %1370 = vmatprep.mubr.f32.mxu0 0.0
    %1371 = vmatmul.mubr.f32.gmra.mxu0 %v1301
    %v1372 = vpop.f32.mrf.mxu0
    %v1373 = vadd.f32 0.0, %v1372
    %v1374 = vpop.f32.mrf.mxu0
    %1375 = vmatprep.mubr.f32.mxu0 0.0
    %1376 = vmatmul.mubr.f32.gmra.mxu0 %v1304
    %v1377 = vpop.f32.mrf.mxu0
    %v1378 = vadd.f32 0.0, %v1377
    %v1379 = vpop.f32.mrf.mxu0
    %1380 = vdwg.mxu0
    %v1381 = vrcp.pop %v1296
    %v1382 = vrcp.pop %v1299
    %v1383 = vmul.f32 %v1373, %v1381
    %v1384 = vmul.f32 %v1378, %v1382
    %1385 = vset.pattern.permute.xlu0 1
    %1386 = vperm.xlu0 %1385, %v1026
    %v1387 = vpop.permute.xlu0 %1386
    %1389 = vset.pattern.permute.xlu0 1
    %1390 = vperm.xlu0 %1389, %v1031
    %v1391 = vpop.permute.xlu0 %1390
    %v1393 = vlaneseq
    %v1394 = vshrl.u32 %v1393, 7
    %v1395 = vsub.s32 1, %v1394
    %v1396 = vrot.slane %v1246, %v1395
    %v1397 = vadd.f32 %v1387, %v1396
    %v1398 = vadd.f32 %v1391, %v1396
    %v1399 = vstv %s1250
    %v1400 = vmul.f32 %v1399, %v465
    %v1401 = vmul.f32 %v1399, %v466
    %v1402 = vadd.f32 %v1397, %v1400
    %v1403 = vadd.f32 %v1398, %v1401
    %v1404 = vmul.f32 %v1402, 0.2
    %v1405 = vmul.f32 %v1403, 0.2
    %v1406 = vmax.f32 %v1402, %v1404
    %v1407 = vmax.f32 %v1403, %v1405
    %v1408 = vadd.f32 %v1406, %v469
    %v1409 = vadd.f32 %v1407, %v470
    %v1410 = vsel %vm1281, %v1408, -inf
    %1411 = vmax.xlane.f32.xlu0 %v1410
    %v1412 = vpop.xlane.xlu0 %1411
    %v1413 = vsel %vm1281, %v1409, -inf
    %1414 = vmax.xlane.f32.xlu0 %v1413
    %v1415 = vpop.xlane.xlu0 %1414
    %v1416 = vsub.f32 %v1408, %v1412
    %v1417 = vsub.f32 %v1409, %v1415
    %v1418 = vmul.f32 %v1416, 1.442695
    %v1419 = vpow.pop %v1418
    %v1420 = vmul.f32 %v1417, 1.442695
    %v1421 = vpow.pop %v1420
    %v1422 = vsel %vm1281, %v1419, 0.0
    %1423 = vadd.xlane.f32.xlu0 %v1422
    %v1424 = vpop.xlane.xlu0 %1423
    %v1425 = vsel %vm1281, %v1421, 0.0
    %1426 = vadd.xlane.f32.xlu0 %v1425
    %v1427 = vpop.xlane.xlu0 %1426
    %v1429 = vsel %vm1281, %v1419, 0
    %v1432 = vsel %vm1281, %v1421, 0
    %1434 = vmatprep.subr.mxu0 0.0
    %1435 = vmatpush1.msra.mxu0 0.0
    %1436 = vmatprep.subr.mxu0 0.0
    %1437 = vmatpush1.msra.mxu0 0.0
    %1438 = vmatprep.subr.mxu0 0.0
    %1439 = vmatpush1.msra.mxu0 0.0
    %1440 = vmatprep.subr.mxu0 0.0
    %1441 = vmatpush1.msra.mxu0 0.0
    %1442 = vmatprep.subr.mxu0 0.0
    %1443 = vmatpush1.msra.mxu0 0.0
    %1444 = vmatprep.subr.mxu0 0.0
    %1445 = vmatpush1.msra.mxu0 0.0
    %1446 = vmatprep.subr.mxu0 0.0
    %1447 = vmatpush1.msra.mxu0 0.0
    %1448 = vmatprep.subr.mxu0 0.0
    %1449 = vmatpush1.msra.mxu0 0.0
    %1450 = vmatprep.subr.mxu0 0.0
    %1451 = vmatpush1.msra.mxu0 0.0
    %1452 = vmatprep.subr.mxu0 0.0
    %1453 = vmatpush1.msra.mxu0 0.0
    %1454 = vmatprep.subr.mxu0 0.0
    %1455 = vmatpush1.msra.mxu0 0.0
    %1456 = vmatprep.subr.mxu0 0.0
    %1457 = vmatpush1.msra.mxu0 0.0
    %1458 = vmatprep.subr.mxu0 0.0
    %1459 = vmatpush1.msra.mxu0 0.0
    %1460 = vmatprep.subr.mxu0 0.0
    %1461 = vmatpush1.msra.mxu0 0.0
    %1462 = vmatprep.subr.mxu0 0.0
    %1463 = vmatpush1.msra.mxu0 %v575
    %1464 = vmatprep.subr.mxu0 0.0
    %1465 = vmatpush1.msra.mxu0 %v569
    %1466 = vmatprep.subr.mxu0 0.0
    %1467 = vmatpush2.msra.mxu0 0.0
    %1468 = vmatprep.subr.mxu0 0.0
    %1469 = vmatpush2.msra.mxu0 0.0
    %1470 = vmatprep.subr.mxu0 0.0
    %1471 = vmatpush2.msra.mxu0 0.0
    %1472 = vmatprep.subr.mxu0 0.0
    %1473 = vmatpush2.msra.mxu0 0.0
    %1474 = vmatprep.subr.mxu0 0.0
    %1475 = vmatpush2.msra.mxu0 0.0
    %1476 = vmatprep.subr.mxu0 0.0
    %1477 = vmatpush2.msra.mxu0 0.0
    %1478 = vmatprep.subr.mxu0 0.0
    %1479 = vmatpush2.msra.mxu0 0.0
    %1480 = vmatprep.subr.mxu0 0.0
    %1481 = vmatpush2.msra.mxu0 0.0
    %1482 = vmatprep.subr.mxu0 0.0
    %1483 = vmatpush2.msra.mxu0 0.0
    %1484 = vmatprep.subr.mxu0 0.0
    %1485 = vmatpush2.msra.mxu0 0.0
    %1486 = vmatprep.subr.mxu0 0.0
    %1487 = vmatpush2.msra.mxu0 0.0
    %1488 = vmatprep.subr.mxu0 0.0
    %1489 = vmatpush2.msra.mxu0 0.0
    %1490 = vmatprep.subr.mxu0 0.0
    %1491 = vmatpush2.msra.mxu0 0.0
    %1492 = vmatprep.subr.mxu0 0.0
    %1493 = vmatpush2.msra.mxu0 0.0
    %1494 = vmatprep.subr.mxu0 0.0
    %1495 = vmatpush2.msra.mxu0 0.0
    %1496 = vmatprep.subr.mxu0 0.0
    %1497 = vmatpush2.msra.mxu0 0.0
    %1498 = vmatprep.mubr.f32.mxu0 0.0
    %1499 = vmatmul.mubr.f32.gmra.mxu0 %v1429
    %v1500 = vpop.f32.mrf.mxu0
    %v1501 = vadd.f32 0.0, %v1500
    %v1502 = vpop.f32.mrf.mxu0
    %1503 = vmatprep.mubr.f32.mxu0 0.0
    %1504 = vmatmul.mubr.f32.gmra.mxu0 %v1432
    %v1505 = vpop.f32.mrf.mxu0
    %v1506 = vadd.f32 0.0, %v1505
    %v1507 = vpop.f32.mrf.mxu0
    %1508 = vdwg.mxu0
    %v1509 = vrcp.pop %v1424
    %v1510 = vrcp.pop %v1427
    %v1511 = vmul.f32 %v1501, %v1509
    %v1512 = vmul.f32 %v1506, %v1510
    %1513 = vset.pattern.permute.xlu0 2
    %1514 = vperm.xlu0 %1513, %v1026
    %v1515 = vpop.permute.xlu0 %1514
    %1517 = vset.pattern.permute.xlu0 2
    %1518 = vperm.xlu0 %1517, %v1031
    %v1519 = vpop.permute.xlu0 %1518
    %v1521 = vlaneseq
    %v1522 = vshrl.u32 %v1521, 7
    %v1523 = vsub.s32 2, %v1522
    %v1524 = vrot.slane %v1246, %v1523
    %v1525 = vadd.f32 %v1515, %v1524
    %v1526 = vadd.f32 %v1519, %v1524
    %v1527 = vstv %s1251
    %v1528 = vmul.f32 %v1527, %v465
    %v1529 = vmul.f32 %v1527, %v466
    %v1530 = vadd.f32 %v1525, %v1528
    %v1531 = vadd.f32 %v1526, %v1529
    %v1532 = vmul.f32 %v1530, 0.2
    %v1533 = vmul.f32 %v1531, 0.2
    %v1534 = vmax.f32 %v1530, %v1532
    %v1535 = vmax.f32 %v1531, %v1533
    %v1536 = vadd.f32 %v1534, %v469
    %v1537 = vadd.f32 %v1535, %v470
    %v1538 = vsel %vm1281, %v1536, -inf
    %1539 = vmax.xlane.f32.xlu0 %v1538
    %v1540 = vpop.xlane.xlu0 %1539
    %v1541 = vsel %vm1281, %v1537, -inf
    %1542 = vmax.xlane.f32.xlu0 %v1541
    %v1543 = vpop.xlane.xlu0 %1542
    %v1544 = vsub.f32 %v1536, %v1540
    %v1545 = vsub.f32 %v1537, %v1543
    %v1546 = vmul.f32 %v1544, 1.442695
    %v1547 = vpow.pop %v1546
    %v1548 = vmul.f32 %v1545, 1.442695
    %v1549 = vpow.pop %v1548
    %v1550 = vsel %vm1281, %v1547, 0.0
    %1551 = vadd.xlane.f32.xlu0 %v1550
    %v1552 = vpop.xlane.xlu0 %1551
    %v1553 = vsel %vm1281, %v1549, 0.0
    %1554 = vadd.xlane.f32.xlu0 %v1553
    %v1555 = vpop.xlane.xlu0 %1554
    %v1557 = vsel %vm1281, %v1547, 0
    %v1560 = vsel %vm1281, %v1549, 0
    %1562 = vmatprep.subr.mxu0 0.0
    %1563 = vmatpush1.msra.mxu0 0.0
    %1564 = vmatprep.subr.mxu0 0.0
    %1565 = vmatpush1.msra.mxu0 0.0
    %1566 = vmatprep.subr.mxu0 0.0
    %1567 = vmatpush1.msra.mxu0 0.0
    %1568 = vmatprep.subr.mxu0 0.0
    %1569 = vmatpush1.msra.mxu0 0.0
    %1570 = vmatprep.subr.mxu0 0.0
    %1571 = vmatpush1.msra.mxu0 0.0
    %1572 = vmatprep.subr.mxu0 0.0
    %1573 = vmatpush1.msra.mxu0 0.0
    %1574 = vmatprep.subr.mxu0 0.0
    %1575 = vmatpush1.msra.mxu0 0.0
    %1576 = vmatprep.subr.mxu0 0.0
    %1577 = vmatpush1.msra.mxu0 0.0
    %1578 = vmatprep.subr.mxu0 0.0
    %1579 = vmatpush1.msra.mxu0 0.0
    %1580 = vmatprep.subr.mxu0 0.0
    %1581 = vmatpush1.msra.mxu0 0.0
    %1582 = vmatprep.subr.mxu0 0.0
    %1583 = vmatpush1.msra.mxu0 0.0
    %1584 = vmatprep.subr.mxu0 0.0
    %1585 = vmatpush1.msra.mxu0 0.0
    %1586 = vmatprep.subr.mxu0 0.0
    %1587 = vmatpush1.msra.mxu0 0.0
    %1588 = vmatprep.subr.mxu0 0.0
    %1589 = vmatpush1.msra.mxu0 0.0
    %1590 = vmatprep.subr.mxu0 0.0
    %1591 = vmatpush1.msra.mxu0 %v650
    %1592 = vmatprep.subr.mxu0 0.0
    %1593 = vmatpush1.msra.mxu0 %v644
    %1594 = vmatprep.subr.mxu0 0.0
    %1595 = vmatpush2.msra.mxu0 0.0
    %1596 = vmatprep.subr.mxu0 0.0
    %1597 = vmatpush2.msra.mxu0 0.0
    %1598 = vmatprep.subr.mxu0 0.0
    %1599 = vmatpush2.msra.mxu0 0.0
    %1600 = vmatprep.subr.mxu0 0.0
    %1601 = vmatpush2.msra.mxu0 0.0
    %1602 = vmatprep.subr.mxu0 0.0
    %1603 = vmatpush2.msra.mxu0 0.0
    %1604 = vmatprep.subr.mxu0 0.0
    %1605 = vmatpush2.msra.mxu0 0.0
    %1606 = vmatprep.subr.mxu0 0.0
    %1607 = vmatpush2.msra.mxu0 0.0
    %1608 = vmatprep.subr.mxu0 0.0
    %1609 = vmatpush2.msra.mxu0 0.0
    %1610 = vmatprep.subr.mxu0 0.0
    %1611 = vmatpush2.msra.mxu0 0.0
    %1612 = vmatprep.subr.mxu0 0.0
    %1613 = vmatpush2.msra.mxu0 0.0
    %1614 = vmatprep.subr.mxu0 0.0
    %1615 = vmatpush2.msra.mxu0 0.0
    %1616 = vmatprep.subr.mxu0 0.0
    %1617 = vmatpush2.msra.mxu0 0.0
    %1618 = vmatprep.subr.mxu0 0.0
    %1619 = vmatpush2.msra.mxu0 0.0
    %1620 = vmatprep.subr.mxu0 0.0
    %1621 = vmatpush2.msra.mxu0 0.0
    %1622 = vmatprep.subr.mxu0 0.0
    %1623 = vmatpush2.msra.mxu0 0.0
    %1624 = vmatprep.subr.mxu0 0.0
    %1625 = vmatpush2.msra.mxu0 0.0
    %1626 = vmatprep.mubr.f32.mxu0 0.0
    %1627 = vmatmul.mubr.f32.gmra.mxu0 %v1557
    %v1628 = vpop.f32.mrf.mxu0
    %v1629 = vadd.f32 0.0, %v1628
    %v1630 = vpop.f32.mrf.mxu0
    %1631 = vmatprep.mubr.f32.mxu0 0.0
    %1632 = vmatmul.mubr.f32.gmra.mxu0 %v1560
    %v1633 = vpop.f32.mrf.mxu0
    %v1634 = vadd.f32 0.0, %v1633
    %v1635 = vpop.f32.mrf.mxu0
    %1636 = vdwg.mxu0
    %v1637 = vrcp.pop %v1552
    %v1638 = vrcp.pop %v1555
    %v1639 = vmul.f32 %v1629, %v1637
    %v1640 = vmul.f32 %v1634, %v1638
    %1641 = vset.pattern.permute.xlu0 3
    %1642 = vperm.xlu0 %1641, %v1026
    %v1643 = vpop.permute.xlu0 %1642
    %1645 = vset.pattern.permute.xlu0 3
    %1646 = vperm.xlu0 %1645, %v1031
    %v1647 = vpop.permute.xlu0 %1646
    %v1649 = vlaneseq
    %v1650 = vshrl.u32 %v1649, 7
    %v1651 = vsub.s32 3, %v1650
    %v1652 = vrot.slane %v1246, %v1651
    %v1653 = vadd.f32 %v1643, %v1652
    %v1654 = vadd.f32 %v1647, %v1652
    %v1655 = vstv %s1252
    %v1656 = vmul.f32 %v1655, %v465
    %v1657 = vmul.f32 %v1655, %v466
    %v1658 = vadd.f32 %v1653, %v1656
    %v1659 = vadd.f32 %v1654, %v1657
    %v1660 = vmul.f32 %v1658, 0.2
    %v1661 = vmul.f32 %v1659, 0.2
    %v1662 = vmax.f32 %v1658, %v1660
    %v1663 = vmax.f32 %v1659, %v1661
    %v1664 = vadd.f32 %v1662, %v469
    %v1665 = vadd.f32 %v1663, %v470
    %v1666 = vsel %vm1281, %v1664, -inf
    %1667 = vmax.xlane.f32.xlu0 %v1666
    %v1668 = vpop.xlane.xlu0 %1667
    %v1669 = vsel %vm1281, %v1665, -inf
    %1670 = vmax.xlane.f32.xlu0 %v1669
    %v1671 = vpop.xlane.xlu0 %1670
    %v1672 = vsub.f32 %v1664, %v1668
    %v1673 = vsub.f32 %v1665, %v1671
    %v1674 = vmul.f32 %v1672, 1.442695
    %v1675 = vpow.pop %v1674
    %v1676 = vmul.f32 %v1673, 1.442695
    %v1677 = vpow.pop %v1676
    %v1678 = vsel %vm1281, %v1675, 0.0
    %1679 = vadd.xlane.f32.xlu0 %v1678
    %v1680 = vpop.xlane.xlu0 %1679
    %v1681 = vsel %vm1281, %v1677, 0.0
    %1682 = vadd.xlane.f32.xlu0 %v1681
    %v1683 = vpop.xlane.xlu0 %1682
    %v1685 = vsel %vm1281, %v1675, 0
    %v1688 = vsel %vm1281, %v1677, 0
    %1690 = vmatprep.subr.mxu0 0.0
    %1691 = vmatpush1.msra.mxu0 0.0
    %1692 = vmatprep.subr.mxu0 0.0
    %1693 = vmatpush1.msra.mxu0 0.0
    %1694 = vmatprep.subr.mxu0 0.0
    %1695 = vmatpush1.msra.mxu0 0.0
    %1696 = vmatprep.subr.mxu0 0.0
    %1697 = vmatpush1.msra.mxu0 0.0
    %1698 = vmatprep.subr.mxu0 0.0
    %1699 = vmatpush1.msra.mxu0 0.0
    %1700 = vmatprep.subr.mxu0 0.0
    %1701 = vmatpush1.msra.mxu0 0.0
    %1702 = vmatprep.subr.mxu0 0.0
    %1703 = vmatpush1.msra.mxu0 0.0
    %1704 = vmatprep.subr.mxu0 0.0
    %1705 = vmatpush1.msra.mxu0 0.0
    %1706 = vmatprep.subr.mxu0 0.0
    %1707 = vmatpush1.msra.mxu0 0.0
    %1708 = vmatprep.subr.mxu0 0.0
    %1709 = vmatpush1.msra.mxu0 0.0
    %1710 = vmatprep.subr.mxu0 0.0
    %1711 = vmatpush1.msra.mxu0 0.0
    %1712 = vmatprep.subr.mxu0 0.0
    %1713 = vmatpush1.msra.mxu0 0.0
    %1714 = vmatprep.subr.mxu0 0.0
    %1715 = vmatpush1.msra.mxu0 0.0
    %1716 = vmatprep.subr.mxu0 0.0
    %1717 = vmatpush1.msra.mxu0 0.0
    %1718 = vmatprep.subr.mxu0 0.0
    %1719 = vmatpush1.msra.mxu0 %v652
    %1720 = vmatprep.subr.mxu0 0.0
    %1721 = vmatpush1.msra.mxu0 %v646
    %1722 = vmatprep.subr.mxu0 0.0
    %1723 = vmatpush2.msra.mxu0 0.0
    %1724 = vmatprep.subr.mxu0 0.0
    %1725 = vmatpush2.msra.mxu0 0.0
    %1726 = vmatprep.subr.mxu0 0.0
    %1727 = vmatpush2.msra.mxu0 0.0
    %1728 = vmatprep.subr.mxu0 0.0
    %1729 = vmatpush2.msra.mxu0 0.0
    %1730 = vmatprep.subr.mxu0 0.0
    %1731 = vmatpush2.msra.mxu0 0.0
    %1732 = vmatprep.subr.mxu0 0.0
    %1733 = vmatpush2.msra.mxu0 0.0
    %1734 = vmatprep.subr.mxu0 0.0
    %1735 = vmatpush2.msra.mxu0 0.0
    %1736 = vmatprep.subr.mxu0 0.0
    %1737 = vmatpush2.msra.mxu0 0.0
    %1738 = vmatprep.subr.mxu0 0.0
    %1739 = vmatpush2.msra.mxu0 0.0
    %1740 = vmatprep.subr.mxu0 0.0
    %1741 = vmatpush2.msra.mxu0 0.0
    %1742 = vmatprep.subr.mxu0 0.0
    %1743 = vmatpush2.msra.mxu0 0.0
    %1744 = vmatprep.subr.mxu0 0.0
    %1745 = vmatpush2.msra.mxu0 0.0
    %1746 = vmatprep.subr.mxu0 0.0
    %1747 = vmatpush2.msra.mxu0 0.0
    %1748 = vmatprep.subr.mxu0 0.0
    %1749 = vmatpush2.msra.mxu0 0.0
    %1750 = vmatprep.subr.mxu0 0.0
    %1751 = vmatpush2.msra.mxu0 0.0
    %1752 = vmatprep.subr.mxu0 0.0
    %1753 = vmatpush2.msra.mxu0 0.0
    %1754 = vmatprep.mubr.f32.mxu0 0.0
    %1755 = vmatmul.mubr.f32.gmra.mxu0 %v1685
    %v1756 = vpop.f32.mrf.mxu0
    %v1757 = vadd.f32 0.0, %v1756
    %v1758 = vpop.f32.mrf.mxu0
    %1759 = vmatprep.mubr.f32.mxu0 0.0
    %1760 = vmatmul.mubr.f32.gmra.mxu0 %v1688
    %v1761 = vpop.f32.mrf.mxu0
    %v1762 = vadd.f32 0.0, %v1761
    %v1763 = vpop.f32.mrf.mxu0
    %1764 = vdwg.mxu0
    %v1765 = vrcp.pop %v1680
    %v1766 = vrcp.pop %v1683
    %v1767 = vmul.f32 %v1757, %v1765
    %v1768 = vmul.f32 %v1762, %v1766
    %1769 = vset.pattern.permute.xlu0 4
    %1770 = vperm.xlu0 %1769, %v1026
    %v1771 = vpop.permute.xlu0 %1770
    %1773 = vset.pattern.permute.xlu0 4
    %1774 = vperm.xlu0 %1773, %v1031
    %v1775 = vpop.permute.xlu0 %1774
    %v1777 = vlaneseq
    %v1778 = vshrl.u32 %v1777, 7
    %v1779 = vsub.s32 4, %v1778
    %v1780 = vrot.slane %v1246, %v1779
    %v1781 = vadd.f32 %v1771, %v1780
    %v1782 = vadd.f32 %v1775, %v1780
    %v1783 = vstv %s1253
    %v1784 = vmul.f32 %v1783, %v465
    %v1785 = vmul.f32 %v1783, %v466
    %v1786 = vadd.f32 %v1781, %v1784
    %v1787 = vadd.f32 %v1782, %v1785
    %v1788 = vmul.f32 %v1786, 0.2
    %v1789 = vmul.f32 %v1787, 0.2
    %v1790 = vmax.f32 %v1786, %v1788
    %v1791 = vmax.f32 %v1787, %v1789
    %v1792 = vadd.f32 %v1790, %v469
    %v1793 = vadd.f32 %v1791, %v470
    %v1794 = vsel %vm1281, %v1792, -inf
    %1795 = vmax.xlane.f32.xlu0 %v1794
    %v1796 = vpop.xlane.xlu0 %1795
    %v1797 = vsel %vm1281, %v1793, -inf
    %1798 = vmax.xlane.f32.xlu0 %v1797
    %v1799 = vpop.xlane.xlu0 %1798
    %v1800 = vsub.f32 %v1792, %v1796
    %v1801 = vsub.f32 %v1793, %v1799
    %v1802 = vmul.f32 %v1800, 1.442695
    %v1803 = vpow.pop %v1802
    %v1804 = vmul.f32 %v1801, 1.442695
    %v1805 = vpow.pop %v1804
    %v1806 = vsel %vm1281, %v1803, 0.0
    %1807 = vadd.xlane.f32.xlu0 %v1806
    %v1808 = vpop.xlane.xlu0 %1807
    %v1809 = vsel %vm1281, %v1805, 0.0
    %1810 = vadd.xlane.f32.xlu0 %v1809
    %v1811 = vpop.xlane.xlu0 %1810
    %v1813 = vsel %vm1281, %v1803, 0
    %v1816 = vsel %vm1281, %v1805, 0
    %1818 = vmatprep.subr.mxu0 0.0
    %1819 = vmatpush1.msra.mxu0 0.0
    %1820 = vmatprep.subr.mxu0 0.0
    %1821 = vmatpush1.msra.mxu0 0.0
    %1822 = vmatprep.subr.mxu0 0.0
    %1823 = vmatpush1.msra.mxu0 0.0
    %1824 = vmatprep.subr.mxu0 0.0
    %1825 = vmatpush1.msra.mxu0 0.0
    %1826 = vmatprep.subr.mxu0 0.0
    %1827 = vmatpush1.msra.mxu0 0.0
    %1828 = vmatprep.subr.mxu0 0.0
    %1829 = vmatpush1.msra.mxu0 0.0
    %1830 = vmatprep.subr.mxu0 0.0
    %1831 = vmatpush1.msra.mxu0 0.0
    %1832 = vmatprep.subr.mxu0 0.0
    %1833 = vmatpush1.msra.mxu0 0.0
    %1834 = vmatprep.subr.mxu0 0.0
    %1835 = vmatpush1.msra.mxu0 0.0
    %1836 = vmatprep.subr.mxu0 0.0
    %1837 = vmatpush1.msra.mxu0 0.0
    %1838 = vmatprep.subr.mxu0 0.0
    %1839 = vmatpush1.msra.mxu0 0.0
    %1840 = vmatprep.subr.mxu0 0.0
    %1841 = vmatpush1.msra.mxu0 0.0
    %1842 = vmatprep.subr.mxu0 0.0
    %1843 = vmatpush1.msra.mxu0 0.0
    %1844 = vmatprep.subr.mxu0 0.0
    %1845 = vmatpush1.msra.mxu0 0.0
    %1846 = vmatprep.subr.mxu0 0.0
    %1847 = vmatpush1.msra.mxu0 %v726
    %1848 = vmatprep.subr.mxu0 0.0
    %1849 = vmatpush1.msra.mxu0 %v721
    %1850 = vmatprep.subr.mxu0 0.0
    %1851 = vmatpush2.msra.mxu0 0.0
    %1852 = vmatprep.subr.mxu0 0.0
    %1853 = vmatpush2.msra.mxu0 0.0
    %1854 = vmatprep.subr.mxu0 0.0
    %1855 = vmatpush2.msra.mxu0 0.0
    %1856 = vmatprep.subr.mxu0 0.0
    %1857 = vmatpush2.msra.mxu0 0.0
    %1858 = vmatprep.subr.mxu0 0.0
    %1859 = vmatpush2.msra.mxu0 0.0
    %1860 = vmatprep.subr.mxu0 0.0
    %1861 = vmatpush2.msra.mxu0 0.0
    %1862 = vmatprep.subr.mxu0 0.0
    %1863 = vmatpush2.msra.mxu0 0.0
    %1864 = vmatprep.subr.mxu0 0.0
    %1865 = vmatpush2.msra.mxu0 0.0
    %1866 = vmatprep.subr.mxu0 0.0
    %1867 = vmatpush2.msra.mxu0 0.0
    %1868 = vmatprep.subr.mxu0 0.0
    %1869 = vmatpush2.msra.mxu0 0.0
    %1870 = vmatprep.subr.mxu0 0.0
    %1871 = vmatpush2.msra.mxu0 0.0
    %1872 = vmatprep.subr.mxu0 0.0
    %1873 = vmatpush2.msra.mxu0 0.0
    %1874 = vmatprep.subr.mxu0 0.0
    %1875 = vmatpush2.msra.mxu0 0.0
    %1876 = vmatprep.subr.mxu0 0.0
    %1877 = vmatpush2.msra.mxu0 0.0
    %1878 = vmatprep.subr.mxu0 0.0
    %1879 = vmatpush2.msra.mxu0 0.0
    %1880 = vmatprep.subr.mxu0 0.0
    %1881 = vmatpush2.msra.mxu0 0.0
    %1882 = vmatprep.mubr.f32.mxu0 0.0
    %1883 = vmatmul.mubr.f32.gmra.mxu0 %v1813
    %v1884 = vpop.f32.mrf.mxu0
    %v1885 = vadd.f32 0.0, %v1884
    %v1886 = vpop.f32.mrf.mxu0
    %1887 = vmatprep.mubr.f32.mxu0 0.0
    %1888 = vmatmul.mubr.f32.gmra.mxu0 %v1816
    %v1889 = vpop.f32.mrf.mxu0
    %v1890 = vadd.f32 0.0, %v1889
    %v1891 = vpop.f32.mrf.mxu0
    %1892 = vdwg.mxu0
    %v1893 = vrcp.pop %v1808
    %v1894 = vrcp.pop %v1811
    %v1895 = vmul.f32 %v1885, %v1893
    %v1896 = vmul.f32 %v1890, %v1894
    %v1897 = vld [vmem:[#allocation13] sm:$0x1f]
    %v1899 = vlaneseq
    %v1900 = vshrl.u32 %v1899, 7
    %v1901 = vsub.s32 0, %v1900
    %v1902 = vrot.slane %v1897, %v1901
    %v1903 = vlaneseq
    %v1904 = vshrl.u32 %v1903, 7
    %v1905 = vsub.s32 1, %v1904
    %v1906 = vrot.slane %v1897, %v1905
    %v1907 = vlaneseq
    %v1908 = vshrl.u32 %v1907, 7
    %v1909 = vsub.s32 2, %v1908
    %v1910 = vrot.slane %v1897, %v1909
    %v1911 = vlaneseq
    %v1912 = vshrl.u32 %v1911, 7
    %v1913 = vsub.s32 3, %v1912
    %v1914 = vrot.slane %v1897, %v1913
    %v1915 = vlaneseq
    %v1916 = vshrl.u32 %v1915, 7
    %v1917 = vsub.s32 4, %v1916
    %v1918 = vrot.slane %v1897, %v1917
    %v1924 = vadd.f32 %v1383, %v1902
    %v1925 = vadd.f32 %v1511, %v1906
    %v1926 = vadd.f32 %v1639, %v1910
    %v1927 = vadd.f32 %v1767, %v1914
    %v1928 = vadd.f32 %v1895, %v1918
    %v1929 = vadd.f32 %v1384, %v1902
    %v1930 = vadd.f32 %v1512, %v1906
    %v1931 = vadd.f32 %v1640, %v1910
    %v1932 = vadd.f32 %v1768, %v1914
    %v1933 = vadd.f32 %v1896, %v1918
    %v1934 = vadd.f32 %v1924, %v1929
    %v1935 = vrot.slane %v1934, 4
    %v1936 = vadd.f32 %v1934, %v1935
    %v1937 = vrot.slane %v1936, 2
    %v1938 = vadd.f32 %v1936, %v1937
    %v1939 = vrot.slane %v1938, 1
    %v1940 = vadd.f32 %v1938, %v1939
    %v1941 = vadd.f32 %v1925, %v1930
    %v1942 = vrot.slane %v1941, 4
    %v1943 = vadd.f32 %v1941, %v1942
    %v1944 = vrot.slane %v1943, 2
    %v1945 = vadd.f32 %v1943, %v1944
    %v1946 = vrot.slane %v1945, 1
    %v1947 = vadd.f32 %v1945, %v1946
    %v1948 = vadd.f32 %v1926, %v1931
    %v1949 = vrot.slane %v1948, 4
    %v1950 = vadd.f32 %v1948, %v1949
    %v1951 = vrot.slane %v1950, 2
    %v1952 = vadd.f32 %v1950, %v1951
    %v1953 = vrot.slane %v1952, 1
    %v1954 = vadd.f32 %v1952, %v1953
    %v1955 = vadd.f32 %v1927, %v1932
    %v1956 = vrot.slane %v1955, 4
    %v1957 = vadd.f32 %v1955, %v1956
    %v1958 = vrot.slane %v1957, 2
    %v1959 = vadd.f32 %v1957, %v1958
    %v1960 = vrot.slane %v1959, 1
    %v1961 = vadd.f32 %v1959, %v1960
    %v1962 = vadd.f32 %v1928, %v1933
    %v1963 = vrot.slane %v1962, 4
    %v1964 = vadd.f32 %v1962, %v1963
    %v1965 = vrot.slane %v1964, 2
    %v1966 = vadd.f32 %v1964, %v1965
    %v1967 = vrot.slane %v1966, 1
    %v1968 = vadd.f32 %v1966, %v1967
    %v1969 = vrcp.pop 16.0
    %v1970 = vmul.f32 %v1940, %v1969
    %v1971 = vmul.f32 %v1947, %v1969
    %v1972 = vmul.f32 %v1954, %v1969
    %v1973 = vmul.f32 %v1961, %v1969
    %v1974 = vmul.f32 %v1968, %v1969
    %v1975 = vsub.f32 %v1924, %v1970
    %v1976 = vsub.f32 %v1925, %v1971
    %v1977 = vsub.f32 %v1926, %v1972
    %v1978 = vsub.f32 %v1927, %v1973
    %v1979 = vsub.f32 %v1928, %v1974
    %v1980 = vsub.f32 %v1929, %v1970
    %v1981 = vsub.f32 %v1930, %v1971
    %v1982 = vsub.f32 %v1931, %v1972
    %v1983 = vsub.f32 %v1932, %v1973
    %v1984 = vsub.f32 %v1933, %v1974
    %v1985 = vmul.f32 %v1975, %v1975
    %v1986 = vmul.f32 %v1976, %v1976
    %v1987 = vmul.f32 %v1977, %v1977
    %v1988 = vmul.f32 %v1978, %v1978
    %v1989 = vmul.f32 %v1979, %v1979
    %v1990 = vmul.f32 %v1980, %v1980
    %v1991 = vmul.f32 %v1981, %v1981
    %v1992 = vmul.f32 %v1982, %v1982
    %v1993 = vmul.f32 %v1983, %v1983
    %v1994 = vmul.f32 %v1984, %v1984
    %v1995 = vadd.f32 %v1985, %v1990
    %v1996 = vrot.slane %v1995, 4
    %v1997 = vadd.f32 %v1995, %v1996
    %v1998 = vrot.slane %v1997, 2
    %v1999 = vadd.f32 %v1997, %v1998
    %v2000 = vrot.slane %v1999, 1
    %v2001 = vadd.f32 %v1999, %v2000
    %v2002 = vadd.f32 %v1986, %v1991
    %v2003 = vrot.slane %v2002, 4
    %v2004 = vadd.f32 %v2002, %v2003
    %v2005 = vrot.slane %v2004, 2
    %v2006 = vadd.f32 %v2004, %v2005
    %v2007 = vrot.slane %v2006, 1
    %v2008 = vadd.f32 %v2006, %v2007
    %v2009 = vadd.f32 %v1987, %v1992
    %v2010 = vrot.slane %v2009, 4
    %v2011 = vadd.f32 %v2009, %v2010
    %v2012 = vrot.slane %v2011, 2
    %v2013 = vadd.f32 %v2011, %v2012
    %v2014 = vrot.slane %v2013, 1
    %v2015 = vadd.f32 %v2013, %v2014
    %v2016 = vadd.f32 %v1988, %v1993
    %v2017 = vrot.slane %v2016, 4
    %v2018 = vadd.f32 %v2016, %v2017
    %v2019 = vrot.slane %v2018, 2
    %v2020 = vadd.f32 %v2018, %v2019
    %v2021 = vrot.slane %v2020, 1
    %v2022 = vadd.f32 %v2020, %v2021
    %v2023 = vadd.f32 %v1989, %v1994
    %v2024 = vrot.slane %v2023, 4
    %v2025 = vadd.f32 %v2023, %v2024
    %v2026 = vrot.slane %v2025, 2
    %v2027 = vadd.f32 %v2025, %v2026
    %v2028 = vrot.slane %v2027, 1
    %v2029 = vadd.f32 %v2027, %v2028
    %v2030 = vmul.f32 %v2001, %v1969
    %v2031 = vmul.f32 %v2008, %v1969
    %v2032 = vmul.f32 %v2015, %v1969
    %v2033 = vmul.f32 %v2022, %v1969
    %v2034 = vmul.f32 %v2029, %v1969
    %v2035 = vadd.f32 %v2030, 1e-05
    %v2036 = vadd.f32 %v2031, 1e-05
    %v2037 = vadd.f32 %v2032, 1e-05
    %v2038 = vadd.f32 %v2033, 1e-05
    %v2039 = vadd.f32 %v2034, 1e-05
    %v2040 = vrsqrt.pop %v2035
    %v2041 = vrsqrt.pop %v2036
    %v2042 = vrsqrt.pop %v2037
    %v2043 = vrsqrt.pop %v2038
    %v2044 = vrsqrt.pop %v2039
    %v2045 = vmul.f32 %v1975, %v2040
    %v2046 = vmul.f32 %v1976, %v2041
    %v2047 = vmul.f32 %v1977, %v2042
    %v2048 = vmul.f32 %v1978, %v2043
    %v2049 = vmul.f32 %v1979, %v2044
    %v2050 = vmul.f32 %v1980, %v2040
    %v2051 = vmul.f32 %v1981, %v2041
    %v2052 = vmul.f32 %v1982, %v2042
    %v2053 = vmul.f32 %v1983, %v2043
    %v2054 = vmul.f32 %v1984, %v2044
    %v2055 = vld [vmem:[#allocation37] sm:$0x1f]
    %v2057 = vlaneseq
    %v2058 = vshrl.u32 %v2057, 7
    %v2059 = vsub.s32 0, %v2058
    %v2060 = vrot.slane %v2055, %v2059
    %v2061 = vlaneseq
    %v2062 = vshrl.u32 %v2061, 7
    %v2063 = vsub.s32 1, %v2062
    %v2064 = vrot.slane %v2055, %v2063
    %v2065 = vlaneseq
    %v2066 = vshrl.u32 %v2065, 7
    %v2067 = vsub.s32 2, %v2066
    %v2068 = vrot.slane %v2055, %v2067
    %v2069 = vlaneseq
    %v2070 = vshrl.u32 %v2069, 7
    %v2071 = vsub.s32 3, %v2070
    %v2072 = vrot.slane %v2055, %v2071
    %v2073 = vlaneseq
    %v2074 = vshrl.u32 %v2073, 7
    %v2075 = vsub.s32 4, %v2074
    %v2076 = vrot.slane %v2055, %v2075
    %v2082 = vmul.f32 %v2045, %v2060
    %v2083 = vmul.f32 %v2046, %v2064
    %v2084 = vmul.f32 %v2047, %v2068
    %v2085 = vmul.f32 %v2048, %v2072
    %v2086 = vmul.f32 %v2049, %v2076
    %v2087 = vmul.f32 %v2050, %v2060
    %v2088 = vmul.f32 %v2051, %v2064
    %v2089 = vmul.f32 %v2052, %v2068
    %v2090 = vmul.f32 %v2053, %v2072
    %v2091 = vmul.f32 %v2054, %v2076
    %v2092 = vld [vmem:[#allocation39] sm:$0x1f]
    %v2094 = vlaneseq
    %v2095 = vshrl.u32 %v2094, 7
    %v2096 = vsub.s32 0, %v2095
    %v2097 = vrot.slane %v2092, %v2096
    %v2098 = vlaneseq
    %v2099 = vshrl.u32 %v2098, 7
    %v2100 = vsub.s32 1, %v2099
    %v2101 = vrot.slane %v2092, %v2100
    %v2102 = vlaneseq
    %v2103 = vshrl.u32 %v2102, 7
    %v2104 = vsub.s32 2, %v2103
    %v2105 = vrot.slane %v2092, %v2104
    %v2106 = vlaneseq
    %v2107 = vshrl.u32 %v2106, 7
    %v2108 = vsub.s32 3, %v2107
    %v2109 = vrot.slane %v2092, %v2108
    %v2110 = vlaneseq
    %v2111 = vshrl.u32 %v2110, 7
    %v2112 = vsub.s32 4, %v2111
    %v2113 = vrot.slane %v2092, %v2112
    %v2119 = vadd.f32 %v2082, %v2097
    %v2120 = vadd.f32 %v2083, %v2101
    %v2121 = vadd.f32 %v2084, %v2105
    %v2122 = vadd.f32 %v2085, %v2109
    %v2123 = vadd.f32 %v2086, %v2113
    %v2124 = vadd.f32 %v2087, %v2097
    %v2125 = vadd.f32 %v2088, %v2101
    %v2126 = vadd.f32 %v2089, %v2105
    %v2127 = vadd.f32 %v2090, %v2109
    %v2128 = vadd.f32 %v2091, %v2113
    %v2129 = vmax.f32 %v2119, 0.0
    %v2130 = vmax.f32 %v2120, 0.0
    %v2131 = vmax.f32 %v2121, 0.0
    %v2132 = vmax.f32 %v2122, 0.0
    %v2133 = vmax.f32 %v2123, 0.0
    %v2134 = vmax.f32 %v2124, 0.0
    %v2135 = vmax.f32 %v2125, 0.0
    %v2136 = vmax.f32 %v2126, 0.0
    %v2137 = vmax.f32 %v2127, 0.0
    %v2138 = vmax.f32 %v2128, 0.0
    %v2139 = vld [vmem:[#allocation16] sm:$0xff]
    %v2140 = vld [vmem:[#allocation16 + $0x8] sm:$0xff]
    %v2141 = vld [vmem:[#allocation16 + $0x10] sm:$0xff]
    %v2142 = vld [vmem:[#allocation16 + $0x18] sm:$0xff]
    %v2143 = vld [vmem:[#allocation16 + $0x20] sm:$0xff]
    %v2144 = vld [vmem:[#allocation16 + $0x28] sm:$0xff]
    %v2145 = vld [vmem:[#allocation16 + $0x30] sm:$0xff]
    %v2146 = vld [vmem:[#allocation16 + $0x38] sm:$0xff]
    %v2147 = vld [vmem:[#allocation16 + $0x40] sm:$0xff]
    %v2148 = vld [vmem:[#allocation16 + $0x48] sm:$0xff]
    %v2149 = vld [vmem:[#allocation16 + $0x50] sm:$0xff]
    %v2150 = vld [vmem:[#allocation16 + $0x58] sm:$0xff]
    %v2151 = vld [vmem:[#allocation16 + $0x60] sm:$0xff]
    %v2152 = vld [vmem:[#allocation16 + $0x68] sm:$0xff]
    %v2153 = vld [vmem:[#allocation16 + $0x70] sm:$0xff]
    %v2154 = vld [vmem:[#allocation16 + $0x78] sm:$0xff]
    %v2155 = vld [vmem:[#allocation16 + $0x80] sm:$0xff]
    %v2156 = vld [vmem:[#allocation16 + $0x88] sm:$0xff]
    %v2157 = vld [vmem:[#allocation16 + $0x90] sm:$0xff]
    %v2158 = vld [vmem:[#allocation16 + $0x98] sm:$0xff]
    %v2159 = vld [vmem:[#allocation16 + $0xa0] sm:$0xff]
    %v2160 = vld [vmem:[#allocation16 + $0xa8] sm:$0xff]
    %v2161 = vld [vmem:[#allocation16 + $0xb0] sm:$0xff]
    %v2162 = vld [vmem:[#allocation16 + $0xb8] sm:$0xff]
    %v2163 = vld [vmem:[#allocation16 + $0xc0] sm:$0xff]
    %v2164 = vld [vmem:[#allocation16 + $0xc8] sm:$0xff]
    %v2165 = vld [vmem:[#allocation16 + $0xd0] sm:$0xff]
    %v2166 = vld [vmem:[#allocation16 + $0xd8] sm:$0xff]
    %v2167 = vld [vmem:[#allocation16 + $0xe0] sm:$0xff]
    %v2168 = vld [vmem:[#allocation16 + $0xe8] sm:$0xff]
    %v2169 = vld [vmem:[#allocation16 + $0xf0] sm:$0xff]
    %v2170 = vld [vmem:[#allocation16 + $0xf8] sm:$0xff]
    %v2171 = vld [vmem:[#allocation16 + $0x100] sm:$0xff]
    %v2172 = vld [vmem:[#allocation16 + $0x108] sm:$0xff]
    %v2173 = vld [vmem:[#allocation16 + $0x110] sm:$0xff]
    %v2174 = vld [vmem:[#allocation16 + $0x118] sm:$0xff]
    %v2175 = vld [vmem:[#allocation16 + $0x120] sm:$0xff]
    %v2176 = vld [vmem:[#allocation16 + $0x128] sm:$0xff]
    %v2177 = vld [vmem:[#allocation16 + $0x130] sm:$0xff]
    %v2178 = vld [vmem:[#allocation16 + $0x138] sm:$0xff]
    %v2179 = vld [vmem:[#allocation16 + $0x140] sm:$0xff]
    %v2180 = vld [vmem:[#allocation16 + $0x148] sm:$0xff]
    %v2181 = vld [vmem:[#allocation16 + $0x150] sm:$0xff]
    %v2182 = vld [vmem:[#allocation16 + $0x158] sm:$0xff]
    %v2183 = vld [vmem:[#allocation16 + $0x160] sm:$0xff]
    %v2184 = vld [vmem:[#allocation16 + $0x168] sm:$0xff]
    %v2185 = vld [vmem:[#allocation16 + $0x170] sm:$0xff]
    %v2186 = vld [vmem:[#allocation16 + $0x178] sm:$0xff]
    %v2187 = vld [vmem:[#allocation16 + $0x180] sm:$0xff]
    %v2188 = vld [vmem:[#allocation16 + $0x188] sm:$0xff]
    %v2189 = vld [vmem:[#allocation16 + $0x190] sm:$0xff]
    %v2190 = vld [vmem:[#allocation16 + $0x198] sm:$0xff]
    %v2191 = vld [vmem:[#allocation16 + $0x1a0] sm:$0xff]
    %v2192 = vld [vmem:[#allocation16 + $0x1a8] sm:$0xff]
    %v2193 = vld [vmem:[#allocation16 + $0x1b0] sm:$0xff]
    %v2194 = vld [vmem:[#allocation16 + $0x1b8] sm:$0xff]
    %v2195 = vld [vmem:[#allocation16 + $0x1c0] sm:$0xff]
    %v2196 = vld [vmem:[#allocation16 + $0x1c8] sm:$0xff]
    %v2197 = vld [vmem:[#allocation16 + $0x1d0] sm:$0xff]
    %v2198 = vld [vmem:[#allocation16 + $0x1d8] sm:$0xff]
    %v2199 = vld [vmem:[#allocation16 + $0x1e0] sm:$0xff]
    %v2200 = vld [vmem:[#allocation16 + $0x1e8] sm:$0xff]
    %v2201 = vld [vmem:[#allocation16 + $0x1f0] sm:$0xff]
    %v2202 = vld [vmem:[#allocation16 + $0x1f8] sm:$0xff]
    %v2203 = vld [vmem:[#allocation16 + $0x200] sm:$0xff]
    %v2204 = vld [vmem:[#allocation16 + $0x208] sm:$0xff]
    %v2205 = vld [vmem:[#allocation16 + $0x210] sm:$0xff]
    %v2206 = vld [vmem:[#allocation16 + $0x218] sm:$0xff]
    %v2207 = vld [vmem:[#allocation16 + $0x220] sm:$0xff]
    %v2208 = vld [vmem:[#allocation16 + $0x228] sm:$0xff]
    %v2209 = vld [vmem:[#allocation16 + $0x230] sm:$0xff]
    %v2210 = vld [vmem:[#allocation16 + $0x238] sm:$0xff]
    %v2211 = vld [vmem:[#allocation16 + $0x240] sm:$0xff]
    %v2212 = vld [vmem:[#allocation16 + $0x248] sm:$0xff]
    %v2213 = vld [vmem:[#allocation16 + $0x250] sm:$0xff]
    %v2214 = vld [vmem:[#allocation16 + $0x258] sm:$0xff]
    %v2215 = vld [vmem:[#allocation16 + $0x260] sm:$0xff]
    %v2216 = vld [vmem:[#allocation16 + $0x268] sm:$0xff]
    %v2217 = vld [vmem:[#allocation16 + $0x270] sm:$0xff]
    %v2218 = vld [vmem:[#allocation16 + $0x278] sm:$0xff]
    %v2219 = vld [vmem:[#allocation16 + $0x280] sm:$0xff]
    %v2220 = vld [vmem:[#allocation16 + $0x288] sm:$0xff]
    %v2221 = vld [vmem:[#allocation16 + $0x290] sm:$0xff]
    %v2222 = vld [vmem:[#allocation16 + $0x298] sm:$0xff]
    %v2223 = vld [vmem:[#allocation16 + $0x2a0] sm:$0xff]
    %v2224 = vld [vmem:[#allocation16 + $0x2a8] sm:$0xff]
    %v2225 = vld [vmem:[#allocation16 + $0x2b0] sm:$0xff]
    %v2226 = vld [vmem:[#allocation16 + $0x2b8] sm:$0xff]
    %v2227 = vld [vmem:[#allocation16 + $0x2c0] sm:$0xff]
    %v2228 = vld [vmem:[#allocation16 + $0x2c8] sm:$0xff]
    %v2229 = vld [vmem:[#allocation16 + $0x2d0] sm:$0xff]
    %v2230 = vld [vmem:[#allocation16 + $0x2d8] sm:$0xff]
    %v2231 = vld [vmem:[#allocation16 + $0x2e0] sm:$0xff]
    %v2232 = vld [vmem:[#allocation16 + $0x2e8] sm:$0xff]
    %v2233 = vld [vmem:[#allocation16 + $0x2f0] sm:$0xff]
    %v2234 = vld [vmem:[#allocation16 + $0x2f8] sm:$0xff]
    %v2235 = vld [vmem:[#allocation16 + $0x300] sm:$0xff]
    %v2236 = vld [vmem:[#allocation16 + $0x308] sm:$0xff]
    %v2237 = vld [vmem:[#allocation16 + $0x310] sm:$0xff]
    %v2238 = vld [vmem:[#allocation16 + $0x318] sm:$0xff]
    %v2239 = vld [vmem:[#allocation16 + $0x320] sm:$0xff]
    %v2240 = vld [vmem:[#allocation16 + $0x328] sm:$0xff]
    %v2241 = vld [vmem:[#allocation16 + $0x330] sm:$0xff]
    %v2242 = vld [vmem:[#allocation16 + $0x338] sm:$0xff]
    %v2243 = vld [vmem:[#allocation16 + $0x340] sm:$0xff]
    %v2244 = vld [vmem:[#allocation16 + $0x348] sm:$0xff]
    %v2245 = vld [vmem:[#allocation16 + $0x350] sm:$0xff]
    %v2246 = vld [vmem:[#allocation16 + $0x358] sm:$0xff]
    %v2247 = vld [vmem:[#allocation16 + $0x360] sm:$0xff]
    %v2248 = vld [vmem:[#allocation16 + $0x368] sm:$0xff]
    %v2249 = vld [vmem:[#allocation16 + $0x370] sm:$0xff]
    %v2250 = vld [vmem:[#allocation16 + $0x378] sm:$0xff]
    %v2251 = vld [vmem:[#allocation16 + $0x380] sm:$0xff]
    %v2252 = vld [vmem:[#allocation16 + $0x388] sm:$0xff]
    %v2253 = vld [vmem:[#allocation16 + $0x390] sm:$0xff]
    %v2254 = vld [vmem:[#allocation16 + $0x398] sm:$0xff]
    %v2255 = vld [vmem:[#allocation16 + $0x3a0] sm:$0xff]
    %v2256 = vld [vmem:[#allocation16 + $0x3a8] sm:$0xff]
    %v2257 = vld [vmem:[#allocation16 + $0x3b0] sm:$0xff]
    %v2258 = vld [vmem:[#allocation16 + $0x3b8] sm:$0xff]
    %v2259 = vld [vmem:[#allocation16 + $0x3c0] sm:$0xff]
    %v2260 = vld [vmem:[#allocation16 + $0x3c8] sm:$0xff]
    %v2261 = vld [vmem:[#allocation16 + $0x3d0] sm:$0xff]
    %v2262 = vld [vmem:[#allocation16 + $0x3d8] sm:$0xff]
    %v2263 = vld [vmem:[#allocation16 + $0x3e0] sm:$0xff]
    %v2264 = vld [vmem:[#allocation16 + $0x3e8] sm:$0xff]
    %v2265 = vld [vmem:[#allocation16 + $0x3f0] sm:$0xff]
    %v2266 = vld [vmem:[#allocation16 + $0x3f8] sm:$0xff]
    %v2267 = vld [vmem:[#allocation16 + $0x400] sm:$0xff]
    %v2268 = vld [vmem:[#allocation16 + $0x408] sm:$0xff]
    %v2269 = vld [vmem:[#allocation16 + $0x410] sm:$0xff]
    %v2270 = vld [vmem:[#allocation16 + $0x418] sm:$0xff]
    %v2271 = vld [vmem:[#allocation16 + $0x420] sm:$0xff]
    %v2272 = vld [vmem:[#allocation16 + $0x428] sm:$0xff]
    %v2273 = vld [vmem:[#allocation16 + $0x430] sm:$0xff]
    %v2274 = vld [vmem:[#allocation16 + $0x438] sm:$0xff]
    %v2275 = vld [vmem:[#allocation16 + $0x440] sm:$0xff]
    %v2276 = vld [vmem:[#allocation16 + $0x448] sm:$0xff]
    %v2277 = vld [vmem:[#allocation16 + $0x450] sm:$0xff]
    %v2278 = vld [vmem:[#allocation16 + $0x458] sm:$0xff]
    %v2279 = vld [vmem:[#allocation16 + $0x460] sm:$0xff]
    %v2280 = vld [vmem:[#allocation16 + $0x468] sm:$0xff]
    %v2281 = vld [vmem:[#allocation16 + $0x470] sm:$0xff]
    %v2282 = vld [vmem:[#allocation16 + $0x478] sm:$0xff]
    %v2283 = vld [vmem:[#allocation16 + $0x480] sm:$0xff]
    %v2284 = vld [vmem:[#allocation16 + $0x488] sm:$0xff]
    %v2285 = vld [vmem:[#allocation16 + $0x490] sm:$0xff]
    %v2286 = vld [vmem:[#allocation16 + $0x498] sm:$0xff]
    %v2287 = vld [vmem:[#allocation16 + $0x4a0] sm:$0xff]
    %v2288 = vld [vmem:[#allocation16 + $0x4a8] sm:$0xff]
    %v2289 = vld [vmem:[#allocation16 + $0x4b0] sm:$0xff]
    %v2290 = vld [vmem:[#allocation16 + $0x4b8] sm:$0xff]
    %v2291 = vld [vmem:[#allocation16 + $0x4c0] sm:$0xff]
    %v2292 = vld [vmem:[#allocation16 + $0x4c8] sm:$0xff]
    %v2293 = vld [vmem:[#allocation16 + $0x4d0] sm:$0xff]
    %v2294 = vld [vmem:[#allocation16 + $0x4d8] sm:$0xff]
    %v2295 = vld [vmem:[#allocation16 + $0x4e0] sm:$0xff]
    %v2296 = vld [vmem:[#allocation16 + $0x4e8] sm:$0xff]
    %v2297 = vld [vmem:[#allocation16 + $0x4f0] sm:$0xff]
    %v2298 = vld [vmem:[#allocation16 + $0x4f8] sm:$0xff]
    %v2299 = vld [vmem:[#allocation16 + $0x500] sm:$0xff]
    %v2300 = vld [vmem:[#allocation16 + $0x508] sm:$0xff]
    %v2301 = vld [vmem:[#allocation16 + $0x510] sm:$0xff]
    %v2302 = vld [vmem:[#allocation16 + $0x518] sm:$0xff]
    %v2303 = vld [vmem:[#allocation16 + $0x520] sm:$0xff]
    %v2304 = vld [vmem:[#allocation16 + $0x528] sm:$0xff]
    %v2305 = vld [vmem:[#allocation16 + $0x530] sm:$0xff]
    %v2306 = vld [vmem:[#allocation16 + $0x538] sm:$0xff]
    %v2307 = vld [vmem:[#allocation16 + $0x540] sm:$0xff]
    %v2308 = vld [vmem:[#allocation16 + $0x548] sm:$0xff]
    %v2309 = vld [vmem:[#allocation16 + $0x550] sm:$0xff]
    %v2310 = vld [vmem:[#allocation16 + $0x558] sm:$0xff]
    %v2311 = vld [vmem:[#allocation16 + $0x560] sm:$0xff]
    %v2312 = vld [vmem:[#allocation16 + $0x568] sm:$0xff]
    %v2313 = vld [vmem:[#allocation16 + $0x570] sm:$0xff]
    %v2314 = vld [vmem:[#allocation16 + $0x578] sm:$0xff]
    %v2315 = vld [vmem:[#allocation16 + $0x580] sm:$0xff]
    %v2316 = vld [vmem:[#allocation16 + $0x588] sm:$0xff]
    %v2317 = vld [vmem:[#allocation16 + $0x590] sm:$0xff]
    %v2318 = vld [vmem:[#allocation16 + $0x598] sm:$0xff]
    %v2319 = vld [vmem:[#allocation16 + $0x5a0] sm:$0xff]
    %v2320 = vld [vmem:[#allocation16 + $0x5a8] sm:$0xff]
    %v2321 = vld [vmem:[#allocation16 + $0x5b0] sm:$0xff]
    %v2322 = vld [vmem:[#allocation16 + $0x5b8] sm:$0xff]
    %v2323 = vld [vmem:[#allocation16 + $0x5c0] sm:$0xff]
    %v2324 = vld [vmem:[#allocation16 + $0x5c8] sm:$0xff]
    %v2325 = vld [vmem:[#allocation16 + $0x5d0] sm:$0xff]
    %v2326 = vld [vmem:[#allocation16 + $0x5d8] sm:$0xff]
    %v2327 = vld [vmem:[#allocation16 + $0x5e0] sm:$0xff]
    %v2328 = vld [vmem:[#allocation16 + $0x5e8] sm:$0xff]
    %v2329 = vld [vmem:[#allocation16 + $0x5f0] sm:$0xff]
    %v2330 = vld [vmem:[#allocation16 + $0x5f8] sm:$0xff]
    %v2331 = vld [vmem:[#allocation16 + $0x600] sm:$0xff]
    %v2332 = vld [vmem:[#allocation16 + $0x608] sm:$0xff]
    %v2333 = vld [vmem:[#allocation16 + $0x610] sm:$0xff]
    %v2334 = vld [vmem:[#allocation16 + $0x618] sm:$0xff]
    %v2335 = vld [vmem:[#allocation16 + $0x620] sm:$0xff]
    %v2336 = vld [vmem:[#allocation16 + $0x628] sm:$0xff]
    %v2337 = vld [vmem:[#allocation16 + $0x630] sm:$0xff]
    %v2338 = vld [vmem:[#allocation16 + $0x638] sm:$0xff]
    %v2339 = vld [vmem:[#allocation16 + $0x640] sm:$0xff]
    %v2340 = vld [vmem:[#allocation16 + $0x648] sm:$0xff]
    %v2341 = vld [vmem:[#allocation16 + $0x650] sm:$0xff]
    %v2342 = vld [vmem:[#allocation16 + $0x658] sm:$0xff]
    %v2343 = vld [vmem:[#allocation16 + $0x660] sm:$0xff]
    %v2344 = vld [vmem:[#allocation16 + $0x668] sm:$0xff]
    %v2345 = vld [vmem:[#allocation16 + $0x670] sm:$0xff]
    %v2346 = vld [vmem:[#allocation16 + $0x678] sm:$0xff]
    %v2347 = vld [vmem:[#allocation16 + $0x680] sm:$0xff]
    %v2348 = vld [vmem:[#allocation16 + $0x688] sm:$0xff]
    %v2349 = vld [vmem:[#allocation16 + $0x690] sm:$0xff]
    %v2350 = vld [vmem:[#allocation16 + $0x698] sm:$0xff]
    %v2351 = vld [vmem:[#allocation16 + $0x6a0] sm:$0xff]
    %v2352 = vld [vmem:[#allocation16 + $0x6a8] sm:$0xff]
    %v2353 = vld [vmem:[#allocation16 + $0x6b0] sm:$0xff]
    %v2354 = vld [vmem:[#allocation16 + $0x6b8] sm:$0xff]
    %v2355 = vld [vmem:[#allocation16 + $0x6c0] sm:$0xff]
    %v2356 = vld [vmem:[#allocation16 + $0x6c8] sm:$0xff]
    %v2357 = vld [vmem:[#allocation16 + $0x6d0] sm:$0xff]
    %v2358 = vld [vmem:[#allocation16 + $0x6d8] sm:$0xff]
    %v2359 = vld [vmem:[#allocation16 + $0x6e0] sm:$0xff]
    %v2360 = vld [vmem:[#allocation16 + $0x6e8] sm:$0xff]
    %v2361 = vld [vmem:[#allocation16 + $0x6f0] sm:$0xff]
    %v2362 = vld [vmem:[#allocation16 + $0x6f8] sm:$0xff]
    %v2363 = vld [vmem:[#allocation16 + $0x700] sm:$0xff]
    %v2364 = vld [vmem:[#allocation16 + $0x708] sm:$0xff]
    %v2365 = vld [vmem:[#allocation16 + $0x710] sm:$0xff]
    %v2366 = vld [vmem:[#allocation16 + $0x718] sm:$0xff]
    %v2367 = vld [vmem:[#allocation16 + $0x720] sm:$0xff]
    %v2368 = vld [vmem:[#allocation16 + $0x728] sm:$0xff]
    %v2369 = vld [vmem:[#allocation16 + $0x730] sm:$0xff]
    %v2370 = vld [vmem:[#allocation16 + $0x738] sm:$0xff]
    %v2371 = vld [vmem:[#allocation16 + $0x740] sm:$0xff]
    %v2372 = vld [vmem:[#allocation16 + $0x748] sm:$0xff]
    %v2373 = vld [vmem:[#allocation16 + $0x750] sm:$0xff]
    %v2374 = vld [vmem:[#allocation16 + $0x758] sm:$0xff]
    %v2375 = vld [vmem:[#allocation16 + $0x760] sm:$0xff]
    %v2376 = vld [vmem:[#allocation16 + $0x768] sm:$0xff]
    %v2377 = vld [vmem:[#allocation16 + $0x770] sm:$0xff]
    %v2378 = vld [vmem:[#allocation16 + $0x778] sm:$0xff]
    %v2379 = vld [vmem:[#allocation16 + $0x780] sm:$0xff]
    %v2380 = vld [vmem:[#allocation16 + $0x788] sm:$0xff]
    %v2381 = vld [vmem:[#allocation16 + $0x790] sm:$0xff]
    %v2382 = vld [vmem:[#allocation16 + $0x798] sm:$0xff]
    %v2383 = vld [vmem:[#allocation16 + $0x7a0] sm:$0xff]
    %v2384 = vld [vmem:[#allocation16 + $0x7a8] sm:$0xff]
    %v2385 = vld [vmem:[#allocation16 + $0x7b0] sm:$0xff]
    %v2386 = vld [vmem:[#allocation16 + $0x7b8] sm:$0xff]
    %v2387 = vld [vmem:[#allocation16 + $0x7c0] sm:$0xff]
    %v2388 = vld [vmem:[#allocation16 + $0x7c8] sm:$0xff]
    %v2389 = vld [vmem:[#allocation16 + $0x7d0] sm:$0xff]
    %v2390 = vld [vmem:[#allocation16 + $0x7d8] sm:$0xff]
    %v2391 = vld [vmem:[#allocation16 + $0x7e0] sm:$0xff]
    %v2392 = vld [vmem:[#allocation16 + $0x7e8] sm:$0xff]
    %v2393 = vld [vmem:[#allocation16 + $0x7f0] sm:$0xff]
    %v2394 = vld [vmem:[#allocation16 + $0x7f8] sm:$0xff]
    %v2395 = vld [vmem:[#allocation16 + $0x800] sm:$0xff]
    %v2396 = vld [vmem:[#allocation16 + $0x808] sm:$0xff]
    %v2397 = vld [vmem:[#allocation16 + $0x810] sm:$0xff]
    %v2398 = vld [vmem:[#allocation16 + $0x818] sm:$0xff]
    %v2399 = vld [vmem:[#allocation16 + $0x820] sm:$0xff]
    %v2400 = vld [vmem:[#allocation16 + $0x828] sm:$0xff]
    %v2401 = vld [vmem:[#allocation16 + $0x830] sm:$0xff]
    %v2402 = vld [vmem:[#allocation16 + $0x838] sm:$0xff]
    %v2403 = vld [vmem:[#allocation16 + $0x840] sm:$0xff]
    %v2404 = vld [vmem:[#allocation16 + $0x848] sm:$0xff]
    %v2405 = vld [vmem:[#allocation16 + $0x850] sm:$0xff]
    %v2406 = vld [vmem:[#allocation16 + $0x858] sm:$0xff]
    %v2407 = vld [vmem:[#allocation16 + $0x860] sm:$0xff]
    %v2408 = vld [vmem:[#allocation16 + $0x868] sm:$0xff]
    %v2409 = vld [vmem:[#allocation16 + $0x870] sm:$0xff]
    %v2410 = vld [vmem:[#allocation16 + $0x878] sm:$0xff]
    %v2411 = vld [vmem:[#allocation16 + $0x880] sm:$0xff]
    %v2412 = vld [vmem:[#allocation16 + $0x888] sm:$0xff]
    %v2413 = vld [vmem:[#allocation16 + $0x890] sm:$0xff]
    %v2414 = vld [vmem:[#allocation16 + $0x898] sm:$0xff]
    %v2415 = vld [vmem:[#allocation16 + $0x8a0] sm:$0xff]
    %v2416 = vld [vmem:[#allocation16 + $0x8a8] sm:$0xff]
    %v2417 = vld [vmem:[#allocation16 + $0x8b0] sm:$0xff]
    %v2418 = vld [vmem:[#allocation16 + $0x8b8] sm:$0xff]
    %v2419 = vld [vmem:[#allocation16 + $0x8c0] sm:$0xff]
    %v2420 = vld [vmem:[#allocation16 + $0x8c8] sm:$0xff]
    %v2421 = vld [vmem:[#allocation16 + $0x8d0] sm:$0xff]
    %v2422 = vld [vmem:[#allocation16 + $0x8d8] sm:$0xff]
    %v2423 = vld [vmem:[#allocation16 + $0x8e0] sm:$0xff]
    %v2424 = vld [vmem:[#allocation16 + $0x8e8] sm:$0xff]
    %v2425 = vld [vmem:[#allocation16 + $0x8f0] sm:$0xff]
    %v2426 = vld [vmem:[#allocation16 + $0x8f8] sm:$0xff]
    %v2427 = vld [vmem:[#allocation16 + $0x900] sm:$0xff]
    %v2428 = vld [vmem:[#allocation16 + $0x908] sm:$0xff]
    %v2429 = vld [vmem:[#allocation16 + $0x910] sm:$0xff]
    %v2430 = vld [vmem:[#allocation16 + $0x918] sm:$0xff]
    %v2431 = vld [vmem:[#allocation16 + $0x920] sm:$0xff]
    %v2432 = vld [vmem:[#allocation16 + $0x928] sm:$0xff]
    %v2433 = vld [vmem:[#allocation16 + $0x930] sm:$0xff]
    %v2434 = vld [vmem:[#allocation16 + $0x938] sm:$0xff]
    %v2435 = vld [vmem:[#allocation16 + $0x940] sm:$0xff]
    %v2436 = vld [vmem:[#allocation16 + $0x948] sm:$0xff]
    %v2437 = vld [vmem:[#allocation16 + $0x950] sm:$0xff]
    %v2438 = vld [vmem:[#allocation16 + $0x958] sm:$0xff]
    %v2439 = vld [vmem:[#allocation16 + $0x960] sm:$0xff]
    %v2440 = vld [vmem:[#allocation16 + $0x968] sm:$0xff]
    %v2441 = vld [vmem:[#allocation16 + $0x970] sm:$0xff]
    %v2442 = vld [vmem:[#allocation16 + $0x978] sm:$0xff]
    %v2443 = vld [vmem:[#allocation16 + $0x980] sm:$0xff]
    %v2444 = vld [vmem:[#allocation16 + $0x988] sm:$0xff]
    %v2445 = vld [vmem:[#allocation16 + $0x990] sm:$0xff]
    %v2446 = vld [vmem:[#allocation16 + $0x998] sm:$0xff]
    %v2447 = vld [vmem:[#allocation16 + $0x9a0] sm:$0xff]
    %v2448 = vld [vmem:[#allocation16 + $0x9a8] sm:$0xff]
    %v2449 = vld [vmem:[#allocation16 + $0x9b0] sm:$0xff]
    %v2450 = vld [vmem:[#allocation16 + $0x9b8] sm:$0xff]
    %v2451 = vld [vmem:[#allocation16 + $0x9c0] sm:$0xff]
    %v2452 = vld [vmem:[#allocation16 + $0x9c8] sm:$0xff]
    %v2453 = vld [vmem:[#allocation16 + $0x9d0] sm:$0xff]
    %v2454 = vld [vmem:[#allocation16 + $0x9d8] sm:$0xff]
    %v2455 = vld [vmem:[#allocation16 + $0x9e0] sm:$0xff]
    %v2456 = vld [vmem:[#allocation16 + $0x9e8] sm:$0xff]
    %v2457 = vld [vmem:[#allocation16 + $0x9f0] sm:$0xff]
    %v2458 = vld [vmem:[#allocation16 + $0x9f8] sm:$0xff]
    %v2459 = vld [vmem:[#allocation16 + $0xa00] sm:$0xff]
    %v2460 = vld [vmem:[#allocation16 + $0xa08] sm:$0xff]
    %v2461 = vld [vmem:[#allocation16 + $0xa10] sm:$0xff]
    %v2462 = vld [vmem:[#allocation16 + $0xa18] sm:$0xff]
    %v2463 = vld [vmem:[#allocation16 + $0xa20] sm:$0xff]
    %v2464 = vld [vmem:[#allocation16 + $0xa28] sm:$0xff]
    %v2465 = vld [vmem:[#allocation16 + $0xa30] sm:$0xff]
    %v2466 = vld [vmem:[#allocation16 + $0xa38] sm:$0xff]
    %v2467 = vld [vmem:[#allocation16 + $0xa40] sm:$0xff]
    %v2468 = vld [vmem:[#allocation16 + $0xa48] sm:$0xff]
    %v2469 = vld [vmem:[#allocation16 + $0xa50] sm:$0xff]
    %v2470 = vld [vmem:[#allocation16 + $0xa58] sm:$0xff]
    %v2471 = vld [vmem:[#allocation16 + $0xa60] sm:$0xff]
    %v2472 = vld [vmem:[#allocation16 + $0xa68] sm:$0xff]
    %v2473 = vld [vmem:[#allocation16 + $0xa70] sm:$0xff]
    %v2474 = vld [vmem:[#allocation16 + $0xa78] sm:$0xff]
    %v2475 = vld [vmem:[#allocation16 + $0xa80] sm:$0xff]
    %v2476 = vld [vmem:[#allocation16 + $0xa88] sm:$0xff]
    %v2477 = vld [vmem:[#allocation16 + $0xa90] sm:$0xff]
    %v2478 = vld [vmem:[#allocation16 + $0xa98] sm:$0xff]
    %v2479 = vld [vmem:[#allocation16 + $0xaa0] sm:$0xff]
    %v2480 = vld [vmem:[#allocation16 + $0xaa8] sm:$0xff]
    %v2481 = vld [vmem:[#allocation16 + $0xab0] sm:$0xff]
    %v2482 = vld [vmem:[#allocation16 + $0xab8] sm:$0xff]
    %v2483 = vld [vmem:[#allocation16 + $0xac0] sm:$0xff]
    %v2484 = vld [vmem:[#allocation16 + $0xac8] sm:$0xff]
    %v2485 = vld [vmem:[#allocation16 + $0xad0] sm:$0xff]
    %v2486 = vld [vmem:[#allocation16 + $0xad8] sm:$0xff]
    %v2487 = vld [vmem:[#allocation16 + $0xae0] sm:$0xff]
    %v2488 = vld [vmem:[#allocation16 + $0xae8] sm:$0xff]
    %v2489 = vld [vmem:[#allocation16 + $0xaf0] sm:$0xff]
    %v2490 = vld [vmem:[#allocation16 + $0xaf8] sm:$0xff]
    %v2491 = vld [vmem:[#allocation16 + $0xb00] sm:$0xff]
    %v2492 = vld [vmem:[#allocation16 + $0xb08] sm:$0xff]
    %v2493 = vld [vmem:[#allocation16 + $0xb10] sm:$0xff]
    %v2494 = vld [vmem:[#allocation16 + $0xb18] sm:$0xff]
    %v2495 = vld [vmem:[#allocation16 + $0xb20] sm:$0xff]
    %v2496 = vld [vmem:[#allocation16 + $0xb28] sm:$0xff]
    %v2497 = vld [vmem:[#allocation16 + $0xb30] sm:$0xff]
    %v2498 = vld [vmem:[#allocation16 + $0xb38] sm:$0xff]
    %v2499 = vld [vmem:[#allocation16 + $0xb40] sm:$0xff]
    %v2500 = vld [vmem:[#allocation16 + $0xb48] sm:$0xff]
    %v2501 = vld [vmem:[#allocation16 + $0xb50] sm:$0xff]
    %v2502 = vld [vmem:[#allocation16 + $0xb58] sm:$0xff]
    %v2503 = vld [vmem:[#allocation16 + $0xb60] sm:$0xff]
    %v2504 = vld [vmem:[#allocation16 + $0xb68] sm:$0xff]
    %v2505 = vld [vmem:[#allocation16 + $0xb70] sm:$0xff]
    %v2506 = vld [vmem:[#allocation16 + $0xb78] sm:$0xff]
    %v2507 = vld [vmem:[#allocation16 + $0xb80] sm:$0xff]
    %v2508 = vld [vmem:[#allocation16 + $0xb88] sm:$0xff]
    %v2509 = vld [vmem:[#allocation16 + $0xb90] sm:$0xff]
    %v2510 = vld [vmem:[#allocation16 + $0xb98] sm:$0xff]
    %v2511 = vld [vmem:[#allocation16 + $0xba0] sm:$0xff]
    %v2512 = vld [vmem:[#allocation16 + $0xba8] sm:$0xff]
    %v2513 = vld [vmem:[#allocation16 + $0xbb0] sm:$0xff]
    %v2514 = vld [vmem:[#allocation16 + $0xbb8] sm:$0xff]
    %v2515 = vld [vmem:[#allocation16 + $0xbc0] sm:$0xff]
    %v2516 = vld [vmem:[#allocation16 + $0xbc8] sm:$0xff]
    %v2517 = vld [vmem:[#allocation16 + $0xbd0] sm:$0xff]
    %v2518 = vld [vmem:[#allocation16 + $0xbd8] sm:$0xff]
    %v2519 = vld [vmem:[#allocation16 + $0xbe0] sm:$0xff]
    %v2520 = vld [vmem:[#allocation16 + $0xbe8] sm:$0xff]
    %v2521 = vld [vmem:[#allocation16 + $0xbf0] sm:$0xff]
    %v2522 = vld [vmem:[#allocation16 + $0xbf8] sm:$0xff]
    %v2523 = vld [vmem:[#allocation16 + $0xc00] sm:$0xff]
    %v2524 = vld [vmem:[#allocation16 + $0xc08] sm:$0xff]
    %v2525 = vld [vmem:[#allocation16 + $0xc10] sm:$0xff]
    %v2526 = vld [vmem:[#allocation16 + $0xc18] sm:$0xff]
    %v2527 = vld [vmem:[#allocation16 + $0xc20] sm:$0xff]
    %v2528 = vld [vmem:[#allocation16 + $0xc28] sm:$0xff]
    %v2529 = vld [vmem:[#allocation16 + $0xc30] sm:$0xff]
    %v2530 = vld [vmem:[#allocation16 + $0xc38] sm:$0xff]
    %v2531 = vld [vmem:[#allocation16 + $0xc40] sm:$0xff]
    %v2532 = vld [vmem:[#allocation16 + $0xc48] sm:$0xff]
    %v2533 = vld [vmem:[#allocation16 + $0xc50] sm:$0xff]
    %v2534 = vld [vmem:[#allocation16 + $0xc58] sm:$0xff]
    %v2535 = vld [vmem:[#allocation16 + $0xc60] sm:$0xff]
    %v2536 = vld [vmem:[#allocation16 + $0xc68] sm:$0xff]
    %v2537 = vld [vmem:[#allocation16 + $0xc70] sm:$0xff]
    %v2538 = vld [vmem:[#allocation16 + $0xc78] sm:$0xff]
    %2539 = vmatprep.subr.mxu0 %v2215
    %2540 = vmatpush1.msra.mxu0 %v2214
    %2541 = vmatprep.subr.mxu0 %v2210
    %2542 = vmatpush1.msra.mxu0 %v2209
    %2543 = vmatprep.subr.mxu0 %v2205
    %2544 = vmatpush1.msra.mxu0 %v2204
    %2545 = vmatprep.subr.mxu0 %v2200
    %2546 = vmatpush1.msra.mxu0 %v2199
    %2547 = vmatprep.subr.mxu0 %v2195
    %2548 = vmatpush1.msra.mxu0 %v2194
    %2549 = vmatprep.subr.mxu0 %v2190
    %2550 = vmatpush1.msra.mxu0 %v2189
    %2551 = vmatprep.subr.mxu0 %v2185
    %2552 = vmatpush1.msra.mxu0 %v2184
    %2553 = vmatprep.subr.mxu0 %v2180
    %2554 = vmatpush1.msra.mxu0 %v2179
    %2555 = vmatprep.subr.mxu0 %v2175
    %2556 = vmatpush1.msra.mxu0 %v2174
    %2557 = vmatprep.subr.mxu0 %v2170
    %2558 = vmatpush1.msra.mxu0 %v2169
    %2559 = vmatprep.subr.mxu0 %v2165
    %2560 = vmatpush1.msra.mxu0 %v2164
    %2561 = vmatprep.subr.mxu0 %v2160
    %2562 = vmatpush1.msra.mxu0 %v2159
    %2563 = vmatprep.subr.mxu0 %v2155
    %2564 = vmatpush1.msra.mxu0 %v2154
    %2565 = vmatprep.subr.mxu0 %v2150
    %2566 = vmatpush1.msra.mxu0 %v2149
    %2567 = vmatprep.subr.mxu0 %v2145
    %2568 = vmatpush1.msra.mxu0 %v2144
    %2569 = vmatprep.subr.mxu0 %v2140
    %2570 = vmatpush1.msra.mxu0 %v2139
    %2571 = vmatprep.subr.mxu0 %v2295
    %2572 = vmatpush2.msra.mxu0 %v2294
    %2573 = vmatprep.subr.mxu0 %v2290
    %2574 = vmatpush2.msra.mxu0 %v2289
    %2575 = vmatprep.subr.mxu0 %v2285
    %2576 = vmatpush2.msra.mxu0 %v2284
    %2577 = vmatprep.subr.mxu0 %v2280
    %2578 = vmatpush2.msra.mxu0 %v2279
    %2579 = vmatprep.subr.mxu0 %v2275
    %2580 = vmatpush2.msra.mxu0 %v2274
    %2581 = vmatprep.subr.mxu0 %v2270
    %2582 = vmatpush2.msra.mxu0 %v2269
    %2583 = vmatprep.subr.mxu0 %v2265
    %2584 = vmatpush2.msra.mxu0 %v2264
    %2585 = vmatprep.subr.mxu0 %v2260
    %2586 = vmatpush2.msra.mxu0 %v2259
    %2587 = vmatprep.subr.mxu0 %v2255
    %2588 = vmatpush2.msra.mxu0 %v2254
    %2589 = vmatprep.subr.mxu0 %v2250
    %2590 = vmatpush2.msra.mxu0 %v2249
    %2591 = vmatprep.subr.mxu0 %v2245
    %2592 = vmatpush2.msra.mxu0 %v2244
    %2593 = vmatprep.subr.mxu0 %v2240
    %2594 = vmatpush2.msra.mxu0 %v2239
    %2595 = vmatprep.subr.mxu0 %v2235
    %2596 = vmatpush2.msra.mxu0 %v2234
    %2597 = vmatprep.subr.mxu0 %v2230
    %2598 = vmatpush2.msra.mxu0 %v2229
    %2599 = vmatprep.subr.mxu0 %v2225
    %2600 = vmatpush2.msra.mxu0 %v2224
    %2601 = vmatprep.subr.mxu0 %v2220
    %2602 = vmatpush2.msra.mxu0 %v2219
    %2603 = vmatprep.mubr.f32.mxu0 %v2130
    %2604 = vmatmul.mubr.f32.gmra.mxu0 %v2129
    %v2605 = vpop.f32.mrf.mxu0
    %v2606 = vadd.f32 0.0, %v2605
    %v2607 = vpop.f32.mrf.mxu0
    %v2608 = vadd.f32 0.0, %v2607
    %2609 = vmatprep.mubr.f32.mxu0 %v2135
    %2610 = vmatmul.mubr.f32.gmra.mxu0 %v2134
    %v2611 = vpop.f32.mrf.mxu0
    %v2612 = vadd.f32 0.0, %v2611
    %v2613 = vpop.f32.mrf.mxu0
    %v2614 = vadd.f32 0.0, %v2613
    %2615 = vdwg.mxu0
    %2616 = vmatprep.subr.mxu0 %v2375
    %2617 = vmatpush1.msra.mxu0 %v2374
    %2618 = vmatprep.subr.mxu0 %v2370
    %2619 = vmatpush1.msra.mxu0 %v2369
    %2620 = vmatprep.subr.mxu0 %v2365
    %2621 = vmatpush1.msra.mxu0 %v2364
    %2622 = vmatprep.subr.mxu0 %v2360
    %2623 = vmatpush1.msra.mxu0 %v2359
    %2624 = vmatprep.subr.mxu0 %v2355
    %2625 = vmatpush1.msra.mxu0 %v2354
    %2626 = vmatprep.subr.mxu0 %v2350
    %2627 = vmatpush1.msra.mxu0 %v2349
    %2628 = vmatprep.subr.mxu0 %v2345
    %2629 = vmatpush1.msra.mxu0 %v2344
    %2630 = vmatprep.subr.mxu0 %v2340
    %2631 = vmatpush1.msra.mxu0 %v2339
    %2632 = vmatprep.subr.mxu0 %v2335
    %2633 = vmatpush1.msra.mxu0 %v2334
    %2634 = vmatprep.subr.mxu0 %v2330
    %2635 = vmatpush1.msra.mxu0 %v2329
    %2636 = vmatprep.subr.mxu0 %v2325
    %2637 = vmatpush1.msra.mxu0 %v2324
    %2638 = vmatprep.subr.mxu0 %v2320
    %2639 = vmatpush1.msra.mxu0 %v2319
    %2640 = vmatprep.subr.mxu0 %v2315
    %2641 = vmatpush1.msra.mxu0 %v2314
    %2642 = vmatprep.subr.mxu0 %v2310
    %2643 = vmatpush1.msra.mxu0 %v2309
    %2644 = vmatprep.subr.mxu0 %v2305
    %2645 = vmatpush1.msra.mxu0 %v2304
    %2646 = vmatprep.subr.mxu0 %v2300
    %2647 = vmatpush1.msra.mxu0 %v2299
    %2648 = vmatprep.subr.mxu0 %v2455
    %2649 = vmatpush2.msra.mxu0 %v2454
    %2650 = vmatprep.subr.mxu0 %v2450
    %2651 = vmatpush2.msra.mxu0 %v2449
    %2652 = vmatprep.subr.mxu0 %v2445
    %2653 = vmatpush2.msra.mxu0 %v2444
    %2654 = vmatprep.subr.mxu0 %v2440
    %2655 = vmatpush2.msra.mxu0 %v2439
    %2656 = vmatprep.subr.mxu0 %v2435
    %2657 = vmatpush2.msra.mxu0 %v2434
    %2658 = vmatprep.subr.mxu0 %v2430
    %2659 = vmatpush2.msra.mxu0 %v2429
    %2660 = vmatprep.subr.mxu0 %v2425
    %2661 = vmatpush2.msra.mxu0 %v2424
    %2662 = vmatprep.subr.mxu0 %v2420
    %2663 = vmatpush2.msra.mxu0 %v2419
    %2664 = vmatprep.subr.mxu0 %v2415
    %2665 = vmatpush2.msra.mxu0 %v2414
    %2666 = vmatprep.subr.mxu0 %v2410
    %2667 = vmatpush2.msra.mxu0 %v2409
    %2668 = vmatprep.subr.mxu0 %v2405
    %2669 = vmatpush2.msra.mxu0 %v2404
    %2670 = vmatprep.subr.mxu0 %v2400
    %2671 = vmatpush2.msra.mxu0 %v2399
    %2672 = vmatprep.subr.mxu0 %v2395
    %2673 = vmatpush2.msra.mxu0 %v2394
    %2674 = vmatprep.subr.mxu0 %v2390
    %2675 = vmatpush2.msra.mxu0 %v2389
    %2676 = vmatprep.subr.mxu0 %v2385
    %2677 = vmatpush2.msra.mxu0 %v2384
    %2678 = vmatprep.subr.mxu0 %v2380
    %2679 = vmatpush2.msra.mxu0 %v2379
    %2680 = vmatprep.mubr.f32.mxu0 %v2132
    %2681 = vmatmul.mubr.f32.gmra.mxu0 %v2131
    %v2682 = vpop.f32.mrf.mxu0
    %v2683 = vadd.f32 %v2606, %v2682
    %v2684 = vpop.f32.mrf.mxu0
    %v2685 = vadd.f32 %v2608, %v2684
    %2686 = vmatprep.mubr.f32.mxu0 %v2137
    %2687 = vmatmul.mubr.f32.gmra.mxu0 %v2136
    %v2688 = vpop.f32.mrf.mxu0
    %v2689 = vadd.f32 %v2612, %v2688
    %v2690 = vpop.f32.mrf.mxu0
    %v2691 = vadd.f32 %v2614, %v2690
    %2692 = vdwg.mxu0
    %2693 = vmatprep.subr.mxu0 %v2535
    %2694 = vmatpush1.msra.mxu0 %v2534
    %2695 = vmatprep.subr.mxu0 %v2530
    %2696 = vmatpush1.msra.mxu0 %v2529
    %2697 = vmatprep.subr.mxu0 %v2525
    %2698 = vmatpush1.msra.mxu0 %v2524
    %2699 = vmatprep.subr.mxu0 %v2520
    %2700 = vmatpush1.msra.mxu0 %v2519
    %2701 = vmatprep.subr.mxu0 %v2515
    %2702 = vmatpush1.msra.mxu0 %v2514
    %2703 = vmatprep.subr.mxu0 %v2510
    %2704 = vmatpush1.msra.mxu0 %v2509
    %2705 = vmatprep.subr.mxu0 %v2505
    %2706 = vmatpush1.msra.mxu0 %v2504
    %2707 = vmatprep.subr.mxu0 %v2500
    %2708 = vmatpush1.msra.mxu0 %v2499
    %2709 = vmatprep.subr.mxu0 %v2495
    %2710 = vmatpush1.msra.mxu0 %v2494
    %2711 = vmatprep.subr.mxu0 %v2490
    %2712 = vmatpush1.msra.mxu0 %v2489
    %2713 = vmatprep.subr.mxu0 %v2485
    %2714 = vmatpush1.msra.mxu0 %v2484
    %2715 = vmatprep.subr.mxu0 %v2480
    %2716 = vmatpush1.msra.mxu0 %v2479
    %2717 = vmatprep.subr.mxu0 %v2475
    %2718 = vmatpush1.msra.mxu0 %v2474
    %2719 = vmatprep.subr.mxu0 %v2470
    %2720 = vmatpush1.msra.mxu0 %v2469
    %2721 = vmatprep.subr.mxu0 %v2465
    %2722 = vmatpush1.msra.mxu0 %v2464
    %2723 = vmatprep.subr.mxu0 %v2460
    %2724 = vmatpush1.msra.mxu0 %v2459
    %2725 = vmatprep.subr.mxu0 0.0
    %2726 = vmatpush2.msra.mxu0 0.0
    %2727 = vmatprep.subr.mxu0 0.0
    %2728 = vmatpush2.msra.mxu0 0.0
    %2729 = vmatprep.subr.mxu0 0.0
    %2730 = vmatpush2.msra.mxu0 0.0
    %2731 = vmatprep.subr.mxu0 0.0
    %2732 = vmatpush2.msra.mxu0 0.0
    %2733 = vmatprep.subr.mxu0 0.0
    %2734 = vmatpush2.msra.mxu0 0.0
    %2735 = vmatprep.subr.mxu0 0.0
    %2736 = vmatpush2.msra.mxu0 0.0
    %2737 = vmatprep.subr.mxu0 0.0
    %2738 = vmatpush2.msra.mxu0 0.0
    %2739 = vmatprep.subr.mxu0 0.0
    %2740 = vmatpush2.msra.mxu0 0.0
    %2741 = vmatprep.subr.mxu0 0.0
    %2742 = vmatpush2.msra.mxu0 0.0
    %2743 = vmatprep.subr.mxu0 0.0
    %2744 = vmatpush2.msra.mxu0 0.0
    %2745 = vmatprep.subr.mxu0 0.0
    %2746 = vmatpush2.msra.mxu0 0.0
    %2747 = vmatprep.subr.mxu0 0.0
    %2748 = vmatpush2.msra.mxu0 0.0
    %2749 = vmatprep.subr.mxu0 0.0
    %2750 = vmatpush2.msra.mxu0 0.0
    %2751 = vmatprep.subr.mxu0 0.0
    %2752 = vmatpush2.msra.mxu0 0.0
    %2753 = vmatprep.subr.mxu0 0.0
    %2754 = vmatpush2.msra.mxu0 0.0
    %2755 = vmatprep.subr.mxu0 0.0
    %2756 = vmatpush2.msra.mxu0 0.0
    %2757 = vmatprep.mubr.f32.mxu0 0.0
    %2758 = vmatmul.mubr.f32.gmra.mxu0 %v2133
    %v2759 = vpop.f32.mrf.mxu0
    %v2760 = vadd.f32 %v2683, %v2759
    %v2761 = vpop.f32.mrf.mxu0
    %v2762 = vadd.f32 %v2685, %v2761
    %2763 = vmatprep.mubr.f32.mxu0 0.0
    %2764 = vmatmul.mubr.f32.gmra.mxu0 %v2138
    %v2765 = vpop.f32.mrf.mxu0
    %v2766 = vadd.f32 %v2689, %v2765
    %v2767 = vpop.f32.mrf.mxu0
    %v2768 = vadd.f32 %v2691, %v2767
    %2769 = vdwg.mxu0
    %2770 = vmatprep.subr.mxu0 %v2217
    %2771 = vmatpush1.msra.mxu0 %v2216
    %2772 = vmatprep.subr.mxu0 %v2212
    %2773 = vmatpush1.msra.mxu0 %v2211
    %2774 = vmatprep.subr.mxu0 %v2207
    %2775 = vmatpush1.msra.mxu0 %v2206
    %2776 = vmatprep.subr.mxu0 %v2202
    %2777 = vmatpush1.msra.mxu0 %v2201
    %2778 = vmatprep.subr.mxu0 %v2197
    %2779 = vmatpush1.msra.mxu0 %v2196
    %2780 = vmatprep.subr.mxu0 %v2192
    %2781 = vmatpush1.msra.mxu0 %v2191
    %2782 = vmatprep.subr.mxu0 %v2187
    %2783 = vmatpush1.msra.mxu0 %v2186
    %2784 = vmatprep.subr.mxu0 %v2182
    %2785 = vmatpush1.msra.mxu0 %v2181
    %2786 = vmatprep.subr.mxu0 %v2177
    %2787 = vmatpush1.msra.mxu0 %v2176
    %2788 = vmatprep.subr.mxu0 %v2172
    %2789 = vmatpush1.msra.mxu0 %v2171
    %2790 = vmatprep.subr.mxu0 %v2167
    %2791 = vmatpush1.msra.mxu0 %v2166
    %2792 = vmatprep.subr.mxu0 %v2162
    %2793 = vmatpush1.msra.mxu0 %v2161
    %2794 = vmatprep.subr.mxu0 %v2157
    %2795 = vmatpush1.msra.mxu0 %v2156
    %2796 = vmatprep.subr.mxu0 %v2152
    %2797 = vmatpush1.msra.mxu0 %v2151
    %2798 = vmatprep.subr.mxu0 %v2147
    %2799 = vmatpush1.msra.mxu0 %v2146
    %2800 = vmatprep.subr.mxu0 %v2142
    %2801 = vmatpush1.msra.mxu0 %v2141
    %2802 = vmatprep.subr.mxu0 %v2297
    %2803 = vmatpush2.msra.mxu0 %v2296
    %2804 = vmatprep.subr.mxu0 %v2292
    %2805 = vmatpush2.msra.mxu0 %v2291
    %2806 = vmatprep.subr.mxu0 %v2287
    %2807 = vmatpush2.msra.mxu0 %v2286
    %2808 = vmatprep.subr.mxu0 %v2282
    %2809 = vmatpush2.msra.mxu0 %v2281
    %2810 = vmatprep.subr.mxu0 %v2277
    %2811 = vmatpush2.msra.mxu0 %v2276
    %2812 = vmatprep.subr.mxu0 %v2272
    %2813 = vmatpush2.msra.mxu0 %v2271
    %2814 = vmatprep.subr.mxu0 %v2267
    %2815 = vmatpush2.msra.mxu0 %v2266
    %2816 = vmatprep.subr.mxu0 %v2262
    %2817 = vmatpush2.msra.mxu0 %v2261
    %2818 = vmatprep.subr.mxu0 %v2257
    %2819 = vmatpush2.msra.mxu0 %v2256
    %2820 = vmatprep.subr.mxu0 %v2252
    %2821 = vmatpush2.msra.mxu0 %v2251
    %2822 = vmatprep.subr.mxu0 %v2247
    %2823 = vmatpush2.msra.mxu0 %v2246
    %2824 = vmatprep.subr.mxu0 %v2242
    %2825 = vmatpush2.msra.mxu0 %v2241
    %2826 = vmatprep.subr.mxu0 %v2237
    %2827 = vmatpush2.msra.mxu0 %v2236
    %2828 = vmatprep.subr.mxu0 %v2232
    %2829 = vmatpush2.msra.mxu0 %v2231
    %2830 = vmatprep.subr.mxu0 %v2227
    %2831 = vmatpush2.msra.mxu0 %v2226
    %2832 = vmatprep.subr.mxu0 %v2222
    %2833 = vmatpush2.msra.mxu0 %v2221
    %2834 = vmatprep.mubr.f32.mxu0 %v2130
    %2835 = vmatmul.mubr.f32.gmra.mxu0 %v2129
    %v2836 = vpop.f32.mrf.mxu0
    %v2837 = vadd.f32 0.0, %v2836
    %v2838 = vpop.f32.mrf.mxu0
    %v2839 = vadd.f32 0.0, %v2838
    %2840 = vmatprep.mubr.f32.mxu0 %v2135
    %2841 = vmatmul.mubr.f32.gmra.mxu0 %v2134
    %v2842 = vpop.f32.mrf.mxu0
    %v2843 = vadd.f32 0.0, %v2842
    %v2844 = vpop.f32.mrf.mxu0
    %v2845 = vadd.f32 0.0, %v2844
    %2846 = vdwg.mxu0
    %2847 = vmatprep.subr.mxu0 %v2377
    %2848 = vmatpush1.msra.mxu0 %v2376
    %2849 = vmatprep.subr.mxu0 %v2372
    %2850 = vmatpush1.msra.mxu0 %v2371
    %2851 = vmatprep.subr.mxu0 %v2367
    %2852 = vmatpush1.msra.mxu0 %v2366
    %2853 = vmatprep.subr.mxu0 %v2362
    %2854 = vmatpush1.msra.mxu0 %v2361
    %2855 = vmatprep.subr.mxu0 %v2357
    %2856 = vmatpush1.msra.mxu0 %v2356
    %2857 = vmatprep.subr.mxu0 %v2352
    %2858 = vmatpush1.msra.mxu0 %v2351
    %2859 = vmatprep.subr.mxu0 %v2347
    %2860 = vmatpush1.msra.mxu0 %v2346
    %2861 = vmatprep.subr.mxu0 %v2342
    %2862 = vmatpush1.msra.mxu0 %v2341
    %2863 = vmatprep.subr.mxu0 %v2337
    %2864 = vmatpush1.msra.mxu0 %v2336
    %2865 = vmatprep.subr.mxu0 %v2332
    %2866 = vmatpush1.msra.mxu0 %v2331
    %2867 = vmatprep.subr.mxu0 %v2327
    %2868 = vmatpush1.msra.mxu0 %v2326
    %2869 = vmatprep.subr.mxu0 %v2322
    %2870 = vmatpush1.msra.mxu0 %v2321
    %2871 = vmatprep.subr.mxu0 %v2317
    %2872 = vmatpush1.msra.mxu0 %v2316
    %2873 = vmatprep.subr.mxu0 %v2312
    %2874 = vmatpush1.msra.mxu0 %v2311
    %2875 = vmatprep.subr.mxu0 %v2307
    %2876 = vmatpush1.msra.mxu0 %v2306
    %2877 = vmatprep.subr.mxu0 %v2302
    %2878 = vmatpush1.msra.mxu0 %v2301
    %2879 = vmatprep.subr.mxu0 %v2457
    %2880 = vmatpush2.msra.mxu0 %v2456
    %2881 = vmatprep.subr.mxu0 %v2452
    %2882 = vmatpush2.msra.mxu0 %v2451
    %2883 = vmatprep.subr.mxu0 %v2447
    %2884 = vmatpush2.msra.mxu0 %v2446
    %2885 = vmatprep.subr.mxu0 %v2442
    %2886 = vmatpush2.msra.mxu0 %v2441
    %2887 = vmatprep.subr.mxu0 %v2437
    %2888 = vmatpush2.msra.mxu0 %v2436
    %2889 = vmatprep.subr.mxu0 %v2432
    %2890 = vmatpush2.msra.mxu0 %v2431
    %2891 = vmatprep.subr.mxu0 %v2427
    %2892 = vmatpush2.msra.mxu0 %v2426
    %2893 = vmatprep.subr.mxu0 %v2422
    %2894 = vmatpush2.msra.mxu0 %v2421
    %2895 = vmatprep.subr.mxu0 %v2417
    %2896 = vmatpush2.msra.mxu0 %v2416
    %2897 = vmatprep.subr.mxu0 %v2412
    %2898 = vmatpush2.msra.mxu0 %v2411
    %2899 = vmatprep.subr.mxu0 %v2407
    %2900 = vmatpush2.msra.mxu0 %v2406
    %2901 = vmatprep.subr.mxu0 %v2402
    %2902 = vmatpush2.msra.mxu0 %v2401
    %2903 = vmatprep.subr.mxu0 %v2397
    %2904 = vmatpush2.msra.mxu0 %v2396
    %2905 = vmatprep.subr.mxu0 %v2392
    %2906 = vmatpush2.msra.mxu0 %v2391
    %2907 = vmatprep.subr.mxu0 %v2387
    %2908 = vmatpush2.msra.mxu0 %v2386
    %2909 = vmatprep.subr.mxu0 %v2382
    %2910 = vmatpush2.msra.mxu0 %v2381
    %2911 = vmatprep.mubr.f32.mxu0 %v2132
    %2912 = vmatmul.mubr.f32.gmra.mxu0 %v2131
    %v2913 = vpop.f32.mrf.mxu0
    %v2914 = vadd.f32 %v2837, %v2913
    %v2915 = vpop.f32.mrf.mxu0
    %v2916 = vadd.f32 %v2839, %v2915
    %2917 = vmatprep.mubr.f32.mxu0 %v2137
    %2918 = vmatmul.mubr.f32.gmra.mxu0 %v2136
    %v2919 = vpop.f32.mrf.mxu0
    %v2920 = vadd.f32 %v2843, %v2919
    %v2921 = vpop.f32.mrf.mxu0
    %v2922 = vadd.f32 %v2845, %v2921
    %2923 = vdwg.mxu0
    %2924 = vmatprep.subr.mxu0 %v2537
    %2925 = vmatpush1.msra.mxu0 %v2536
    %2926 = vmatprep.subr.mxu0 %v2532
    %2927 = vmatpush1.msra.mxu0 %v2531
    %2928 = vmatprep.subr.mxu0 %v2527
    %2929 = vmatpush1.msra.mxu0 %v2526
    %2930 = vmatprep.subr.mxu0 %v2522
    %2931 = vmatpush1.msra.mxu0 %v2521
    %2932 = vmatprep.subr.mxu0 %v2517
    %2933 = vmatpush1.msra.mxu0 %v2516
    %2934 = vmatprep.subr.mxu0 %v2512
    %2935 = vmatpush1.msra.mxu0 %v2511
    %2936 = vmatprep.subr.mxu0 %v2507
    %2937 = vmatpush1.msra.mxu0 %v2506
    %2938 = vmatprep.subr.mxu0 %v2502
    %2939 = vmatpush1.msra.mxu0 %v2501
    %2940 = vmatprep.subr.mxu0 %v2497
    %2941 = vmatpush1.msra.mxu0 %v2496
    %2942 = vmatprep.subr.mxu0 %v2492
    %2943 = vmatpush1.msra.mxu0 %v2491
    %2944 = vmatprep.subr.mxu0 %v2487
    %2945 = vmatpush1.msra.mxu0 %v2486
    %2946 = vmatprep.subr.mxu0 %v2482
    %2947 = vmatpush1.msra.mxu0 %v2481
    %2948 = vmatprep.subr.mxu0 %v2477
    %2949 = vmatpush1.msra.mxu0 %v2476
    %2950 = vmatprep.subr.mxu0 %v2472
    %2951 = vmatpush1.msra.mxu0 %v2471
    %2952 = vmatprep.subr.mxu0 %v2467
    %2953 = vmatpush1.msra.mxu0 %v2466
    %2954 = vmatprep.subr.mxu0 %v2462
    %2955 = vmatpush1.msra.mxu0 %v2461
    %2956 = vmatprep.subr.mxu0 0.0
    %2957 = vmatpush2.msra.mxu0 0.0
    %2958 = vmatprep.subr.mxu0 0.0
    %2959 = vmatpush2.msra.mxu0 0.0
    %2960 = vmatprep.subr.mxu0 0.0
    %2961 = vmatpush2.msra.mxu0 0.0
    %2962 = vmatprep.subr.mxu0 0.0
    %2963 = vmatpush2.msra.mxu0 0.0
    %2964 = vmatprep.subr.mxu0 0.0
    %2965 = vmatpush2.msra.mxu0 0.0
    %2966 = vmatprep.subr.mxu0 0.0
    %2967 = vmatpush2.msra.mxu0 0.0
    %2968 = vmatprep.subr.mxu0 0.0
    %2969 = vmatpush2.msra.mxu0 0.0
    %2970 = vmatprep.subr.mxu0 0.0
    %2971 = vmatpush2.msra.mxu0 0.0
    %2972 = vmatprep.subr.mxu0 0.0
    %2973 = vmatpush2.msra.mxu0 0.0
    %2974 = vmatprep.subr.mxu0 0.0
    %2975 = vmatpush2.msra.mxu0 0.0
    %2976 = vmatprep.subr.mxu0 0.0
    %2977 = vmatpush2.msra.mxu0 0.0
    %2978 = vmatprep.subr.mxu0 0.0
    %2979 = vmatpush2.msra.mxu0 0.0
    %2980 = vmatprep.subr.mxu0 0.0
    %2981 = vmatpush2.msra.mxu0 0.0
    %2982 = vmatprep.subr.mxu0 0.0
    %2983 = vmatpush2.msra.mxu0 0.0
    %2984 = vmatprep.subr.mxu0 0.0
    %2985 = vmatpush2.msra.mxu0 0.0
    %2986 = vmatprep.subr.mxu0 0.0
    %2987 = vmatpush2.msra.mxu0 0.0
    %2988 = vmatprep.mubr.f32.mxu0 0.0
    %2989 = vmatmul.mubr.f32.gmra.mxu0 %v2133
    %v2990 = vpop.f32.mrf.mxu0
    %v2991 = vadd.f32 %v2914, %v2990
    %v2992 = vpop.f32.mrf.mxu0
    %v2993 = vadd.f32 %v2916, %v2992
    %2994 = vmatprep.mubr.f32.mxu0 0.0
    %2995 = vmatmul.mubr.f32.gmra.mxu0 %v2138
    %v2996 = vpop.f32.mrf.mxu0
    %v2997 = vadd.f32 %v2920, %v2996
    %v2998 = vpop.f32.mrf.mxu0
    %v2999 = vadd.f32 %v2922, %v2998
    %3000 = vdwg.mxu0
    %3001 = vmatprep.subr.mxu0 0.0
    %3002 = vmatpush1.msra.mxu0 %v2218
    %3003 = vmatprep.subr.mxu0 0.0
    %3004 = vmatpush1.msra.mxu0 %v2213
    %3005 = vmatprep.subr.mxu0 0.0
    %3006 = vmatpush1.msra.mxu0 %v2208
    %3007 = vmatprep.subr.mxu0 0.0
    %3008 = vmatpush1.msra.mxu0 %v2203
    %3009 = vmatprep.subr.mxu0 0.0
    %3010 = vmatpush1.msra.mxu0 %v2198
    %3011 = vmatprep.subr.mxu0 0.0
    %3012 = vmatpush1.msra.mxu0 %v2193
    %3013 = vmatprep.subr.mxu0 0.0
    %3014 = vmatpush1.msra.mxu0 %v2188
    %3015 = vmatprep.subr.mxu0 0.0
    %3016 = vmatpush1.msra.mxu0 %v2183
    %3017 = vmatprep.subr.mxu0 0.0
    %3018 = vmatpush1.msra.mxu0 %v2178
    %3019 = vmatprep.subr.mxu0 0.0
    %3020 = vmatpush1.msra.mxu0 %v2173
    %3021 = vmatprep.subr.mxu0 0.0
    %3022 = vmatpush1.msra.mxu0 %v2168
    %3023 = vmatprep.subr.mxu0 0.0
    %3024 = vmatpush1.msra.mxu0 %v2163
    %3025 = vmatprep.subr.mxu0 0.0
    %3026 = vmatpush1.msra.mxu0 %v2158
    %3027 = vmatprep.subr.mxu0 0.0
    %3028 = vmatpush1.msra.mxu0 %v2153
    %3029 = vmatprep.subr.mxu0 0.0
    %3030 = vmatpush1.msra.mxu0 %v2148
    %3031 = vmatprep.subr.mxu0 0.0
    %3032 = vmatpush1.msra.mxu0 %v2143
    %3033 = vmatprep.subr.mxu0 0.0
    %3034 = vmatpush2.msra.mxu0 %v2298
    %3035 = vmatprep.subr.mxu0 0.0
    %3036 = vmatpush2.msra.mxu0 %v2293
    %3037 = vmatprep.subr.mxu0 0.0
    %3038 = vmatpush2.msra.mxu0 %v2288
    %3039 = vmatprep.subr.mxu0 0.0
    %3040 = vmatpush2.msra.mxu0 %v2283
    %3041 = vmatprep.subr.mxu0 0.0
    %3042 = vmatpush2.msra.mxu0 %v2278
    %3043 = vmatprep.subr.mxu0 0.0
    %3044 = vmatpush2.msra.mxu0 %v2273
    %3045 = vmatprep.subr.mxu0 0.0
    %3046 = vmatpush2.msra.mxu0 %v2268
    %3047 = vmatprep.subr.mxu0 0.0
    %3048 = vmatpush2.msra.mxu0 %v2263
    %3049 = vmatprep.subr.mxu0 0.0
    %3050 = vmatpush2.msra.mxu0 %v2258
    %3051 = vmatprep.subr.mxu0 0.0
    %3052 = vmatpush2.msra.mxu0 %v2253
    %3053 = vmatprep.subr.mxu0 0.0
    %3054 = vmatpush2.msra.mxu0 %v2248
    %3055 = vmatprep.subr.mxu0 0.0
    %3056 = vmatpush2.msra.mxu0 %v2243
    %3057 = vmatprep.subr.mxu0 0.0
    %3058 = vmatpush2.msra.mxu0 %v2238
    %3059 = vmatprep.subr.mxu0 0.0
    %3060 = vmatpush2.msra.mxu0 %v2233
    %3061 = vmatprep.subr.mxu0 0.0
    %3062 = vmatpush2.msra.mxu0 %v2228
    %3063 = vmatprep.subr.mxu0 0.0
    %3064 = vmatpush2.msra.mxu0 %v2223
    %3065 = vmatprep.mubr.f32.mxu0 %v2130
    %3066 = vmatmul.mubr.f32.gmra.mxu0 %v2129
    %v3067 = vpop.f32.mrf.mxu0
    %v3068 = vadd.f32 0.0, %v3067
    %v3069 = vpop.f32.mrf.mxu0
    %3070 = vmatprep.mubr.f32.mxu0 %v2135
    %3071 = vmatmul.mubr.f32.gmra.mxu0 %v2134
    %v3072 = vpop.f32.mrf.mxu0
    %v3073 = vadd.f32 0.0, %v3072
    %v3074 = vpop.f32.mrf.mxu0
    %3075 = vdwg.mxu0
    %3076 = vmatprep.subr.mxu0 0.0
    %3077 = vmatpush1.msra.mxu0 %v2378
    %3078 = vmatprep.subr.mxu0 0.0
    %3079 = vmatpush1.msra.mxu0 %v2373
    %3080 = vmatprep.subr.mxu0 0.0
    %3081 = vmatpush1.msra.mxu0 %v2368
    %3082 = vmatprep.subr.mxu0 0.0
    %3083 = vmatpush1.msra.mxu0 %v2363
    %3084 = vmatprep.subr.mxu0 0.0
    %3085 = vmatpush1.msra.mxu0 %v2358
    %3086 = vmatprep.subr.mxu0 0.0
    %3087 = vmatpush1.msra.mxu0 %v2353
    %3088 = vmatprep.subr.mxu0 0.0
    %3089 = vmatpush1.msra.mxu0 %v2348
    %3090 = vmatprep.subr.mxu0 0.0
    %3091 = vmatpush1.msra.mxu0 %v2343
    %3092 = vmatprep.subr.mxu0 0.0
    %3093 = vmatpush1.msra.mxu0 %v2338
    %3094 = vmatprep.subr.mxu0 0.0
    %3095 = vmatpush1.msra.mxu0 %v2333
    %3096 = vmatprep.subr.mxu0 0.0
    %3097 = vmatpush1.msra.mxu0 %v2328
    %3098 = vmatprep.subr.mxu0 0.0
    %3099 = vmatpush1.msra.mxu0 %v2323
    %3100 = vmatprep.subr.mxu0 0.0
    %3101 = vmatpush1.msra.mxu0 %v2318
    %3102 = vmatprep.subr.mxu0 0.0
    %3103 = vmatpush1.msra.mxu0 %v2313
    %3104 = vmatprep.subr.mxu0 0.0
    %3105 = vmatpush1.msra.mxu0 %v2308
    %3106 = vmatprep.subr.mxu0 0.0
    %3107 = vmatpush1.msra.mxu0 %v2303
    %3108 = vmatprep.subr.mxu0 0.0
    %3109 = vmatpush2.msra.mxu0 %v2458
    %3110 = vmatprep.subr.mxu0 0.0
    %3111 = vmatpush2.msra.mxu0 %v2453
    %3112 = vmatprep.subr.mxu0 0.0
    %3113 = vmatpush2.msra.mxu0 %v2448
    %3114 = vmatprep.subr.mxu0 0.0
    %3115 = vmatpush2.msra.mxu0 %v2443
    %3116 = vmatprep.subr.mxu0 0.0
    %3117 = vmatpush2.msra.mxu0 %v2438
    %3118 = vmatprep.subr.mxu0 0.0
    %3119 = vmatpush2.msra.mxu0 %v2433
    %3120 = vmatprep.subr.mxu0 0.0
    %3121 = vmatpush2.msra.mxu0 %v2428
    %3122 = vmatprep.subr.mxu0 0.0
    %3123 = vmatpush2.msra.mxu0 %v2423
    %3124 = vmatprep.subr.mxu0 0.0
    %3125 = vmatpush2.msra.mxu0 %v2418
    %3126 = vmatprep.subr.mxu0 0.0
    %3127 = vmatpush2.msra.mxu0 %v2413
    %3128 = vmatprep.subr.mxu0 0.0
    %3129 = vmatpush2.msra.mxu0 %v2408
    %3130 = vmatprep.subr.mxu0 0.0
    %3131 = vmatpush2.msra.mxu0 %v2403
    %3132 = vmatprep.subr.mxu0 0.0
    %3133 = vmatpush2.msra.mxu0 %v2398
    %3134 = vmatprep.subr.mxu0 0.0
    %3135 = vmatpush2.msra.mxu0 %v2393
    %3136 = vmatprep.subr.mxu0 0.0
    %3137 = vmatpush2.msra.mxu0 %v2388
    %3138 = vmatprep.subr.mxu0 0.0
    %3139 = vmatpush2.msra.mxu0 %v2383
    %3140 = vmatprep.mubr.f32.mxu0 %v2132
    %3141 = vmatmul.mubr.f32.gmra.mxu0 %v2131
    %v3142 = vpop.f32.mrf.mxu0
    %v3143 = vadd.f32 %v3068, %v3142
    %v3144 = vpop.f32.mrf.mxu0
    %3145 = vmatprep.mubr.f32.mxu0 %v2137
    %3146 = vmatmul.mubr.f32.gmra.mxu0 %v2136
    %v3147 = vpop.f32.mrf.mxu0
    %v3148 = vadd.f32 %v3073, %v3147
    %v3149 = vpop.f32.mrf.mxu0
    %3150 = vdwg.mxu0
    %3151 = vmatprep.subr.mxu0 0.0
    %3152 = vmatpush1.msra.mxu0 %v2538
    %3153 = vmatprep.subr.mxu0 0.0
    %3154 = vmatpush1.msra.mxu0 %v2533
    %3155 = vmatprep.subr.mxu0 0.0
    %3156 = vmatpush1.msra.mxu0 %v2528
    %3157 = vmatprep.subr.mxu0 0.0
    %3158 = vmatpush1.msra.mxu0 %v2523
    %3159 = vmatprep.subr.mxu0 0.0
    %3160 = vmatpush1.msra.mxu0 %v2518
    %3161 = vmatprep.subr.mxu0 0.0
    %3162 = vmatpush1.msra.mxu0 %v2513
    %3163 = vmatprep.subr.mxu0 0.0
    %3164 = vmatpush1.msra.mxu0 %v2508
    %3165 = vmatprep.subr.mxu0 0.0
    %3166 = vmatpush1.msra.mxu0 %v2503
    %3167 = vmatprep.subr.mxu0 0.0
    %3168 = vmatpush1.msra.mxu0 %v2498
    %3169 = vmatprep.subr.mxu0 0.0
    %3170 = vmatpush1.msra.mxu0 %v2493
    %3171 = vmatprep.subr.mxu0 0.0
    %3172 = vmatpush1.msra.mxu0 %v2488
    %3173 = vmatprep.subr.mxu0 0.0
    %3174 = vmatpush1.msra.mxu0 %v2483
    %3175 = vmatprep.subr.mxu0 0.0
    %3176 = vmatpush1.msra.mxu0 %v2478
    %3177 = vmatprep.subr.mxu0 0.0
    %3178 = vmatpush1.msra.mxu0 %v2473
    %3179 = vmatprep.subr.mxu0 0.0
    %3180 = vmatpush1.msra.mxu0 %v2468
    %3181 = vmatprep.subr.mxu0 0.0
    %3182 = vmatpush1.msra.mxu0 %v2463
    %3183 = vmatprep.subr.mxu0 0.0
    %3184 = vmatpush2.msra.mxu0 0.0
    %3185 = vmatprep.subr.mxu0 0.0
    %3186 = vmatpush2.msra.mxu0 0.0
    %3187 = vmatprep.subr.mxu0 0.0
    %3188 = vmatpush2.msra.mxu0 0.0
    %3189 = vmatprep.subr.mxu0 0.0
    %3190 = vmatpush2.msra.mxu0 0.0
    %3191 = vmatprep.subr.mxu0 0.0
    %3192 = vmatpush2.msra.mxu0 0.0
    %3193 = vmatprep.subr.mxu0 0.0
    %3194 = vmatpush2.msra.mxu0 0.0
    %3195 = vmatprep.subr.mxu0 0.0
    %3196 = vmatpush2.msra.mxu0 0.0
    %3197 = vmatprep.subr.mxu0 0.0
    %3198 = vmatpush2.msra.mxu0 0.0
    %3199 = vmatprep.subr.mxu0 0.0
    %3200 = vmatpush2.msra.mxu0 0.0
    %3201 = vmatprep.subr.mxu0 0.0
    %3202 = vmatpush2.msra.mxu0 0.0
    %3203 = vmatprep.subr.mxu0 0.0
    %3204 = vmatpush2.msra.mxu0 0.0
    %3205 = vmatprep.subr.mxu0 0.0
    %3206 = vmatpush2.msra.mxu0 0.0
    %3207 = vmatprep.subr.mxu0 0.0
    %3208 = vmatpush2.msra.mxu0 0.0
    %3209 = vmatprep.subr.mxu0 0.0
    %3210 = vmatpush2.msra.mxu0 0.0
    %3211 = vmatprep.subr.mxu0 0.0
    %3212 = vmatpush2.msra.mxu0 0.0
    %3213 = vmatprep.subr.mxu0 0.0
    %3214 = vmatpush2.msra.mxu0 0.0
    %3215 = vmatprep.mubr.f32.mxu0 0.0
    %3216 = vmatmul.mubr.f32.gmra.mxu0 %v2133
    %v3217 = vpop.f32.mrf.mxu0
    %v3218 = vadd.f32 %v3143, %v3217
    %v3219 = vpop.f32.mrf.mxu0
    %3220 = vmatprep.mubr.f32.mxu0 0.0
    %3221 = vmatmul.mubr.f32.gmra.mxu0 %v2138
    %v3222 = vpop.f32.mrf.mxu0
    %v3223 = vadd.f32 %v3148, %v3222
    %v3224 = vpop.f32.mrf.mxu0
    %3225 = vdwg.mxu0
    %v3226 = vld [vmem:[%s21] sm:$0xff]
    %v3227 = vld [vmem:[%s21 + $0x8] sm:$0xff]
    %v3228 = vld [vmem:[%s21 + $0x10] sm:$0xff]
    %v3229 = vld [vmem:[%s21 + $0x18] sm:$0xff]
    %v3230 = vld [vmem:[%s21 + $0x20] sm:$0xff]
    %v3231 = vld [vmem:[%s21 + $0x28] sm:$0xff]
    %v3232 = vld [vmem:[%s21 + $0x30] sm:$0xff]
    %v3233 = vld [vmem:[%s21 + $0x38] sm:$0xff]
    %v3234 = vld [vmem:[%s21 + $0x40] sm:$0xff]
    %v3235 = vld [vmem:[%s21 + $0x48] sm:$0xff]
    %v3236 = vld [vmem:[%s21 + $0x50] sm:$0xff]
    %v3237 = vld [vmem:[%s21 + $0x58] sm:$0xff]
    %v3238 = vld [vmem:[%s21 + $0x60] sm:$0xff]
    %v3239 = vld [vmem:[%s21 + $0x68] sm:$0xff]
    %v3240 = vld [vmem:[%s21 + $0x70] sm:$0xff]
    %v3241 = vld [vmem:[%s21 + $0x78] sm:$0xff]
    %v3242 = vld [vmem:[%s21 + $0x80] sm:$0xff]
    %v3243 = vld [vmem:[%s21 + $0x88] sm:$0xff]
    %v3244 = vld [vmem:[%s21 + $0x90] sm:$0xff]
    %v3245 = vld [vmem:[%s21 + $0x98] sm:$0xff]
    %v3246 = vld [vmem:[%s21 + $0xa0] sm:$0xff]
    %v3247 = vld [vmem:[%s21 + $0xa8] sm:$0xff]
    %v3248 = vld [vmem:[%s21 + $0xb0] sm:$0xff]
    %v3249 = vld [vmem:[%s21 + $0xb8] sm:$0xff]
    %v3250 = vld [vmem:[%s21 + $0xc0] sm:$0xff]
    %v3251 = vld [vmem:[%s21 + $0xc8] sm:$0xff]
    %v3252 = vld [vmem:[%s21 + $0xd0] sm:$0xff]
    %v3253 = vld [vmem:[%s21 + $0xd8] sm:$0xff]
    %v3254 = vld [vmem:[%s21 + $0xe0] sm:$0xff]
    %v3255 = vld [vmem:[%s21 + $0xe8] sm:$0xff]
    %v3256 = vld [vmem:[%s21 + $0xf0] sm:$0xff]
    %v3257 = vld [vmem:[%s21 + $0xf8] sm:$0xff]
    %v3258 = vld [vmem:[%s21 + $0x100] sm:$0xff]
    %v3259 = vld [vmem:[%s21 + $0x108] sm:$0xff]
    %v3260 = vld [vmem:[%s21 + $0x110] sm:$0xff]
    %v3261 = vld [vmem:[%s21 + $0x118] sm:$0xff]
    %v3262 = vld [vmem:[%s21 + $0x120] sm:$0xff]
    %v3263 = vld [vmem:[%s21 + $0x128] sm:$0xff]
    %v3264 = vld [vmem:[%s21 + $0x130] sm:$0xff]
    %v3265 = vld [vmem:[%s21 + $0x138] sm:$0xff]
    %v3266 = vld [vmem:[%s21 + $0x140] sm:$0xff]
    %v3267 = vld [vmem:[%s21 + $0x148] sm:$0xff]
    %v3268 = vld [vmem:[%s21 + $0x150] sm:$0xff]
    %v3269 = vld [vmem:[%s21 + $0x158] sm:$0xff]
    %v3270 = vld [vmem:[%s21 + $0x160] sm:$0xff]
    %v3271 = vld [vmem:[%s21 + $0x168] sm:$0xff]
    %v3272 = vld [vmem:[%s21 + $0x170] sm:$0xff]
    %v3273 = vld [vmem:[%s21 + $0x178] sm:$0xff]
    %v3274 = vld [vmem:[%s21 + $0x180] sm:$0xff]
    %v3275 = vld [vmem:[%s21 + $0x188] sm:$0xff]
    %v3276 = vld [vmem:[%s21 + $0x190] sm:$0xff]
    %v3277 = vld [vmem:[%s21 + $0x198] sm:$0xff]
    %v3278 = vld [vmem:[%s21 + $0x1a0] sm:$0xff]
    %v3279 = vld [vmem:[%s21 + $0x1a8] sm:$0xff]
    %v3280 = vld [vmem:[%s21 + $0x1b0] sm:$0xff]
    %v3281 = vld [vmem:[%s21 + $0x1b8] sm:$0xff]
    %v3282 = vld [vmem:[%s21 + $0x1c0] sm:$0xff]
    %v3283 = vld [vmem:[%s21 + $0x1c8] sm:$0xff]
    %v3284 = vld [vmem:[%s21 + $0x1d0] sm:$0xff]
    %v3285 = vld [vmem:[%s21 + $0x1d8] sm:$0xff]
    %v3286 = vld [vmem:[%s21 + $0x1e0] sm:$0xff]
    %v3287 = vld [vmem:[%s21 + $0x1e8] sm:$0xff]
    %v3288 = vld [vmem:[%s21 + $0x1f0] sm:$0xff]
    %v3289 = vld [vmem:[%s21 + $0x1f8] sm:$0xff]
    %v3290 = vld [vmem:[%s21 + $0x200] sm:$0xff]
    %v3291 = vld [vmem:[%s21 + $0x208] sm:$0xff]
    %v3292 = vld [vmem:[%s21 + $0x210] sm:$0xff]
    %v3293 = vld [vmem:[%s21 + $0x218] sm:$0xff]
    %v3294 = vld [vmem:[%s21 + $0x220] sm:$0xff]
    %v3295 = vld [vmem:[%s21 + $0x228] sm:$0xff]
    %v3296 = vld [vmem:[%s21 + $0x230] sm:$0xff]
    %v3297 = vld [vmem:[%s21 + $0x238] sm:$0xff]
    %v3298 = vld [vmem:[%s21 + $0x240] sm:$0xff]
    %v3299 = vld [vmem:[%s21 + $0x248] sm:$0xff]
    %v3300 = vld [vmem:[%s21 + $0x250] sm:$0xff]
    %v3301 = vld [vmem:[%s21 + $0x258] sm:$0xff]
    %v3302 = vld [vmem:[%s21 + $0x260] sm:$0xff]
    %v3303 = vld [vmem:[%s21 + $0x268] sm:$0xff]
    %v3304 = vld [vmem:[%s21 + $0x270] sm:$0xff]
    %v3305 = vld [vmem:[%s21 + $0x278] sm:$0xff]
    %3306 = vmatprep.subr.mxu0 0.0
    %3307 = vmatpush1.msra.mxu0 %v3241
    %3308 = vmatprep.subr.mxu0 0.0
    %3309 = vmatpush1.msra.mxu0 %v3240
    %3310 = vmatprep.subr.mxu0 0.0
    %3311 = vmatpush1.msra.mxu0 %v3239
    %3312 = vmatprep.subr.mxu0 0.0
    %3313 = vmatpush1.msra.mxu0 %v3238
    %3314 = vmatprep.subr.mxu0 0.0
    %3315 = vmatpush1.msra.mxu0 %v3237
    %3316 = vmatprep.subr.mxu0 0.0
    %3317 = vmatpush1.msra.mxu0 %v3236
    %3318 = vmatprep.subr.mxu0 0.0
    %3319 = vmatpush1.msra.mxu0 %v3235
    %3320 = vmatprep.subr.mxu0 0.0
    %3321 = vmatpush1.msra.mxu0 %v3234
    %3322 = vmatprep.subr.mxu0 0.0
    %3323 = vmatpush1.msra.mxu0 %v3233
    %3324 = vmatprep.subr.mxu0 0.0
    %3325 = vmatpush1.msra.mxu0 %v3232
    %3326 = vmatprep.subr.mxu0 0.0
    %3327 = vmatpush1.msra.mxu0 %v3231
    %3328 = vmatprep.subr.mxu0 0.0
    %3329 = vmatpush1.msra.mxu0 %v3230
    %3330 = vmatprep.subr.mxu0 0.0
    %3331 = vmatpush1.msra.mxu0 %v3229
    %3332 = vmatprep.subr.mxu0 0.0
    %3333 = vmatpush1.msra.mxu0 %v3228
    %3334 = vmatprep.subr.mxu0 0.0
    %3335 = vmatpush1.msra.mxu0 %v3227
    %3336 = vmatprep.subr.mxu0 0.0
    %3337 = vmatpush1.msra.mxu0 %v3226
    %3338 = vmatprep.subr.mxu0 0.0
    %3339 = vmatpush2.msra.mxu0 %v3257
    %3340 = vmatprep.subr.mxu0 0.0
    %3341 = vmatpush2.msra.mxu0 %v3256
    %3342 = vmatprep.subr.mxu0 0.0
    %3343 = vmatpush2.msra.mxu0 %v3255
    %3344 = vmatprep.subr.mxu0 0.0
    %3345 = vmatpush2.msra.mxu0 %v3254
    %3346 = vmatprep.subr.mxu0 0.0
    %3347 = vmatpush2.msra.mxu0 %v3253
    %3348 = vmatprep.subr.mxu0 0.0
    %3349 = vmatpush2.msra.mxu0 %v3252
    %3350 = vmatprep.subr.mxu0 0.0
    %3351 = vmatpush2.msra.mxu0 %v3251
    %3352 = vmatprep.subr.mxu0 0.0
    %3353 = vmatpush2.msra.mxu0 %v3250
    %3354 = vmatprep.subr.mxu0 0.0
    %3355 = vmatpush2.msra.mxu0 %v3249
    %3356 = vmatprep.subr.mxu0 0.0
    %3357 = vmatpush2.msra.mxu0 %v3248
    %3358 = vmatprep.subr.mxu0 0.0
    %3359 = vmatpush2.msra.mxu0 %v3247
    %3360 = vmatprep.subr.mxu0 0.0
    %3361 = vmatpush2.msra.mxu0 %v3246
    %3362 = vmatprep.subr.mxu0 0.0
    %3363 = vmatpush2.msra.mxu0 %v3245
    %3364 = vmatprep.subr.mxu0 0.0
    %3365 = vmatpush2.msra.mxu0 %v3244
    %3366 = vmatprep.subr.mxu0 0.0
    %3367 = vmatpush2.msra.mxu0 %v3243
    %3368 = vmatprep.subr.mxu0 0.0
    %3369 = vmatpush2.msra.mxu0 %v3242
    %3370 = vmatprep.mubr.f32.mxu0 %v2762
    %3371 = vmatmul.mubr.f32.gmra.mxu0 %v2760
    %v3372 = vpop.f32.mrf.mxu0
    %v3373 = vadd.f32 0.0, %v3372
    %v3374 = vpop.f32.mrf.mxu0
    %3375 = vmatprep.mubr.f32.mxu0 %v2768
    %3376 = vmatmul.mubr.f32.gmra.mxu0 %v2766
    %v3377 = vpop.f32.mrf.mxu0
    %v3378 = vadd.f32 0.0, %v3377
    %v3379 = vpop.f32.mrf.mxu0
    %3380 = vdwg.mxu0
    %3381 = vmatprep.subr.mxu0 0.0
    %3382 = vmatpush1.msra.mxu0 %v3273
    %3383 = vmatprep.subr.mxu0 0.0
    %3384 = vmatpush1.msra.mxu0 %v3272
    %3385 = vmatprep.subr.mxu0 0.0
    %3386 = vmatpush1.msra.mxu0 %v3271
    %3387 = vmatprep.subr.mxu0 0.0
    %3388 = vmatpush1.msra.mxu0 %v3270
    %3389 = vmatprep.subr.mxu0 0.0
    %3390 = vmatpush1.msra.mxu0 %v3269
    %3391 = vmatprep.subr.mxu0 0.0
    %3392 = vmatpush1.msra.mxu0 %v3268
    %3393 = vmatprep.subr.mxu0 0.0
    %3394 = vmatpush1.msra.mxu0 %v3267
    %3395 = vmatprep.subr.mxu0 0.0
    %3396 = vmatpush1.msra.mxu0 %v3266
    %3397 = vmatprep.subr.mxu0 0.0
    %3398 = vmatpush1.msra.mxu0 %v3265
    %3399 = vmatprep.subr.mxu0 0.0
    %3400 = vmatpush1.msra.mxu0 %v3264
    %3401 = vmatprep.subr.mxu0 0.0
    %3402 = vmatpush1.msra.mxu0 %v3263
    %3403 = vmatprep.subr.mxu0 0.0
    %3404 = vmatpush1.msra.mxu0 %v3262
    %3405 = vmatprep.subr.mxu0 0.0
    %3406 = vmatpush1.msra.mxu0 %v3261
    %3407 = vmatprep.subr.mxu0 0.0
    %3408 = vmatpush1.msra.mxu0 %v3260
    %3409 = vmatprep.subr.mxu0 0.0
    %3410 = vmatpush1.msra.mxu0 %v3259
    %3411 = vmatprep.subr.mxu0 0.0
    %3412 = vmatpush1.msra.mxu0 %v3258
    %3413 = vmatprep.subr.mxu0 0.0
    %3414 = vmatpush2.msra.mxu0 %v3289
    %3415 = vmatprep.subr.mxu0 0.0
    %3416 = vmatpush2.msra.mxu0 %v3288
    %3417 = vmatprep.subr.mxu0 0.0
    %3418 = vmatpush2.msra.mxu0 %v3287
    %3419 = vmatprep.subr.mxu0 0.0
    %3420 = vmatpush2.msra.mxu0 %v3286
    %3421 = vmatprep.subr.mxu0 0.0
    %3422 = vmatpush2.msra.mxu0 %v3285
    %3423 = vmatprep.subr.mxu0 0.0
    %3424 = vmatpush2.msra.mxu0 %v3284
    %3425 = vmatprep.subr.mxu0 0.0
    %3426 = vmatpush2.msra.mxu0 %v3283
    %3427 = vmatprep.subr.mxu0 0.0
    %3428 = vmatpush2.msra.mxu0 %v3282
    %3429 = vmatprep.subr.mxu0 0.0
    %3430 = vmatpush2.msra.mxu0 %v3281
    %3431 = vmatprep.subr.mxu0 0.0
    %3432 = vmatpush2.msra.mxu0 %v3280
    %3433 = vmatprep.subr.mxu0 0.0
    %3434 = vmatpush2.msra.mxu0 %v3279
    %3435 = vmatprep.subr.mxu0 0.0
    %3436 = vmatpush2.msra.mxu0 %v3278
    %3437 = vmatprep.subr.mxu0 0.0
    %3438 = vmatpush2.msra.mxu0 %v3277
    %3439 = vmatprep.subr.mxu0 0.0
    %3440 = vmatpush2.msra.mxu0 %v3276
    %3441 = vmatprep.subr.mxu0 0.0
    %3442 = vmatpush2.msra.mxu0 %v3275
    %3443 = vmatprep.subr.mxu0 0.0
    %3444 = vmatpush2.msra.mxu0 %v3274
    %3445 = vmatprep.mubr.f32.mxu0 %v2993
    %3446 = vmatmul.mubr.f32.gmra.mxu0 %v2991
    %v3447 = vpop.f32.mrf.mxu0
    %v3448 = vadd.f32 %v3373, %v3447
    %v3449 = vpop.f32.mrf.mxu0
    %3450 = vmatprep.mubr.f32.mxu0 %v2999
    %3451 = vmatmul.mubr.f32.gmra.mxu0 %v2997
    %v3452 = vpop.f32.mrf.mxu0
    %v3453 = vadd.f32 %v3378, %v3452
    %v3454 = vpop.f32.mrf.mxu0
    %3455 = vdwg.mxu0
    %3456 = vmatprep.subr.mxu0 0.0
    %3457 = vmatpush1.msra.mxu0 %v3305
    %3458 = vmatprep.subr.mxu0 0.0
    %3459 = vmatpush1.msra.mxu0 %v3304
    %3460 = vmatprep.subr.mxu0 0.0
    %3461 = vmatpush1.msra.mxu0 %v3303
    %3462 = vmatprep.subr.mxu0 0.0
    %3463 = vmatpush1.msra.mxu0 %v3302
    %3464 = vmatprep.subr.mxu0 0.0
    %3465 = vmatpush1.msra.mxu0 %v3301
    %3466 = vmatprep.subr.mxu0 0.0
    %3467 = vmatpush1.msra.mxu0 %v3300
    %3468 = vmatprep.subr.mxu0 0.0
    %3469 = vmatpush1.msra.mxu0 %v3299
    %3470 = vmatprep.subr.mxu0 0.0
    %3471 = vmatpush1.msra.mxu0 %v3298
    %3472 = vmatprep.subr.mxu0 0.0
    %3473 = vmatpush1.msra.mxu0 %v3297
    %3474 = vmatprep.subr.mxu0 0.0
    %3475 = vmatpush1.msra.mxu0 %v3296
    %3476 = vmatprep.subr.mxu0 0.0
    %3477 = vmatpush1.msra.mxu0 %v3295
    %3478 = vmatprep.subr.mxu0 0.0
    %3479 = vmatpush1.msra.mxu0 %v3294
    %3480 = vmatprep.subr.mxu0 0.0
    %3481 = vmatpush1.msra.mxu0 %v3293
    %3482 = vmatprep.subr.mxu0 0.0
    %3483 = vmatpush1.msra.mxu0 %v3292
    %3484 = vmatprep.subr.mxu0 0.0
    %3485 = vmatpush1.msra.mxu0 %v3291
    %3486 = vmatprep.subr.mxu0 0.0
    %3487 = vmatpush1.msra.mxu0 %v3290
    %3488 = vmatprep.subr.mxu0 0.0
    %3489 = vmatpush2.msra.mxu0 0.0
    %3490 = vmatprep.subr.mxu0 0.0
    %3491 = vmatpush2.msra.mxu0 0.0
    %3492 = vmatprep.subr.mxu0 0.0
    %3493 = vmatpush2.msra.mxu0 0.0
    %3494 = vmatprep.subr.mxu0 0.0
    %3495 = vmatpush2.msra.mxu0 0.0
    %3496 = vmatprep.subr.mxu0 0.0
    %3497 = vmatpush2.msra.mxu0 0.0
    %3498 = vmatprep.subr.mxu0 0.0
    %3499 = vmatpush2.msra.mxu0 0.0
    %3500 = vmatprep.subr.mxu0 0.0
    %3501 = vmatpush2.msra.mxu0 0.0
    %3502 = vmatprep.subr.mxu0 0.0
    %3503 = vmatpush2.msra.mxu0 0.0
    %3504 = vmatprep.subr.mxu0 0.0
    %3505 = vmatpush2.msra.mxu0 0.0
    %3506 = vmatprep.subr.mxu0 0.0
    %3507 = vmatpush2.msra.mxu0 0.0
    %3508 = vmatprep.subr.mxu0 0.0
    %3509 = vmatpush2.msra.mxu0 0.0
    %3510 = vmatprep.subr.mxu0 0.0
    %3511 = vmatpush2.msra.mxu0 0.0
    %3512 = vmatprep.subr.mxu0 0.0
    %3513 = vmatpush2.msra.mxu0 0.0
    %3514 = vmatprep.subr.mxu0 0.0
    %3515 = vmatpush2.msra.mxu0 0.0
    %3516 = vmatprep.subr.mxu0 0.0
    %3517 = vmatpush2.msra.mxu0 0.0
    %3518 = vmatprep.subr.mxu0 0.0
    %3519 = vmatpush2.msra.mxu0 0.0
    %3520 = vmatprep.mubr.f32.mxu0 0.0
    %3521 = vmatmul.mubr.f32.gmra.mxu0 %v3218
    %v3522 = vpop.f32.mrf.mxu0
    %v3523 = vadd.f32 %v3448, %v3522
    %v3524 = vpop.f32.mrf.mxu0
    %3525 = vmatprep.mubr.f32.mxu0 0.0
    %3526 = vmatmul.mubr.f32.gmra.mxu0 %v3223
    %v3527 = vpop.f32.mrf.mxu0
    %v3528 = vadd.f32 %v3453, %v3527
    %v3529 = vpop.f32.mrf.mxu0
    %3530 = vdwg.mxu0
    %v3531 = vld [vmem:[#allocation17] sm:$0x1f]
    %v3532 = vld [vmem:[#allocation17 + $0x8] sm:$0x1f]
    %v3533 = vld [vmem:[#allocation17 + $0x10] sm:$0x1f]
    %v3534 = vld [vmem:[#allocation17 + $0x18] sm:$0x1f]
    %v3535 = vld [vmem:[#allocation17 + $0x20] sm:$0x1f]
    %3536 = vmatprep.subr.mxu0 0.0
    %3537 = vmatpush1.xpose.msra.mxu0 0.0
    %3538 = vmatprep.subr.mxu0 0.0
    %3539 = vmatpush1.xpose.msra.mxu0 0.0
    %3540 = vmatprep.subr.mxu0 0.0
    %3541 = vmatpush1.xpose.msra.mxu0 0.0
    %3542 = vmatprep.subr.mxu0 0.0
    %3543 = vmatpush1.xpose.msra.mxu0 0.0
    %3544 = vmatprep.subr.mxu0 0.0
    %3545 = vmatpush1.xpose.msra.mxu0 0.0
    %3546 = vmatprep.subr.mxu0 0.0
    %3547 = vmatpush1.xpose.msra.mxu0 0.0
    %3548 = vmatprep.subr.mxu0 0.0
    %3549 = vmatpush1.xpose.msra.mxu0 0.0
    %3550 = vmatprep.subr.mxu0 0.0
    %3551 = vmatpush1.xpose.msra.mxu0 0.0
    %3552 = vmatprep.subr.mxu0 0.0
    %3553 = vmatpush1.xpose.msra.mxu0 0.0
    %3554 = vmatprep.subr.mxu0 0.0
    %3555 = vmatpush1.xpose.msra.mxu0 0.0
    %3556 = vmatprep.subr.mxu0 0.0
    %3557 = vmatpush1.xpose.msra.mxu0 0.0
    %3558 = vmatprep.subr.mxu0 0.0
    %3559 = vmatpush1.xpose.msra.mxu0 0.0
    %3560 = vmatprep.subr.mxu0 0.0
    %3561 = vmatpush1.xpose.msra.mxu0 0.0
    %3562 = vmatprep.subr.mxu0 0.0
    %3563 = vmatpush1.xpose.msra.mxu0 0.0
    %3564 = vmatprep.subr.mxu0 %v2768
    %3565 = vmatpush1.xpose.msra.mxu0 %v2766
    %3566 = vmatprep.subr.mxu0 %v2762
    %3567 = vmatpush1.xpose.msra.mxu0 %v2760
    %3568 = vmatprep.subr.mxu0 0.0
    %3569 = vmatpush2.xpose.msra.mxu0 0.0
    %3570 = vmatprep.subr.mxu0 0.0
    %3571 = vmatpush2.xpose.msra.mxu0 0.0
    %3572 = vmatprep.subr.mxu0 0.0
    %3573 = vmatpush2.xpose.msra.mxu0 0.0
    %3574 = vmatprep.subr.mxu0 0.0
    %3575 = vmatpush2.xpose.msra.mxu0 0.0
    %3576 = vmatprep.subr.mxu0 0.0
    %3577 = vmatpush2.xpose.msra.mxu0 0.0
    %3578 = vmatprep.subr.mxu0 0.0
    %3579 = vmatpush2.xpose.msra.mxu0 0.0
    %3580 = vmatprep.subr.mxu0 0.0
    %3581 = vmatpush2.xpose.msra.mxu0 0.0
    %3582 = vmatprep.subr.mxu0 0.0
    %3583 = vmatpush2.xpose.msra.mxu0 0.0
    %3584 = vmatprep.subr.mxu0 0.0
    %3585 = vmatpush2.xpose.msra.mxu0 0.0
    %3586 = vmatprep.subr.mxu0 0.0
    %3587 = vmatpush2.xpose.msra.mxu0 0.0
    %3588 = vmatprep.subr.mxu0 0.0
    %3589 = vmatpush2.xpose.msra.mxu0 0.0
    %3590 = vmatprep.subr.mxu0 0.0
    %3591 = vmatpush2.xpose.msra.mxu0 0.0
    %3592 = vmatprep.subr.mxu0 0.0
    %3593 = vmatpush2.xpose.msra.mxu0 0.0
    %3594 = vmatprep.subr.mxu0 0.0
    %3595 = vmatpush2.xpose.msra.mxu0 0.0
    %3596 = vmatprep.subr.mxu0 0.0
    %3597 = vmatpush2.xpose.msra.mxu0 0.0
    %3598 = vmatprep.subr.mxu0 0.0
    %3599 = vmatpush2.xpose.msra.mxu0 0.0
    %3600 = vmatprep.mubr.f32.mxu0 %v3532
    %3601 = vmatmul.mubr.f32.gmra.mxu0 %v3531
    %v3602 = vpop.f32.mrf.mxu0
    %v3603 = vadd.f32 0.0, %v3602
    %v3604 = vpop.f32.mrf.mxu0
    %3605 = vdwg.mxu0
    %3606 = vmatprep.subr.mxu0 0.0
    %3607 = vmatpush1.xpose.msra.mxu0 0.0
    %3608 = vmatprep.subr.mxu0 0.0
    %3609 = vmatpush1.xpose.msra.mxu0 0.0
    %3610 = vmatprep.subr.mxu0 0.0
    %3611 = vmatpush1.xpose.msra.mxu0 0.0
    %3612 = vmatprep.subr.mxu0 0.0
    %3613 = vmatpush1.xpose.msra.mxu0 0.0
    %3614 = vmatprep.subr.mxu0 0.0
    %3615 = vmatpush1.xpose.msra.mxu0 0.0
    %3616 = vmatprep.subr.mxu0 0.0
    %3617 = vmatpush1.xpose.msra.mxu0 0.0
    %3618 = vmatprep.subr.mxu0 0.0
    %3619 = vmatpush1.xpose.msra.mxu0 0.0
    %3620 = vmatprep.subr.mxu0 0.0
    %3621 = vmatpush1.xpose.msra.mxu0 0.0
    %3622 = vmatprep.subr.mxu0 0.0
    %3623 = vmatpush1.xpose.msra.mxu0 0.0
    %3624 = vmatprep.subr.mxu0 0.0
    %3625 = vmatpush1.xpose.msra.mxu0 0.0
    %3626 = vmatprep.subr.mxu0 0.0
    %3627 = vmatpush1.xpose.msra.mxu0 0.0
    %3628 = vmatprep.subr.mxu0 0.0
    %3629 = vmatpush1.xpose.msra.mxu0 0.0
    %3630 = vmatprep.subr.mxu0 0.0
    %3631 = vmatpush1.xpose.msra.mxu0 0.0
    %3632 = vmatprep.subr.mxu0 0.0
    %3633 = vmatpush1.xpose.msra.mxu0 0.0
    %3634 = vmatprep.subr.mxu0 %v2999
    %3635 = vmatpush1.xpose.msra.mxu0 %v2997
    %3636 = vmatprep.subr.mxu0 %v2993
    %3637 = vmatpush1.xpose.msra.mxu0 %v2991
    %3638 = vmatprep.subr.mxu0 0.0
    %3639 = vmatpush2.xpose.msra.mxu0 0.0
    %3640 = vmatprep.subr.mxu0 0.0
    %3641 = vmatpush2.xpose.msra.mxu0 0.0
    %3642 = vmatprep.subr.mxu0 0.0
    %3643 = vmatpush2.xpose.msra.mxu0 0.0
    %3644 = vmatprep.subr.mxu0 0.0
    %3645 = vmatpush2.xpose.msra.mxu0 0.0
    %3646 = vmatprep.subr.mxu0 0.0
    %3647 = vmatpush2.xpose.msra.mxu0 0.0
    %3648 = vmatprep.subr.mxu0 0.0
    %3649 = vmatpush2.xpose.msra.mxu0 0.0
    %3650 = vmatprep.subr.mxu0 0.0
    %3651 = vmatpush2.xpose.msra.mxu0 0.0
    %3652 = vmatprep.subr.mxu0 0.0
    %3653 = vmatpush2.xpose.msra.mxu0 0.0
    %3654 = vmatprep.subr.mxu0 0.0
    %3655 = vmatpush2.xpose.msra.mxu0 0.0
    %3656 = vmatprep.subr.mxu0 0.0
    %3657 = vmatpush2.xpose.msra.mxu0 0.0
    %3658 = vmatprep.subr.mxu0 0.0
    %3659 = vmatpush2.xpose.msra.mxu0 0.0
    %3660 = vmatprep.subr.mxu0 0.0
    %3661 = vmatpush2.xpose.msra.mxu0 0.0
    %3662 = vmatprep.subr.mxu0 0.0
    %3663 = vmatpush2.xpose.msra.mxu0 0.0
    %3664 = vmatprep.subr.mxu0 0.0
    %3665 = vmatpush2.xpose.msra.mxu0 0.0
    %3666 = vmatprep.subr.mxu0 0.0
    %3667 = vmatpush2.xpose.msra.mxu0 0.0
    %3668 = vmatprep.subr.mxu0 0.0
    %3669 = vmatpush2.xpose.msra.mxu0 0.0
    %3670 = vmatprep.mubr.f32.mxu0 %v3534
    %3671 = vmatmul.mubr.f32.gmra.mxu0 %v3533
    %v3672 = vpop.f32.mrf.mxu0
    %v3673 = vadd.f32 %v3603, %v3672
    %v3674 = vpop.f32.mrf.mxu0
    %3675 = vdwg.mxu0
    %3676 = vmatprep.subr.mxu0 0.0
    %3677 = vmatpush1.xpose.msra.mxu0 0.0
    %3678 = vmatprep.subr.mxu0 0.0
    %3679 = vmatpush1.xpose.msra.mxu0 0.0
    %3680 = vmatprep.subr.mxu0 0.0
    %3681 = vmatpush1.xpose.msra.mxu0 0.0
    %3682 = vmatprep.subr.mxu0 0.0
    %3683 = vmatpush1.xpose.msra.mxu0 0.0
    %3684 = vmatprep.subr.mxu0 0.0
    %3685 = vmatpush1.xpose.msra.mxu0 0.0
    %3686 = vmatprep.subr.mxu0 0.0
    %3687 = vmatpush1.xpose.msra.mxu0 0.0
    %3688 = vmatprep.subr.mxu0 0.0
    %3689 = vmatpush1.xpose.msra.mxu0 0.0
    %3690 = vmatprep.subr.mxu0 0.0
    %3691 = vmatpush1.xpose.msra.mxu0 0.0
    %3692 = vmatprep.subr.mxu0 0.0
    %3693 = vmatpush1.xpose.msra.mxu0 0.0
    %3694 = vmatprep.subr.mxu0 0.0
    %3695 = vmatpush1.xpose.msra.mxu0 0.0
    %3696 = vmatprep.subr.mxu0 0.0
    %3697 = vmatpush1.xpose.msra.mxu0 0.0
    %3698 = vmatprep.subr.mxu0 0.0
    %3699 = vmatpush1.xpose.msra.mxu0 0.0
    %3700 = vmatprep.subr.mxu0 0.0
    %3701 = vmatpush1.xpose.msra.mxu0 0.0
    %3702 = vmatprep.subr.mxu0 0.0
    %3703 = vmatpush1.xpose.msra.mxu0 0.0
    %3704 = vmatprep.subr.mxu0 0.0
    %3705 = vmatpush1.xpose.msra.mxu0 %v3223
    %3706 = vmatprep.subr.mxu0 0.0
    %3707 = vmatpush1.xpose.msra.mxu0 %v3218
    %3708 = vmatprep.subr.mxu0 0.0
    %3709 = vmatpush2.xpose.msra.mxu0 0.0
    %3710 = vmatprep.subr.mxu0 0.0
    %3711 = vmatpush2.xpose.msra.mxu0 0.0
    %3712 = vmatprep.subr.mxu0 0.0
    %3713 = vmatpush2.xpose.msra.mxu0 0.0
    %3714 = vmatprep.subr.mxu0 0.0
    %3715 = vmatpush2.xpose.msra.mxu0 0.0
    %3716 = vmatprep.subr.mxu0 0.0
    %3717 = vmatpush2.xpose.msra.mxu0 0.0
    %3718 = vmatprep.subr.mxu0 0.0
    %3719 = vmatpush2.xpose.msra.mxu0 0.0
    %3720 = vmatprep.subr.mxu0 0.0
    %3721 = vmatpush2.xpose.msra.mxu0 0.0
    %3722 = vmatprep.subr.mxu0 0.0
    %3723 = vmatpush2.xpose.msra.mxu0 0.0
    %3724 = vmatprep.subr.mxu0 0.0
    %3725 = vmatpush2.xpose.msra.mxu0 0.0
    %3726 = vmatprep.subr.mxu0 0.0
    %3727 = vmatpush2.xpose.msra.mxu0 0.0
    %3728 = vmatprep.subr.mxu0 0.0
    %3729 = vmatpush2.xpose.msra.mxu0 0.0
    %3730 = vmatprep.subr.mxu0 0.0
    %3731 = vmatpush2.xpose.msra.mxu0 0.0
    %3732 = vmatprep.subr.mxu0 0.0
    %3733 = vmatpush2.xpose.msra.mxu0 0.0
    %3734 = vmatprep.subr.mxu0 0.0
    %3735 = vmatpush2.xpose.msra.mxu0 0.0
    %3736 = vmatprep.subr.mxu0 0.0
    %3737 = vmatpush2.xpose.msra.mxu0 0.0
    %3738 = vmatprep.subr.mxu0 0.0
    %3739 = vmatpush2.xpose.msra.mxu0 0.0
    %3740 = vmatprep.mubr.f32.mxu0 0.0
    %3741 = vmatmul.mubr.f32.gmra.mxu0 %v3535
    %v3742 = vpop.f32.mrf.mxu0
    %v3743 = vadd.f32 %v3673, %v3742
    %v3744 = vpop.f32.mrf.mxu0
    %3745 = vdwg.mxu0
    %s3746 = sld [smem:[#allocation20]]
    %s3747 = sld [smem:[#allocation20 + $0x1]]
    %s3748 = sld [smem:[#allocation20 + $0x2]]
    %s3749 = sld [smem:[#allocation20 + $0x3]]
    %s3750 = sld [smem:[#allocation20 + $0x4]]
    %3752 = vset.pattern.permute.xlu0 0
    %3753 = vperm.xlu0 %3752, %v3523
    %v3754 = vpop.permute.xlu0 %3753
    %3757 = vset.pattern.permute.xlu0 0
    %3758 = vperm.xlu0 %3757, %v3528
    %v3759 = vpop.permute.xlu0 %3758
    %v3761 = vlaneseq
    %v3762 = vshrl.u32 %v3761, 7
    %v3763 = vsub.s32 0, %v3762
    %v3764 = vrot.slane %v3743, %v3763
    %v3765 = vadd.f32 %v3754, %v3764
    %v3766 = vadd.f32 %v3759, %v3764
    %v3767 = vstv %s3746
    %v3768 = vmul.f32 %v3767, %v465
    %v3769 = vmul.f32 %v3767, %v466
    %v3770 = vadd.f32 %v3765, %v3768
    %v3771 = vadd.f32 %v3766, %v3769
    %v3772 = vmul.f32 %v3770, 0.2
    %v3773 = vmul.f32 %v3771, 0.2
    %v3774 = vmax.f32 %v3770, %v3772
    %v3775 = vmax.f32 %v3771, %v3773
    %v3776 = vadd.f32 %v3774, %v469
    %v3777 = vadd.f32 %v3775, %v470
    %v3778 = vsel %vm1281, %v3776, -inf
    %3779 = vmax.xlane.f32.xlu0 %v3778
    %v3780 = vpop.xlane.xlu0 %3779
    %v3781 = vsel %vm1281, %v3777, -inf
    %3782 = vmax.xlane.f32.xlu0 %v3781
    %v3783 = vpop.xlane.xlu0 %3782
    %v3784 = vsub.f32 %v3776, %v3780
    %v3785 = vsub.f32 %v3777, %v3783
    %v3786 = vmul.f32 %v3784, 1.442695
    %v3787 = vpow.pop %v3786
    %v3788 = vmul.f32 %v3785, 1.442695
    %v3789 = vpow.pop %v3788
    %v3790 = vsel %vm1281, %v3787, 0.0
    %3791 = vadd.xlane.f32.xlu0 %v3790
    %v3792 = vpop.xlane.xlu0 %3791
    %v3793 = vsel %vm1281, %v3789, 0.0
    %3794 = vadd.xlane.f32.xlu0 %v3793
    %v3795 = vpop.xlane.xlu0 %3794
    %v3797 = vsel %vm1281, %v3787, 0
    %v3800 = vsel %vm1281, %v3789, 0
    %3802 = vmatprep.subr.mxu0 0.0
    %3803 = vmatpush1.msra.mxu0 0.0
    %3804 = vmatprep.subr.mxu0 0.0
    %3805 = vmatpush1.msra.mxu0 0.0
    %3806 = vmatprep.subr.mxu0 0.0
    %3807 = vmatpush1.msra.mxu0 0.0
    %3808 = vmatprep.subr.mxu0 0.0
    %3809 = vmatpush1.msra.mxu0 0.0
    %3810 = vmatprep.subr.mxu0 0.0
    %3811 = vmatpush1.msra.mxu0 0.0
    %3812 = vmatprep.subr.mxu0 0.0
    %3813 = vmatpush1.msra.mxu0 0.0
    %3814 = vmatprep.subr.mxu0 0.0
    %3815 = vmatpush1.msra.mxu0 0.0
    %3816 = vmatprep.subr.mxu0 0.0
    %3817 = vmatpush1.msra.mxu0 0.0
    %3818 = vmatprep.subr.mxu0 0.0
    %3819 = vmatpush1.msra.mxu0 0.0
    %3820 = vmatprep.subr.mxu0 0.0
    %3821 = vmatpush1.msra.mxu0 0.0
    %3822 = vmatprep.subr.mxu0 0.0
    %3823 = vmatpush1.msra.mxu0 0.0
    %3824 = vmatprep.subr.mxu0 0.0
    %3825 = vmatpush1.msra.mxu0 0.0
    %3826 = vmatprep.subr.mxu0 0.0
    %3827 = vmatpush1.msra.mxu0 0.0
    %3828 = vmatprep.subr.mxu0 0.0
    %3829 = vmatpush1.msra.mxu0 0.0
    %3830 = vmatprep.subr.mxu0 0.0
    %3831 = vmatpush1.msra.mxu0 %v2766
    %3832 = vmatprep.subr.mxu0 0.0
    %3833 = vmatpush1.msra.mxu0 %v2760
    %3834 = vmatprep.subr.mxu0 0.0
    %3835 = vmatpush2.msra.mxu0 0.0
    %3836 = vmatprep.subr.mxu0 0.0
    %3837 = vmatpush2.msra.mxu0 0.0
    %3838 = vmatprep.subr.mxu0 0.0
    %3839 = vmatpush2.msra.mxu0 0.0
    %3840 = vmatprep.subr.mxu0 0.0
    %3841 = vmatpush2.msra.mxu0 0.0
    %3842 = vmatprep.subr.mxu0 0.0
    %3843 = vmatpush2.msra.mxu0 0.0
    %3844 = vmatprep.subr.mxu0 0.0
    %3845 = vmatpush2.msra.mxu0 0.0
    %3846 = vmatprep.subr.mxu0 0.0
    %3847 = vmatpush2.msra.mxu0 0.0
    %3848 = vmatprep.subr.mxu0 0.0
    %3849 = vmatpush2.msra.mxu0 0.0
    %3850 = vmatprep.subr.mxu0 0.0
    %3851 = vmatpush2.msra.mxu0 0.0
    %3852 = vmatprep.subr.mxu0 0.0
    %3853 = vmatpush2.msra.mxu0 0.0
    %3854 = vmatprep.subr.mxu0 0.0
    %3855 = vmatpush2.msra.mxu0 0.0
    %3856 = vmatprep.subr.mxu0 0.0
    %3857 = vmatpush2.msra.mxu0 0.0
    %3858 = vmatprep.subr.mxu0 0.0
    %3859 = vmatpush2.msra.mxu0 0.0
    %3860 = vmatprep.subr.mxu0 0.0
    %3861 = vmatpush2.msra.mxu0 0.0
    %3862 = vmatprep.subr.mxu0 0.0
    %3863 = vmatpush2.msra.mxu0 0.0
    %3864 = vmatprep.subr.mxu0 0.0
    %3865 = vmatpush2.msra.mxu0 0.0
    %3866 = vmatprep.mubr.f32.mxu0 0.0
    %3867 = vmatmul.mubr.f32.gmra.mxu0 %v3797
    %v3868 = vpop.f32.mrf.mxu0
    %v3869 = vadd.f32 0.0, %v3868
    %v3870 = vpop.f32.mrf.mxu0
    %3871 = vmatprep.mubr.f32.mxu0 0.0
    %3872 = vmatmul.mubr.f32.gmra.mxu0 %v3800
    %v3873 = vpop.f32.mrf.mxu0
    %v3874 = vadd.f32 0.0, %v3873
    %v3875 = vpop.f32.mrf.mxu0
    %3876 = vdwg.mxu0
    %v3877 = vrcp.pop %v3792
    %v3878 = vrcp.pop %v3795
    %v3879 = vmul.f32 %v3869, %v3877
    %v3880 = vmul.f32 %v3874, %v3878
    %3881 = vset.pattern.permute.xlu0 1
    %3882 = vperm.xlu0 %3881, %v3523
    %v3883 = vpop.permute.xlu0 %3882
    %3885 = vset.pattern.permute.xlu0 1
    %3886 = vperm.xlu0 %3885, %v3528
    %v3887 = vpop.permute.xlu0 %3886
    %v3889 = vlaneseq
    %v3890 = vshrl.u32 %v3889, 7
    %v3891 = vsub.s32 1, %v3890
    %v3892 = vrot.slane %v3743, %v3891
    %v3893 = vadd.f32 %v3883, %v3892
    %v3894 = vadd.f32 %v3887, %v3892
    %v3895 = vstv %s3747
    %v3896 = vmul.f32 %v3895, %v465
    %v3897 = vmul.f32 %v3895, %v466
    %v3898 = vadd.f32 %v3893, %v3896
    %v3899 = vadd.f32 %v3894, %v3897
    %v3900 = vmul.f32 %v3898, 0.2
    %v3901 = vmul.f32 %v3899, 0.2
    %v3902 = vmax.f32 %v3898, %v3900
    %v3903 = vmax.f32 %v3899, %v3901
    %v3904 = vadd.f32 %v3902, %v469
    %v3905 = vadd.f32 %v3903, %v470
    %v3906 = vsel %vm1281, %v3904, -inf
    %3907 = vmax.xlane.f32.xlu0 %v3906
    %v3908 = vpop.xlane.xlu0 %3907
    %v3909 = vsel %vm1281, %v3905, -inf
    %3910 = vmax.xlane.f32.xlu0 %v3909
    %v3911 = vpop.xlane.xlu0 %3910
    %v3912 = vsub.f32 %v3904, %v3908
    %v3913 = vsub.f32 %v3905, %v3911
    %v3914 = vmul.f32 %v3912, 1.442695
    %v3915 = vpow.pop %v3914
    %v3916 = vmul.f32 %v3913, 1.442695
    %v3917 = vpow.pop %v3916
    %v3918 = vsel %vm1281, %v3915, 0.0
    %3919 = vadd.xlane.f32.xlu0 %v3918
    %v3920 = vpop.xlane.xlu0 %3919
    %v3921 = vsel %vm1281, %v3917, 0.0
    %3922 = vadd.xlane.f32.xlu0 %v3921
    %v3923 = vpop.xlane.xlu0 %3922
    %v3925 = vsel %vm1281, %v3915, 0
    %v3928 = vsel %vm1281, %v3917, 0
    %3930 = vmatprep.subr.mxu0 0.0
    %3931 = vmatpush1.msra.mxu0 0.0
    %3932 = vmatprep.subr.mxu0 0.0
    %3933 = vmatpush1.msra.mxu0 0.0
    %3934 = vmatprep.subr.mxu0 0.0
    %3935 = vmatpush1.msra.mxu0 0.0
    %3936 = vmatprep.subr.mxu0 0.0
    %3937 = vmatpush1.msra.mxu0 0.0
    %3938 = vmatprep.subr.mxu0 0.0
    %3939 = vmatpush1.msra.mxu0 0.0
    %3940 = vmatprep.subr.mxu0 0.0
    %3941 = vmatpush1.msra.mxu0 0.0
    %3942 = vmatprep.subr.mxu0 0.0
    %3943 = vmatpush1.msra.mxu0 0.0
    %3944 = vmatprep.subr.mxu0 0.0
    %3945 = vmatpush1.msra.mxu0 0.0
    %3946 = vmatprep.subr.mxu0 0.0
    %3947 = vmatpush1.msra.mxu0 0.0
    %3948 = vmatprep.subr.mxu0 0.0
    %3949 = vmatpush1.msra.mxu0 0.0
    %3950 = vmatprep.subr.mxu0 0.0
    %3951 = vmatpush1.msra.mxu0 0.0
    %3952 = vmatprep.subr.mxu0 0.0
    %3953 = vmatpush1.msra.mxu0 0.0
    %3954 = vmatprep.subr.mxu0 0.0
    %3955 = vmatpush1.msra.mxu0 0.0
    %3956 = vmatprep.subr.mxu0 0.0
    %3957 = vmatpush1.msra.mxu0 0.0
    %3958 = vmatprep.subr.mxu0 0.0
    %3959 = vmatpush1.msra.mxu0 %v2768
    %3960 = vmatprep.subr.mxu0 0.0
    %3961 = vmatpush1.msra.mxu0 %v2762
    %3962 = vmatprep.subr.mxu0 0.0
    %3963 = vmatpush2.msra.mxu0 0.0
    %3964 = vmatprep.subr.mxu0 0.0
    %3965 = vmatpush2.msra.mxu0 0.0
    %3966 = vmatprep.subr.mxu0 0.0
    %3967 = vmatpush2.msra.mxu0 0.0
    %3968 = vmatprep.subr.mxu0 0.0
    %3969 = vmatpush2.msra.mxu0 0.0
    %3970 = vmatprep.subr.mxu0 0.0
    %3971 = vmatpush2.msra.mxu0 0.0
    %3972 = vmatprep.subr.mxu0 0.0
    %3973 = vmatpush2.msra.mxu0 0.0
    %3974 = vmatprep.subr.mxu0 0.0
    %3975 = vmatpush2.msra.mxu0 0.0
    %3976 = vmatprep.subr.mxu0 0.0
    %3977 = vmatpush2.msra.mxu0 0.0
    %3978 = vmatprep.subr.mxu0 0.0
    %3979 = vmatpush2.msra.mxu0 0.0
    %3980 = vmatprep.subr.mxu0 0.0
    %3981 = vmatpush2.msra.mxu0 0.0
    %3982 = vmatprep.subr.mxu0 0.0
    %3983 = vmatpush2.msra.mxu0 0.0
    %3984 = vmatprep.subr.mxu0 0.0
    %3985 = vmatpush2.msra.mxu0 0.0
    %3986 = vmatprep.subr.mxu0 0.0
    %3987 = vmatpush2.msra.mxu0 0.0
    %3988 = vmatprep.subr.mxu0 0.0
    %3989 = vmatpush2.msra.mxu0 0.0
    %3990 = vmatprep.subr.mxu0 0.0
    %3991 = vmatpush2.msra.mxu0 0.0
    %3992 = vmatprep.subr.mxu0 0.0
    %3993 = vmatpush2.msra.mxu0 0.0
    %3994 = vmatprep.mubr.f32.mxu0 0.0
    %3995 = vmatmul.mubr.f32.gmra.mxu0 %v3925
    %v3996 = vpop.f32.mrf.mxu0
    %v3997 = vadd.f32 0.0, %v3996
    %v3998 = vpop.f32.mrf.mxu0
    %3999 = vmatprep.mubr.f32.mxu0 0.0
    %4000 = vmatmul.mubr.f32.gmra.mxu0 %v3928
    %v4001 = vpop.f32.mrf.mxu0
    %v4002 = vadd.f32 0.0, %v4001
    %v4003 = vpop.f32.mrf.mxu0
    %4004 = vdwg.mxu0
    %v4005 = vrcp.pop %v3920
    %v4006 = vrcp.pop %v3923
    %v4007 = vmul.f32 %v3997, %v4005
    %v4008 = vmul.f32 %v4002, %v4006
    %4009 = vset.pattern.permute.xlu0 2
    %4010 = vperm.xlu0 %4009, %v3523
    %v4011 = vpop.permute.xlu0 %4010
    %4013 = vset.pattern.permute.xlu0 2
    %4014 = vperm.xlu0 %4013, %v3528
    %v4015 = vpop.permute.xlu0 %4014
    %v4017 = vlaneseq
    %v4018 = vshrl.u32 %v4017, 7
    %v4019 = vsub.s32 2, %v4018
    %v4020 = vrot.slane %v3743, %v4019
    %v4021 = vadd.f32 %v4011, %v4020
    %v4022 = vadd.f32 %v4015, %v4020
    %v4023 = vstv %s3748
    %v4024 = vmul.f32 %v4023, %v465
    %v4025 = vmul.f32 %v4023, %v466
    %v4026 = vadd.f32 %v4021, %v4024
    %v4027 = vadd.f32 %v4022, %v4025
    %v4028 = vmul.f32 %v4026, 0.2
    %v4029 = vmul.f32 %v4027, 0.2
    %v4030 = vmax.f32 %v4026, %v4028
    %v4031 = vmax.f32 %v4027, %v4029
    %v4032 = vadd.f32 %v4030, %v469
    %v4033 = vadd.f32 %v4031, %v470
    %v4034 = vsel %vm1281, %v4032, -inf
    %4035 = vmax.xlane.f32.xlu0 %v4034
    %v4036 = vpop.xlane.xlu0 %4035
    %v4037 = vsel %vm1281, %v4033, -inf
    %4038 = vmax.xlane.f32.xlu0 %v4037
    %v4039 = vpop.xlane.xlu0 %4038
    %v4040 = vsub.f32 %v4032, %v4036
    %v4041 = vsub.f32 %v4033, %v4039
    %v4042 = vmul.f32 %v4040, 1.442695
    %v4043 = vpow.pop %v4042
    %v4044 = vmul.f32 %v4041, 1.442695
    %v4045 = vpow.pop %v4044
    %v4046 = vsel %vm1281, %v4043, 0.0
    %4047 = vadd.xlane.f32.xlu0 %v4046
    %v4048 = vpop.xlane.xlu0 %4047
    %v4049 = vsel %vm1281, %v4045, 0.0
    %4050 = vadd.xlane.f32.xlu0 %v4049
    %v4051 = vpop.xlane.xlu0 %4050
    %v4053 = vsel %vm1281, %v4043, 0
    %v4056 = vsel %vm1281, %v4045, 0
    %4058 = vmatprep.subr.mxu0 0.0
    %4059 = vmatpush1.msra.mxu0 0.0
    %4060 = vmatprep.subr.mxu0 0.0
    %4061 = vmatpush1.msra.mxu0 0.0
    %4062 = vmatprep.subr.mxu0 0.0
    %4063 = vmatpush1.msra.mxu0 0.0
    %4064 = vmatprep.subr.mxu0 0.0
    %4065 = vmatpush1.msra.mxu0 0.0
    %4066 = vmatprep.subr.mxu0 0.0
    %4067 = vmatpush1.msra.mxu0 0.0
    %4068 = vmatprep.subr.mxu0 0.0
    %4069 = vmatpush1.msra.mxu0 0.0
    %4070 = vmatprep.subr.mxu0 0.0
    %4071 = vmatpush1.msra.mxu0 0.0
    %4072 = vmatprep.subr.mxu0 0.0
    %4073 = vmatpush1.msra.mxu0 0.0
    %4074 = vmatprep.subr.mxu0 0.0
    %4075 = vmatpush1.msra.mxu0 0.0
    %4076 = vmatprep.subr.mxu0 0.0
    %4077 = vmatpush1.msra.mxu0 0.0
    %4078 = vmatprep.subr.mxu0 0.0
    %4079 = vmatpush1.msra.mxu0 0.0
    %4080 = vmatprep.subr.mxu0 0.0
    %4081 = vmatpush1.msra.mxu0 0.0
    %4082 = vmatprep.subr.mxu0 0.0
    %4083 = vmatpush1.msra.mxu0 0.0
    %4084 = vmatprep.subr.mxu0 0.0
    %4085 = vmatpush1.msra.mxu0 0.0
    %4086 = vmatprep.subr.mxu0 0.0
    %4087 = vmatpush1.msra.mxu0 %v2997
    %4088 = vmatprep.subr.mxu0 0.0
    %4089 = vmatpush1.msra.mxu0 %v2991
    %4090 = vmatprep.subr.mxu0 0.0
    %4091 = vmatpush2.msra.mxu0 0.0
    %4092 = vmatprep.subr.mxu0 0.0
    %4093 = vmatpush2.msra.mxu0 0.0
    %4094 = vmatprep.subr.mxu0 0.0
    %4095 = vmatpush2.msra.mxu0 0.0
    %4096 = vmatprep.subr.mxu0 0.0
    %4097 = vmatpush2.msra.mxu0 0.0
    %4098 = vmatprep.subr.mxu0 0.0
    %4099 = vmatpush2.msra.mxu0 0.0
    %4100 = vmatprep.subr.mxu0 0.0
    %4101 = vmatpush2.msra.mxu0 0.0
    %4102 = vmatprep.subr.mxu0 0.0
    %4103 = vmatpush2.msra.mxu0 0.0
    %4104 = vmatprep.subr.mxu0 0.0
    %4105 = vmatpush2.msra.mxu0 0.0
    %4106 = vmatprep.subr.mxu0 0.0
    %4107 = vmatpush2.msra.mxu0 0.0
    %4108 = vmatprep.subr.mxu0 0.0
    %4109 = vmatpush2.msra.mxu0 0.0
    %4110 = vmatprep.subr.mxu0 0.0
    %4111 = vmatpush2.msra.mxu0 0.0
    %4112 = vmatprep.subr.mxu0 0.0
    %4113 = vmatpush2.msra.mxu0 0.0
    %4114 = vmatprep.subr.mxu0 0.0
    %4115 = vmatpush2.msra.mxu0 0.0
    %4116 = vmatprep.subr.mxu0 0.0
    %4117 = vmatpush2.msra.mxu0 0.0
    %4118 = vmatprep.subr.mxu0 0.0
    %4119 = vmatpush2.msra.mxu0 0.0
    %4120 = vmatprep.subr.mxu0 0.0
    %4121 = vmatpush2.msra.mxu0 0.0
    %4122 = vmatprep.mubr.f32.mxu0 0.0
    %4123 = vmatmul.mubr.f32.gmra.mxu0 %v4053
    %v4124 = vpop.f32.mrf.mxu0
    %v4125 = vadd.f32 0.0, %v4124
    %v4126 = vpop.f32.mrf.mxu0
    %4127 = vmatprep.mubr.f32.mxu0 0.0
    %4128 = vmatmul.mubr.f32.gmra.mxu0 %v4056
    %v4129 = vpop.f32.mrf.mxu0
    %v4130 = vadd.f32 0.0, %v4129
    %v4131 = vpop.f32.mrf.mxu0
    %4132 = vdwg.mxu0
    %v4133 = vrcp.pop %v4048
    %v4134 = vrcp.pop %v4051
    %v4135 = vmul.f32 %v4125, %v4133
    %v4136 = vmul.f32 %v4130, %v4134
    %4137 = vset.pattern.permute.xlu0 3
    %4138 = vperm.xlu0 %4137, %v3523
    %v4139 = vpop.permute.xlu0 %4138
    %4141 = vset.pattern.permute.xlu0 3
    %4142 = vperm.xlu0 %4141, %v3528
    %v4143 = vpop.permute.xlu0 %4142
    %v4145 = vlaneseq
    %v4146 = vshrl.u32 %v4145, 7
    %v4147 = vsub.s32 3, %v4146
    %v4148 = vrot.slane %v3743, %v4147
    %v4149 = vadd.f32 %v4139, %v4148
    %v4150 = vadd.f32 %v4143, %v4148
    %v4151 = vstv %s3749
    %v4152 = vmul.f32 %v4151, %v465
    %v4153 = vmul.f32 %v4151, %v466
    %v4154 = vadd.f32 %v4149, %v4152
    %v4155 = vadd.f32 %v4150, %v4153
    %v4156 = vmul.f32 %v4154, 0.2
    %v4157 = vmul.f32 %v4155, 0.2
    %v4158 = vmax.f32 %v4154, %v4156
    %v4159 = vmax.f32 %v4155, %v4157
    %v4160 = vadd.f32 %v4158, %v469
    %v4161 = vadd.f32 %v4159, %v470
    %v4162 = vsel %vm1281, %v4160, -inf
    %4163 = vmax.xlane.f32.xlu0 %v4162
    %v4164 = vpop.xlane.xlu0 %4163
    %v4165 = vsel %vm1281, %v4161, -inf
    %4166 = vmax.xlane.f32.xlu0 %v4165
    %v4167 = vpop.xlane.xlu0 %4166
    %v4168 = vsub.f32 %v4160, %v4164
    %v4169 = vsub.f32 %v4161, %v4167
    %v4170 = vmul.f32 %v4168, 1.442695
    %v4171 = vpow.pop %v4170
    %v4172 = vmul.f32 %v4169, 1.442695
    %v4173 = vpow.pop %v4172
    %v4174 = vsel %vm1281, %v4171, 0.0
    %4175 = vadd.xlane.f32.xlu0 %v4174
    %v4176 = vpop.xlane.xlu0 %4175
    %v4177 = vsel %vm1281, %v4173, 0.0
    %4178 = vadd.xlane.f32.xlu0 %v4177
    %v4179 = vpop.xlane.xlu0 %4178
    %v4181 = vsel %vm1281, %v4171, 0
    %v4184 = vsel %vm1281, %v4173, 0
    %4186 = vmatprep.subr.mxu0 0.0
    %4187 = vmatpush1.msra.mxu0 0.0
    %4188 = vmatprep.subr.mxu0 0.0
    %4189 = vmatpush1.msra.mxu0 0.0
    %4190 = vmatprep.subr.mxu0 0.0
    %4191 = vmatpush1.msra.mxu0 0.0
    %4192 = vmatprep.subr.mxu0 0.0
    %4193 = vmatpush1.msra.mxu0 0.0
    %4194 = vmatprep.subr.mxu0 0.0
    %4195 = vmatpush1.msra.mxu0 0.0
    %4196 = vmatprep.subr.mxu0 0.0
    %4197 = vmatpush1.msra.mxu0 0.0
    %4198 = vmatprep.subr.mxu0 0.0
    %4199 = vmatpush1.msra.mxu0 0.0
    %4200 = vmatprep.subr.mxu0 0.0
    %4201 = vmatpush1.msra.mxu0 0.0
    %4202 = vmatprep.subr.mxu0 0.0
    %4203 = vmatpush1.msra.mxu0 0.0
    %4204 = vmatprep.subr.mxu0 0.0
    %4205 = vmatpush1.msra.mxu0 0.0
    %4206 = vmatprep.subr.mxu0 0.0
    %4207 = vmatpush1.msra.mxu0 0.0
    %4208 = vmatprep.subr.mxu0 0.0
    %4209 = vmatpush1.msra.mxu0 0.0
    %4210 = vmatprep.subr.mxu0 0.0
    %4211 = vmatpush1.msra.mxu0 0.0
    %4212 = vmatprep.subr.mxu0 0.0
    %4213 = vmatpush1.msra.mxu0 0.0
    %4214 = vmatprep.subr.mxu0 0.0
    %4215 = vmatpush1.msra.mxu0 %v2999
    %4216 = vmatprep.subr.mxu0 0.0
    %4217 = vmatpush1.msra.mxu0 %v2993
    %4218 = vmatprep.subr.mxu0 0.0
    %4219 = vmatpush2.msra.mxu0 0.0
    %4220 = vmatprep.subr.mxu0 0.0
    %4221 = vmatpush2.msra.mxu0 0.0
    %4222 = vmatprep.subr.mxu0 0.0
    %4223 = vmatpush2.msra.mxu0 0.0
    %4224 = vmatprep.subr.mxu0 0.0
    %4225 = vmatpush2.msra.mxu0 0.0
    %4226 = vmatprep.subr.mxu0 0.0
    %4227 = vmatpush2.msra.mxu0 0.0
    %4228 = vmatprep.subr.mxu0 0.0
    %4229 = vmatpush2.msra.mxu0 0.0
    %4230 = vmatprep.subr.mxu0 0.0
    %4231 = vmatpush2.msra.mxu0 0.0
    %4232 = vmatprep.subr.mxu0 0.0
    %4233 = vmatpush2.msra.mxu0 0.0
    %4234 = vmatprep.subr.mxu0 0.0
    %4235 = vmatpush2.msra.mxu0 0.0
    %4236 = vmatprep.subr.mxu0 0.0
    %4237 = vmatpush2.msra.mxu0 0.0
    %4238 = vmatprep.subr.mxu0 0.0
    %4239 = vmatpush2.msra.mxu0 0.0
    %4240 = vmatprep.subr.mxu0 0.0
    %4241 = vmatpush2.msra.mxu0 0.0
    %4242 = vmatprep.subr.mxu0 0.0
    %4243 = vmatpush2.msra.mxu0 0.0
    %4244 = vmatprep.subr.mxu0 0.0
    %4245 = vmatpush2.msra.mxu0 0.0
    %4246 = vmatprep.subr.mxu0 0.0
    %4247 = vmatpush2.msra.mxu0 0.0
    %4248 = vmatprep.subr.mxu0 0.0
    %4249 = vmatpush2.msra.mxu0 0.0
    %4250 = vmatprep.mubr.f32.mxu0 0.0
    %4251 = vmatmul.mubr.f32.gmra.mxu0 %v4181
    %v4252 = vpop.f32.mrf.mxu0
    %v4253 = vadd.f32 0.0, %v4252
    %v4254 = vpop.f32.mrf.mxu0
    %4255 = vmatprep.mubr.f32.mxu0 0.0
    %4256 = vmatmul.mubr.f32.gmra.mxu0 %v4184
    %v4257 = vpop.f32.mrf.mxu0
    %v4258 = vadd.f32 0.0, %v4257
    %v4259 = vpop.f32.mrf.mxu0
    %4260 = vdwg.mxu0
    %v4261 = vrcp.pop %v4176
    %v4262 = vrcp.pop %v4179
    %v4263 = vmul.f32 %v4253, %v4261
    %v4264 = vmul.f32 %v4258, %v4262
    %4265 = vset.pattern.permute.xlu0 4
    %4266 = vperm.xlu0 %4265, %v3523
    %v4267 = vpop.permute.xlu0 %4266
    %4269 = vset.pattern.permute.xlu0 4
    %4270 = vperm.xlu0 %4269, %v3528
    %v4271 = vpop.permute.xlu0 %4270
    %v4273 = vlaneseq
    %v4274 = vshrl.u32 %v4273, 7
    %v4275 = vsub.s32 4, %v4274
    %v4276 = vrot.slane %v3743, %v4275
    %v4277 = vadd.f32 %v4267, %v4276
    %v4278 = vadd.f32 %v4271, %v4276
    %v4279 = vstv %s3750
    %v4280 = vmul.f32 %v4279, %v465
    %v4281 = vmul.f32 %v4279, %v466
    %v4282 = vadd.f32 %v4277, %v4280
    %v4283 = vadd.f32 %v4278, %v4281
    %v4284 = vmul.f32 %v4282, 0.2
    %v4285 = vmul.f32 %v4283, 0.2
    %v4286 = vmax.f32 %v4282, %v4284
    %v4287 = vmax.f32 %v4283, %v4285
    %v4288 = vadd.f32 %v4286, %v469
    %v4289 = vadd.f32 %v4287, %v470
    %v4290 = vsel %vm1281, %v4288, -inf
    %4291 = vmax.xlane.f32.xlu0 %v4290
    %v4292 = vpop.xlane.xlu0 %4291
    %v4293 = vsel %vm1281, %v4289, -inf
    %4294 = vmax.xlane.f32.xlu0 %v4293
    %v4295 = vpop.xlane.xlu0 %4294
    %v4296 = vsub.f32 %v4288, %v4292
    %v4297 = vsub.f32 %v4289, %v4295
    %v4298 = vmul.f32 %v4296, 1.442695
    %v4299 = vpow.pop %v4298
    %v4300 = vmul.f32 %v4297, 1.442695
    %v4301 = vpow.pop %v4300
    %v4302 = vsel %vm1281, %v4299, 0.0
    %4303 = vadd.xlane.f32.xlu0 %v4302
    %v4304 = vpop.xlane.xlu0 %4303
    %v4305 = vsel %vm1281, %v4301, 0.0
    %4306 = vadd.xlane.f32.xlu0 %v4305
    %v4307 = vpop.xlane.xlu0 %4306
    %v4309 = vsel %vm1281, %v4299, 0
    %v4312 = vsel %vm1281, %v4301, 0
    %4314 = vmatprep.subr.mxu0 0.0
    %4315 = vmatpush1.msra.mxu0 0.0
    %4316 = vmatprep.subr.mxu0 0.0
    %4317 = vmatpush1.msra.mxu0 0.0
    %4318 = vmatprep.subr.mxu0 0.0
    %4319 = vmatpush1.msra.mxu0 0.0
    %4320 = vmatprep.subr.mxu0 0.0
    %4321 = vmatpush1.msra.mxu0 0.0
    %4322 = vmatprep.subr.mxu0 0.0
    %4323 = vmatpush1.msra.mxu0 0.0
    %4324 = vmatprep.subr.mxu0 0.0
    %4325 = vmatpush1.msra.mxu0 0.0
    %4326 = vmatprep.subr.mxu0 0.0
    %4327 = vmatpush1.msra.mxu0 0.0
    %4328 = vmatprep.subr.mxu0 0.0
    %4329 = vmatpush1.msra.mxu0 0.0
    %4330 = vmatprep.subr.mxu0 0.0
    %4331 = vmatpush1.msra.mxu0 0.0
    %4332 = vmatprep.subr.mxu0 0.0
    %4333 = vmatpush1.msra.mxu0 0.0
    %4334 = vmatprep.subr.mxu0 0.0
    %4335 = vmatpush1.msra.mxu0 0.0
    %4336 = vmatprep.subr.mxu0 0.0
    %4337 = vmatpush1.msra.mxu0 0.0
    %4338 = vmatprep.subr.mxu0 0.0
    %4339 = vmatpush1.msra.mxu0 0.0
    %4340 = vmatprep.subr.mxu0 0.0
    %4341 = vmatpush1.msra.mxu0 0.0
    %4342 = vmatprep.subr.mxu0 0.0
    %4343 = vmatpush1.msra.mxu0 %v3223
    %4344 = vmatprep.subr.mxu0 0.0
    %4345 = vmatpush1.msra.mxu0 %v3218
    %4346 = vmatprep.subr.mxu0 0.0
    %4347 = vmatpush2.msra.mxu0 0.0
    %4348 = vmatprep.subr.mxu0 0.0
    %4349 = vmatpush2.msra.mxu0 0.0
    %4350 = vmatprep.subr.mxu0 0.0
    %4351 = vmatpush2.msra.mxu0 0.0
    %4352 = vmatprep.subr.mxu0 0.0
    %4353 = vmatpush2.msra.mxu0 0.0
    %4354 = vmatprep.subr.mxu0 0.0
    %4355 = vmatpush2.msra.mxu0 0.0
    %4356 = vmatprep.subr.mxu0 0.0
    %4357 = vmatpush2.msra.mxu0 0.0
    %4358 = vmatprep.subr.mxu0 0.0
    %4359 = vmatpush2.msra.mxu0 0.0
    %4360 = vmatprep.subr.mxu0 0.0
    %4361 = vmatpush2.msra.mxu0 0.0
    %4362 = vmatprep.subr.mxu0 0.0
    %4363 = vmatpush2.msra.mxu0 0.0
    %4364 = vmatprep.subr.mxu0 0.0
    %4365 = vmatpush2.msra.mxu0 0.0
    %4366 = vmatprep.subr.mxu0 0.0
    %4367 = vmatpush2.msra.mxu0 0.0
    %4368 = vmatprep.subr.mxu0 0.0
    %4369 = vmatpush2.msra.mxu0 0.0
    %4370 = vmatprep.subr.mxu0 0.0
    %4371 = vmatpush2.msra.mxu0 0.0
    %4372 = vmatprep.subr.mxu0 0.0
    %4373 = vmatpush2.msra.mxu0 0.0
    %4374 = vmatprep.subr.mxu0 0.0
    %4375 = vmatpush2.msra.mxu0 0.0
    %4376 = vmatprep.subr.mxu0 0.0
    %4377 = vmatpush2.msra.mxu0 0.0
    %4378 = vmatprep.mubr.f32.mxu0 0.0
    %4379 = vmatmul.mubr.f32.gmra.mxu0 %v4309
    %v4380 = vpop.f32.mrf.mxu0
    %v4381 = vadd.f32 0.0, %v4380
    %v4382 = vpop.f32.mrf.mxu0
    %4383 = vmatprep.mubr.f32.mxu0 0.0
    %4384 = vmatmul.mubr.f32.gmra.mxu0 %v4312
    %v4385 = vpop.f32.mrf.mxu0
    %v4386 = vadd.f32 0.0, %v4385
    %v4387 = vpop.f32.mrf.mxu0
    %4388 = vdwg.mxu0
    %v4389 = vrcp.pop %v4304
    %v4390 = vrcp.pop %v4307
    %v4391 = vmul.f32 %v4381, %v4389
    %v4392 = vmul.f32 %v4386, %v4390
    %v4393 = vld [vmem:[#allocation19] sm:$0x1f]
    %v4395 = vlaneseq
    %v4396 = vshrl.u32 %v4395, 7
    %v4397 = vsub.s32 0, %v4396
    %v4398 = vrot.slane %v4393, %v4397
    %v4399 = vlaneseq
    %v4400 = vshrl.u32 %v4399, 7
    %v4401 = vsub.s32 1, %v4400
    %v4402 = vrot.slane %v4393, %v4401
    %v4403 = vlaneseq
    %v4404 = vshrl.u32 %v4403, 7
    %v4405 = vsub.s32 2, %v4404
    %v4406 = vrot.slane %v4393, %v4405
    %v4407 = vlaneseq
    %v4408 = vshrl.u32 %v4407, 7
    %v4409 = vsub.s32 3, %v4408
    %v4410 = vrot.slane %v4393, %v4409
    %v4411 = vlaneseq
    %v4412 = vshrl.u32 %v4411, 7
    %v4413 = vsub.s32 4, %v4412
    %v4414 = vrot.slane %v4393, %v4413
    %v4420 = vadd.f32 %v3879, %v4398
    %v4421 = vadd.f32 %v4007, %v4402
    %v4422 = vadd.f32 %v4135, %v4406
    %v4423 = vadd.f32 %v4263, %v4410
    %v4424 = vadd.f32 %v4391, %v4414
    %v4425 = vadd.f32 %v3880, %v4398
    %v4426 = vadd.f32 %v4008, %v4402
    %v4427 = vadd.f32 %v4136, %v4406
    %v4428 = vadd.f32 %v4264, %v4410
    %v4429 = vadd.f32 %v4392, %v4414
    %v4430 = vadd.f32 %v4420, %v4425
    %v4431 = vrot.slane %v4430, 4
    %v4432 = vadd.f32 %v4430, %v4431
    %v4433 = vrot.slane %v4432, 2
    %v4434 = vadd.f32 %v4432, %v4433
    %v4435 = vrot.slane %v4434, 1
    %v4436 = vadd.f32 %v4434, %v4435
    %v4437 = vadd.f32 %v4421, %v4426
    %v4438 = vrot.slane %v4437, 4
    %v4439 = vadd.f32 %v4437, %v4438
    %v4440 = vrot.slane %v4439, 2
    %v4441 = vadd.f32 %v4439, %v4440
    %v4442 = vrot.slane %v4441, 1
    %v4443 = vadd.f32 %v4441, %v4442
    %v4444 = vadd.f32 %v4422, %v4427
    %v4445 = vrot.slane %v4444, 4
    %v4446 = vadd.f32 %v4444, %v4445
    %v4447 = vrot.slane %v4446, 2
    %v4448 = vadd.f32 %v4446, %v4447
    %v4449 = vrot.slane %v4448, 1
    %v4450 = vadd.f32 %v4448, %v4449
    %v4451 = vadd.f32 %v4423, %v4428
    %v4452 = vrot.slane %v4451, 4
    %v4453 = vadd.f32 %v4451, %v4452
    %v4454 = vrot.slane %v4453, 2
    %v4455 = vadd.f32 %v4453, %v4454
    %v4456 = vrot.slane %v4455, 1
    %v4457 = vadd.f32 %v4455, %v4456
    %v4458 = vadd.f32 %v4424, %v4429
    %v4459 = vrot.slane %v4458, 4
    %v4460 = vadd.f32 %v4458, %v4459
    %v4461 = vrot.slane %v4460, 2
    %v4462 = vadd.f32 %v4460, %v4461
    %v4463 = vrot.slane %v4462, 1
    %v4464 = vadd.f32 %v4462, %v4463
    %v4465 = vmul.f32 %v4436, %v1969
    %v4466 = vmul.f32 %v4443, %v1969
    %v4467 = vmul.f32 %v4450, %v1969
    %v4468 = vmul.f32 %v4457, %v1969
    %v4469 = vmul.f32 %v4464, %v1969
    %v4470 = vsub.f32 %v4420, %v4465
    %v4471 = vsub.f32 %v4421, %v4466
    %v4472 = vsub.f32 %v4422, %v4467
    %v4473 = vsub.f32 %v4423, %v4468
    %v4474 = vsub.f32 %v4424, %v4469
    %v4475 = vsub.f32 %v4425, %v4465
    %v4476 = vsub.f32 %v4426, %v4466
    %v4477 = vsub.f32 %v4427, %v4467
    %v4478 = vsub.f32 %v4428, %v4468
    %v4479 = vsub.f32 %v4429, %v4469
    %v4480 = vmul.f32 %v4470, %v4470
    %v4481 = vmul.f32 %v4471, %v4471
    %v4482 = vmul.f32 %v4472, %v4472
    %v4483 = vmul.f32 %v4473, %v4473
    %v4484 = vmul.f32 %v4474, %v4474
    %v4485 = vmul.f32 %v4475, %v4475
    %v4486 = vmul.f32 %v4476, %v4476
    %v4487 = vmul.f32 %v4477, %v4477
    %v4488 = vmul.f32 %v4478, %v4478
    %v4489 = vmul.f32 %v4479, %v4479
    %v4490 = vadd.f32 %v4480, %v4485
    %v4491 = vrot.slane %v4490, 4
    %v4492 = vadd.f32 %v4490, %v4491
    %v4493 = vrot.slane %v4492, 2
    %v4494 = vadd.f32 %v4492, %v4493
    %v4495 = vrot.slane %v4494, 1
    %v4496 = vadd.f32 %v4494, %v4495
    %v4497 = vadd.f32 %v4481, %v4486
    %v4498 = vrot.slane %v4497, 4
    %v4499 = vadd.f32 %v4497, %v4498
    %v4500 = vrot.slane %v4499, 2
    %v4501 = vadd.f32 %v4499, %v4500
    %v4502 = vrot.slane %v4501, 1
    %v4503 = vadd.f32 %v4501, %v4502
    %v4504 = vadd.f32 %v4482, %v4487
    %v4505 = vrot.slane %v4504, 4
    %v4506 = vadd.f32 %v4504, %v4505
    %v4507 = vrot.slane %v4506, 2
    %v4508 = vadd.f32 %v4506, %v4507
    %v4509 = vrot.slane %v4508, 1
    %v4510 = vadd.f32 %v4508, %v4509
    %v4511 = vadd.f32 %v4483, %v4488
    %v4512 = vrot.slane %v4511, 4
    %v4513 = vadd.f32 %v4511, %v4512
    %v4514 = vrot.slane %v4513, 2
    %v4515 = vadd.f32 %v4513, %v4514
    %v4516 = vrot.slane %v4515, 1
    %v4517 = vadd.f32 %v4515, %v4516
    %v4518 = vadd.f32 %v4484, %v4489
    %v4519 = vrot.slane %v4518, 4
    %v4520 = vadd.f32 %v4518, %v4519
    %v4521 = vrot.slane %v4520, 2
    %v4522 = vadd.f32 %v4520, %v4521
    %v4523 = vrot.slane %v4522, 1
    %v4524 = vadd.f32 %v4522, %v4523
    %v4525 = vmul.f32 %v4496, %v1969
    %v4526 = vmul.f32 %v4503, %v1969
    %v4527 = vmul.f32 %v4510, %v1969
    %v4528 = vmul.f32 %v4517, %v1969
    %v4529 = vmul.f32 %v4524, %v1969
    %v4530 = vadd.f32 %v4525, 1e-05
    %v4531 = vadd.f32 %v4526, 1e-05
    %v4532 = vadd.f32 %v4527, 1e-05
    %v4533 = vadd.f32 %v4528, 1e-05
    %v4534 = vadd.f32 %v4529, 1e-05
    %v4535 = vrsqrt.pop %v4530
    %v4536 = vrsqrt.pop %v4531
    %v4537 = vrsqrt.pop %v4532
    %v4538 = vrsqrt.pop %v4533
    %v4539 = vrsqrt.pop %v4534
    %v4540 = vmul.f32 %v4470, %v4535
    %v4541 = vmul.f32 %v4471, %v4536
    %v4542 = vmul.f32 %v4472, %v4537
    %v4543 = vmul.f32 %v4473, %v4538
    %v4544 = vmul.f32 %v4474, %v4539
    %v4545 = vmul.f32 %v4475, %v4535
    %v4546 = vmul.f32 %v4476, %v4536
    %v4547 = vmul.f32 %v4477, %v4537
    %v4548 = vmul.f32 %v4478, %v4538
    %v4549 = vmul.f32 %v4479, %v4539
    %v4550 = vld [vmem:[#allocation40] sm:$0x1f]
    %v4552 = vlaneseq
    %v4553 = vshrl.u32 %v4552, 7
    %v4554 = vsub.s32 0, %v4553
    %v4555 = vrot.slane %v4550, %v4554
    %v4556 = vlaneseq
    %v4557 = vshrl.u32 %v4556, 7
    %v4558 = vsub.s32 1, %v4557
    %v4559 = vrot.slane %v4550, %v4558
    %v4560 = vlaneseq
    %v4561 = vshrl.u32 %v4560, 7
    %v4562 = vsub.s32 2, %v4561
    %v4563 = vrot.slane %v4550, %v4562
    %v4564 = vlaneseq
    %v4565 = vshrl.u32 %v4564, 7
    %v4566 = vsub.s32 3, %v4565
    %v4567 = vrot.slane %v4550, %v4566
    %v4568 = vlaneseq
    %v4569 = vshrl.u32 %v4568, 7
    %v4570 = vsub.s32 4, %v4569
    %v4571 = vrot.slane %v4550, %v4570
    %v4577 = vmul.f32 %v4540, %v4555
    %v4578 = vmul.f32 %v4541, %v4559
    %v4579 = vmul.f32 %v4542, %v4563
    %v4580 = vmul.f32 %v4543, %v4567
    %v4581 = vmul.f32 %v4544, %v4571
    %v4582 = vmul.f32 %v4545, %v4555
    %v4583 = vmul.f32 %v4546, %v4559
    %v4584 = vmul.f32 %v4547, %v4563
    %v4585 = vmul.f32 %v4548, %v4567
    %v4586 = vmul.f32 %v4549, %v4571
    %v4587 = vld [vmem:[#allocation42] sm:$0x1f]
    %v4589 = vlaneseq
    %v4590 = vshrl.u32 %v4589, 7
    %v4591 = vsub.s32 0, %v4590
    %v4592 = vrot.slane %v4587, %v4591
    %v4593 = vlaneseq
    %v4594 = vshrl.u32 %v4593, 7
    %v4595 = vsub.s32 1, %v4594
    %v4596 = vrot.slane %v4587, %v4595
    %v4597 = vlaneseq
    %v4598 = vshrl.u32 %v4597, 7
    %v4599 = vsub.s32 2, %v4598
    %v4600 = vrot.slane %v4587, %v4599
    %v4601 = vlaneseq
    %v4602 = vshrl.u32 %v4601, 7
    %v4603 = vsub.s32 3, %v4602
    %v4604 = vrot.slane %v4587, %v4603
    %v4605 = vlaneseq
    %v4606 = vshrl.u32 %v4605, 7
    %v4607 = vsub.s32 4, %v4606
    %v4608 = vrot.slane %v4587, %v4607
    %v4614 = vadd.f32 %v4577, %v4592
    %v4615 = vadd.f32 %v4578, %v4596
    %v4616 = vadd.f32 %v4579, %v4600
    %v4617 = vadd.f32 %v4580, %v4604
    %v4618 = vadd.f32 %v4581, %v4608
    %v4619 = vadd.f32 %v4582, %v4592
    %v4620 = vadd.f32 %v4583, %v4596
    %v4621 = vadd.f32 %v4584, %v4600
    %v4622 = vadd.f32 %v4585, %v4604
    %v4623 = vadd.f32 %v4586, %v4608
    %v4624 = vmax.f32 %v4614, 0.0
    %v4625 = vmax.f32 %v4615, 0.0
    %v4626 = vmax.f32 %v4616, 0.0
    %v4627 = vmax.f32 %v4617, 0.0
    %v4628 = vmax.f32 %v4618, 0.0
    %v4629 = vmax.f32 %v4619, 0.0
    %v4630 = vmax.f32 %v4620, 0.0
    %v4631 = vmax.f32 %v4621, 0.0
    %v4632 = vmax.f32 %v4622, 0.0
    %v4633 = vmax.f32 %v4623, 0.0
    %v4634 = vld [vmem:[%s27] sm:$0xff]
    %v4635 = vld [vmem:[%s27 + $0x8] sm:$0xff]
    %v4636 = vld [vmem:[%s27 + $0x10] sm:$0xff]
    %v4637 = vld [vmem:[%s27 + $0x18] sm:$0xff]
    %v4638 = vld [vmem:[%s27 + $0x20] sm:$0xff]
    %v4639 = vld [vmem:[%s27 + $0x28] sm:$0xff]
    %v4640 = vld [vmem:[%s27 + $0x30] sm:$0xff]
    %v4641 = vld [vmem:[%s27 + $0x38] sm:$0xff]
    %v4642 = vld [vmem:[%s27 + $0x40] sm:$0xff]
    %v4643 = vld [vmem:[%s27 + $0x48] sm:$0xff]
    %v4644 = vld [vmem:[%s27 + $0x50] sm:$0xff]
    %v4645 = vld [vmem:[%s27 + $0x58] sm:$0xff]
    %v4646 = vld [vmem:[%s27 + $0x60] sm:$0xff]
    %v4647 = vld [vmem:[%s27 + $0x68] sm:$0xff]
    %v4648 = vld [vmem:[%s27 + $0x70] sm:$0xff]
    %v4649 = vld [vmem:[%s27 + $0x78] sm:$0xff]
    %v4650 = vld [vmem:[%s27 + $0x80] sm:$0xff]
    %v4651 = vld [vmem:[%s27 + $0x88] sm:$0xff]
    %v4652 = vld [vmem:[%s27 + $0x90] sm:$0xff]
    %v4653 = vld [vmem:[%s27 + $0x98] sm:$0xff]
    %v4654 = vld [vmem:[%s27 + $0xa0] sm:$0xff]
    %v4655 = vld [vmem:[%s27 + $0xa8] sm:$0xff]
    %v4656 = vld [vmem:[%s27 + $0xb0] sm:$0xff]
    %v4657 = vld [vmem:[%s27 + $0xb8] sm:$0xff]
    %v4658 = vld [vmem:[%s27 + $0xc0] sm:$0xff]
    %v4659 = vld [vmem:[%s27 + $0xc8] sm:$0xff]
    %v4660 = vld [vmem:[%s27 + $0xd0] sm:$0xff]
    %v4661 = vld [vmem:[%s27 + $0xd8] sm:$0xff]
    %v4662 = vld [vmem:[%s27 + $0xe0] sm:$0xff]
    %v4663 = vld [vmem:[%s27 + $0xe8] sm:$0xff]
    %v4664 = vld [vmem:[%s27 + $0xf0] sm:$0xff]
    %v4665 = vld [vmem:[%s27 + $0xf8] sm:$0xff]
    %v4666 = vld [vmem:[%s27 + $0x100] sm:$0xff]
    %v4667 = vld [vmem:[%s27 + $0x108] sm:$0xff]
    %v4668 = vld [vmem:[%s27 + $0x110] sm:$0xff]
    %v4669 = vld [vmem:[%s27 + $0x118] sm:$0xff]
    %v4670 = vld [vmem:[%s27 + $0x120] sm:$0xff]
    %v4671 = vld [vmem:[%s27 + $0x128] sm:$0xff]
    %v4672 = vld [vmem:[%s27 + $0x130] sm:$0xff]
    %v4673 = vld [vmem:[%s27 + $0x138] sm:$0xff]
    %v4674 = vld [vmem:[%s27 + $0x140] sm:$0xff]
    %v4675 = vld [vmem:[%s27 + $0x148] sm:$0xff]
    %v4676 = vld [vmem:[%s27 + $0x150] sm:$0xff]
    %v4677 = vld [vmem:[%s27 + $0x158] sm:$0xff]
    %v4678 = vld [vmem:[%s27 + $0x160] sm:$0xff]
    %v4679 = vld [vmem:[%s27 + $0x168] sm:$0xff]
    %v4680 = vld [vmem:[%s27 + $0x170] sm:$0xff]
    %v4681 = vld [vmem:[%s27 + $0x178] sm:$0xff]
    %v4682 = vld [vmem:[%s27 + $0x180] sm:$0xff]
    %v4683 = vld [vmem:[%s27 + $0x188] sm:$0xff]
    %v4684 = vld [vmem:[%s27 + $0x190] sm:$0xff]
    %v4685 = vld [vmem:[%s27 + $0x198] sm:$0xff]
    %v4686 = vld [vmem:[%s27 + $0x1a0] sm:$0xff]
    %v4687 = vld [vmem:[%s27 + $0x1a8] sm:$0xff]
    %v4688 = vld [vmem:[%s27 + $0x1b0] sm:$0xff]
    %v4689 = vld [vmem:[%s27 + $0x1b8] sm:$0xff]
    %v4690 = vld [vmem:[%s27 + $0x1c0] sm:$0xff]
    %v4691 = vld [vmem:[%s27 + $0x1c8] sm:$0xff]
    %v4692 = vld [vmem:[%s27 + $0x1d0] sm:$0xff]
    %v4693 = vld [vmem:[%s27 + $0x1d8] sm:$0xff]
    %v4694 = vld [vmem:[%s27 + $0x1e0] sm:$0xff]
    %v4695 = vld [vmem:[%s27 + $0x1e8] sm:$0xff]
    %v4696 = vld [vmem:[%s27 + $0x1f0] sm:$0xff]
    %v4697 = vld [vmem:[%s27 + $0x1f8] sm:$0xff]
    %v4698 = vld [vmem:[%s27 + $0x200] sm:$0xff]
    %v4699 = vld [vmem:[%s27 + $0x208] sm:$0xff]
    %v4700 = vld [vmem:[%s27 + $0x210] sm:$0xff]
    %v4701 = vld [vmem:[%s27 + $0x218] sm:$0xff]
    %v4702 = vld [vmem:[%s27 + $0x220] sm:$0xff]
    %v4703 = vld [vmem:[%s27 + $0x228] sm:$0xff]
    %v4704 = vld [vmem:[%s27 + $0x230] sm:$0xff]
    %v4705 = vld [vmem:[%s27 + $0x238] sm:$0xff]
    %v4706 = vld [vmem:[%s27 + $0x240] sm:$0xff]
    %v4707 = vld [vmem:[%s27 + $0x248] sm:$0xff]
    %v4708 = vld [vmem:[%s27 + $0x250] sm:$0xff]
    %v4709 = vld [vmem:[%s27 + $0x258] sm:$0xff]
    %v4710 = vld [vmem:[%s27 + $0x260] sm:$0xff]
    %v4711 = vld [vmem:[%s27 + $0x268] sm:$0xff]
    %v4712 = vld [vmem:[%s27 + $0x270] sm:$0xff]
    %v4713 = vld [vmem:[%s27 + $0x278] sm:$0xff]
    %v4714 = vld [vmem:[%s27 + $0x280] sm:$0xff]
    %v4715 = vld [vmem:[%s27 + $0x288] sm:$0xff]
    %v4716 = vld [vmem:[%s27 + $0x290] sm:$0xff]
    %v4717 = vld [vmem:[%s27 + $0x298] sm:$0xff]
    %v4718 = vld [vmem:[%s27 + $0x2a0] sm:$0xff]
    %v4719 = vld [vmem:[%s27 + $0x2a8] sm:$0xff]
    %v4720 = vld [vmem:[%s27 + $0x2b0] sm:$0xff]
    %v4721 = vld [vmem:[%s27 + $0x2b8] sm:$0xff]
    %v4722 = vld [vmem:[%s27 + $0x2c0] sm:$0xff]
    %v4723 = vld [vmem:[%s27 + $0x2c8] sm:$0xff]
    %v4724 = vld [vmem:[%s27 + $0x2d0] sm:$0xff]
    %v4725 = vld [vmem:[%s27 + $0x2d8] sm:$0xff]
    %v4726 = vld [vmem:[%s27 + $0x2e0] sm:$0xff]
    %v4727 = vld [vmem:[%s27 + $0x2e8] sm:$0xff]
    %v4728 = vld [vmem:[%s27 + $0x2f0] sm:$0xff]
    %v4729 = vld [vmem:[%s27 + $0x2f8] sm:$0xff]
    %v4730 = vld [vmem:[%s27 + $0x300] sm:$0xff]
    %v4731 = vld [vmem:[%s27 + $0x308] sm:$0xff]
    %v4732 = vld [vmem:[%s27 + $0x310] sm:$0xff]
    %v4733 = vld [vmem:[%s27 + $0x318] sm:$0xff]
    %v4734 = vld [vmem:[%s27 + $0x320] sm:$0xff]
    %v4735 = vld [vmem:[%s27 + $0x328] sm:$0xff]
    %v4736 = vld [vmem:[%s27 + $0x330] sm:$0xff]
    %v4737 = vld [vmem:[%s27 + $0x338] sm:$0xff]
    %v4738 = vld [vmem:[%s27 + $0x340] sm:$0xff]
    %v4739 = vld [vmem:[%s27 + $0x348] sm:$0xff]
    %v4740 = vld [vmem:[%s27 + $0x350] sm:$0xff]
    %v4741 = vld [vmem:[%s27 + $0x358] sm:$0xff]
    %v4742 = vld [vmem:[%s27 + $0x360] sm:$0xff]
    %v4743 = vld [vmem:[%s27 + $0x368] sm:$0xff]
    %v4744 = vld [vmem:[%s27 + $0x370] sm:$0xff]
    %v4745 = vld [vmem:[%s27 + $0x378] sm:$0xff]
    %v4746 = vld [vmem:[%s27 + $0x380] sm:$0xff]
    %v4747 = vld [vmem:[%s27 + $0x388] sm:$0xff]
    %v4748 = vld [vmem:[%s27 + $0x390] sm:$0xff]
    %v4749 = vld [vmem:[%s27 + $0x398] sm:$0xff]
    %v4750 = vld [vmem:[%s27 + $0x3a0] sm:$0xff]
    %v4751 = vld [vmem:[%s27 + $0x3a8] sm:$0xff]
    %v4752 = vld [vmem:[%s27 + $0x3b0] sm:$0xff]
    %v4753 = vld [vmem:[%s27 + $0x3b8] sm:$0xff]
    %v4754 = vld [vmem:[%s27 + $0x3c0] sm:$0xff]
    %v4755 = vld [vmem:[%s27 + $0x3c8] sm:$0xff]
    %v4756 = vld [vmem:[%s27 + $0x3d0] sm:$0xff]
    %v4757 = vld [vmem:[%s27 + $0x3d8] sm:$0xff]
    %v4758 = vld [vmem:[%s27 + $0x3e0] sm:$0xff]
    %v4759 = vld [vmem:[%s27 + $0x3e8] sm:$0xff]
    %v4760 = vld [vmem:[%s27 + $0x3f0] sm:$0xff]
    %v4761 = vld [vmem:[%s27 + $0x3f8] sm:$0xff]
    %v4762 = vld [vmem:[%s27 + $0x400] sm:$0xff]
    %v4763 = vld [vmem:[%s27 + $0x408] sm:$0xff]
    %v4764 = vld [vmem:[%s27 + $0x410] sm:$0xff]
    %v4765 = vld [vmem:[%s27 + $0x418] sm:$0xff]
    %v4766 = vld [vmem:[%s27 + $0x420] sm:$0xff]
    %v4767 = vld [vmem:[%s27 + $0x428] sm:$0xff]
    %v4768 = vld [vmem:[%s27 + $0x430] sm:$0xff]
    %v4769 = vld [vmem:[%s27 + $0x438] sm:$0xff]
    %v4770 = vld [vmem:[%s27 + $0x440] sm:$0xff]
    %v4771 = vld [vmem:[%s27 + $0x448] sm:$0xff]
    %v4772 = vld [vmem:[%s27 + $0x450] sm:$0xff]
    %v4773 = vld [vmem:[%s27 + $0x458] sm:$0xff]
    %v4774 = vld [vmem:[%s27 + $0x460] sm:$0xff]
    %v4775 = vld [vmem:[%s27 + $0x468] sm:$0xff]
    %v4776 = vld [vmem:[%s27 + $0x470] sm:$0xff]
    %v4777 = vld [vmem:[%s27 + $0x478] sm:$0xff]
    %v4778 = vld [vmem:[%s27 + $0x480] sm:$0xff]
    %v4779 = vld [vmem:[%s27 + $0x488] sm:$0xff]
    %v4780 = vld [vmem:[%s27 + $0x490] sm:$0xff]
    %v4781 = vld [vmem:[%s27 + $0x498] sm:$0xff]
    %v4782 = vld [vmem:[%s27 + $0x4a0] sm:$0xff]
    %v4783 = vld [vmem:[%s27 + $0x4a8] sm:$0xff]
    %v4784 = vld [vmem:[%s27 + $0x4b0] sm:$0xff]
    %v4785 = vld [vmem:[%s27 + $0x4b8] sm:$0xff]
    %v4786 = vld [vmem:[%s27 + $0x4c0] sm:$0xff]
    %v4787 = vld [vmem:[%s27 + $0x4c8] sm:$0xff]
    %v4788 = vld [vmem:[%s27 + $0x4d0] sm:$0xff]
    %v4789 = vld [vmem:[%s27 + $0x4d8] sm:$0xff]
    %v4790 = vld [vmem:[%s27 + $0x4e0] sm:$0xff]
    %v4791 = vld [vmem:[%s27 + $0x4e8] sm:$0xff]
    %v4792 = vld [vmem:[%s27 + $0x4f0] sm:$0xff]
    %v4793 = vld [vmem:[%s27 + $0x4f8] sm:$0xff]
    %v4794 = vld [vmem:[%s27 + $0x500] sm:$0xff]
    %v4795 = vld [vmem:[%s27 + $0x508] sm:$0xff]
    %v4796 = vld [vmem:[%s27 + $0x510] sm:$0xff]
    %v4797 = vld [vmem:[%s27 + $0x518] sm:$0xff]
    %v4798 = vld [vmem:[%s27 + $0x520] sm:$0xff]
    %v4799 = vld [vmem:[%s27 + $0x528] sm:$0xff]
    %v4800 = vld [vmem:[%s27 + $0x530] sm:$0xff]
    %v4801 = vld [vmem:[%s27 + $0x538] sm:$0xff]
    %v4802 = vld [vmem:[%s27 + $0x540] sm:$0xff]
    %v4803 = vld [vmem:[%s27 + $0x548] sm:$0xff]
    %v4804 = vld [vmem:[%s27 + $0x550] sm:$0xff]
    %v4805 = vld [vmem:[%s27 + $0x558] sm:$0xff]
    %v4806 = vld [vmem:[%s27 + $0x560] sm:$0xff]
    %v4807 = vld [vmem:[%s27 + $0x568] sm:$0xff]
    %v4808 = vld [vmem:[%s27 + $0x570] sm:$0xff]
    %v4809 = vld [vmem:[%s27 + $0x578] sm:$0xff]
    %v4810 = vld [vmem:[%s27 + $0x580] sm:$0xff]
    %v4811 = vld [vmem:[%s27 + $0x588] sm:$0xff]
    %v4812 = vld [vmem:[%s27 + $0x590] sm:$0xff]
    %v4813 = vld [vmem:[%s27 + $0x598] sm:$0xff]
    %v4814 = vld [vmem:[%s27 + $0x5a0] sm:$0xff]
    %v4815 = vld [vmem:[%s27 + $0x5a8] sm:$0xff]
    %v4816 = vld [vmem:[%s27 + $0x5b0] sm:$0xff]
    %v4817 = vld [vmem:[%s27 + $0x5b8] sm:$0xff]
    %v4818 = vld [vmem:[%s27 + $0x5c0] sm:$0xff]
    %v4819 = vld [vmem:[%s27 + $0x5c8] sm:$0xff]
    %v4820 = vld [vmem:[%s27 + $0x5d0] sm:$0xff]
    %v4821 = vld [vmem:[%s27 + $0x5d8] sm:$0xff]
    %v4822 = vld [vmem:[%s27 + $0x5e0] sm:$0xff]
    %v4823 = vld [vmem:[%s27 + $0x5e8] sm:$0xff]
    %v4824 = vld [vmem:[%s27 + $0x5f0] sm:$0xff]
    %v4825 = vld [vmem:[%s27 + $0x5f8] sm:$0xff]
    %v4826 = vld [vmem:[%s27 + $0x600] sm:$0xff]
    %v4827 = vld [vmem:[%s27 + $0x608] sm:$0xff]
    %v4828 = vld [vmem:[%s27 + $0x610] sm:$0xff]
    %v4829 = vld [vmem:[%s27 + $0x618] sm:$0xff]
    %v4830 = vld [vmem:[%s27 + $0x620] sm:$0xff]
    %v4831 = vld [vmem:[%s27 + $0x628] sm:$0xff]
    %v4832 = vld [vmem:[%s27 + $0x630] sm:$0xff]
    %v4833 = vld [vmem:[%s27 + $0x638] sm:$0xff]
    %v4834 = vld [vmem:[%s27 + $0x640] sm:$0xff]
    %v4835 = vld [vmem:[%s27 + $0x648] sm:$0xff]
    %v4836 = vld [vmem:[%s27 + $0x650] sm:$0xff]
    %v4837 = vld [vmem:[%s27 + $0x658] sm:$0xff]
    %v4838 = vld [vmem:[%s27 + $0x660] sm:$0xff]
    %v4839 = vld [vmem:[%s27 + $0x668] sm:$0xff]
    %v4840 = vld [vmem:[%s27 + $0x670] sm:$0xff]
    %v4841 = vld [vmem:[%s27 + $0x678] sm:$0xff]
    %v4842 = vld [vmem:[%s27 + $0x680] sm:$0xff]
    %v4843 = vld [vmem:[%s27 + $0x688] sm:$0xff]
    %v4844 = vld [vmem:[%s27 + $0x690] sm:$0xff]
    %v4845 = vld [vmem:[%s27 + $0x698] sm:$0xff]
    %v4846 = vld [vmem:[%s27 + $0x6a0] sm:$0xff]
    %v4847 = vld [vmem:[%s27 + $0x6a8] sm:$0xff]
    %v4848 = vld [vmem:[%s27 + $0x6b0] sm:$0xff]
    %v4849 = vld [vmem:[%s27 + $0x6b8] sm:$0xff]
    %v4850 = vld [vmem:[%s27 + $0x6c0] sm:$0xff]
    %v4851 = vld [vmem:[%s27 + $0x6c8] sm:$0xff]
    %v4852 = vld [vmem:[%s27 + $0x6d0] sm:$0xff]
    %v4853 = vld [vmem:[%s27 + $0x6d8] sm:$0xff]
    %v4854 = vld [vmem:[%s27 + $0x6e0] sm:$0xff]
    %v4855 = vld [vmem:[%s27 + $0x6e8] sm:$0xff]
    %v4856 = vld [vmem:[%s27 + $0x6f0] sm:$0xff]
    %v4857 = vld [vmem:[%s27 + $0x6f8] sm:$0xff]
    %v4858 = vld [vmem:[%s27 + $0x700] sm:$0xff]
    %v4859 = vld [vmem:[%s27 + $0x708] sm:$0xff]
    %v4860 = vld [vmem:[%s27 + $0x710] sm:$0xff]
    %v4861 = vld [vmem:[%s27 + $0x718] sm:$0xff]
    %v4862 = vld [vmem:[%s27 + $0x720] sm:$0xff]
    %v4863 = vld [vmem:[%s27 + $0x728] sm:$0xff]
    %v4864 = vld [vmem:[%s27 + $0x730] sm:$0xff]
    %v4865 = vld [vmem:[%s27 + $0x738] sm:$0xff]
    %v4866 = vld [vmem:[%s27 + $0x740] sm:$0xff]
    %v4867 = vld [vmem:[%s27 + $0x748] sm:$0xff]
    %v4868 = vld [vmem:[%s27 + $0x750] sm:$0xff]
    %v4869 = vld [vmem:[%s27 + $0x758] sm:$0xff]
    %v4870 = vld [vmem:[%s27 + $0x760] sm:$0xff]
    %v4871 = vld [vmem:[%s27 + $0x768] sm:$0xff]
    %v4872 = vld [vmem:[%s27 + $0x770] sm:$0xff]
    %v4873 = vld [vmem:[%s27 + $0x778] sm:$0xff]
    %v4874 = vld [vmem:[%s27 + $0x780] sm:$0xff]
    %v4875 = vld [vmem:[%s27 + $0x788] sm:$0xff]
    %v4876 = vld [vmem:[%s27 + $0x790] sm:$0xff]
    %v4877 = vld [vmem:[%s27 + $0x798] sm:$0xff]
    %v4878 = vld [vmem:[%s27 + $0x7a0] sm:$0xff]
    %v4879 = vld [vmem:[%s27 + $0x7a8] sm:$0xff]
    %v4880 = vld [vmem:[%s27 + $0x7b0] sm:$0xff]
    %v4881 = vld [vmem:[%s27 + $0x7b8] sm:$0xff]
    %v4882 = vld [vmem:[%s27 + $0x7c0] sm:$0xff]
    %v4883 = vld [vmem:[%s27 + $0x7c8] sm:$0xff]
    %v4884 = vld [vmem:[%s27 + $0x7d0] sm:$0xff]
    %v4885 = vld [vmem:[%s27 + $0x7d8] sm:$0xff]
    %v4886 = vld [vmem:[%s27 + $0x7e0] sm:$0xff]
    %v4887 = vld [vmem:[%s27 + $0x7e8] sm:$0xff]
    %v4888 = vld [vmem:[%s27 + $0x7f0] sm:$0xff]
    %v4889 = vld [vmem:[%s27 + $0x7f8] sm:$0xff]
    %v4890 = vld [vmem:[%s27 + $0x800] sm:$0xff]
    %v4891 = vld [vmem:[%s27 + $0x808] sm:$0xff]
    %v4892 = vld [vmem:[%s27 + $0x810] sm:$0xff]
    %v4893 = vld [vmem:[%s27 + $0x818] sm:$0xff]
    %v4894 = vld [vmem:[%s27 + $0x820] sm:$0xff]
    %v4895 = vld [vmem:[%s27 + $0x828] sm:$0xff]
    %v4896 = vld [vmem:[%s27 + $0x830] sm:$0xff]
    %v4897 = vld [vmem:[%s27 + $0x838] sm:$0xff]
    %v4898 = vld [vmem:[%s27 + $0x840] sm:$0xff]
    %v4899 = vld [vmem:[%s27 + $0x848] sm:$0xff]
    %v4900 = vld [vmem:[%s27 + $0x850] sm:$0xff]
    %v4901 = vld [vmem:[%s27 + $0x858] sm:$0xff]
    %v4902 = vld [vmem:[%s27 + $0x860] sm:$0xff]
    %v4903 = vld [vmem:[%s27 + $0x868] sm:$0xff]
    %v4904 = vld [vmem:[%s27 + $0x870] sm:$0xff]
    %v4905 = vld [vmem:[%s27 + $0x878] sm:$0xff]
    %v4906 = vld [vmem:[%s27 + $0x880] sm:$0xff]
    %v4907 = vld [vmem:[%s27 + $0x888] sm:$0xff]
    %v4908 = vld [vmem:[%s27 + $0x890] sm:$0xff]
    %v4909 = vld [vmem:[%s27 + $0x898] sm:$0xff]
    %v4910 = vld [vmem:[%s27 + $0x8a0] sm:$0xff]
    %v4911 = vld [vmem:[%s27 + $0x8a8] sm:$0xff]
    %v4912 = vld [vmem:[%s27 + $0x8b0] sm:$0xff]
    %v4913 = vld [vmem:[%s27 + $0x8b8] sm:$0xff]
    %v4914 = vld [vmem:[%s27 + $0x8c0] sm:$0xff]
    %v4915 = vld [vmem:[%s27 + $0x8c8] sm:$0xff]
    %v4916 = vld [vmem:[%s27 + $0x8d0] sm:$0xff]
    %v4917 = vld [vmem:[%s27 + $0x8d8] sm:$0xff]
    %v4918 = vld [vmem:[%s27 + $0x8e0] sm:$0xff]
    %v4919 = vld [vmem:[%s27 + $0x8e8] sm:$0xff]
    %v4920 = vld [vmem:[%s27 + $0x8f0] sm:$0xff]
    %v4921 = vld [vmem:[%s27 + $0x8f8] sm:$0xff]
    %v4922 = vld [vmem:[%s27 + $0x900] sm:$0xff]
    %v4923 = vld [vmem:[%s27 + $0x908] sm:$0xff]
    %v4924 = vld [vmem:[%s27 + $0x910] sm:$0xff]
    %v4925 = vld [vmem:[%s27 + $0x918] sm:$0xff]
    %v4926 = vld [vmem:[%s27 + $0x920] sm:$0xff]
    %v4927 = vld [vmem:[%s27 + $0x928] sm:$0xff]
    %v4928 = vld [vmem:[%s27 + $0x930] sm:$0xff]
    %v4929 = vld [vmem:[%s27 + $0x938] sm:$0xff]
    %v4930 = vld [vmem:[%s27 + $0x940] sm:$0xff]
    %v4931 = vld [vmem:[%s27 + $0x948] sm:$0xff]
    %v4932 = vld [vmem:[%s27 + $0x950] sm:$0xff]
    %v4933 = vld [vmem:[%s27 + $0x958] sm:$0xff]
    %v4934 = vld [vmem:[%s27 + $0x960] sm:$0xff]
    %v4935 = vld [vmem:[%s27 + $0x968] sm:$0xff]
    %v4936 = vld [vmem:[%s27 + $0x970] sm:$0xff]
    %v4937 = vld [vmem:[%s27 + $0x978] sm:$0xff]
    %v4938 = vld [vmem:[%s27 + $0x980] sm:$0xff]
    %v4939 = vld [vmem:[%s27 + $0x988] sm:$0xff]
    %v4940 = vld [vmem:[%s27 + $0x990] sm:$0xff]
    %v4941 = vld [vmem:[%s27 + $0x998] sm:$0xff]
    %v4942 = vld [vmem:[%s27 + $0x9a0] sm:$0xff]
    %v4943 = vld [vmem:[%s27 + $0x9a8] sm:$0xff]
    %v4944 = vld [vmem:[%s27 + $0x9b0] sm:$0xff]
    %v4945 = vld [vmem:[%s27 + $0x9b8] sm:$0xff]
    %v4946 = vld [vmem:[%s27 + $0x9c0] sm:$0xff]
    %v4947 = vld [vmem:[%s27 + $0x9c8] sm:$0xff]
    %v4948 = vld [vmem:[%s27 + $0x9d0] sm:$0xff]
    %v4949 = vld [vmem:[%s27 + $0x9d8] sm:$0xff]
    %v4950 = vld [vmem:[%s27 + $0x9e0] sm:$0xff]
    %v4951 = vld [vmem:[%s27 + $0x9e8] sm:$0xff]
    %v4952 = vld [vmem:[%s27 + $0x9f0] sm:$0xff]
    %v4953 = vld [vmem:[%s27 + $0x9f8] sm:$0xff]
    %4954 = vmatprep.subr.mxu0 %v4695
    %4955 = vmatpush1.msra.mxu0 %v4694
    %4956 = vmatprep.subr.mxu0 %v4691
    %4957 = vmatpush1.msra.mxu0 %v4690
    %4958 = vmatprep.subr.mxu0 %v4687
    %4959 = vmatpush1.msra.mxu0 %v4686
    %4960 = vmatprep.subr.mxu0 %v4683
    %4961 = vmatpush1.msra.mxu0 %v4682
    %4962 = vmatprep.subr.mxu0 %v4679
    %4963 = vmatpush1.msra.mxu0 %v4678
    %4964 = vmatprep.subr.mxu0 %v4675
    %4965 = vmatpush1.msra.mxu0 %v4674
    %4966 = vmatprep.subr.mxu0 %v4671
    %4967 = vmatpush1.msra.mxu0 %v4670
    %4968 = vmatprep.subr.mxu0 %v4667
    %4969 = vmatpush1.msra.mxu0 %v4666
    %4970 = vmatprep.subr.mxu0 %v4663
    %4971 = vmatpush1.msra.mxu0 %v4662
    %4972 = vmatprep.subr.mxu0 %v4659
    %4973 = vmatpush1.msra.mxu0 %v4658
    %4974 = vmatprep.subr.mxu0 %v4655
    %4975 = vmatpush1.msra.mxu0 %v4654
    %4976 = vmatprep.subr.mxu0 %v4651
    %4977 = vmatpush1.msra.mxu0 %v4650
    %4978 = vmatprep.subr.mxu0 %v4647
    %4979 = vmatpush1.msra.mxu0 %v4646
    %4980 = vmatprep.subr.mxu0 %v4643
    %4981 = vmatpush1.msra.mxu0 %v4642
    %4982 = vmatprep.subr.mxu0 %v4639
    %4983 = vmatpush1.msra.mxu0 %v4638
    %4984 = vmatprep.subr.mxu0 %v4635
    %4985 = vmatpush1.msra.mxu0 %v4634
    %4986 = vmatprep.subr.mxu0 %v4759
    %4987 = vmatpush2.msra.mxu0 %v4758
    %4988 = vmatprep.subr.mxu0 %v4755
    %4989 = vmatpush2.msra.mxu0 %v4754
    %4990 = vmatprep.subr.mxu0 %v4751
    %4991 = vmatpush2.msra.mxu0 %v4750
    %4992 = vmatprep.subr.mxu0 %v4747
    %4993 = vmatpush2.msra.mxu0 %v4746
    %4994 = vmatprep.subr.mxu0 %v4743
    %4995 = vmatpush2.msra.mxu0 %v4742
    %4996 = vmatprep.subr.mxu0 %v4739
    %4997 = vmatpush2.msra.mxu0 %v4738
    %4998 = vmatprep.subr.mxu0 %v4735
    %4999 = vmatpush2.msra.mxu0 %v4734
    %5000 = vmatprep.subr.mxu0 %v4731
    %5001 = vmatpush2.msra.mxu0 %v4730
    %5002 = vmatprep.subr.mxu0 %v4727
    %5003 = vmatpush2.msra.mxu0 %v4726
    %5004 = vmatprep.subr.mxu0 %v4723
    %5005 = vmatpush2.msra.mxu0 %v4722
    %5006 = vmatprep.subr.mxu0 %v4719
    %5007 = vmatpush2.msra.mxu0 %v4718
    %5008 = vmatprep.subr.mxu0 %v4715
    %5009 = vmatpush2.msra.mxu0 %v4714
    %5010 = vmatprep.subr.mxu0 %v4711
    %5011 = vmatpush2.msra.mxu0 %v4710
    %5012 = vmatprep.subr.mxu0 %v4707
    %5013 = vmatpush2.msra.mxu0 %v4706
    %5014 = vmatprep.subr.mxu0 %v4703
    %5015 = vmatpush2.msra.mxu0 %v4702
    %5016 = vmatprep.subr.mxu0 %v4699
    %5017 = vmatpush2.msra.mxu0 %v4698
    %5018 = vmatprep.mubr.f32.mxu0 %v4625
    %5019 = vmatmul.mubr.f32.gmra.mxu0 %v4624
    %v5020 = vpop.f32.mrf.mxu0
    %v5021 = vadd.f32 0.0, %v5020
    %v5022 = vpop.f32.mrf.mxu0
    %v5023 = vadd.f32 0.0, %v5022
    %5024 = vmatprep.mubr.f32.mxu0 %v4630
    %5025 = vmatmul.mubr.f32.gmra.mxu0 %v4629
    %v5026 = vpop.f32.mrf.mxu0
    %v5027 = vadd.f32 0.0, %v5026
    %v5028 = vpop.f32.mrf.mxu0
    %v5029 = vadd.f32 0.0, %v5028
    %5030 = vdwg.mxu0
    %5031 = vmatprep.subr.mxu0 %v4823
    %5032 = vmatpush1.msra.mxu0 %v4822
    %5033 = vmatprep.subr.mxu0 %v4819
    %5034 = vmatpush1.msra.mxu0 %v4818
    %5035 = vmatprep.subr.mxu0 %v4815
    %5036 = vmatpush1.msra.mxu0 %v4814
    %5037 = vmatprep.subr.mxu0 %v4811
    %5038 = vmatpush1.msra.mxu0 %v4810
    %5039 = vmatprep.subr.mxu0 %v4807
    %5040 = vmatpush1.msra.mxu0 %v4806
    %5041 = vmatprep.subr.mxu0 %v4803
    %5042 = vmatpush1.msra.mxu0 %v4802
    %5043 = vmatprep.subr.mxu0 %v4799
    %5044 = vmatpush1.msra.mxu0 %v4798
    %5045 = vmatprep.subr.mxu0 %v4795
    %5046 = vmatpush1.msra.mxu0 %v4794
    %5047 = vmatprep.subr.mxu0 %v4791
    %5048 = vmatpush1.msra.mxu0 %v4790
    %5049 = vmatprep.subr.mxu0 %v4787
    %5050 = vmatpush1.msra.mxu0 %v4786
    %5051 = vmatprep.subr.mxu0 %v4783
    %5052 = vmatpush1.msra.mxu0 %v4782
    %5053 = vmatprep.subr.mxu0 %v4779
    %5054 = vmatpush1.msra.mxu0 %v4778
    %5055 = vmatprep.subr.mxu0 %v4775
    %5056 = vmatpush1.msra.mxu0 %v4774
    %5057 = vmatprep.subr.mxu0 %v4771
    %5058 = vmatpush1.msra.mxu0 %v4770
    %5059 = vmatprep.subr.mxu0 %v4767
    %5060 = vmatpush1.msra.mxu0 %v4766
    %5061 = vmatprep.subr.mxu0 %v4763
    %5062 = vmatpush1.msra.mxu0 %v4762
    %5063 = vmatprep.subr.mxu0 %v4887
    %5064 = vmatpush2.msra.mxu0 %v4886
    %5065 = vmatprep.subr.mxu0 %v4883
    %5066 = vmatpush2.msra.mxu0 %v4882
    %5067 = vmatprep.subr.mxu0 %v4879
    %5068 = vmatpush2.msra.mxu0 %v4878
    %5069 = vmatprep.subr.mxu0 %v4875
    %5070 = vmatpush2.msra.mxu0 %v4874
    %5071 = vmatprep.subr.mxu0 %v4871
    %5072 = vmatpush2.msra.mxu0 %v4870
    %5073 = vmatprep.subr.mxu0 %v4867
    %5074 = vmatpush2.msra.mxu0 %v4866
    %5075 = vmatprep.subr.mxu0 %v4863
    %5076 = vmatpush2.msra.mxu0 %v4862
    %5077 = vmatprep.subr.mxu0 %v4859
    %5078 = vmatpush2.msra.mxu0 %v4858
    %5079 = vmatprep.subr.mxu0 %v4855
    %5080 = vmatpush2.msra.mxu0 %v4854
    %5081 = vmatprep.subr.mxu0 %v4851
    %5082 = vmatpush2.msra.mxu0 %v4850
    %5083 = vmatprep.subr.mxu0 %v4847
    %5084 = vmatpush2.msra.mxu0 %v4846
    %5085 = vmatprep.subr.mxu0 %v4843
    %5086 = vmatpush2.msra.mxu0 %v4842
    %5087 = vmatprep.subr.mxu0 %v4839
    %5088 = vmatpush2.msra.mxu0 %v4838
    %5089 = vmatprep.subr.mxu0 %v4835
    %5090 = vmatpush2.msra.mxu0 %v4834
    %5091 = vmatprep.subr.mxu0 %v4831
    %5092 = vmatpush2.msra.mxu0 %v4830
    %5093 = vmatprep.subr.mxu0 %v4827
    %5094 = vmatpush2.msra.mxu0 %v4826
    %5095 = vmatprep.mubr.f32.mxu0 %v4627
    %5096 = vmatmul.mubr.f32.gmra.mxu0 %v4626
    %v5097 = vpop.f32.mrf.mxu0
    %v5098 = vadd.f32 %v5021, %v5097
    %v5099 = vpop.f32.mrf.mxu0
    %v5100 = vadd.f32 %v5023, %v5099
    %5101 = vmatprep.mubr.f32.mxu0 %v4632
    %5102 = vmatmul.mubr.f32.gmra.mxu0 %v4631
    %v5103 = vpop.f32.mrf.mxu0
    %v5104 = vadd.f32 %v5027, %v5103
    %v5105 = vpop.f32.mrf.mxu0
    %v5106 = vadd.f32 %v5029, %v5105
    %5107 = vdwg.mxu0
    %5108 = vmatprep.subr.mxu0 %v4951
    %5109 = vmatpush1.msra.mxu0 %v4950
    %5110 = vmatprep.subr.mxu0 %v4947
    %5111 = vmatpush1.msra.mxu0 %v4946
    %5112 = vmatprep.subr.mxu0 %v4943
    %5113 = vmatpush1.msra.mxu0 %v4942
    %5114 = vmatprep.subr.mxu0 %v4939
    %5115 = vmatpush1.msra.mxu0 %v4938
    %5116 = vmatprep.subr.mxu0 %v4935
    %5117 = vmatpush1.msra.mxu0 %v4934
    %5118 = vmatprep.subr.mxu0 %v4931
    %5119 = vmatpush1.msra.mxu0 %v4930
    %5120 = vmatprep.subr.mxu0 %v4927
    %5121 = vmatpush1.msra.mxu0 %v4926
    %5122 = vmatprep.subr.mxu0 %v4923
    %5123 = vmatpush1.msra.mxu0 %v4922
    %5124 = vmatprep.subr.mxu0 %v4919
    %5125 = vmatpush1.msra.mxu0 %v4918
    %5126 = vmatprep.subr.mxu0 %v4915
    %5127 = vmatpush1.msra.mxu0 %v4914
    %5128 = vmatprep.subr.mxu0 %v4911
    %5129 = vmatpush1.msra.mxu0 %v4910
    %5130 = vmatprep.subr.mxu0 %v4907
    %5131 = vmatpush1.msra.mxu0 %v4906
    %5132 = vmatprep.subr.mxu0 %v4903
    %5133 = vmatpush1.msra.mxu0 %v4902
    %5134 = vmatprep.subr.mxu0 %v4899
    %5135 = vmatpush1.msra.mxu0 %v4898
    %5136 = vmatprep.subr.mxu0 %v4895
    %5137 = vmatpush1.msra.mxu0 %v4894
    %5138 = vmatprep.subr.mxu0 %v4891
    %5139 = vmatpush1.msra.mxu0 %v4890
    %5140 = vmatprep.subr.mxu0 0.0
    %5141 = vmatpush2.msra.mxu0 0.0
    %5142 = vmatprep.subr.mxu0 0.0
    %5143 = vmatpush2.msra.mxu0 0.0
    %5144 = vmatprep.subr.mxu0 0.0
    %5145 = vmatpush2.msra.mxu0 0.0
    %5146 = vmatprep.subr.mxu0 0.0
    %5147 = vmatpush2.msra.mxu0 0.0
    %5148 = vmatprep.subr.mxu0 0.0
    %5149 = vmatpush2.msra.mxu0 0.0
    %5150 = vmatprep.subr.mxu0 0.0
    %5151 = vmatpush2.msra.mxu0 0.0
    %5152 = vmatprep.subr.mxu0 0.0
    %5153 = vmatpush2.msra.mxu0 0.0
    %5154 = vmatprep.subr.mxu0 0.0
    %5155 = vmatpush2.msra.mxu0 0.0
    %5156 = vmatprep.subr.mxu0 0.0
    %5157 = vmatpush2.msra.mxu0 0.0
    %5158 = vmatprep.subr.mxu0 0.0
    %5159 = vmatpush2.msra.mxu0 0.0
    %5160 = vmatprep.subr.mxu0 0.0
    %5161 = vmatpush2.msra.mxu0 0.0
    %5162 = vmatprep.subr.mxu0 0.0
    %5163 = vmatpush2.msra.mxu0 0.0
    %5164 = vmatprep.subr.mxu0 0.0
    %5165 = vmatpush2.msra.mxu0 0.0
    %5166 = vmatprep.subr.mxu0 0.0
    %5167 = vmatpush2.msra.mxu0 0.0
    %5168 = vmatprep.subr.mxu0 0.0
    %5169 = vmatpush2.msra.mxu0 0.0
    %5170 = vmatprep.subr.mxu0 0.0
    %5171 = vmatpush2.msra.mxu0 0.0
    %5172 = vmatprep.mubr.f32.mxu0 0.0
    %5173 = vmatmul.mubr.f32.gmra.mxu0 %v4628
    %v5174 = vpop.f32.mrf.mxu0
    %v5175 = vadd.f32 %v5098, %v5174
    %v5176 = vpop.f32.mrf.mxu0
    %v5177 = vadd.f32 %v5100, %v5176
    %5178 = vmatprep.mubr.f32.mxu0 0.0
    %5179 = vmatmul.mubr.f32.gmra.mxu0 %v4633
    %v5180 = vpop.f32.mrf.mxu0
    %v5181 = vadd.f32 %v5104, %v5180
    %v5182 = vpop.f32.mrf.mxu0
    %v5183 = vadd.f32 %v5106, %v5182
    %5184 = vdwg.mxu0
    %5185 = vmatprep.subr.mxu0 %v4697
    %5186 = vmatpush1.msra.mxu0 %v4696
    %5187 = vmatprep.subr.mxu0 %v4693
    %5188 = vmatpush1.msra.mxu0 %v4692
    %5189 = vmatprep.subr.mxu0 %v4689
    %5190 = vmatpush1.msra.mxu0 %v4688
    %5191 = vmatprep.subr.mxu0 %v4685
    %5192 = vmatpush1.msra.mxu0 %v4684
    %5193 = vmatprep.subr.mxu0 %v4681
    %5194 = vmatpush1.msra.mxu0 %v4680
    %5195 = vmatprep.subr.mxu0 %v4677
    %5196 = vmatpush1.msra.mxu0 %v4676
    %5197 = vmatprep.subr.mxu0 %v4673
    %5198 = vmatpush1.msra.mxu0 %v4672
    %5199 = vmatprep.subr.mxu0 %v4669
    %5200 = vmatpush1.msra.mxu0 %v4668
    %5201 = vmatprep.subr.mxu0 %v4665
    %5202 = vmatpush1.msra.mxu0 %v4664
    %5203 = vmatprep.subr.mxu0 %v4661
    %5204 = vmatpush1.msra.mxu0 %v4660
    %5205 = vmatprep.subr.mxu0 %v4657
    %5206 = vmatpush1.msra.mxu0 %v4656
    %5207 = vmatprep.subr.mxu0 %v4653
    %5208 = vmatpush1.msra.mxu0 %v4652
    %5209 = vmatprep.subr.mxu0 %v4649
    %5210 = vmatpush1.msra.mxu0 %v4648
    %5211 = vmatprep.subr.mxu0 %v4645
    %5212 = vmatpush1.msra.mxu0 %v4644
    %5213 = vmatprep.subr.mxu0 %v4641
    %5214 = vmatpush1.msra.mxu0 %v4640
    %5215 = vmatprep.subr.mxu0 %v4637
    %5216 = vmatpush1.msra.mxu0 %v4636
    %5217 = vmatprep.subr.mxu0 %v4761
    %5218 = vmatpush2.msra.mxu0 %v4760
    %5219 = vmatprep.subr.mxu0 %v4757
    %5220 = vmatpush2.msra.mxu0 %v4756
    %5221 = vmatprep.subr.mxu0 %v4753
    %5222 = vmatpush2.msra.mxu0 %v4752
    %5223 = vmatprep.subr.mxu0 %v4749
    %5224 = vmatpush2.msra.mxu0 %v4748
    %5225 = vmatprep.subr.mxu0 %v4745
    %5226 = vmatpush2.msra.mxu0 %v4744
    %5227 = vmatprep.subr.mxu0 %v4741
    %5228 = vmatpush2.msra.mxu0 %v4740
    %5229 = vmatprep.subr.mxu0 %v4737
    %5230 = vmatpush2.msra.mxu0 %v4736
    %5231 = vmatprep.subr.mxu0 %v4733
    %5232 = vmatpush2.msra.mxu0 %v4732
    %5233 = vmatprep.subr.mxu0 %v4729
    %5234 = vmatpush2.msra.mxu0 %v4728
    %5235 = vmatprep.subr.mxu0 %v4725
    %5236 = vmatpush2.msra.mxu0 %v4724
    %5237 = vmatprep.subr.mxu0 %v4721
    %5238 = vmatpush2.msra.mxu0 %v4720
    %5239 = vmatprep.subr.mxu0 %v4717
    %5240 = vmatpush2.msra.mxu0 %v4716
    %5241 = vmatprep.subr.mxu0 %v4713
    %5242 = vmatpush2.msra.mxu0 %v4712
    %5243 = vmatprep.subr.mxu0 %v4709
    %5244 = vmatpush2.msra.mxu0 %v4708
    %5245 = vmatprep.subr.mxu0 %v4705
    %5246 = vmatpush2.msra.mxu0 %v4704
    %5247 = vmatprep.subr.mxu0 %v4701
    %5248 = vmatpush2.msra.mxu0 %v4700
    %5249 = vmatprep.mubr.f32.mxu0 %v4625
    %5250 = vmatmul.mubr.f32.gmra.mxu0 %v4624
    %v5251 = vpop.f32.mrf.mxu0
    %v5252 = vadd.f32 0.0, %v5251
    %v5253 = vpop.f32.mrf.mxu0
    %v5254 = vadd.f32 0.0, %v5253
    %5255 = vmatprep.mubr.f32.mxu0 %v4630
    %5256 = vmatmul.mubr.f32.gmra.mxu0 %v4629
    %v5257 = vpop.f32.mrf.mxu0
    %v5258 = vadd.f32 0.0, %v5257
    %v5259 = vpop.f32.mrf.mxu0
    %v5260 = vadd.f32 0.0, %v5259
    %5261 = vdwg.mxu0
    %5262 = vmatprep.subr.mxu0 %v4825
    %5263 = vmatpush1.msra.mxu0 %v4824
    %5264 = vmatprep.subr.mxu0 %v4821
    %5265 = vmatpush1.msra.mxu0 %v4820
    %5266 = vmatprep.subr.mxu0 %v4817
    %5267 = vmatpush1.msra.mxu0 %v4816
    %5268 = vmatprep.subr.mxu0 %v4813
    %5269 = vmatpush1.msra.mxu0 %v4812
    %5270 = vmatprep.subr.mxu0 %v4809
    %5271 = vmatpush1.msra.mxu0 %v4808
    %5272 = vmatprep.subr.mxu0 %v4805
    %5273 = vmatpush1.msra.mxu0 %v4804
    %5274 = vmatprep.subr.mxu0 %v4801
    %5275 = vmatpush1.msra.mxu0 %v4800
    %5276 = vmatprep.subr.mxu0 %v4797
    %5277 = vmatpush1.msra.mxu0 %v4796
    %5278 = vmatprep.subr.mxu0 %v4793
    %5279 = vmatpush1.msra.mxu0 %v4792
    %5280 = vmatprep.subr.mxu0 %v4789
    %5281 = vmatpush1.msra.mxu0 %v4788
    %5282 = vmatprep.subr.mxu0 %v4785
    %5283 = vmatpush1.msra.mxu0 %v4784
    %5284 = vmatprep.subr.mxu0 %v4781
    %5285 = vmatpush1.msra.mxu0 %v4780
    %5286 = vmatprep.subr.mxu0 %v4777
    %5287 = vmatpush1.msra.mxu0 %v4776
    %5288 = vmatprep.subr.mxu0 %v4773
    %5289 = vmatpush1.msra.mxu0 %v4772
    %5290 = vmatprep.subr.mxu0 %v4769
    %5291 = vmatpush1.msra.mxu0 %v4768
    %5292 = vmatprep.subr.mxu0 %v4765
    %5293 = vmatpush1.msra.mxu0 %v4764
    %5294 = vmatprep.subr.mxu0 %v4889
    %5295 = vmatpush2.msra.mxu0 %v4888
    %5296 = vmatprep.subr.mxu0 %v4885
    %5297 = vmatpush2.msra.mxu0 %v4884
    %5298 = vmatprep.subr.mxu0 %v4881
    %5299 = vmatpush2.msra.mxu0 %v4880
    %5300 = vmatprep.subr.mxu0 %v4877
    %5301 = vmatpush2.msra.mxu0 %v4876
    %5302 = vmatprep.subr.mxu0 %v4873
    %5303 = vmatpush2.msra.mxu0 %v4872
    %5304 = vmatprep.subr.mxu0 %v4869
    %5305 = vmatpush2.msra.mxu0 %v4868
    %5306 = vmatprep.subr.mxu0 %v4865
    %5307 = vmatpush2.msra.mxu0 %v4864
    %5308 = vmatprep.subr.mxu0 %v4861
    %5309 = vmatpush2.msra.mxu0 %v4860
    %5310 = vmatprep.subr.mxu0 %v4857
    %5311 = vmatpush2.msra.mxu0 %v4856
    %5312 = vmatprep.subr.mxu0 %v4853
    %5313 = vmatpush2.msra.mxu0 %v4852
    %5314 = vmatprep.subr.mxu0 %v4849
    %5315 = vmatpush2.msra.mxu0 %v4848
    %5316 = vmatprep.subr.mxu0 %v4845
    %5317 = vmatpush2.msra.mxu0 %v4844
    %5318 = vmatprep.subr.mxu0 %v4841
    %5319 = vmatpush2.msra.mxu0 %v4840
    %5320 = vmatprep.subr.mxu0 %v4837
    %5321 = vmatpush2.msra.mxu0 %v4836
    %5322 = vmatprep.subr.mxu0 %v4833
    %5323 = vmatpush2.msra.mxu0 %v4832
    %5324 = vmatprep.subr.mxu0 %v4829
    %5325 = vmatpush2.msra.mxu0 %v4828
    %5326 = vmatprep.mubr.f32.mxu0 %v4627
    %5327 = vmatmul.mubr.f32.gmra.mxu0 %v4626
    %v5328 = vpop.f32.mrf.mxu0
    %v5329 = vadd.f32 %v5252, %v5328
    %v5330 = vpop.f32.mrf.mxu0
    %v5331 = vadd.f32 %v5254, %v5330
    %5332 = vmatprep.mubr.f32.mxu0 %v4632
    %5333 = vmatmul.mubr.f32.gmra.mxu0 %v4631
    %v5334 = vpop.f32.mrf.mxu0
    %v5335 = vadd.f32 %v5258, %v5334
    %v5336 = vpop.f32.mrf.mxu0
    %v5337 = vadd.f32 %v5260, %v5336
    %5338 = vdwg.mxu0
    %5339 = vmatprep.subr.mxu0 %v4953
    %5340 = vmatpush1.msra.mxu0 %v4952
    %5341 = vmatprep.subr.mxu0 %v4949
    %5342 = vmatpush1.msra.mxu0 %v4948
    %5343 = vmatprep.subr.mxu0 %v4945
    %5344 = vmatpush1.msra.mxu0 %v4944
    %5345 = vmatprep.subr.mxu0 %v4941
    %5346 = vmatpush1.msra.mxu0 %v4940
    %5347 = vmatprep.subr.mxu0 %v4937
    %5348 = vmatpush1.msra.mxu0 %v4936
    %5349 = vmatprep.subr.mxu0 %v4933
    %5350 = vmatpush1.msra.mxu0 %v4932
    %5351 = vmatprep.subr.mxu0 %v4929
    %5352 = vmatpush1.msra.mxu0 %v4928
    %5353 = vmatprep.subr.mxu0 %v4925
    %5354 = vmatpush1.msra.mxu0 %v4924
    %5355 = vmatprep.subr.mxu0 %v4921
    %5356 = vmatpush1.msra.mxu0 %v4920
    %5357 = vmatprep.subr.mxu0 %v4917
    %5358 = vmatpush1.msra.mxu0 %v4916
    %5359 = vmatprep.subr.mxu0 %v4913
    %5360 = vmatpush1.msra.mxu0 %v4912
    %5361 = vmatprep.subr.mxu0 %v4909
    %5362 = vmatpush1.msra.mxu0 %v4908
    %5363 = vmatprep.subr.mxu0 %v4905
    %5364 = vmatpush1.msra.mxu0 %v4904
    %5365 = vmatprep.subr.mxu0 %v4901
    %5366 = vmatpush1.msra.mxu0 %v4900
    %5367 = vmatprep.subr.mxu0 %v4897
    %5368 = vmatpush1.msra.mxu0 %v4896
    %5369 = vmatprep.subr.mxu0 %v4893
    %5370 = vmatpush1.msra.mxu0 %v4892
    %5371 = vmatprep.subr.mxu0 0.0
    %5372 = vmatpush2.msra.mxu0 0.0
    %5373 = vmatprep.subr.mxu0 0.0
    %5374 = vmatpush2.msra.mxu0 0.0
    %5375 = vmatprep.subr.mxu0 0.0
    %5376 = vmatpush2.msra.mxu0 0.0
    %5377 = vmatprep.subr.mxu0 0.0
    %5378 = vmatpush2.msra.mxu0 0.0
    %5379 = vmatprep.subr.mxu0 0.0
    %5380 = vmatpush2.msra.mxu0 0.0
    %5381 = vmatprep.subr.mxu0 0.0
    %5382 = vmatpush2.msra.mxu0 0.0
    %5383 = vmatprep.subr.mxu0 0.0
    %5384 = vmatpush2.msra.mxu0 0.0
    %5385 = vmatprep.subr.mxu0 0.0
    %5386 = vmatpush2.msra.mxu0 0.0
    %5387 = vmatprep.subr.mxu0 0.0
    %5388 = vmatpush2.msra.mxu0 0.0
    %5389 = vmatprep.subr.mxu0 0.0
    %5390 = vmatpush2.msra.mxu0 0.0
    %5391 = vmatprep.subr.mxu0 0.0
    %5392 = vmatpush2.msra.mxu0 0.0
    %5393 = vmatprep.subr.mxu0 0.0
    %5394 = vmatpush2.msra.mxu0 0.0
    %5395 = vmatprep.subr.mxu0 0.0
    %5396 = vmatpush2.msra.mxu0 0.0
    %5397 = vmatprep.subr.mxu0 0.0
    %5398 = vmatpush2.msra.mxu0 0.0
    %5399 = vmatprep.subr.mxu0 0.0
    %5400 = vmatpush2.msra.mxu0 0.0
    %5401 = vmatprep.subr.mxu0 0.0
    %5402 = vmatpush2.msra.mxu0 0.0
    %5403 = vmatprep.mubr.f32.mxu0 0.0
    %5404 = vmatmul.mubr.f32.gmra.mxu0 %v4628
    %v5405 = vpop.f32.mrf.mxu0
    %v5406 = vadd.f32 %v5329, %v5405
    %v5407 = vpop.f32.mrf.mxu0
    %v5408 = vadd.f32 %v5331, %v5407
    %5409 = vmatprep.mubr.f32.mxu0 0.0
    %5410 = vmatmul.mubr.f32.gmra.mxu0 %v4633
    %v5411 = vpop.f32.mrf.mxu0
    %v5412 = vadd.f32 %v5335, %v5411
    %v5413 = vpop.f32.mrf.mxu0
    %v5414 = vadd.f32 %v5337, %v5413
    %5415 = vdwg.mxu0
    %v5416 = vld [vmem:[%s31] sm:$0xff]
    %v5417 = vld [vmem:[%s31 + $0x8] sm:$0xff]
    %v5418 = vld [vmem:[%s31 + $0x10] sm:$0xff]
    %v5419 = vld [vmem:[%s31 + $0x18] sm:$0xff]
    %v5420 = vld [vmem:[%s31 + $0x20] sm:$0xff]
    %v5421 = vld [vmem:[%s31 + $0x28] sm:$0xff]
    %v5422 = vld [vmem:[%s31 + $0x30] sm:$0xff]
    %v5423 = vld [vmem:[%s31 + $0x38] sm:$0xff]
    %v5424 = vld [vmem:[%s31 + $0x40] sm:$0xff]
    %v5425 = vld [vmem:[%s31 + $0x48] sm:$0xff]
    %v5426 = vld [vmem:[%s31 + $0x50] sm:$0xff]
    %v5427 = vld [vmem:[%s31 + $0x58] sm:$0xff]
    %v5428 = vld [vmem:[%s31 + $0x60] sm:$0xff]
    %v5429 = vld [vmem:[%s31 + $0x68] sm:$0xff]
    %v5430 = vld [vmem:[%s31 + $0x70] sm:$0xff]
    %v5431 = vld [vmem:[%s31 + $0x78] sm:$0xff]
    %v5432 = vld [vmem:[%s31 + $0x80] sm:$0xff]
    %v5433 = vld [vmem:[%s31 + $0x88] sm:$0xff]
    %v5434 = vld [vmem:[%s31 + $0x90] sm:$0xff]
    %v5435 = vld [vmem:[%s31 + $0x98] sm:$0xff]
    %v5436 = vld [vmem:[%s31 + $0xa0] sm:$0xff]
    %v5437 = vld [vmem:[%s31 + $0xa8] sm:$0xff]
    %v5438 = vld [vmem:[%s31 + $0xb0] sm:$0xff]
    %v5439 = vld [vmem:[%s31 + $0xb8] sm:$0xff]
    %v5440 = vld [vmem:[%s31 + $0xc0] sm:$0xff]
    %v5441 = vld [vmem:[%s31 + $0xc8] sm:$0xff]
    %v5442 = vld [vmem:[%s31 + $0xd0] sm:$0xff]
    %v5443 = vld [vmem:[%s31 + $0xd8] sm:$0xff]
    %v5444 = vld [vmem:[%s31 + $0xe0] sm:$0xff]
    %v5445 = vld [vmem:[%s31 + $0xe8] sm:$0xff]
    %v5446 = vld [vmem:[%s31 + $0xf0] sm:$0xff]
    %v5447 = vld [vmem:[%s31 + $0xf8] sm:$0xff]
    %v5448 = vld [vmem:[%s31 + $0x100] sm:$0xff]
    %v5449 = vld [vmem:[%s31 + $0x108] sm:$0xff]
    %v5450 = vld [vmem:[%s31 + $0x110] sm:$0xff]
    %v5451 = vld [vmem:[%s31 + $0x118] sm:$0xff]
    %v5452 = vld [vmem:[%s31 + $0x120] sm:$0xff]
    %v5453 = vld [vmem:[%s31 + $0x128] sm:$0xff]
    %v5454 = vld [vmem:[%s31 + $0x130] sm:$0xff]
    %v5455 = vld [vmem:[%s31 + $0x138] sm:$0xff]
    %v5456 = vld [vmem:[%s31 + $0x140] sm:$0xff]
    %v5457 = vld [vmem:[%s31 + $0x148] sm:$0xff]
    %v5458 = vld [vmem:[%s31 + $0x150] sm:$0xff]
    %v5459 = vld [vmem:[%s31 + $0x158] sm:$0xff]
    %v5460 = vld [vmem:[%s31 + $0x160] sm:$0xff]
    %v5461 = vld [vmem:[%s31 + $0x168] sm:$0xff]
    %v5462 = vld [vmem:[%s31 + $0x170] sm:$0xff]
    %v5463 = vld [vmem:[%s31 + $0x178] sm:$0xff]
    %v5464 = vld [vmem:[%s31 + $0x180] sm:$0xff]
    %v5465 = vld [vmem:[%s31 + $0x188] sm:$0xff]
    %v5466 = vld [vmem:[%s31 + $0x190] sm:$0xff]
    %v5467 = vld [vmem:[%s31 + $0x198] sm:$0xff]
    %v5468 = vld [vmem:[%s31 + $0x1a0] sm:$0xff]
    %v5469 = vld [vmem:[%s31 + $0x1a8] sm:$0xff]
    %v5470 = vld [vmem:[%s31 + $0x1b0] sm:$0xff]
    %v5471 = vld [vmem:[%s31 + $0x1b8] sm:$0xff]
    %v5472 = vld [vmem:[%s31 + $0x1c0] sm:$0xff]
    %v5473 = vld [vmem:[%s31 + $0x1c8] sm:$0xff]
    %v5474 = vld [vmem:[%s31 + $0x1d0] sm:$0xff]
    %v5475 = vld [vmem:[%s31 + $0x1d8] sm:$0xff]
    %v5476 = vld [vmem:[%s31 + $0x1e0] sm:$0xff]
    %v5477 = vld [vmem:[%s31 + $0x1e8] sm:$0xff]
    %v5478 = vld [vmem:[%s31 + $0x1f0] sm:$0xff]
    %v5479 = vld [vmem:[%s31 + $0x1f8] sm:$0xff]
    %5480 = vmatprep.subr.mxu0 0.0
    %5481 = vmatpush1.msra.mxu0 %v5431
    %5482 = vmatprep.subr.mxu0 0.0
    %5483 = vmatpush1.msra.mxu0 %v5430
    %5484 = vmatprep.subr.mxu0 0.0
    %5485 = vmatpush1.msra.mxu0 %v5429
    %5486 = vmatprep.subr.mxu0 0.0
    %5487 = vmatpush1.msra.mxu0 %v5428
    %5488 = vmatprep.subr.mxu0 0.0
    %5489 = vmatpush1.msra.mxu0 %v5427
    %5490 = vmatprep.subr.mxu0 0.0
    %5491 = vmatpush1.msra.mxu0 %v5426
    %5492 = vmatprep.subr.mxu0 0.0
    %5493 = vmatpush1.msra.mxu0 %v5425
    %5494 = vmatprep.subr.mxu0 0.0
    %5495 = vmatpush1.msra.mxu0 %v5424
    %5496 = vmatprep.subr.mxu0 0.0
    %5497 = vmatpush1.msra.mxu0 %v5423
    %5498 = vmatprep.subr.mxu0 0.0
    %5499 = vmatpush1.msra.mxu0 %v5422
    %5500 = vmatprep.subr.mxu0 0.0
    %5501 = vmatpush1.msra.mxu0 %v5421
    %5502 = vmatprep.subr.mxu0 0.0
    %5503 = vmatpush1.msra.mxu0 %v5420
    %5504 = vmatprep.subr.mxu0 0.0
    %5505 = vmatpush1.msra.mxu0 %v5419
    %5506 = vmatprep.subr.mxu0 0.0
    %5507 = vmatpush1.msra.mxu0 %v5418
    %5508 = vmatprep.subr.mxu0 0.0
    %5509 = vmatpush1.msra.mxu0 %v5417
    %5510 = vmatprep.subr.mxu0 0.0
    %5511 = vmatpush1.msra.mxu0 %v5416
    %5512 = vmatprep.subr.mxu0 0.0
    %5513 = vmatpush2.msra.mxu0 %v5447
    %5514 = vmatprep.subr.mxu0 0.0
    %5515 = vmatpush2.msra.mxu0 %v5446
    %5516 = vmatprep.subr.mxu0 0.0
    %5517 = vmatpush2.msra.mxu0 %v5445
    %5518 = vmatprep.subr.mxu0 0.0
    %5519 = vmatpush2.msra.mxu0 %v5444
    %5520 = vmatprep.subr.mxu0 0.0
    %5521 = vmatpush2.msra.mxu0 %v5443
    %5522 = vmatprep.subr.mxu0 0.0
    %5523 = vmatpush2.msra.mxu0 %v5442
    %5524 = vmatprep.subr.mxu0 0.0
    %5525 = vmatpush2.msra.mxu0 %v5441
    %5526 = vmatprep.subr.mxu0 0.0
    %5527 = vmatpush2.msra.mxu0 %v5440
    %5528 = vmatprep.subr.mxu0 0.0
    %5529 = vmatpush2.msra.mxu0 %v5439
    %5530 = vmatprep.subr.mxu0 0.0
    %5531 = vmatpush2.msra.mxu0 %v5438
    %5532 = vmatprep.subr.mxu0 0.0
    %5533 = vmatpush2.msra.mxu0 %v5437
    %5534 = vmatprep.subr.mxu0 0.0
    %5535 = vmatpush2.msra.mxu0 %v5436
    %5536 = vmatprep.subr.mxu0 0.0
    %5537 = vmatpush2.msra.mxu0 %v5435
    %5538 = vmatprep.subr.mxu0 0.0
    %5539 = vmatpush2.msra.mxu0 %v5434
    %5540 = vmatprep.subr.mxu0 0.0
    %5541 = vmatpush2.msra.mxu0 %v5433
    %5542 = vmatprep.subr.mxu0 0.0
    %5543 = vmatpush2.msra.mxu0 %v5432
    %5544 = vmatprep.mubr.f32.mxu0 %v5177
    %5545 = vmatmul.mubr.f32.gmra.mxu0 %v5175
    %v5546 = vpop.f32.mrf.mxu0
    %v5547 = vadd.f32 0.0, %v5546
    %v5548 = vpop.f32.mrf.mxu0
    %5549 = vmatprep.mubr.f32.mxu0 %v5183
    %5550 = vmatmul.mubr.f32.gmra.mxu0 %v5181
    %v5551 = vpop.f32.mrf.mxu0
    %v5552 = vadd.f32 0.0, %v5551
    %v5553 = vpop.f32.mrf.mxu0
    %5554 = vdwg.mxu0
    %5555 = vmatprep.subr.mxu0 0.0
    %5556 = vmatpush1.msra.mxu0 %v5463
    %5557 = vmatprep.subr.mxu0 0.0
    %5558 = vmatpush1.msra.mxu0 %v5462
    %5559 = vmatprep.subr.mxu0 0.0
    %5560 = vmatpush1.msra.mxu0 %v5461
    %5561 = vmatprep.subr.mxu0 0.0
    %5562 = vmatpush1.msra.mxu0 %v5460
    %5563 = vmatprep.subr.mxu0 0.0
    %5564 = vmatpush1.msra.mxu0 %v5459
    %5565 = vmatprep.subr.mxu0 0.0
    %5566 = vmatpush1.msra.mxu0 %v5458
    %5567 = vmatprep.subr.mxu0 0.0
    %5568 = vmatpush1.msra.mxu0 %v5457
    %5569 = vmatprep.subr.mxu0 0.0
    %5570 = vmatpush1.msra.mxu0 %v5456
    %5571 = vmatprep.subr.mxu0 0.0
    %5572 = vmatpush1.msra.mxu0 %v5455
    %5573 = vmatprep.subr.mxu0 0.0
    %5574 = vmatpush1.msra.mxu0 %v5454
    %5575 = vmatprep.subr.mxu0 0.0
    %5576 = vmatpush1.msra.mxu0 %v5453
    %5577 = vmatprep.subr.mxu0 0.0
    %5578 = vmatpush1.msra.mxu0 %v5452
    %5579 = vmatprep.subr.mxu0 0.0
    %5580 = vmatpush1.msra.mxu0 %v5451
    %5581 = vmatprep.subr.mxu0 0.0
    %5582 = vmatpush1.msra.mxu0 %v5450
    %5583 = vmatprep.subr.mxu0 0.0
    %5584 = vmatpush1.msra.mxu0 %v5449
    %5585 = vmatprep.subr.mxu0 0.0
    %5586 = vmatpush1.msra.mxu0 %v5448
    %5587 = vmatprep.subr.mxu0 0.0
    %5588 = vmatpush2.msra.mxu0 %v5479
    %5589 = vmatprep.subr.mxu0 0.0
    %5590 = vmatpush2.msra.mxu0 %v5478
    %5591 = vmatprep.subr.mxu0 0.0
    %5592 = vmatpush2.msra.mxu0 %v5477
    %5593 = vmatprep.subr.mxu0 0.0
    %5594 = vmatpush2.msra.mxu0 %v5476
    %5595 = vmatprep.subr.mxu0 0.0
    %5596 = vmatpush2.msra.mxu0 %v5475
    %5597 = vmatprep.subr.mxu0 0.0
    %5598 = vmatpush2.msra.mxu0 %v5474
    %5599 = vmatprep.subr.mxu0 0.0
    %5600 = vmatpush2.msra.mxu0 %v5473
    %5601 = vmatprep.subr.mxu0 0.0
    %5602 = vmatpush2.msra.mxu0 %v5472
    %5603 = vmatprep.subr.mxu0 0.0
    %5604 = vmatpush2.msra.mxu0 %v5471
    %5605 = vmatprep.subr.mxu0 0.0
    %5606 = vmatpush2.msra.mxu0 %v5470
    %5607 = vmatprep.subr.mxu0 0.0
    %5608 = vmatpush2.msra.mxu0 %v5469
    %5609 = vmatprep.subr.mxu0 0.0
    %5610 = vmatpush2.msra.mxu0 %v5468
    %5611 = vmatprep.subr.mxu0 0.0
    %5612 = vmatpush2.msra.mxu0 %v5467
    %5613 = vmatprep.subr.mxu0 0.0
    %5614 = vmatpush2.msra.mxu0 %v5466
    %5615 = vmatprep.subr.mxu0 0.0
    %5616 = vmatpush2.msra.mxu0 %v5465
    %5617 = vmatprep.subr.mxu0 0.0
    %5618 = vmatpush2.msra.mxu0 %v5464
    %5619 = vmatprep.mubr.f32.mxu0 %v5408
    %5620 = vmatmul.mubr.f32.gmra.mxu0 %v5406
    %v5621 = vpop.f32.mrf.mxu0
    %v5622 = vadd.f32 %v5547, %v5621
    %v5623 = vpop.f32.mrf.mxu0
    %5624 = vmatprep.mubr.f32.mxu0 %v5414
    %5625 = vmatmul.mubr.f32.gmra.mxu0 %v5412
    %v5626 = vpop.f32.mrf.mxu0
    %v5627 = vadd.f32 %v5552, %v5626
    %v5628 = vpop.f32.mrf.mxu0
    %5629 = vdwg.mxu0
    %v5630 = vld [vmem:[#allocation22] sm:$0xff]
    %v5631 = vld [vmem:[#allocation22 + $0x8] sm:$0xff]
    %v5634 = vcombine.high %v5630, %v5630
    %v5635 = vcombine.high %v5631, %v5631
    %5638 = vmatprep.subr.mxu0 0.0
    %5639 = vmatpush1.xpose.msra.mxu0 0.0
    %5640 = vmatprep.subr.mxu0 0.0
    %5641 = vmatpush1.xpose.msra.mxu0 0.0
    %5642 = vmatprep.subr.mxu0 0.0
    %5643 = vmatpush1.xpose.msra.mxu0 0.0
    %5644 = vmatprep.subr.mxu0 0.0
    %5645 = vmatpush1.xpose.msra.mxu0 0.0
    %5646 = vmatprep.subr.mxu0 0.0
    %5647 = vmatpush1.xpose.msra.mxu0 0.0
    %5648 = vmatprep.subr.mxu0 0.0
    %5649 = vmatpush1.xpose.msra.mxu0 0.0
    %5650 = vmatprep.subr.mxu0 0.0
    %5651 = vmatpush1.xpose.msra.mxu0 0.0
    %5652 = vmatprep.subr.mxu0 0.0
    %5653 = vmatpush1.xpose.msra.mxu0 0.0
    %5654 = vmatprep.subr.mxu0 0.0
    %5655 = vmatpush1.xpose.msra.mxu0 0.0
    %5656 = vmatprep.subr.mxu0 0.0
    %5657 = vmatpush1.xpose.msra.mxu0 0.0
    %5658 = vmatprep.subr.mxu0 0.0
    %5659 = vmatpush1.xpose.msra.mxu0 0.0
    %5660 = vmatprep.subr.mxu0 0.0
    %5661 = vmatpush1.xpose.msra.mxu0 0.0
    %5662 = vmatprep.subr.mxu0 0.0
    %5663 = vmatpush1.xpose.msra.mxu0 0.0
    %5664 = vmatprep.subr.mxu0 0.0
    %5665 = vmatpush1.xpose.msra.mxu0 0.0
    %5666 = vmatprep.subr.mxu0 %v5183
    %5667 = vmatpush1.xpose.msra.mxu0 %v5181
    %5668 = vmatprep.subr.mxu0 %v5177
    %5669 = vmatpush1.xpose.msra.mxu0 %v5175
    %5670 = vmatprep.subr.mxu0 0.0
    %5671 = vmatpush2.xpose.msra.mxu0 0.0
    %5672 = vmatprep.subr.mxu0 0.0
    %5673 = vmatpush2.xpose.msra.mxu0 0.0
    %5674 = vmatprep.subr.mxu0 0.0
    %5675 = vmatpush2.xpose.msra.mxu0 0.0
    %5676 = vmatprep.subr.mxu0 0.0
    %5677 = vmatpush2.xpose.msra.mxu0 0.0
    %5678 = vmatprep.subr.mxu0 0.0
    %5679 = vmatpush2.xpose.msra.mxu0 0.0
    %5680 = vmatprep.subr.mxu0 0.0
    %5681 = vmatpush2.xpose.msra.mxu0 0.0
    %5682 = vmatprep.subr.mxu0 0.0
    %5683 = vmatpush2.xpose.msra.mxu0 0.0
    %5684 = vmatprep.subr.mxu0 0.0
    %5685 = vmatpush2.xpose.msra.mxu0 0.0
    %5686 = vmatprep.subr.mxu0 0.0
    %5687 = vmatpush2.xpose.msra.mxu0 0.0
    %5688 = vmatprep.subr.mxu0 0.0
    %5689 = vmatpush2.xpose.msra.mxu0 0.0
    %5690 = vmatprep.subr.mxu0 0.0
    %5691 = vmatpush2.xpose.msra.mxu0 0.0
    %5692 = vmatprep.subr.mxu0 0.0
    %5693 = vmatpush2.xpose.msra.mxu0 0.0
    %5694 = vmatprep.subr.mxu0 0.0
    %5695 = vmatpush2.xpose.msra.mxu0 0.0
    %5696 = vmatprep.subr.mxu0 0.0
    %5697 = vmatpush2.xpose.msra.mxu0 0.0
    %5698 = vmatprep.subr.mxu0 0.0
    %5699 = vmatpush2.xpose.msra.mxu0 0.0
    %5700 = vmatprep.subr.mxu0 0.0
    %5701 = vmatpush2.xpose.msra.mxu0 0.0
    %5702 = vmatprep.mubr.f32.mxu0 %v5634
    %5703 = vmatmul.mubr.f32.gmra.mxu0 %v5630
    %v5704 = vpop.f32.mrf.mxu0
    %v5705 = vadd.f32 0.0, %v5704
    %v5706 = vpop.f32.mrf.mxu0
    %5707 = vdwg.mxu0
    %5708 = vmatprep.subr.mxu0 0.0
    %5709 = vmatpush1.xpose.msra.mxu0 0.0
    %5710 = vmatprep.subr.mxu0 0.0
    %5711 = vmatpush1.xpose.msra.mxu0 0.0
    %5712 = vmatprep.subr.mxu0 0.0
    %5713 = vmatpush1.xpose.msra.mxu0 0.0
    %5714 = vmatprep.subr.mxu0 0.0
    %5715 = vmatpush1.xpose.msra.mxu0 0.0
    %5716 = vmatprep.subr.mxu0 0.0
    %5717 = vmatpush1.xpose.msra.mxu0 0.0
    %5718 = vmatprep.subr.mxu0 0.0
    %5719 = vmatpush1.xpose.msra.mxu0 0.0
    %5720 = vmatprep.subr.mxu0 0.0
    %5721 = vmatpush1.xpose.msra.mxu0 0.0
    %5722 = vmatprep.subr.mxu0 0.0
    %5723 = vmatpush1.xpose.msra.mxu0 0.0
    %5724 = vmatprep.subr.mxu0 0.0
    %5725 = vmatpush1.xpose.msra.mxu0 0.0
    %5726 = vmatprep.subr.mxu0 0.0
    %5727 = vmatpush1.xpose.msra.mxu0 0.0
    %5728 = vmatprep.subr.mxu0 0.0
    %5729 = vmatpush1.xpose.msra.mxu0 0.0
    %5730 = vmatprep.subr.mxu0 0.0
    %5731 = vmatpush1.xpose.msra.mxu0 0.0
    %5732 = vmatprep.subr.mxu0 0.0
    %5733 = vmatpush1.xpose.msra.mxu0 0.0
    %5734 = vmatprep.subr.mxu0 0.0
    %5735 = vmatpush1.xpose.msra.mxu0 0.0
    %5736 = vmatprep.subr.mxu0 %v5414
    %5737 = vmatpush1.xpose.msra.mxu0 %v5412
    %5738 = vmatprep.subr.mxu0 %v5408
    %5739 = vmatpush1.xpose.msra.mxu0 %v5406
    %5740 = vmatprep.subr.mxu0 0.0
    %5741 = vmatpush2.xpose.msra.mxu0 0.0
    %5742 = vmatprep.subr.mxu0 0.0
    %5743 = vmatpush2.xpose.msra.mxu0 0.0
    %5744 = vmatprep.subr.mxu0 0.0
    %5745 = vmatpush2.xpose.msra.mxu0 0.0
    %5746 = vmatprep.subr.mxu0 0.0
    %5747 = vmatpush2.xpose.msra.mxu0 0.0
    %5748 = vmatprep.subr.mxu0 0.0
    %5749 = vmatpush2.xpose.msra.mxu0 0.0
    %5750 = vmatprep.subr.mxu0 0.0
    %5751 = vmatpush2.xpose.msra.mxu0 0.0
    %5752 = vmatprep.subr.mxu0 0.0
    %5753 = vmatpush2.xpose.msra.mxu0 0.0
    %5754 = vmatprep.subr.mxu0 0.0
    %5755 = vmatpush2.xpose.msra.mxu0 0.0
    %5756 = vmatprep.subr.mxu0 0.0
    %5757 = vmatpush2.xpose.msra.mxu0 0.0
    %5758 = vmatprep.subr.mxu0 0.0
    %5759 = vmatpush2.xpose.msra.mxu0 0.0
    %5760 = vmatprep.subr.mxu0 0.0
    %5761 = vmatpush2.xpose.msra.mxu0 0.0
    %5762 = vmatprep.subr.mxu0 0.0
    %5763 = vmatpush2.xpose.msra.mxu0 0.0
    %5764 = vmatprep.subr.mxu0 0.0
    %5765 = vmatpush2.xpose.msra.mxu0 0.0
    %5766 = vmatprep.subr.mxu0 0.0
    %5767 = vmatpush2.xpose.msra.mxu0 0.0
    %5768 = vmatprep.subr.mxu0 0.0
    %5769 = vmatpush2.xpose.msra.mxu0 0.0
    %5770 = vmatprep.subr.mxu0 0.0
    %5771 = vmatpush2.xpose.msra.mxu0 0.0
    %5772 = vmatprep.mubr.f32.mxu0 %v5635
    %5773 = vmatmul.mubr.f32.gmra.mxu0 %v5631
    %v5774 = vpop.f32.mrf.mxu0
    %v5775 = vadd.f32 %v5705, %v5774
    %v5776 = vpop.f32.mrf.mxu0
    %5777 = vdwg.mxu0
    %s5778 = sld [smem:[#allocation25]]
    %s5779 = sld [smem:[#allocation25 + $0x1]]
    %s5780 = sld [smem:[#allocation25 + $0x2]]
    %s5781 = sld [smem:[#allocation25 + $0x3]]
    %5783 = vset.pattern.permute.xlu0 0
    %5784 = vperm.xlu0 %5783, %v5622
    %v5785 = vpop.permute.xlu0 %5784
    %5788 = vset.pattern.permute.xlu0 0
    %5789 = vperm.xlu0 %5788, %v5627
    %v5790 = vpop.permute.xlu0 %5789
    %v5792 = vlaneseq
    %v5793 = vshrl.u32 %v5792, 7
    %v5794 = vsub.s32 0, %v5793
    %v5795 = vrot.slane %v5775, %v5794
    %v5796 = vadd.f32 %v5785, %v5795
    %v5797 = vadd.f32 %v5790, %v5795
    %v5798 = vstv %s5778
    %v5799 = vmul.f32 %v5798, %v465
    %v5800 = vmul.f32 %v5798, %v466
    %v5801 = vadd.f32 %v5796, %v5799
    %v5802 = vadd.f32 %v5797, %v5800
    %v5803 = vmul.f32 %v5801, 0.2
    %v5804 = vmul.f32 %v5802, 0.2
    %v5805 = vmax.f32 %v5801, %v5803
    %v5806 = vmax.f32 %v5802, %v5804
    %v5807 = vadd.f32 %v5805, %v469
    %v5808 = vadd.f32 %v5806, %v470
    %v5809 = vsel %vm1281, %v5807, -inf
    %5810 = vmax.xlane.f32.xlu0 %v5809
    %v5811 = vpop.xlane.xlu0 %5810
    %v5812 = vsel %vm1281, %v5808, -inf
    %5813 = vmax.xlane.f32.xlu0 %v5812
    %v5814 = vpop.xlane.xlu0 %5813
    %v5815 = vsub.f32 %v5807, %v5811
    %v5816 = vsub.f32 %v5808, %v5814
    %v5817 = vmul.f32 %v5815, 1.442695
    %v5818 = vpow.pop %v5817
    %v5819 = vmul.f32 %v5816, 1.442695
    %v5820 = vpow.pop %v5819
    %v5821 = vsel %vm1281, %v5818, 0.0
    %5822 = vadd.xlane.f32.xlu0 %v5821
    %v5823 = vpop.xlane.xlu0 %5822
    %v5824 = vsel %vm1281, %v5820, 0.0
    %5825 = vadd.xlane.f32.xlu0 %v5824
    %v5826 = vpop.xlane.xlu0 %5825
    %v5828 = vsel %vm1281, %v5818, 0
    %v5831 = vsel %vm1281, %v5820, 0
    %5833 = vmatprep.subr.mxu0 0.0
    %5834 = vmatpush1.msra.mxu0 0.0
    %5835 = vmatprep.subr.mxu0 0.0
    %5836 = vmatpush1.msra.mxu0 0.0
    %5837 = vmatprep.subr.mxu0 0.0
    %5838 = vmatpush1.msra.mxu0 0.0
    %5839 = vmatprep.subr.mxu0 0.0
    %5840 = vmatpush1.msra.mxu0 0.0
    %5841 = vmatprep.subr.mxu0 0.0
    %5842 = vmatpush1.msra.mxu0 0.0
    %5843 = vmatprep.subr.mxu0 0.0
    %5844 = vmatpush1.msra.mxu0 0.0
    %5845 = vmatprep.subr.mxu0 0.0
    %5846 = vmatpush1.msra.mxu0 0.0
    %5847 = vmatprep.subr.mxu0 0.0
    %5848 = vmatpush1.msra.mxu0 0.0
    %5849 = vmatprep.subr.mxu0 0.0
    %5850 = vmatpush1.msra.mxu0 0.0
    %5851 = vmatprep.subr.mxu0 0.0
    %5852 = vmatpush1.msra.mxu0 0.0
    %5853 = vmatprep.subr.mxu0 0.0
    %5854 = vmatpush1.msra.mxu0 0.0
    %5855 = vmatprep.subr.mxu0 0.0
    %5856 = vmatpush1.msra.mxu0 0.0
    %5857 = vmatprep.subr.mxu0 0.0
    %5858 = vmatpush1.msra.mxu0 0.0
    %5859 = vmatprep.subr.mxu0 0.0
    %5860 = vmatpush1.msra.mxu0 0.0
    %5861 = vmatprep.subr.mxu0 0.0
    %5862 = vmatpush1.msra.mxu0 %v5181
    %5863 = vmatprep.subr.mxu0 0.0
    %5864 = vmatpush1.msra.mxu0 %v5175
    %5865 = vmatprep.subr.mxu0 0.0
    %5866 = vmatpush2.msra.mxu0 0.0
    %5867 = vmatprep.subr.mxu0 0.0
    %5868 = vmatpush2.msra.mxu0 0.0
    %5869 = vmatprep.subr.mxu0 0.0
    %5870 = vmatpush2.msra.mxu0 0.0
    %5871 = vmatprep.subr.mxu0 0.0
    %5872 = vmatpush2.msra.mxu0 0.0
    %5873 = vmatprep.subr.mxu0 0.0
    %5874 = vmatpush2.msra.mxu0 0.0
    %5875 = vmatprep.subr.mxu0 0.0
    %5876 = vmatpush2.msra.mxu0 0.0
    %5877 = vmatprep.subr.mxu0 0.0
    %5878 = vmatpush2.msra.mxu0 0.0
    %5879 = vmatprep.subr.mxu0 0.0
    %5880 = vmatpush2.msra.mxu0 0.0
    %5881 = vmatprep.subr.mxu0 0.0
    %5882 = vmatpush2.msra.mxu0 0.0
    %5883 = vmatprep.subr.mxu0 0.0
    %5884 = vmatpush2.msra.mxu0 0.0
    %5885 = vmatprep.subr.mxu0 0.0
    %5886 = vmatpush2.msra.mxu0 0.0
    %5887 = vmatprep.subr.mxu0 0.0
    %5888 = vmatpush2.msra.mxu0 0.0
    %5889 = vmatprep.subr.mxu0 0.0
    %5890 = vmatpush2.msra.mxu0 0.0
    %5891 = vmatprep.subr.mxu0 0.0
    %5892 = vmatpush2.msra.mxu0 0.0
    %5893 = vmatprep.subr.mxu0 0.0
    %5894 = vmatpush2.msra.mxu0 0.0
    %5895 = vmatprep.subr.mxu0 0.0
    %5896 = vmatpush2.msra.mxu0 0.0
    %5897 = vmatprep.mubr.f32.mxu0 0.0
    %5898 = vmatmul.mubr.f32.gmra.mxu0 %v5828
    %v5899 = vpop.f32.mrf.mxu0
    %v5900 = vadd.f32 0.0, %v5899
    %v5901 = vpop.f32.mrf.mxu0
    %5902 = vmatprep.mubr.f32.mxu0 0.0
    %5903 = vmatmul.mubr.f32.gmra.mxu0 %v5831
    %v5904 = vpop.f32.mrf.mxu0
    %v5905 = vadd.f32 0.0, %v5904
    %v5906 = vpop.f32.mrf.mxu0
    %5907 = vdwg.mxu0
    %v5908 = vrcp.pop %v5823
    %v5909 = vrcp.pop %v5826
    %v5910 = vmul.f32 %v5900, %v5908
    %v5911 = vmul.f32 %v5905, %v5909
    %5912 = vset.pattern.permute.xlu0 1
    %5913 = vperm.xlu0 %5912, %v5622
    %v5914 = vpop.permute.xlu0 %5913
    %5916 = vset.pattern.permute.xlu0 1
    %5917 = vperm.xlu0 %5916, %v5627
    %v5918 = vpop.permute.xlu0 %5917
    %v5920 = vlaneseq
    %v5921 = vshrl.u32 %v5920, 7
    %v5922 = vsub.s32 1, %v5921
    %v5923 = vrot.slane %v5775, %v5922
    %v5924 = vadd.f32 %v5914, %v5923
    %v5925 = vadd.f32 %v5918, %v5923
    %v5926 = vstv %s5779
    %v5927 = vmul.f32 %v5926, %v465
    %v5928 = vmul.f32 %v5926, %v466
    %v5929 = vadd.f32 %v5924, %v5927
    %v5930 = vadd.f32 %v5925, %v5928
    %v5931 = vmul.f32 %v5929, 0.2
    %v5932 = vmul.f32 %v5930, 0.2
    %v5933 = vmax.f32 %v5929, %v5931
    %v5934 = vmax.f32 %v5930, %v5932
    %v5935 = vadd.f32 %v5933, %v469
    %v5936 = vadd.f32 %v5934, %v470
    %v5937 = vsel %vm1281, %v5935, -inf
    %5938 = vmax.xlane.f32.xlu0 %v5937
    %v5939 = vpop.xlane.xlu0 %5938
    %v5940 = vsel %vm1281, %v5936, -inf
    %5941 = vmax.xlane.f32.xlu0 %v5940
    %v5942 = vpop.xlane.xlu0 %5941
    %v5943 = vsub.f32 %v5935, %v5939
    %v5944 = vsub.f32 %v5936, %v5942
    %v5945 = vmul.f32 %v5943, 1.442695
    %v5946 = vpow.pop %v5945
    %v5947 = vmul.f32 %v5944, 1.442695
    %v5948 = vpow.pop %v5947
    %v5949 = vsel %vm1281, %v5946, 0.0
    %5950 = vadd.xlane.f32.xlu0 %v5949
    %v5951 = vpop.xlane.xlu0 %5950
    %v5952 = vsel %vm1281, %v5948, 0.0
    %5953 = vadd.xlane.f32.xlu0 %v5952
    %v5954 = vpop.xlane.xlu0 %5953
    %v5956 = vsel %vm1281, %v5946, 0
    %v5959 = vsel %vm1281, %v5948, 0
    %5961 = vmatprep.subr.mxu0 0.0
    %5962 = vmatpush1.msra.mxu0 0.0
    %5963 = vmatprep.subr.mxu0 0.0
    %5964 = vmatpush1.msra.mxu0 0.0
    %5965 = vmatprep.subr.mxu0 0.0
    %5966 = vmatpush1.msra.mxu0 0.0
    %5967 = vmatprep.subr.mxu0 0.0
    %5968 = vmatpush1.msra.mxu0 0.0
    %5969 = vmatprep.subr.mxu0 0.0
    %5970 = vmatpush1.msra.mxu0 0.0
    %5971 = vmatprep.subr.mxu0 0.0
    %5972 = vmatpush1.msra.mxu0 0.0
    %5973 = vmatprep.subr.mxu0 0.0
    %5974 = vmatpush1.msra.mxu0 0.0
    %5975 = vmatprep.subr.mxu0 0.0
    %5976 = vmatpush1.msra.mxu0 0.0
    %5977 = vmatprep.subr.mxu0 0.0
    %5978 = vmatpush1.msra.mxu0 0.0
    %5979 = vmatprep.subr.mxu0 0.0
    %5980 = vmatpush1.msra.mxu0 0.0
    %5981 = vmatprep.subr.mxu0 0.0
    %5982 = vmatpush1.msra.mxu0 0.0
    %5983 = vmatprep.subr.mxu0 0.0
    %5984 = vmatpush1.msra.mxu0 0.0
    %5985 = vmatprep.subr.mxu0 0.0
    %5986 = vmatpush1.msra.mxu0 0.0
    %5987 = vmatprep.subr.mxu0 0.0
    %5988 = vmatpush1.msra.mxu0 0.0
    %5989 = vmatprep.subr.mxu0 0.0
    %5990 = vmatpush1.msra.mxu0 %v5183
    %5991 = vmatprep.subr.mxu0 0.0
    %5992 = vmatpush1.msra.mxu0 %v5177
    %5993 = vmatprep.subr.mxu0 0.0
    %5994 = vmatpush2.msra.mxu0 0.0
    %5995 = vmatprep.subr.mxu0 0.0
    %5996 = vmatpush2.msra.mxu0 0.0
    %5997 = vmatprep.subr.mxu0 0.0
    %5998 = vmatpush2.msra.mxu0 0.0
    %5999 = vmatprep.subr.mxu0 0.0
    %6000 = vmatpush2.msra.mxu0 0.0
    %6001 = vmatprep.subr.mxu0 0.0
    %6002 = vmatpush2.msra.mxu0 0.0
    %6003 = vmatprep.subr.mxu0 0.0
    %6004 = vmatpush2.msra.mxu0 0.0
    %6005 = vmatprep.subr.mxu0 0.0
    %6006 = vmatpush2.msra.mxu0 0.0
    %6007 = vmatprep.subr.mxu0 0.0
    %6008 = vmatpush2.msra.mxu0 0.0
    %6009 = vmatprep.subr.mxu0 0.0
    %6010 = vmatpush2.msra.mxu0 0.0
    %6011 = vmatprep.subr.mxu0 0.0
    %6012 = vmatpush2.msra.mxu0 0.0
    %6013 = vmatprep.subr.mxu0 0.0
    %6014 = vmatpush2.msra.mxu0 0.0
    %6015 = vmatprep.subr.mxu0 0.0
    %6016 = vmatpush2.msra.mxu0 0.0
    %6017 = vmatprep.subr.mxu0 0.0
    %6018 = vmatpush2.msra.mxu0 0.0
    %6019 = vmatprep.subr.mxu0 0.0
    %6020 = vmatpush2.msra.mxu0 0.0
    %6021 = vmatprep.subr.mxu0 0.0
    %6022 = vmatpush2.msra.mxu0 0.0
    %6023 = vmatprep.subr.mxu0 0.0
    %6024 = vmatpush2.msra.mxu0 0.0
    %6025 = vmatprep.mubr.f32.mxu0 0.0
    %6026 = vmatmul.mubr.f32.gmra.mxu0 %v5956
    %v6027 = vpop.f32.mrf.mxu0
    %v6028 = vadd.f32 0.0, %v6027
    %v6029 = vpop.f32.mrf.mxu0
    %6030 = vmatprep.mubr.f32.mxu0 0.0
    %6031 = vmatmul.mubr.f32.gmra.mxu0 %v5959
    %v6032 = vpop.f32.mrf.mxu0
    %v6033 = vadd.f32 0.0, %v6032
    %v6034 = vpop.f32.mrf.mxu0
    %6035 = vdwg.mxu0
    %v6036 = vrcp.pop %v5951
    %v6037 = vrcp.pop %v5954
    %v6038 = vmul.f32 %v6028, %v6036
    %v6039 = vmul.f32 %v6033, %v6037
    %6040 = vset.pattern.permute.xlu0 2
    %6041 = vperm.xlu0 %6040, %v5622
    %v6042 = vpop.permute.xlu0 %6041
    %6044 = vset.pattern.permute.xlu0 2
    %6045 = vperm.xlu0 %6044, %v5627
    %v6046 = vpop.permute.xlu0 %6045
    %v6048 = vlaneseq
    %v6049 = vshrl.u32 %v6048, 7
    %v6050 = vsub.s32 2, %v6049
    %v6051 = vrot.slane %v5775, %v6050
    %v6052 = vadd.f32 %v6042, %v6051
    %v6053 = vadd.f32 %v6046, %v6051
    %v6054 = vstv %s5780
    %v6055 = vmul.f32 %v6054, %v465
    %v6056 = vmul.f32 %v6054, %v466
    %v6057 = vadd.f32 %v6052, %v6055
    %v6058 = vadd.f32 %v6053, %v6056
    %v6059 = vmul.f32 %v6057, 0.2
    %v6060 = vmul.f32 %v6058, 0.2
    %v6061 = vmax.f32 %v6057, %v6059
    %v6062 = vmax.f32 %v6058, %v6060
    %v6063 = vadd.f32 %v6061, %v469
    %v6064 = vadd.f32 %v6062, %v470
    %v6065 = vsel %vm1281, %v6063, -inf
    %6066 = vmax.xlane.f32.xlu0 %v6065
    %v6067 = vpop.xlane.xlu0 %6066
    %v6068 = vsel %vm1281, %v6064, -inf
    %6069 = vmax.xlane.f32.xlu0 %v6068
    %v6070 = vpop.xlane.xlu0 %6069
    %v6071 = vsub.f32 %v6063, %v6067
    %v6072 = vsub.f32 %v6064, %v6070
    %v6073 = vmul.f32 %v6071, 1.442695
    %v6074 = vpow.pop %v6073
    %v6075 = vmul.f32 %v6072, 1.442695
    %v6076 = vpow.pop %v6075
    %v6077 = vsel %vm1281, %v6074, 0.0
    %6078 = vadd.xlane.f32.xlu0 %v6077
    %v6079 = vpop.xlane.xlu0 %6078
    %v6080 = vsel %vm1281, %v6076, 0.0
    %6081 = vadd.xlane.f32.xlu0 %v6080
    %v6082 = vpop.xlane.xlu0 %6081
    %v6084 = vsel %vm1281, %v6074, 0
    %v6087 = vsel %vm1281, %v6076, 0
    %6089 = vmatprep.subr.mxu0 0.0
    %6090 = vmatpush1.msra.mxu0 0.0
    %6091 = vmatprep.subr.mxu0 0.0
    %6092 = vmatpush1.msra.mxu0 0.0
    %6093 = vmatprep.subr.mxu0 0.0
    %6094 = vmatpush1.msra.mxu0 0.0
    %6095 = vmatprep.subr.mxu0 0.0
    %6096 = vmatpush1.msra.mxu0 0.0
    %6097 = vmatprep.subr.mxu0 0.0
    %6098 = vmatpush1.msra.mxu0 0.0
    %6099 = vmatprep.subr.mxu0 0.0
    %6100 = vmatpush1.msra.mxu0 0.0
    %6101 = vmatprep.subr.mxu0 0.0
    %6102 = vmatpush1.msra.mxu0 0.0
    %6103 = vmatprep.subr.mxu0 0.0
    %6104 = vmatpush1.msra.mxu0 0.0
    %6105 = vmatprep.subr.mxu0 0.0
    %6106 = vmatpush1.msra.mxu0 0.0
    %6107 = vmatprep.subr.mxu0 0.0
    %6108 = vmatpush1.msra.mxu0 0.0
    %6109 = vmatprep.subr.mxu0 0.0
    %6110 = vmatpush1.msra.mxu0 0.0
    %6111 = vmatprep.subr.mxu0 0.0
    %6112 = vmatpush1.msra.mxu0 0.0
    %6113 = vmatprep.subr.mxu0 0.0
    %6114 = vmatpush1.msra.mxu0 0.0
    %6115 = vmatprep.subr.mxu0 0.0
    %6116 = vmatpush1.msra.mxu0 0.0
    %6117 = vmatprep.subr.mxu0 0.0
    %6118 = vmatpush1.msra.mxu0 %v5412
    %6119 = vmatprep.subr.mxu0 0.0
    %6120 = vmatpush1.msra.mxu0 %v5406
    %6121 = vmatprep.subr.mxu0 0.0
    %6122 = vmatpush2.msra.mxu0 0.0
    %6123 = vmatprep.subr.mxu0 0.0
    %6124 = vmatpush2.msra.mxu0 0.0
    %6125 = vmatprep.subr.mxu0 0.0
    %6126 = vmatpush2.msra.mxu0 0.0
    %6127 = vmatprep.subr.mxu0 0.0
    %6128 = vmatpush2.msra.mxu0 0.0
    %6129 = vmatprep.subr.mxu0 0.0
    %6130 = vmatpush2.msra.mxu0 0.0
    %6131 = vmatprep.subr.mxu0 0.0
    %6132 = vmatpush2.msra.mxu0 0.0
    %6133 = vmatprep.subr.mxu0 0.0
    %6134 = vmatpush2.msra.mxu0 0.0
    %6135 = vmatprep.subr.mxu0 0.0
    %6136 = vmatpush2.msra.mxu0 0.0
    %6137 = vmatprep.subr.mxu0 0.0
    %6138 = vmatpush2.msra.mxu0 0.0
    %6139 = vmatprep.subr.mxu0 0.0
    %6140 = vmatpush2.msra.mxu0 0.0
    %6141 = vmatprep.subr.mxu0 0.0
    %6142 = vmatpush2.msra.mxu0 0.0
    %6143 = vmatprep.subr.mxu0 0.0
    %6144 = vmatpush2.msra.mxu0 0.0
    %6145 = vmatprep.subr.mxu0 0.0
    %6146 = vmatpush2.msra.mxu0 0.0
    %6147 = vmatprep.subr.mxu0 0.0
    %6148 = vmatpush2.msra.mxu0 0.0
    %6149 = vmatprep.subr.mxu0 0.0
    %6150 = vmatpush2.msra.mxu0 0.0
    %6151 = vmatprep.subr.mxu0 0.0
    %6152 = vmatpush2.msra.mxu0 0.0
    %6153 = vmatprep.mubr.f32.mxu0 0.0
    %6154 = vmatmul.mubr.f32.gmra.mxu0 %v6084
    %v6155 = vpop.f32.mrf.mxu0
    %v6156 = vadd.f32 0.0, %v6155
    %v6157 = vpop.f32.mrf.mxu0
    %6158 = vmatprep.mubr.f32.mxu0 0.0
    %6159 = vmatmul.mubr.f32.gmra.mxu0 %v6087
    %v6160 = vpop.f32.mrf.mxu0
    %v6161 = vadd.f32 0.0, %v6160
    %v6162 = vpop.f32.mrf.mxu0
    %6163 = vdwg.mxu0
    %v6164 = vrcp.pop %v6079
    %v6165 = vrcp.pop %v6082
    %v6166 = vmul.f32 %v6156, %v6164
    %v6167 = vmul.f32 %v6161, %v6165
    %6168 = vset.pattern.permute.xlu0 3
    %6169 = vperm.xlu0 %6168, %v5622
    %v6170 = vpop.permute.xlu0 %6169
    %6172 = vset.pattern.permute.xlu0 3
    %6173 = vperm.xlu0 %6172, %v5627
    %v6174 = vpop.permute.xlu0 %6173
    %v6176 = vlaneseq
    %v6177 = vshrl.u32 %v6176, 7
    %v6178 = vsub.s32 3, %v6177
    %v6179 = vrot.slane %v5775, %v6178
    %v6180 = vadd.f32 %v6170, %v6179
    %v6181 = vadd.f32 %v6174, %v6179
    %v6182 = vstv %s5781
    %v6183 = vmul.f32 %v6182, %v465
    %v6184 = vmul.f32 %v6182, %v466
    %v6185 = vadd.f32 %v6180, %v6183
    %v6186 = vadd.f32 %v6181, %v6184
    %v6187 = vmul.f32 %v6185, 0.2
    %v6188 = vmul.f32 %v6186, 0.2
    %v6189 = vmax.f32 %v6185, %v6187
    %v6190 = vmax.f32 %v6186, %v6188
    %v6191 = vadd.f32 %v6189, %v469
    %v6192 = vadd.f32 %v6190, %v470
    %v6193 = vsel %vm1281, %v6191, -inf
    %6194 = vmax.xlane.f32.xlu0 %v6193
    %v6195 = vpop.xlane.xlu0 %6194
    %v6196 = vsel %vm1281, %v6192, -inf
    %6197 = vmax.xlane.f32.xlu0 %v6196
    %v6198 = vpop.xlane.xlu0 %6197
    %v6199 = vsub.f32 %v6191, %v6195
    %v6200 = vsub.f32 %v6192, %v6198
    %v6201 = vmul.f32 %v6199, 1.442695
    %v6202 = vpow.pop %v6201
    %v6203 = vmul.f32 %v6200, 1.442695
    %v6204 = vpow.pop %v6203
    %v6205 = vsel %vm1281, %v6202, 0.0
    %6206 = vadd.xlane.f32.xlu0 %v6205
    %v6207 = vpop.xlane.xlu0 %6206
    %v6208 = vsel %vm1281, %v6204, 0.0
    %6209 = vadd.xlane.f32.xlu0 %v6208
    %v6210 = vpop.xlane.xlu0 %6209
    %v6212 = vsel %vm1281, %v6202, 0
    %v6215 = vsel %vm1281, %v6204, 0
    %6217 = vmatprep.subr.mxu0 0.0
    %6218 = vmatpush1.msra.mxu0 0.0
    %6219 = vmatprep.subr.mxu0 0.0
    %6220 = vmatpush1.msra.mxu0 0.0
    %6221 = vmatprep.subr.mxu0 0.0
    %6222 = vmatpush1.msra.mxu0 0.0
    %6223 = vmatprep.subr.mxu0 0.0
    %6224 = vmatpush1.msra.mxu0 0.0
    %6225 = vmatprep.subr.mxu0 0.0
    %6226 = vmatpush1.msra.mxu0 0.0
    %6227 = vmatprep.subr.mxu0 0.0
    %6228 = vmatpush1.msra.mxu0 0.0
    %6229 = vmatprep.subr.mxu0 0.0
    %6230 = vmatpush1.msra.mxu0 0.0
    %6231 = vmatprep.subr.mxu0 0.0
    %6232 = vmatpush1.msra.mxu0 0.0
    %6233 = vmatprep.subr.mxu0 0.0
    %6234 = vmatpush1.msra.mxu0 0.0
    %6235 = vmatprep.subr.mxu0 0.0
    %6236 = vmatpush1.msra.mxu0 0.0
    %6237 = vmatprep.subr.mxu0 0.0
    %6238 = vmatpush1.msra.mxu0 0.0
    %6239 = vmatprep.subr.mxu0 0.0
    %6240 = vmatpush1.msra.mxu0 0.0
    %6241 = vmatprep.subr.mxu0 0.0
    %6242 = vmatpush1.msra.mxu0 0.0
    %6243 = vmatprep.subr.mxu0 0.0
    %6244 = vmatpush1.msra.mxu0 0.0
    %6245 = vmatprep.subr.mxu0 0.0
    %6246 = vmatpush1.msra.mxu0 %v5414
    %6247 = vmatprep.subr.mxu0 0.0
    %6248 = vmatpush1.msra.mxu0 %v5408
    %6249 = vmatprep.subr.mxu0 0.0
    %6250 = vmatpush2.msra.mxu0 0.0
    %6251 = vmatprep.subr.mxu0 0.0
    %6252 = vmatpush2.msra.mxu0 0.0
    %6253 = vmatprep.subr.mxu0 0.0
    %6254 = vmatpush2.msra.mxu0 0.0
    %6255 = vmatprep.subr.mxu0 0.0
    %6256 = vmatpush2.msra.mxu0 0.0
    %6257 = vmatprep.subr.mxu0 0.0
    %6258 = vmatpush2.msra.mxu0 0.0
    %6259 = vmatprep.subr.mxu0 0.0
    %6260 = vmatpush2.msra.mxu0 0.0
    %6261 = vmatprep.subr.mxu0 0.0
    %6262 = vmatpush2.msra.mxu0 0.0
    %6263 = vmatprep.subr.mxu0 0.0
    %6264 = vmatpush2.msra.mxu0 0.0
    %6265 = vmatprep.subr.mxu0 0.0
    %6266 = vmatpush2.msra.mxu0 0.0
    %6267 = vmatprep.subr.mxu0 0.0
    %6268 = vmatpush2.msra.mxu0 0.0
    %6269 = vmatprep.subr.mxu0 0.0
    %6270 = vmatpush2.msra.mxu0 0.0
    %6271 = vmatprep.subr.mxu0 0.0
    %6272 = vmatpush2.msra.mxu0 0.0
    %6273 = vmatprep.subr.mxu0 0.0
    %6274 = vmatpush2.msra.mxu0 0.0
    %6275 = vmatprep.subr.mxu0 0.0
    %6276 = vmatpush2.msra.mxu0 0.0
    %6277 = vmatprep.subr.mxu0 0.0
    %6278 = vmatpush2.msra.mxu0 0.0
    %6279 = vmatprep.subr.mxu0 0.0
    %6280 = vmatpush2.msra.mxu0 0.0
    %6281 = vmatprep.mubr.f32.mxu0 0.0
    %6282 = vmatmul.mubr.f32.gmra.mxu0 %v6212
    %v6283 = vpop.f32.mrf.mxu0
    %v6284 = vadd.f32 0.0, %v6283
    %v6285 = vpop.f32.mrf.mxu0
    %6286 = vmatprep.mubr.f32.mxu0 0.0
    %6287 = vmatmul.mubr.f32.gmra.mxu0 %v6215
    %v6288 = vpop.f32.mrf.mxu0
    %v6289 = vadd.f32 0.0, %v6288
    %v6290 = vpop.f32.mrf.mxu0
    %6291 = vdwg.mxu0
    %v6292 = vrcp.pop %v6207
    %v6293 = vrcp.pop %v6210
    %v6294 = vmul.f32 %v6284, %v6292
    %v6295 = vmul.f32 %v6289, %v6293
    %v6296 = vld [vmem:[#allocation24] sm:$0xf]
    %v6298 = vlaneseq
    %v6299 = vshrl.u32 %v6298, 7
    %v6300 = vsub.s32 0, %v6299
    %v6301 = vrot.slane %v6296, %v6300
    %v6302 = vlaneseq
    %v6303 = vshrl.u32 %v6302, 7
    %v6304 = vsub.s32 1, %v6303
    %v6305 = vrot.slane %v6296, %v6304
    %v6306 = vlaneseq
    %v6307 = vshrl.u32 %v6306, 7
    %v6308 = vsub.s32 2, %v6307
    %v6309 = vrot.slane %v6296, %v6308
    %v6310 = vlaneseq
    %v6311 = vshrl.u32 %v6310, 7
    %v6312 = vsub.s32 3, %v6311
    %v6313 = vrot.slane %v6296, %v6312
    %v6318 = vadd.f32 %v5910, %v6301
    %v6319 = vadd.f32 %v6038, %v6305
    %v6320 = vadd.f32 %v6166, %v6309
    %v6321 = vadd.f32 %v6294, %v6313
    %v6322 = vadd.f32 %v5911, %v6301
    %v6323 = vadd.f32 %v6039, %v6305
    %v6324 = vadd.f32 %v6167, %v6309
    %v6325 = vadd.f32 %v6295, %v6313
    %v6326 = vadd.f32 %v6318, %v6322
    %v6327 = vrot.slane %v6326, 4
    %v6328 = vadd.f32 %v6326, %v6327
    %v6329 = vrot.slane %v6328, 2
    %v6330 = vadd.f32 %v6328, %v6329
    %v6331 = vrot.slane %v6330, 1
    %v6332 = vadd.f32 %v6330, %v6331
    %v6333 = vadd.f32 %v6319, %v6323
    %v6334 = vrot.slane %v6333, 4
    %v6335 = vadd.f32 %v6333, %v6334
    %v6336 = vrot.slane %v6335, 2
    %v6337 = vadd.f32 %v6335, %v6336
    %v6338 = vrot.slane %v6337, 1
    %v6339 = vadd.f32 %v6337, %v6338
    %v6340 = vadd.f32 %v6320, %v6324
    %v6341 = vrot.slane %v6340, 4
    %v6342 = vadd.f32 %v6340, %v6341
    %v6343 = vrot.slane %v6342, 2
    %v6344 = vadd.f32 %v6342, %v6343
    %v6345 = vrot.slane %v6344, 1
    %v6346 = vadd.f32 %v6344, %v6345
    %v6347 = vadd.f32 %v6321, %v6325
    %v6348 = vrot.slane %v6347, 4
    %v6349 = vadd.f32 %v6347, %v6348
    %v6350 = vrot.slane %v6349, 2
    %v6351 = vadd.f32 %v6349, %v6350
    %v6352 = vrot.slane %v6351, 1
    %v6353 = vadd.f32 %v6351, %v6352
    %v6354 = vmul.f32 %v6332, %v1969
    %v6355 = vmul.f32 %v6339, %v1969
    %v6356 = vmul.f32 %v6346, %v1969
    %v6357 = vmul.f32 %v6353, %v1969
    %v6358 = vsub.f32 %v6318, %v6354
    %v6359 = vsub.f32 %v6319, %v6355
    %v6360 = vsub.f32 %v6320, %v6356
    %v6361 = vsub.f32 %v6321, %v6357
    %v6362 = vsub.f32 %v6322, %v6354
    %v6363 = vsub.f32 %v6323, %v6355
    %v6364 = vsub.f32 %v6324, %v6356
    %v6365 = vsub.f32 %v6325, %v6357
    %v6366 = vmul.f32 %v6358, %v6358
    %v6367 = vmul.f32 %v6359, %v6359
    %v6368 = vmul.f32 %v6360, %v6360
    %v6369 = vmul.f32 %v6361, %v6361
    %v6370 = vmul.f32 %v6362, %v6362
    %v6371 = vmul.f32 %v6363, %v6363
    %v6372 = vmul.f32 %v6364, %v6364
    %v6373 = vmul.f32 %v6365, %v6365
    %v6374 = vadd.f32 %v6366, %v6370
    %v6375 = vrot.slane %v6374, 4
    %v6376 = vadd.f32 %v6374, %v6375
    %v6377 = vrot.slane %v6376, 2
    %v6378 = vadd.f32 %v6376, %v6377
    %v6379 = vrot.slane %v6378, 1
    %v6380 = vadd.f32 %v6378, %v6379
    %v6381 = vadd.f32 %v6367, %v6371
    %v6382 = vrot.slane %v6381, 4
    %v6383 = vadd.f32 %v6381, %v6382
    %v6384 = vrot.slane %v6383, 2
    %v6385 = vadd.f32 %v6383, %v6384
    %v6386 = vrot.slane %v6385, 1
    %v6387 = vadd.f32 %v6385, %v6386
    %v6388 = vadd.f32 %v6368, %v6372
    %v6389 = vrot.slane %v6388, 4
    %v6390 = vadd.f32 %v6388, %v6389
    %v6391 = vrot.slane %v6390, 2
    %v6392 = vadd.f32 %v6390, %v6391
    %v6393 = vrot.slane %v6392, 1
    %v6394 = vadd.f32 %v6392, %v6393
    %v6395 = vadd.f32 %v6369, %v6373
    %v6396 = vrot.slane %v6395, 4
    %v6397 = vadd.f32 %v6395, %v6396
    %v6398 = vrot.slane %v6397, 2
    %v6399 = vadd.f32 %v6397, %v6398
    %v6400 = vrot.slane %v6399, 1
    %v6401 = vadd.f32 %v6399, %v6400
    %v6402 = vmul.f32 %v6380, %v1969
    %v6403 = vmul.f32 %v6387, %v1969
    %v6404 = vmul.f32 %v6394, %v1969
    %v6405 = vmul.f32 %v6401, %v1969
    %v6406 = vadd.f32 %v6402, 1e-05
    %v6407 = vadd.f32 %v6403, 1e-05
    %v6408 = vadd.f32 %v6404, 1e-05
    %v6409 = vadd.f32 %v6405, 1e-05
    %v6410 = vrsqrt.pop %v6406
    %v6411 = vrsqrt.pop %v6407
    %v6412 = vrsqrt.pop %v6408
    %v6413 = vrsqrt.pop %v6409
    %v6414 = vmul.f32 %v6358, %v6410
    %v6415 = vmul.f32 %v6359, %v6411
    %v6416 = vmul.f32 %v6360, %v6412
    %v6417 = vmul.f32 %v6361, %v6413
    %v6418 = vmul.f32 %v6362, %v6410
    %v6419 = vmul.f32 %v6363, %v6411
    %v6420 = vmul.f32 %v6364, %v6412
    %v6421 = vmul.f32 %v6365, %v6413
    %v6422 = vld [vmem:[#allocation43] sm:$0xf]
    %v6424 = vlaneseq
    %v6425 = vshrl.u32 %v6424, 7
    %v6426 = vsub.s32 0, %v6425
    %v6427 = vrot.slane %v6422, %v6426
    %v6428 = vlaneseq
    %v6429 = vshrl.u32 %v6428, 7
    %v6430 = vsub.s32 1, %v6429
    %v6431 = vrot.slane %v6422, %v6430
    %v6432 = vlaneseq
    %v6433 = vshrl.u32 %v6432, 7
    %v6434 = vsub.s32 2, %v6433
    %v6435 = vrot.slane %v6422, %v6434
    %v6436 = vlaneseq
    %v6437 = vshrl.u32 %v6436, 7
    %v6438 = vsub.s32 3, %v6437
    %v6439 = vrot.slane %v6422, %v6438
    %v6444 = vmul.f32 %v6414, %v6427
    %v6445 = vmul.f32 %v6415, %v6431
    %v6446 = vmul.f32 %v6416, %v6435
    %v6447 = vmul.f32 %v6417, %v6439
    %v6448 = vmul.f32 %v6418, %v6427
    %v6449 = vmul.f32 %v6419, %v6431
    %v6450 = vmul.f32 %v6420, %v6435
    %v6451 = vmul.f32 %v6421, %v6439
    %v6452 = vld [vmem:[#allocation45] sm:$0xf]
    %v6454 = vlaneseq
    %v6455 = vshrl.u32 %v6454, 7
    %v6456 = vsub.s32 0, %v6455
    %v6457 = vrot.slane %v6452, %v6456
    %v6458 = vlaneseq
    %v6459 = vshrl.u32 %v6458, 7
    %v6460 = vsub.s32 1, %v6459
    %v6461 = vrot.slane %v6452, %v6460
    %v6462 = vlaneseq
    %v6463 = vshrl.u32 %v6462, 7
    %v6464 = vsub.s32 2, %v6463
    %v6465 = vrot.slane %v6452, %v6464
    %v6466 = vlaneseq
    %v6467 = vshrl.u32 %v6466, 7
    %v6468 = vsub.s32 3, %v6467
    %v6469 = vrot.slane %v6452, %v6468
    %v6474 = vadd.f32 %v6444, %v6457
    %v6475 = vadd.f32 %v6445, %v6461
    %v6476 = vadd.f32 %v6446, %v6465
    %v6477 = vadd.f32 %v6447, %v6469
    %v6478 = vadd.f32 %v6448, %v6457
    %v6479 = vadd.f32 %v6449, %v6461
    %v6480 = vadd.f32 %v6450, %v6465
    %v6481 = vadd.f32 %v6451, %v6469
    %v6482 = vmax.f32 %v6474, 0.0
    %v6483 = vmax.f32 %v6475, 0.0
    %v6484 = vmax.f32 %v6476, 0.0
    %v6485 = vmax.f32 %v6477, 0.0
    %v6486 = vmax.f32 %v6478, 0.0
    %v6487 = vmax.f32 %v6479, 0.0
    %v6488 = vmax.f32 %v6480, 0.0
    %v6489 = vmax.f32 %v6481, 0.0
    %v6490 = vld [vmem:[#allocation26] sm:$0xff]
    %v6491 = vld [vmem:[#allocation26 + $0x8] sm:$0xff]
    %v6492 = vld [vmem:[#allocation26 + $0x10] sm:$0xff]
    %v6493 = vld [vmem:[#allocation26 + $0x18] sm:$0xff]
    %v6494 = vld [vmem:[#allocation26 + $0x20] sm:$0xff]
    %v6495 = vld [vmem:[#allocation26 + $0x28] sm:$0xff]
    %v6496 = vld [vmem:[#allocation26 + $0x30] sm:$0xff]
    %v6497 = vld [vmem:[#allocation26 + $0x38] sm:$0xff]
    %v6498 = vld [vmem:[#allocation26 + $0x40] sm:$0xff]
    %v6499 = vld [vmem:[#allocation26 + $0x48] sm:$0xff]
    %v6500 = vld [vmem:[#allocation26 + $0x50] sm:$0xff]
    %v6501 = vld [vmem:[#allocation26 + $0x58] sm:$0xff]
    %v6502 = vld [vmem:[#allocation26 + $0x60] sm:$0xff]
    %v6503 = vld [vmem:[#allocation26 + $0x68] sm:$0xff]
    %v6504 = vld [vmem:[#allocation26 + $0x70] sm:$0xff]
    %v6505 = vld [vmem:[#allocation26 + $0x78] sm:$0xff]
    %v6506 = vld [vmem:[#allocation26 + $0x80] sm:$0xff]
    %v6507 = vld [vmem:[#allocation26 + $0x88] sm:$0xff]
    %v6508 = vld [vmem:[#allocation26 + $0x90] sm:$0xff]
    %v6509 = vld [vmem:[#allocation26 + $0x98] sm:$0xff]
    %v6510 = vld [vmem:[#allocation26 + $0xa0] sm:$0xff]
    %v6511 = vld [vmem:[#allocation26 + $0xa8] sm:$0xff]
    %v6512 = vld [vmem:[#allocation26 + $0xb0] sm:$0xff]
    %v6513 = vld [vmem:[#allocation26 + $0xb8] sm:$0xff]
    %v6514 = vld [vmem:[#allocation26 + $0xc0] sm:$0xff]
    %v6515 = vld [vmem:[#allocation26 + $0xc8] sm:$0xff]
    %v6516 = vld [vmem:[#allocation26 + $0xd0] sm:$0xff]
    %v6517 = vld [vmem:[#allocation26 + $0xd8] sm:$0xff]
    %v6518 = vld [vmem:[#allocation26 + $0xe0] sm:$0xff]
    %v6519 = vld [vmem:[#allocation26 + $0xe8] sm:$0xff]
    %v6520 = vld [vmem:[#allocation26 + $0xf0] sm:$0xff]
    %v6521 = vld [vmem:[#allocation26 + $0xf8] sm:$0xff]
    %v6522 = vld [vmem:[#allocation26 + $0x100] sm:$0xff]
    %v6523 = vld [vmem:[#allocation26 + $0x108] sm:$0xff]
    %v6524 = vld [vmem:[#allocation26 + $0x110] sm:$0xff]
    %v6525 = vld [vmem:[#allocation26 + $0x118] sm:$0xff]
    %v6526 = vld [vmem:[#allocation26 + $0x120] sm:$0xff]
    %v6527 = vld [vmem:[#allocation26 + $0x128] sm:$0xff]
    %v6528 = vld [vmem:[#allocation26 + $0x130] sm:$0xff]
    %v6529 = vld [vmem:[#allocation26 + $0x138] sm:$0xff]
    %v6530 = vld [vmem:[#allocation26 + $0x140] sm:$0xff]
    %v6531 = vld [vmem:[#allocation26 + $0x148] sm:$0xff]
    %v6532 = vld [vmem:[#allocation26 + $0x150] sm:$0xff]
    %v6533 = vld [vmem:[#allocation26 + $0x158] sm:$0xff]
    %v6534 = vld [vmem:[#allocation26 + $0x160] sm:$0xff]
    %v6535 = vld [vmem:[#allocation26 + $0x168] sm:$0xff]
    %v6536 = vld [vmem:[#allocation26 + $0x170] sm:$0xff]
    %v6537 = vld [vmem:[#allocation26 + $0x178] sm:$0xff]
    %v6538 = vld [vmem:[#allocation26 + $0x180] sm:$0xff]
    %v6539 = vld [vmem:[#allocation26 + $0x188] sm:$0xff]
    %v6540 = vld [vmem:[#allocation26 + $0x190] sm:$0xff]
    %v6541 = vld [vmem:[#allocation26 + $0x198] sm:$0xff]
    %v6542 = vld [vmem:[#allocation26 + $0x1a0] sm:$0xff]
    %v6543 = vld [vmem:[#allocation26 + $0x1a8] sm:$0xff]
    %v6544 = vld [vmem:[#allocation26 + $0x1b0] sm:$0xff]
    %v6545 = vld [vmem:[#allocation26 + $0x1b8] sm:$0xff]
    %v6546 = vld [vmem:[#allocation26 + $0x1c0] sm:$0xff]
    %v6547 = vld [vmem:[#allocation26 + $0x1c8] sm:$0xff]
    %v6548 = vld [vmem:[#allocation26 + $0x1d0] sm:$0xff]
    %v6549 = vld [vmem:[#allocation26 + $0x1d8] sm:$0xff]
    %v6550 = vld [vmem:[#allocation26 + $0x1e0] sm:$0xff]
    %v6551 = vld [vmem:[#allocation26 + $0x1e8] sm:$0xff]
    %v6552 = vld [vmem:[#allocation26 + $0x1f0] sm:$0xff]
    %v6553 = vld [vmem:[#allocation26 + $0x1f8] sm:$0xff]
    %v6554 = vld [vmem:[#allocation26 + $0x200] sm:$0xff]
    %v6555 = vld [vmem:[#allocation26 + $0x208] sm:$0xff]
    %v6556 = vld [vmem:[#allocation26 + $0x210] sm:$0xff]
    %v6557 = vld [vmem:[#allocation26 + $0x218] sm:$0xff]
    %v6558 = vld [vmem:[#allocation26 + $0x220] sm:$0xff]
    %v6559 = vld [vmem:[#allocation26 + $0x228] sm:$0xff]
    %v6560 = vld [vmem:[#allocation26 + $0x230] sm:$0xff]
    %v6561 = vld [vmem:[#allocation26 + $0x238] sm:$0xff]
    %v6562 = vld [vmem:[#allocation26 + $0x240] sm:$0xff]
    %v6563 = vld [vmem:[#allocation26 + $0x248] sm:$0xff]
    %v6564 = vld [vmem:[#allocation26 + $0x250] sm:$0xff]
    %v6565 = vld [vmem:[#allocation26 + $0x258] sm:$0xff]
    %v6566 = vld [vmem:[#allocation26 + $0x260] sm:$0xff]
    %v6567 = vld [vmem:[#allocation26 + $0x268] sm:$0xff]
    %v6568 = vld [vmem:[#allocation26 + $0x270] sm:$0xff]
    %v6569 = vld [vmem:[#allocation26 + $0x278] sm:$0xff]
    %v6570 = vld [vmem:[#allocation26 + $0x280] sm:$0xff]
    %v6571 = vld [vmem:[#allocation26 + $0x288] sm:$0xff]
    %v6572 = vld [vmem:[#allocation26 + $0x290] sm:$0xff]
    %v6573 = vld [vmem:[#allocation26 + $0x298] sm:$0xff]
    %v6574 = vld [vmem:[#allocation26 + $0x2a0] sm:$0xff]
    %v6575 = vld [vmem:[#allocation26 + $0x2a8] sm:$0xff]
    %v6576 = vld [vmem:[#allocation26 + $0x2b0] sm:$0xff]
    %v6577 = vld [vmem:[#allocation26 + $0x2b8] sm:$0xff]
    %v6578 = vld [vmem:[#allocation26 + $0x2c0] sm:$0xff]
    %v6579 = vld [vmem:[#allocation26 + $0x2c8] sm:$0xff]
    %v6580 = vld [vmem:[#allocation26 + $0x2d0] sm:$0xff]
    %v6581 = vld [vmem:[#allocation26 + $0x2d8] sm:$0xff]
    %v6582 = vld [vmem:[#allocation26 + $0x2e0] sm:$0xff]
    %v6583 = vld [vmem:[#allocation26 + $0x2e8] sm:$0xff]
    %v6584 = vld [vmem:[#allocation26 + $0x2f0] sm:$0xff]
    %v6585 = vld [vmem:[#allocation26 + $0x2f8] sm:$0xff]
    %v6586 = vld [vmem:[#allocation26 + $0x300] sm:$0xff]
    %v6587 = vld [vmem:[#allocation26 + $0x308] sm:$0xff]
    %v6588 = vld [vmem:[#allocation26 + $0x310] sm:$0xff]
    %v6589 = vld [vmem:[#allocation26 + $0x318] sm:$0xff]
    %v6590 = vld [vmem:[#allocation26 + $0x320] sm:$0xff]
    %v6591 = vld [vmem:[#allocation26 + $0x328] sm:$0xff]
    %v6592 = vld [vmem:[#allocation26 + $0x330] sm:$0xff]
    %v6593 = vld [vmem:[#allocation26 + $0x338] sm:$0xff]
    %v6594 = vld [vmem:[#allocation26 + $0x340] sm:$0xff]
    %v6595 = vld [vmem:[#allocation26 + $0x348] sm:$0xff]
    %v6596 = vld [vmem:[#allocation26 + $0x350] sm:$0xff]
    %v6597 = vld [vmem:[#allocation26 + $0x358] sm:$0xff]
    %v6598 = vld [vmem:[#allocation26 + $0x360] sm:$0xff]
    %v6599 = vld [vmem:[#allocation26 + $0x368] sm:$0xff]
    %v6600 = vld [vmem:[#allocation26 + $0x370] sm:$0xff]
    %v6601 = vld [vmem:[#allocation26 + $0x378] sm:$0xff]
    %v6602 = vld [vmem:[#allocation26 + $0x380] sm:$0xff]
    %v6603 = vld [vmem:[#allocation26 + $0x388] sm:$0xff]
    %v6604 = vld [vmem:[#allocation26 + $0x390] sm:$0xff]
    %v6605 = vld [vmem:[#allocation26 + $0x398] sm:$0xff]
    %v6606 = vld [vmem:[#allocation26 + $0x3a0] sm:$0xff]
    %v6607 = vld [vmem:[#allocation26 + $0x3a8] sm:$0xff]
    %v6608 = vld [vmem:[#allocation26 + $0x3b0] sm:$0xff]
    %v6609 = vld [vmem:[#allocation26 + $0x3b8] sm:$0xff]
    %v6610 = vld [vmem:[#allocation26 + $0x3c0] sm:$0xff]
    %v6611 = vld [vmem:[#allocation26 + $0x3c8] sm:$0xff]
    %v6612 = vld [vmem:[#allocation26 + $0x3d0] sm:$0xff]
    %v6613 = vld [vmem:[#allocation26 + $0x3d8] sm:$0xff]
    %v6614 = vld [vmem:[#allocation26 + $0x3e0] sm:$0xff]
    %v6615 = vld [vmem:[#allocation26 + $0x3e8] sm:$0xff]
    %v6616 = vld [vmem:[#allocation26 + $0x3f0] sm:$0xff]
    %v6617 = vld [vmem:[#allocation26 + $0x3f8] sm:$0xff]
    %v6618 = vld [vmem:[#allocation26 + $0x400] sm:$0xff]
    %v6619 = vld [vmem:[#allocation26 + $0x408] sm:$0xff]
    %v6620 = vld [vmem:[#allocation26 + $0x410] sm:$0xff]
    %v6621 = vld [vmem:[#allocation26 + $0x418] sm:$0xff]
    %v6622 = vld [vmem:[#allocation26 + $0x420] sm:$0xff]
    %v6623 = vld [vmem:[#allocation26 + $0x428] sm:$0xff]
    %v6624 = vld [vmem:[#allocation26 + $0x430] sm:$0xff]
    %v6625 = vld [vmem:[#allocation26 + $0x438] sm:$0xff]
    %v6626 = vld [vmem:[#allocation26 + $0x440] sm:$0xff]
    %v6627 = vld [vmem:[#allocation26 + $0x448] sm:$0xff]
    %v6628 = vld [vmem:[#allocation26 + $0x450] sm:$0xff]
    %v6629 = vld [vmem:[#allocation26 + $0x458] sm:$0xff]
    %v6630 = vld [vmem:[#allocation26 + $0x460] sm:$0xff]
    %v6631 = vld [vmem:[#allocation26 + $0x468] sm:$0xff]
    %v6632 = vld [vmem:[#allocation26 + $0x470] sm:$0xff]
    %v6633 = vld [vmem:[#allocation26 + $0x478] sm:$0xff]
    %v6634 = vld [vmem:[#allocation26 + $0x480] sm:$0xff]
    %v6635 = vld [vmem:[#allocation26 + $0x488] sm:$0xff]
    %v6636 = vld [vmem:[#allocation26 + $0x490] sm:$0xff]
    %v6637 = vld [vmem:[#allocation26 + $0x498] sm:$0xff]
    %v6638 = vld [vmem:[#allocation26 + $0x4a0] sm:$0xff]
    %v6639 = vld [vmem:[#allocation26 + $0x4a8] sm:$0xff]
    %v6640 = vld [vmem:[#allocation26 + $0x4b0] sm:$0xff]
    %v6641 = vld [vmem:[#allocation26 + $0x4b8] sm:$0xff]
    %v6642 = vld [vmem:[#allocation26 + $0x4c0] sm:$0xff]
    %v6643 = vld [vmem:[#allocation26 + $0x4c8] sm:$0xff]
    %v6644 = vld [vmem:[#allocation26 + $0x4d0] sm:$0xff]
    %v6645 = vld [vmem:[#allocation26 + $0x4d8] sm:$0xff]
    %v6646 = vld [vmem:[#allocation26 + $0x4e0] sm:$0xff]
    %v6647 = vld [vmem:[#allocation26 + $0x4e8] sm:$0xff]
    %v6648 = vld [vmem:[#allocation26 + $0x4f0] sm:$0xff]
    %v6649 = vld [vmem:[#allocation26 + $0x4f8] sm:$0xff]
    %v6650 = vld [vmem:[#allocation26 + $0x500] sm:$0xff]
    %v6651 = vld [vmem:[#allocation26 + $0x508] sm:$0xff]
    %v6652 = vld [vmem:[#allocation26 + $0x510] sm:$0xff]
    %v6653 = vld [vmem:[#allocation26 + $0x518] sm:$0xff]
    %v6654 = vld [vmem:[#allocation26 + $0x520] sm:$0xff]
    %v6655 = vld [vmem:[#allocation26 + $0x528] sm:$0xff]
    %v6656 = vld [vmem:[#allocation26 + $0x530] sm:$0xff]
    %v6657 = vld [vmem:[#allocation26 + $0x538] sm:$0xff]
    %v6658 = vld [vmem:[#allocation26 + $0x540] sm:$0xff]
    %v6659 = vld [vmem:[#allocation26 + $0x548] sm:$0xff]
    %v6660 = vld [vmem:[#allocation26 + $0x550] sm:$0xff]
    %v6661 = vld [vmem:[#allocation26 + $0x558] sm:$0xff]
    %v6662 = vld [vmem:[#allocation26 + $0x560] sm:$0xff]
    %v6663 = vld [vmem:[#allocation26 + $0x568] sm:$0xff]
    %v6664 = vld [vmem:[#allocation26 + $0x570] sm:$0xff]
    %v6665 = vld [vmem:[#allocation26 + $0x578] sm:$0xff]
    %v6666 = vld [vmem:[#allocation26 + $0x580] sm:$0xff]
    %v6667 = vld [vmem:[#allocation26 + $0x588] sm:$0xff]
    %v6668 = vld [vmem:[#allocation26 + $0x590] sm:$0xff]
    %v6669 = vld [vmem:[#allocation26 + $0x598] sm:$0xff]
    %v6670 = vld [vmem:[#allocation26 + $0x5a0] sm:$0xff]
    %v6671 = vld [vmem:[#allocation26 + $0x5a8] sm:$0xff]
    %v6672 = vld [vmem:[#allocation26 + $0x5b0] sm:$0xff]
    %v6673 = vld [vmem:[#allocation26 + $0x5b8] sm:$0xff]
    %v6674 = vld [vmem:[#allocation26 + $0x5c0] sm:$0xff]
    %v6675 = vld [vmem:[#allocation26 + $0x5c8] sm:$0xff]
    %v6676 = vld [vmem:[#allocation26 + $0x5d0] sm:$0xff]
    %v6677 = vld [vmem:[#allocation26 + $0x5d8] sm:$0xff]
    %v6678 = vld [vmem:[#allocation26 + $0x5e0] sm:$0xff]
    %v6679 = vld [vmem:[#allocation26 + $0x5e8] sm:$0xff]
    %v6680 = vld [vmem:[#allocation26 + $0x5f0] sm:$0xff]
    %v6681 = vld [vmem:[#allocation26 + $0x5f8] sm:$0xff]
    %v6682 = vld [vmem:[#allocation26 + $0x600] sm:$0xff]
    %v6683 = vld [vmem:[#allocation26 + $0x608] sm:$0xff]
    %v6684 = vld [vmem:[#allocation26 + $0x610] sm:$0xff]
    %v6685 = vld [vmem:[#allocation26 + $0x618] sm:$0xff]
    %v6686 = vld [vmem:[#allocation26 + $0x620] sm:$0xff]
    %v6687 = vld [vmem:[#allocation26 + $0x628] sm:$0xff]
    %v6688 = vld [vmem:[#allocation26 + $0x630] sm:$0xff]
    %v6689 = vld [vmem:[#allocation26 + $0x638] sm:$0xff]
    %v6690 = vld [vmem:[#allocation26 + $0x640] sm:$0xff]
    %v6691 = vld [vmem:[#allocation26 + $0x648] sm:$0xff]
    %v6692 = vld [vmem:[#allocation26 + $0x650] sm:$0xff]
    %v6693 = vld [vmem:[#allocation26 + $0x658] sm:$0xff]
    %v6694 = vld [vmem:[#allocation26 + $0x660] sm:$0xff]
    %v6695 = vld [vmem:[#allocation26 + $0x668] sm:$0xff]
    %v6696 = vld [vmem:[#allocation26 + $0x670] sm:$0xff]
    %v6697 = vld [vmem:[#allocation26 + $0x678] sm:$0xff]
    %v6698 = vld [vmem:[#allocation26 + $0x680] sm:$0xff]
    %v6699 = vld [vmem:[#allocation26 + $0x688] sm:$0xff]
    %v6700 = vld [vmem:[#allocation26 + $0x690] sm:$0xff]
    %v6701 = vld [vmem:[#allocation26 + $0x698] sm:$0xff]
    %v6702 = vld [vmem:[#allocation26 + $0x6a0] sm:$0xff]
    %v6703 = vld [vmem:[#allocation26 + $0x6a8] sm:$0xff]
    %v6704 = vld [vmem:[#allocation26 + $0x6b0] sm:$0xff]
    %v6705 = vld [vmem:[#allocation26 + $0x6b8] sm:$0xff]
    %v6706 = vld [vmem:[#allocation26 + $0x6c0] sm:$0xff]
    %v6707 = vld [vmem:[#allocation26 + $0x6c8] sm:$0xff]
    %v6708 = vld [vmem:[#allocation26 + $0x6d0] sm:$0xff]
    %v6709 = vld [vmem:[#allocation26 + $0x6d8] sm:$0xff]
    %v6710 = vld [vmem:[#allocation26 + $0x6e0] sm:$0xff]
    %v6711 = vld [vmem:[#allocation26 + $0x6e8] sm:$0xff]
    %v6712 = vld [vmem:[#allocation26 + $0x6f0] sm:$0xff]
    %v6713 = vld [vmem:[#allocation26 + $0x6f8] sm:$0xff]
    %v6714 = vld [vmem:[#allocation26 + $0x700] sm:$0xff]
    %v6715 = vld [vmem:[#allocation26 + $0x708] sm:$0xff]
    %v6716 = vld [vmem:[#allocation26 + $0x710] sm:$0xff]
    %v6717 = vld [vmem:[#allocation26 + $0x718] sm:$0xff]
    %v6718 = vld [vmem:[#allocation26 + $0x720] sm:$0xff]
    %v6719 = vld [vmem:[#allocation26 + $0x728] sm:$0xff]
    %v6720 = vld [vmem:[#allocation26 + $0x730] sm:$0xff]
    %v6721 = vld [vmem:[#allocation26 + $0x738] sm:$0xff]
    %v6722 = vld [vmem:[#allocation26 + $0x740] sm:$0xff]
    %v6723 = vld [vmem:[#allocation26 + $0x748] sm:$0xff]
    %v6724 = vld [vmem:[#allocation26 + $0x750] sm:$0xff]
    %v6725 = vld [vmem:[#allocation26 + $0x758] sm:$0xff]
    %v6726 = vld [vmem:[#allocation26 + $0x760] sm:$0xff]
    %v6727 = vld [vmem:[#allocation26 + $0x768] sm:$0xff]
    %v6728 = vld [vmem:[#allocation26 + $0x770] sm:$0xff]
    %v6729 = vld [vmem:[#allocation26 + $0x778] sm:$0xff]
    %v6730 = vld [vmem:[#allocation26 + $0x780] sm:$0xff]
    %v6731 = vld [vmem:[#allocation26 + $0x788] sm:$0xff]
    %v6732 = vld [vmem:[#allocation26 + $0x790] sm:$0xff]
    %v6733 = vld [vmem:[#allocation26 + $0x798] sm:$0xff]
    %v6734 = vld [vmem:[#allocation26 + $0x7a0] sm:$0xff]
    %v6735 = vld [vmem:[#allocation26 + $0x7a8] sm:$0xff]
    %v6736 = vld [vmem:[#allocation26 + $0x7b0] sm:$0xff]
    %v6737 = vld [vmem:[#allocation26 + $0x7b8] sm:$0xff]
    %v6738 = vld [vmem:[#allocation26 + $0x7c0] sm:$0xff]
    %v6739 = vld [vmem:[#allocation26 + $0x7c8] sm:$0xff]
    %v6740 = vld [vmem:[#allocation26 + $0x7d0] sm:$0xff]
    %v6741 = vld [vmem:[#allocation26 + $0x7d8] sm:$0xff]
    %v6742 = vld [vmem:[#allocation26 + $0x7e0] sm:$0xff]
    %v6743 = vld [vmem:[#allocation26 + $0x7e8] sm:$0xff]
    %v6744 = vld [vmem:[#allocation26 + $0x7f0] sm:$0xff]
    %v6745 = vld [vmem:[#allocation26 + $0x7f8] sm:$0xff]
    %6746 = vmatprep.subr.mxu0 %v6551
    %6747 = vmatpush1.msra.mxu0 %v6550
    %6748 = vmatprep.subr.mxu0 %v6547
    %6749 = vmatpush1.msra.mxu0 %v6546
    %6750 = vmatprep.subr.mxu0 %v6543
    %6751 = vmatpush1.msra.mxu0 %v6542
    %6752 = vmatprep.subr.mxu0 %v6539
    %6753 = vmatpush1.msra.mxu0 %v6538
    %6754 = vmatprep.subr.mxu0 %v6535
    %6755 = vmatpush1.msra.mxu0 %v6534
    %6756 = vmatprep.subr.mxu0 %v6531
    %6757 = vmatpush1.msra.mxu0 %v6530
    %6758 = vmatprep.subr.mxu0 %v6527
    %6759 = vmatpush1.msra.mxu0 %v6526
    %6760 = vmatprep.subr.mxu0 %v6523
    %6761 = vmatpush1.msra.mxu0 %v6522
    %6762 = vmatprep.subr.mxu0 %v6519
    %6763 = vmatpush1.msra.mxu0 %v6518
    %6764 = vmatprep.subr.mxu0 %v6515
    %6765 = vmatpush1.msra.mxu0 %v6514
    %6766 = vmatprep.subr.mxu0 %v6511
    %6767 = vmatpush1.msra.mxu0 %v6510
    %6768 = vmatprep.subr.mxu0 %v6507
    %6769 = vmatpush1.msra.mxu0 %v6506
    %6770 = vmatprep.subr.mxu0 %v6503
    %6771 = vmatpush1.msra.mxu0 %v6502
    %6772 = vmatprep.subr.mxu0 %v6499
    %6773 = vmatpush1.msra.mxu0 %v6498
    %6774 = vmatprep.subr.mxu0 %v6495
    %6775 = vmatpush1.msra.mxu0 %v6494
    %6776 = vmatprep.subr.mxu0 %v6491
    %6777 = vmatpush1.msra.mxu0 %v6490
    %6778 = vmatprep.subr.mxu0 %v6615
    %6779 = vmatpush2.msra.mxu0 %v6614
    %6780 = vmatprep.subr.mxu0 %v6611
    %6781 = vmatpush2.msra.mxu0 %v6610
    %6782 = vmatprep.subr.mxu0 %v6607
    %6783 = vmatpush2.msra.mxu0 %v6606
    %6784 = vmatprep.subr.mxu0 %v6603
    %6785 = vmatpush2.msra.mxu0 %v6602
    %6786 = vmatprep.subr.mxu0 %v6599
    %6787 = vmatpush2.msra.mxu0 %v6598
    %6788 = vmatprep.subr.mxu0 %v6595
    %6789 = vmatpush2.msra.mxu0 %v6594
    %6790 = vmatprep.subr.mxu0 %v6591
    %6791 = vmatpush2.msra.mxu0 %v6590
    %6792 = vmatprep.subr.mxu0 %v6587
    %6793 = vmatpush2.msra.mxu0 %v6586
    %6794 = vmatprep.subr.mxu0 %v6583
    %6795 = vmatpush2.msra.mxu0 %v6582
    %6796 = vmatprep.subr.mxu0 %v6579
    %6797 = vmatpush2.msra.mxu0 %v6578
    %6798 = vmatprep.subr.mxu0 %v6575
    %6799 = vmatpush2.msra.mxu0 %v6574
    %6800 = vmatprep.subr.mxu0 %v6571
    %6801 = vmatpush2.msra.mxu0 %v6570
    %6802 = vmatprep.subr.mxu0 %v6567
    %6803 = vmatpush2.msra.mxu0 %v6566
    %6804 = vmatprep.subr.mxu0 %v6563
    %6805 = vmatpush2.msra.mxu0 %v6562
    %6806 = vmatprep.subr.mxu0 %v6559
    %6807 = vmatpush2.msra.mxu0 %v6558
    %6808 = vmatprep.subr.mxu0 %v6555
    %6809 = vmatpush2.msra.mxu0 %v6554
    %6810 = vmatprep.mubr.f32.mxu0 %v6483
    %6811 = vmatmul.mubr.f32.gmra.mxu0 %v6482
    %v6812 = vpop.f32.mrf.mxu0
    %v6813 = vadd.f32 0.0, %v6812
    %v6814 = vpop.f32.mrf.mxu0
    %v6815 = vadd.f32 0.0, %v6814
    %6816 = vmatprep.mubr.f32.mxu0 %v6487
    %6817 = vmatmul.mubr.f32.gmra.mxu0 %v6486
    %v6818 = vpop.f32.mrf.mxu0
    %v6819 = vadd.f32 0.0, %v6818
    %v6820 = vpop.f32.mrf.mxu0
    %v6821 = vadd.f32 0.0, %v6820
    %6822 = vdwg.mxu0
    %6823 = vmatprep.subr.mxu0 %v6679
    %6824 = vmatpush1.msra.mxu0 %v6678
    %6825 = vmatprep.subr.mxu0 %v6675
    %6826 = vmatpush1.msra.mxu0 %v6674
    %6827 = vmatprep.subr.mxu0 %v6671
    %6828 = vmatpush1.msra.mxu0 %v6670
    %6829 = vmatprep.subr.mxu0 %v6667
    %6830 = vmatpush1.msra.mxu0 %v6666
    %6831 = vmatprep.subr.mxu0 %v6663
    %6832 = vmatpush1.msra.mxu0 %v6662
    %6833 = vmatprep.subr.mxu0 %v6659
    %6834 = vmatpush1.msra.mxu0 %v6658
    %6835 = vmatprep.subr.mxu0 %v6655
    %6836 = vmatpush1.msra.mxu0 %v6654
    %6837 = vmatprep.subr.mxu0 %v6651
    %6838 = vmatpush1.msra.mxu0 %v6650
    %6839 = vmatprep.subr.mxu0 %v6647
    %6840 = vmatpush1.msra.mxu0 %v6646
    %6841 = vmatprep.subr.mxu0 %v6643
    %6842 = vmatpush1.msra.mxu0 %v6642
    %6843 = vmatprep.subr.mxu0 %v6639
    %6844 = vmatpush1.msra.mxu0 %v6638
    %6845 = vmatprep.subr.mxu0 %v6635
    %6846 = vmatpush1.msra.mxu0 %v6634
    %6847 = vmatprep.subr.mxu0 %v6631
    %6848 = vmatpush1.msra.mxu0 %v6630
    %6849 = vmatprep.subr.mxu0 %v6627
    %6850 = vmatpush1.msra.mxu0 %v6626
    %6851 = vmatprep.subr.mxu0 %v6623
    %6852 = vmatpush1.msra.mxu0 %v6622
    %6853 = vmatprep.subr.mxu0 %v6619
    %6854 = vmatpush1.msra.mxu0 %v6618
    %6855 = vmatprep.subr.mxu0 %v6743
    %6856 = vmatpush2.msra.mxu0 %v6742
    %6857 = vmatprep.subr.mxu0 %v6739
    %6858 = vmatpush2.msra.mxu0 %v6738
    %6859 = vmatprep.subr.mxu0 %v6735
    %6860 = vmatpush2.msra.mxu0 %v6734
    %6861 = vmatprep.subr.mxu0 %v6731
    %6862 = vmatpush2.msra.mxu0 %v6730
    %6863 = vmatprep.subr.mxu0 %v6727
    %6864 = vmatpush2.msra.mxu0 %v6726
    %6865 = vmatprep.subr.mxu0 %v6723
    %6866 = vmatpush2.msra.mxu0 %v6722
    %6867 = vmatprep.subr.mxu0 %v6719
    %6868 = vmatpush2.msra.mxu0 %v6718
    %6869 = vmatprep.subr.mxu0 %v6715
    %6870 = vmatpush2.msra.mxu0 %v6714
    %6871 = vmatprep.subr.mxu0 %v6711
    %6872 = vmatpush2.msra.mxu0 %v6710
    %6873 = vmatprep.subr.mxu0 %v6707
    %6874 = vmatpush2.msra.mxu0 %v6706
    %6875 = vmatprep.subr.mxu0 %v6703
    %6876 = vmatpush2.msra.mxu0 %v6702
    %6877 = vmatprep.subr.mxu0 %v6699
    %6878 = vmatpush2.msra.mxu0 %v6698
    %6879 = vmatprep.subr.mxu0 %v6695
    %6880 = vmatpush2.msra.mxu0 %v6694
    %6881 = vmatprep.subr.mxu0 %v6691
    %6882 = vmatpush2.msra.mxu0 %v6690
    %6883 = vmatprep.subr.mxu0 %v6687
    %6884 = vmatpush2.msra.mxu0 %v6686
    %6885 = vmatprep.subr.mxu0 %v6683
    %6886 = vmatpush2.msra.mxu0 %v6682
    %6887 = vmatprep.mubr.f32.mxu0 %v6485
    %6888 = vmatmul.mubr.f32.gmra.mxu0 %v6484
    %v6889 = vpop.f32.mrf.mxu0
    %v6890 = vadd.f32 %v6813, %v6889
    %v6891 = vpop.f32.mrf.mxu0
    %v6892 = vadd.f32 %v6815, %v6891
    %6893 = vmatprep.mubr.f32.mxu0 %v6489
    %6894 = vmatmul.mubr.f32.gmra.mxu0 %v6488
    %v6895 = vpop.f32.mrf.mxu0
    %v6896 = vadd.f32 %v6819, %v6895
    %v6897 = vpop.f32.mrf.mxu0
    %v6898 = vadd.f32 %v6821, %v6897
    %6899 = vdwg.mxu0
    %6900 = vmatprep.subr.mxu0 %v6553
    %6901 = vmatpush1.msra.mxu0 %v6552
    %6902 = vmatprep.subr.mxu0 %v6549
    %6903 = vmatpush1.msra.mxu0 %v6548
    %6904 = vmatprep.subr.mxu0 %v6545
    %6905 = vmatpush1.msra.mxu0 %v6544
    %6906 = vmatprep.subr.mxu0 %v6541
    %6907 = vmatpush1.msra.mxu0 %v6540
    %6908 = vmatprep.subr.mxu0 %v6537
    %6909 = vmatpush1.msra.mxu0 %v6536
    %6910 = vmatprep.subr.mxu0 %v6533
    %6911 = vmatpush1.msra.mxu0 %v6532
    %6912 = vmatprep.subr.mxu0 %v6529
    %6913 = vmatpush1.msra.mxu0 %v6528
    %6914 = vmatprep.subr.mxu0 %v6525
    %6915 = vmatpush1.msra.mxu0 %v6524
    %6916 = vmatprep.subr.mxu0 %v6521
    %6917 = vmatpush1.msra.mxu0 %v6520
    %6918 = vmatprep.subr.mxu0 %v6517
    %6919 = vmatpush1.msra.mxu0 %v6516
    %6920 = vmatprep.subr.mxu0 %v6513
    %6921 = vmatpush1.msra.mxu0 %v6512
    %6922 = vmatprep.subr.mxu0 %v6509
    %6923 = vmatpush1.msra.mxu0 %v6508
    %6924 = vmatprep.subr.mxu0 %v6505
    %6925 = vmatpush1.msra.mxu0 %v6504
    %6926 = vmatprep.subr.mxu0 %v6501
    %6927 = vmatpush1.msra.mxu0 %v6500
    %6928 = vmatprep.subr.mxu0 %v6497
    %6929 = vmatpush1.msra.mxu0 %v6496
    %6930 = vmatprep.subr.mxu0 %v6493
    %6931 = vmatpush1.msra.mxu0 %v6492
    %6932 = vmatprep.subr.mxu0 %v6617
    %6933 = vmatpush2.msra.mxu0 %v6616
    %6934 = vmatprep.subr.mxu0 %v6613
    %6935 = vmatpush2.msra.mxu0 %v6612
    %6936 = vmatprep.subr.mxu0 %v6609
    %6937 = vmatpush2.msra.mxu0 %v6608
    %6938 = vmatprep.subr.mxu0 %v6605
    %6939 = vmatpush2.msra.mxu0 %v6604
    %6940 = vmatprep.subr.mxu0 %v6601
    %6941 = vmatpush2.msra.mxu0 %v6600
    %6942 = vmatprep.subr.mxu0 %v6597
    %6943 = vmatpush2.msra.mxu0 %v6596
    %6944 = vmatprep.subr.mxu0 %v6593
    %6945 = vmatpush2.msra.mxu0 %v6592
    %6946 = vmatprep.subr.mxu0 %v6589
    %6947 = vmatpush2.msra.mxu0 %v6588
    %6948 = vmatprep.subr.mxu0 %v6585
    %6949 = vmatpush2.msra.mxu0 %v6584
    %6950 = vmatprep.subr.mxu0 %v6581
    %6951 = vmatpush2.msra.mxu0 %v6580
    %6952 = vmatprep.subr.mxu0 %v6577
    %6953 = vmatpush2.msra.mxu0 %v6576
    %6954 = vmatprep.subr.mxu0 %v6573
    %6955 = vmatpush2.msra.mxu0 %v6572
    %6956 = vmatprep.subr.mxu0 %v6569
    %6957 = vmatpush2.msra.mxu0 %v6568
    %6958 = vmatprep.subr.mxu0 %v6565
    %6959 = vmatpush2.msra.mxu0 %v6564
    %6960 = vmatprep.subr.mxu0 %v6561
    %6961 = vmatpush2.msra.mxu0 %v6560
    %6962 = vmatprep.subr.mxu0 %v6557
    %6963 = vmatpush2.msra.mxu0 %v6556
    %6964 = vmatprep.mubr.f32.mxu0 %v6483
    %6965 = vmatmul.mubr.f32.gmra.mxu0 %v6482
    %v6966 = vpop.f32.mrf.mxu0
    %v6967 = vadd.f32 0.0, %v6966
    %v6968 = vpop.f32.mrf.mxu0
    %v6969 = vadd.f32 0.0, %v6968
    %6970 = vmatprep.mubr.f32.mxu0 %v6487
    %6971 = vmatmul.mubr.f32.gmra.mxu0 %v6486
    %v6972 = vpop.f32.mrf.mxu0
    %v6973 = vadd.f32 0.0, %v6972
    %v6974 = vpop.f32.mrf.mxu0
    %v6975 = vadd.f32 0.0, %v6974
    %6976 = vdwg.mxu0
    %6977 = vmatprep.subr.mxu0 %v6681
    %6978 = vmatpush1.msra.mxu0 %v6680
    %6979 = vmatprep.subr.mxu0 %v6677
    %6980 = vmatpush1.msra.mxu0 %v6676
    %6981 = vmatprep.subr.mxu0 %v6673
    %6982 = vmatpush1.msra.mxu0 %v6672
    %6983 = vmatprep.subr.mxu0 %v6669
    %6984 = vmatpush1.msra.mxu0 %v6668
    %6985 = vmatprep.subr.mxu0 %v6665
    %6986 = vmatpush1.msra.mxu0 %v6664
    %6987 = vmatprep.subr.mxu0 %v6661
    %6988 = vmatpush1.msra.mxu0 %v6660
    %6989 = vmatprep.subr.mxu0 %v6657
    %6990 = vmatpush1.msra.mxu0 %v6656
    %6991 = vmatprep.subr.mxu0 %v6653
    %6992 = vmatpush1.msra.mxu0 %v6652
    %6993 = vmatprep.subr.mxu0 %v6649
    %6994 = vmatpush1.msra.mxu0 %v6648
    %6995 = vmatprep.subr.mxu0 %v6645
    %6996 = vmatpush1.msra.mxu0 %v6644
    %6997 = vmatprep.subr.mxu0 %v6641
    %6998 = vmatpush1.msra.mxu0 %v6640
    %6999 = vmatprep.subr.mxu0 %v6637
    %7000 = vmatpush1.msra.mxu0 %v6636
    %7001 = vmatprep.subr.mxu0 %v6633
    %7002 = vmatpush1.msra.mxu0 %v6632
    %7003 = vmatprep.subr.mxu0 %v6629
    %7004 = vmatpush1.msra.mxu0 %v6628
    %7005 = vmatprep.subr.mxu0 %v6625
    %7006 = vmatpush1.msra.mxu0 %v6624
    %7007 = vmatprep.subr.mxu0 %v6621
    %7008 = vmatpush1.msra.mxu0 %v6620
    %7009 = vmatprep.subr.mxu0 %v6745
    %7010 = vmatpush2.msra.mxu0 %v6744
    %7011 = vmatprep.subr.mxu0 %v6741
    %7012 = vmatpush2.msra.mxu0 %v6740
    %7013 = vmatprep.subr.mxu0 %v6737
    %7014 = vmatpush2.msra.mxu0 %v6736
    %7015 = vmatprep.subr.mxu0 %v6733
    %7016 = vmatpush2.msra.mxu0 %v6732
    %7017 = vmatprep.subr.mxu0 %v6729
    %7018 = vmatpush2.msra.mxu0 %v6728
    %7019 = vmatprep.subr.mxu0 %v6725
    %7020 = vmatpush2.msra.mxu0 %v6724
    %7021 = vmatprep.subr.mxu0 %v6721
    %7022 = vmatpush2.msra.mxu0 %v6720
    %7023 = vmatprep.subr.mxu0 %v6717
    %7024 = vmatpush2.msra.mxu0 %v6716
    %7025 = vmatprep.subr.mxu0 %v6713
    %7026 = vmatpush2.msra.mxu0 %v6712
    %7027 = vmatprep.subr.mxu0 %v6709
    %7028 = vmatpush2.msra.mxu0 %v6708
    %7029 = vmatprep.subr.mxu0 %v6705
    %7030 = vmatpush2.msra.mxu0 %v6704
    %7031 = vmatprep.subr.mxu0 %v6701
    %7032 = vmatpush2.msra.mxu0 %v6700
    %7033 = vmatprep.subr.mxu0 %v6697
    %7034 = vmatpush2.msra.mxu0 %v6696
    %7035 = vmatprep.subr.mxu0 %v6693
    %7036 = vmatpush2.msra.mxu0 %v6692
    %7037 = vmatprep.subr.mxu0 %v6689
    %7038 = vmatpush2.msra.mxu0 %v6688
    %7039 = vmatprep.subr.mxu0 %v6685
    %7040 = vmatpush2.msra.mxu0 %v6684
    %7041 = vmatprep.mubr.f32.mxu0 %v6485
    %7042 = vmatmul.mubr.f32.gmra.mxu0 %v6484
    %v7043 = vpop.f32.mrf.mxu0
    %v7044 = vadd.f32 %v6967, %v7043
    %v7045 = vpop.f32.mrf.mxu0
    %v7046 = vadd.f32 %v6969, %v7045
    %7047 = vmatprep.mubr.f32.mxu0 %v6489
    %7048 = vmatmul.mubr.f32.gmra.mxu0 %v6488
    %v7049 = vpop.f32.mrf.mxu0
    %v7050 = vadd.f32 %v6973, %v7049
    %v7051 = vpop.f32.mrf.mxu0
    %v7052 = vadd.f32 %v6975, %v7051
    %7053 = vdwg.mxu0
    %v7054 = vld [vmem:[%s41] sm:$0xff]
    %v7055 = vld [vmem:[%s41 + $0x8] sm:$0xff]
    %v7056 = vld [vmem:[%s41 + $0x10] sm:$0xff]
    %v7057 = vld [vmem:[%s41 + $0x18] sm:$0xff]
    %v7058 = vld [vmem:[%s41 + $0x20] sm:$0xff]
    %v7059 = vld [vmem:[%s41 + $0x28] sm:$0xff]
    %v7060 = vld [vmem:[%s41 + $0x30] sm:$0xff]
    %v7061 = vld [vmem:[%s41 + $0x38] sm:$0xff]
    %v7062 = vld [vmem:[%s41 + $0x40] sm:$0xff]
    %v7063 = vld [vmem:[%s41 + $0x48] sm:$0xff]
    %v7064 = vld [vmem:[%s41 + $0x50] sm:$0xff]
    %v7065 = vld [vmem:[%s41 + $0x58] sm:$0xff]
    %v7066 = vld [vmem:[%s41 + $0x60] sm:$0xff]
    %v7067 = vld [vmem:[%s41 + $0x68] sm:$0xff]
    %v7068 = vld [vmem:[%s41 + $0x70] sm:$0xff]
    %v7069 = vld [vmem:[%s41 + $0x78] sm:$0xff]
    %v7070 = vld [vmem:[%s41 + $0x80] sm:$0xff]
    %v7071 = vld [vmem:[%s41 + $0x88] sm:$0xff]
    %v7072 = vld [vmem:[%s41 + $0x90] sm:$0xff]
    %v7073 = vld [vmem:[%s41 + $0x98] sm:$0xff]
    %v7074 = vld [vmem:[%s41 + $0xa0] sm:$0xff]
    %v7075 = vld [vmem:[%s41 + $0xa8] sm:$0xff]
    %v7076 = vld [vmem:[%s41 + $0xb0] sm:$0xff]
    %v7077 = vld [vmem:[%s41 + $0xb8] sm:$0xff]
    %v7078 = vld [vmem:[%s41 + $0xc0] sm:$0xff]
    %v7079 = vld [vmem:[%s41 + $0xc8] sm:$0xff]
    %v7080 = vld [vmem:[%s41 + $0xd0] sm:$0xff]
    %v7081 = vld [vmem:[%s41 + $0xd8] sm:$0xff]
    %v7082 = vld [vmem:[%s41 + $0xe0] sm:$0xff]
    %v7083 = vld [vmem:[%s41 + $0xe8] sm:$0xff]
    %v7084 = vld [vmem:[%s41 + $0xf0] sm:$0xff]
    %v7085 = vld [vmem:[%s41 + $0xf8] sm:$0xff]
    %v7086 = vld [vmem:[%s41 + $0x100] sm:$0xff]
    %v7087 = vld [vmem:[%s41 + $0x108] sm:$0xff]
    %v7088 = vld [vmem:[%s41 + $0x110] sm:$0xff]
    %v7089 = vld [vmem:[%s41 + $0x118] sm:$0xff]
    %v7090 = vld [vmem:[%s41 + $0x120] sm:$0xff]
    %v7091 = vld [vmem:[%s41 + $0x128] sm:$0xff]
    %v7092 = vld [vmem:[%s41 + $0x130] sm:$0xff]
    %v7093 = vld [vmem:[%s41 + $0x138] sm:$0xff]
    %v7094 = vld [vmem:[%s41 + $0x140] sm:$0xff]
    %v7095 = vld [vmem:[%s41 + $0x148] sm:$0xff]
    %v7096 = vld [vmem:[%s41 + $0x150] sm:$0xff]
    %v7097 = vld [vmem:[%s41 + $0x158] sm:$0xff]
    %v7098 = vld [vmem:[%s41 + $0x160] sm:$0xff]
    %v7099 = vld [vmem:[%s41 + $0x168] sm:$0xff]
    %v7100 = vld [vmem:[%s41 + $0x170] sm:$0xff]
    %v7101 = vld [vmem:[%s41 + $0x178] sm:$0xff]
    %v7102 = vld [vmem:[%s41 + $0x180] sm:$0xff]
    %v7103 = vld [vmem:[%s41 + $0x188] sm:$0xff]
    %v7104 = vld [vmem:[%s41 + $0x190] sm:$0xff]
    %v7105 = vld [vmem:[%s41 + $0x198] sm:$0xff]
    %v7106 = vld [vmem:[%s41 + $0x1a0] sm:$0xff]
    %v7107 = vld [vmem:[%s41 + $0x1a8] sm:$0xff]
    %v7108 = vld [vmem:[%s41 + $0x1b0] sm:$0xff]
    %v7109 = vld [vmem:[%s41 + $0x1b8] sm:$0xff]
    %v7110 = vld [vmem:[%s41 + $0x1c0] sm:$0xff]
    %v7111 = vld [vmem:[%s41 + $0x1c8] sm:$0xff]
    %v7112 = vld [vmem:[%s41 + $0x1d0] sm:$0xff]
    %v7113 = vld [vmem:[%s41 + $0x1d8] sm:$0xff]
    %v7114 = vld [vmem:[%s41 + $0x1e0] sm:$0xff]
    %v7115 = vld [vmem:[%s41 + $0x1e8] sm:$0xff]
    %v7116 = vld [vmem:[%s41 + $0x1f0] sm:$0xff]
    %v7117 = vld [vmem:[%s41 + $0x1f8] sm:$0xff]
    %7118 = vmatprep.subr.mxu0 0.0
    %7119 = vmatpush1.msra.mxu0 %v7069
    %7120 = vmatprep.subr.mxu0 0.0
    %7121 = vmatpush1.msra.mxu0 %v7068
    %7122 = vmatprep.subr.mxu0 0.0
    %7123 = vmatpush1.msra.mxu0 %v7067
    %7124 = vmatprep.subr.mxu0 0.0
    %7125 = vmatpush1.msra.mxu0 %v7066
    %7126 = vmatprep.subr.mxu0 0.0
    %7127 = vmatpush1.msra.mxu0 %v7065
    %7128 = vmatprep.subr.mxu0 0.0
    %7129 = vmatpush1.msra.mxu0 %v7064
    %7130 = vmatprep.subr.mxu0 0.0
    %7131 = vmatpush1.msra.mxu0 %v7063
    %7132 = vmatprep.subr.mxu0 0.0
    %7133 = vmatpush1.msra.mxu0 %v7062
    %7134 = vmatprep.subr.mxu0 0.0
    %7135 = vmatpush1.msra.mxu0 %v7061
    %7136 = vmatprep.subr.mxu0 0.0
    %7137 = vmatpush1.msra.mxu0 %v7060
    %7138 = vmatprep.subr.mxu0 0.0
    %7139 = vmatpush1.msra.mxu0 %v7059
    %7140 = vmatprep.subr.mxu0 0.0
    %7141 = vmatpush1.msra.mxu0 %v7058
    %7142 = vmatprep.subr.mxu0 0.0
    %7143 = vmatpush1.msra.mxu0 %v7057
    %7144 = vmatprep.subr.mxu0 0.0
    %7145 = vmatpush1.msra.mxu0 %v7056
    %7146 = vmatprep.subr.mxu0 0.0
    %7147 = vmatpush1.msra.mxu0 %v7055
    %7148 = vmatprep.subr.mxu0 0.0
    %7149 = vmatpush1.msra.mxu0 %v7054
    %7150 = vmatprep.subr.mxu0 0.0
    %7151 = vmatpush2.msra.mxu0 %v7085
    %7152 = vmatprep.subr.mxu0 0.0
    %7153 = vmatpush2.msra.mxu0 %v7084
    %7154 = vmatprep.subr.mxu0 0.0
    %7155 = vmatpush2.msra.mxu0 %v7083
    %7156 = vmatprep.subr.mxu0 0.0
    %7157 = vmatpush2.msra.mxu0 %v7082
    %7158 = vmatprep.subr.mxu0 0.0
    %7159 = vmatpush2.msra.mxu0 %v7081
    %7160 = vmatprep.subr.mxu0 0.0
    %7161 = vmatpush2.msra.mxu0 %v7080
    %7162 = vmatprep.subr.mxu0 0.0
    %7163 = vmatpush2.msra.mxu0 %v7079
    %7164 = vmatprep.subr.mxu0 0.0
    %7165 = vmatpush2.msra.mxu0 %v7078
    %7166 = vmatprep.subr.mxu0 0.0
    %7167 = vmatpush2.msra.mxu0 %v7077
    %7168 = vmatprep.subr.mxu0 0.0
    %7169 = vmatpush2.msra.mxu0 %v7076
    %7170 = vmatprep.subr.mxu0 0.0
    %7171 = vmatpush2.msra.mxu0 %v7075
    %7172 = vmatprep.subr.mxu0 0.0
    %7173 = vmatpush2.msra.mxu0 %v7074
    %7174 = vmatprep.subr.mxu0 0.0
    %7175 = vmatpush2.msra.mxu0 %v7073
    %7176 = vmatprep.subr.mxu0 0.0
    %7177 = vmatpush2.msra.mxu0 %v7072
    %7178 = vmatprep.subr.mxu0 0.0
    %7179 = vmatpush2.msra.mxu0 %v7071
    %7180 = vmatprep.subr.mxu0 0.0
    %7181 = vmatpush2.msra.mxu0 %v7070
    %7182 = vmatprep.mubr.f32.mxu0 %v6892
    %7183 = vmatmul.mubr.f32.gmra.mxu0 %v6890
    %v7184 = vpop.f32.mrf.mxu0
    %v7185 = vadd.f32 0.0, %v7184
    %v7186 = vpop.f32.mrf.mxu0
    %7187 = vmatprep.mubr.f32.mxu0 %v6898
    %7188 = vmatmul.mubr.f32.gmra.mxu0 %v6896
    %v7189 = vpop.f32.mrf.mxu0
    %v7190 = vadd.f32 0.0, %v7189
    %v7191 = vpop.f32.mrf.mxu0
    %7192 = vdwg.mxu0
    %7193 = vmatprep.subr.mxu0 0.0
    %7194 = vmatpush1.msra.mxu0 %v7101
    %7195 = vmatprep.subr.mxu0 0.0
    %7196 = vmatpush1.msra.mxu0 %v7100
    %7197 = vmatprep.subr.mxu0 0.0
    %7198 = vmatpush1.msra.mxu0 %v7099
    %7199 = vmatprep.subr.mxu0 0.0
    %7200 = vmatpush1.msra.mxu0 %v7098
    %7201 = vmatprep.subr.mxu0 0.0
    %7202 = vmatpush1.msra.mxu0 %v7097
    %7203 = vmatprep.subr.mxu0 0.0
    %7204 = vmatpush1.msra.mxu0 %v7096
    %7205 = vmatprep.subr.mxu0 0.0
    %7206 = vmatpush1.msra.mxu0 %v7095
    %7207 = vmatprep.subr.mxu0 0.0
    %7208 = vmatpush1.msra.mxu0 %v7094
    %7209 = vmatprep.subr.mxu0 0.0
    %7210 = vmatpush1.msra.mxu0 %v7093
    %7211 = vmatprep.subr.mxu0 0.0
    %7212 = vmatpush1.msra.mxu0 %v7092
    %7213 = vmatprep.subr.mxu0 0.0
    %7214 = vmatpush1.msra.mxu0 %v7091
    %7215 = vmatprep.subr.mxu0 0.0
    %7216 = vmatpush1.msra.mxu0 %v7090
    %7217 = vmatprep.subr.mxu0 0.0
    %7218 = vmatpush1.msra.mxu0 %v7089
    %7219 = vmatprep.subr.mxu0 0.0
    %7220 = vmatpush1.msra.mxu0 %v7088
    %7221 = vmatprep.subr.mxu0 0.0
    %7222 = vmatpush1.msra.mxu0 %v7087
    %7223 = vmatprep.subr.mxu0 0.0
    %7224 = vmatpush1.msra.mxu0 %v7086
    %7225 = vmatprep.subr.mxu0 0.0
    %7226 = vmatpush2.msra.mxu0 %v7117
    %7227 = vmatprep.subr.mxu0 0.0
    %7228 = vmatpush2.msra.mxu0 %v7116
    %7229 = vmatprep.subr.mxu0 0.0
    %7230 = vmatpush2.msra.mxu0 %v7115
    %7231 = vmatprep.subr.mxu0 0.0
    %7232 = vmatpush2.msra.mxu0 %v7114
    %7233 = vmatprep.subr.mxu0 0.0
    %7234 = vmatpush2.msra.mxu0 %v7113
    %7235 = vmatprep.subr.mxu0 0.0
    %7236 = vmatpush2.msra.mxu0 %v7112
    %7237 = vmatprep.subr.mxu0 0.0
    %7238 = vmatpush2.msra.mxu0 %v7111
    %7239 = vmatprep.subr.mxu0 0.0
    %7240 = vmatpush2.msra.mxu0 %v7110
    %7241 = vmatprep.subr.mxu0 0.0
    %7242 = vmatpush2.msra.mxu0 %v7109
    %7243 = vmatprep.subr.mxu0 0.0
    %7244 = vmatpush2.msra.mxu0 %v7108
    %7245 = vmatprep.subr.mxu0 0.0
    %7246 = vmatpush2.msra.mxu0 %v7107
    %7247 = vmatprep.subr.mxu0 0.0
    %7248 = vmatpush2.msra.mxu0 %v7106
    %7249 = vmatprep.subr.mxu0 0.0
    %7250 = vmatpush2.msra.mxu0 %v7105
    %7251 = vmatprep.subr.mxu0 0.0
    %7252 = vmatpush2.msra.mxu0 %v7104
    %7253 = vmatprep.subr.mxu0 0.0
    %7254 = vmatpush2.msra.mxu0 %v7103
    %7255 = vmatprep.subr.mxu0 0.0
    %7256 = vmatpush2.msra.mxu0 %v7102
    %7257 = vmatprep.mubr.f32.mxu0 %v7046
    %7258 = vmatmul.mubr.f32.gmra.mxu0 %v7044
    %v7259 = vpop.f32.mrf.mxu0
    %v7260 = vadd.f32 %v7185, %v7259
    %v7261 = vpop.f32.mrf.mxu0
    %7262 = vmatprep.mubr.f32.mxu0 %v7052
    %7263 = vmatmul.mubr.f32.gmra.mxu0 %v7050
    %v7264 = vpop.f32.mrf.mxu0
    %v7265 = vadd.f32 %v7190, %v7264
    %v7266 = vpop.f32.mrf.mxu0
    %7267 = vdwg.mxu0
    %v7268 = vld [vmem:[#allocation28] sm:$0xff]
    %v7269 = vld [vmem:[#allocation28 + $0x8] sm:$0xff]
    %v7272 = vcombine.high %v7268, %v7268
    %v7273 = vcombine.high %v7269, %v7269
    %7276 = vmatprep.subr.mxu0 0.0
    %7277 = vmatpush1.xpose.msra.mxu0 0.0
    %7278 = vmatprep.subr.mxu0 0.0
    %7279 = vmatpush1.xpose.msra.mxu0 0.0
    %7280 = vmatprep.subr.mxu0 0.0
    %7281 = vmatpush1.xpose.msra.mxu0 0.0
    %7282 = vmatprep.subr.mxu0 0.0
    %7283 = vmatpush1.xpose.msra.mxu0 0.0
    %7284 = vmatprep.subr.mxu0 0.0
    %7285 = vmatpush1.xpose.msra.mxu0 0.0
    %7286 = vmatprep.subr.mxu0 0.0
    %7287 = vmatpush1.xpose.msra.mxu0 0.0
    %7288 = vmatprep.subr.mxu0 0.0
    %7289 = vmatpush1.xpose.msra.mxu0 0.0
    %7290 = vmatprep.subr.mxu0 0.0
    %7291 = vmatpush1.xpose.msra.mxu0 0.0
    %7292 = vmatprep.subr.mxu0 0.0
    %7293 = vmatpush1.xpose.msra.mxu0 0.0
    %7294 = vmatprep.subr.mxu0 0.0
    %7295 = vmatpush1.xpose.msra.mxu0 0.0
    %7296 = vmatprep.subr.mxu0 0.0
    %7297 = vmatpush1.xpose.msra.mxu0 0.0
    %7298 = vmatprep.subr.mxu0 0.0
    %7299 = vmatpush1.xpose.msra.mxu0 0.0
    %7300 = vmatprep.subr.mxu0 0.0
    %7301 = vmatpush1.xpose.msra.mxu0 0.0
    %7302 = vmatprep.subr.mxu0 0.0
    %7303 = vmatpush1.xpose.msra.mxu0 0.0
    %7304 = vmatprep.subr.mxu0 %v6898
    %7305 = vmatpush1.xpose.msra.mxu0 %v6896
    %7306 = vmatprep.subr.mxu0 %v6892
    %7307 = vmatpush1.xpose.msra.mxu0 %v6890
    %7308 = vmatprep.subr.mxu0 0.0
    %7309 = vmatpush2.xpose.msra.mxu0 0.0
    %7310 = vmatprep.subr.mxu0 0.0
    %7311 = vmatpush2.xpose.msra.mxu0 0.0
    %7312 = vmatprep.subr.mxu0 0.0
    %7313 = vmatpush2.xpose.msra.mxu0 0.0
    %7314 = vmatprep.subr.mxu0 0.0
    %7315 = vmatpush2.xpose.msra.mxu0 0.0
    %7316 = vmatprep.subr.mxu0 0.0
    %7317 = vmatpush2.xpose.msra.mxu0 0.0
    %7318 = vmatprep.subr.mxu0 0.0
    %7319 = vmatpush2.xpose.msra.mxu0 0.0
    %7320 = vmatprep.subr.mxu0 0.0
    %7321 = vmatpush2.xpose.msra.mxu0 0.0
    %7322 = vmatprep.subr.mxu0 0.0
    %7323 = vmatpush2.xpose.msra.mxu0 0.0
    %7324 = vmatprep.subr.mxu0 0.0
    %7325 = vmatpush2.xpose.msra.mxu0 0.0
    %7326 = vmatprep.subr.mxu0 0.0
    %7327 = vmatpush2.xpose.msra.mxu0 0.0
    %7328 = vmatprep.subr.mxu0 0.0
    %7329 = vmatpush2.xpose.msra.mxu0 0.0
    %7330 = vmatprep.subr.mxu0 0.0
    %7331 = vmatpush2.xpose.msra.mxu0 0.0
    %7332 = vmatprep.subr.mxu0 0.0
    %7333 = vmatpush2.xpose.msra.mxu0 0.0
    %7334 = vmatprep.subr.mxu0 0.0
    %7335 = vmatpush2.xpose.msra.mxu0 0.0
    %7336 = vmatprep.subr.mxu0 0.0
    %7337 = vmatpush2.xpose.msra.mxu0 0.0
    %7338 = vmatprep.subr.mxu0 0.0
    %7339 = vmatpush2.xpose.msra.mxu0 0.0
    %7340 = vmatprep.mubr.f32.mxu0 %v7272
    %7341 = vmatmul.mubr.f32.gmra.mxu0 %v7268
    %v7342 = vpop.f32.mrf.mxu0
    %v7343 = vadd.f32 0.0, %v7342
    %v7344 = vpop.f32.mrf.mxu0
    %7345 = vdwg.mxu0
    %7346 = vmatprep.subr.mxu0 0.0
    %7347 = vmatpush1.xpose.msra.mxu0 0.0
    %7348 = vmatprep.subr.mxu0 0.0
    %7349 = vmatpush1.xpose.msra.mxu0 0.0
    %7350 = vmatprep.subr.mxu0 0.0
    %7351 = vmatpush1.xpose.msra.mxu0 0.0
    %7352 = vmatprep.subr.mxu0 0.0
    %7353 = vmatpush1.xpose.msra.mxu0 0.0
    %7354 = vmatprep.subr.mxu0 0.0
    %7355 = vmatpush1.xpose.msra.mxu0 0.0
    %7356 = vmatprep.subr.mxu0 0.0
    %7357 = vmatpush1.xpose.msra.mxu0 0.0
    %7358 = vmatprep.subr.mxu0 0.0
    %7359 = vmatpush1.xpose.msra.mxu0 0.0
    %7360 = vmatprep.subr.mxu0 0.0
    %7361 = vmatpush1.xpose.msra.mxu0 0.0
    %7362 = vmatprep.subr.mxu0 0.0
    %7363 = vmatpush1.xpose.msra.mxu0 0.0
    %7364 = vmatprep.subr.mxu0 0.0
    %7365 = vmatpush1.xpose.msra.mxu0 0.0
    %7366 = vmatprep.subr.mxu0 0.0
    %7367 = vmatpush1.xpose.msra.mxu0 0.0
    %7368 = vmatprep.subr.mxu0 0.0
    %7369 = vmatpush1.xpose.msra.mxu0 0.0
    %7370 = vmatprep.subr.mxu0 0.0
    %7371 = vmatpush1.xpose.msra.mxu0 0.0
    %7372 = vmatprep.subr.mxu0 0.0
    %7373 = vmatpush1.xpose.msra.mxu0 0.0
    %7374 = vmatprep.subr.mxu0 %v7052
    %7375 = vmatpush1.xpose.msra.mxu0 %v7050
    %7376 = vmatprep.subr.mxu0 %v7046
    %7377 = vmatpush1.xpose.msra.mxu0 %v7044
    %7378 = vmatprep.subr.mxu0 0.0
    %7379 = vmatpush2.xpose.msra.mxu0 0.0
    %7380 = vmatprep.subr.mxu0 0.0
    %7381 = vmatpush2.xpose.msra.mxu0 0.0
    %7382 = vmatprep.subr.mxu0 0.0
    %7383 = vmatpush2.xpose.msra.mxu0 0.0
    %7384 = vmatprep.subr.mxu0 0.0
    %7385 = vmatpush2.xpose.msra.mxu0 0.0
    %7386 = vmatprep.subr.mxu0 0.0
    %7387 = vmatpush2.xpose.msra.mxu0 0.0
    %7388 = vmatprep.subr.mxu0 0.0
    %7389 = vmatpush2.xpose.msra.mxu0 0.0
    %7390 = vmatprep.subr.mxu0 0.0
    %7391 = vmatpush2.xpose.msra.mxu0 0.0
    %7392 = vmatprep.subr.mxu0 0.0
    %7393 = vmatpush2.xpose.msra.mxu0 0.0
    %7394 = vmatprep.subr.mxu0 0.0
    %7395 = vmatpush2.xpose.msra.mxu0 0.0
    %7396 = vmatprep.subr.mxu0 0.0
    %7397 = vmatpush2.xpose.msra.mxu0 0.0
    %7398 = vmatprep.subr.mxu0 0.0
    %7399 = vmatpush2.xpose.msra.mxu0 0.0
    %7400 = vmatprep.subr.mxu0 0.0
    %7401 = vmatpush2.xpose.msra.mxu0 0.0
    %7402 = vmatprep.subr.mxu0 0.0
    %7403 = vmatpush2.xpose.msra.mxu0 0.0
    %7404 = vmatprep.subr.mxu0 0.0
    %7405 = vmatpush2.xpose.msra.mxu0 0.0
    %7406 = vmatprep.subr.mxu0 0.0
    %7407 = vmatpush2.xpose.msra.mxu0 0.0
    %7408 = vmatprep.subr.mxu0 0.0
    %7409 = vmatpush2.xpose.msra.mxu0 0.0
    %7410 = vmatprep.mubr.f32.mxu0 %v7273
    %7411 = vmatmul.mubr.f32.gmra.mxu0 %v7269
    %v7412 = vpop.f32.mrf.mxu0
    %v7413 = vadd.f32 %v7343, %v7412
    %v7414 = vpop.f32.mrf.mxu0
    %7415 = vdwg.mxu0
    %s7416 = sld [smem:[#allocation31]]
    %s7417 = sld [smem:[#allocation31 + $0x1]]
    %s7418 = sld [smem:[#allocation31 + $0x2]]
    %s7419 = sld [smem:[#allocation31 + $0x3]]
    %7421 = vset.pattern.permute.xlu0 0
    %7422 = vperm.xlu0 %7421, %v7260
    %v7423 = vpop.permute.xlu0 %7422
    %7426 = vset.pattern.permute.xlu0 0
    %7427 = vperm.xlu0 %7426, %v7265
    %v7428 = vpop.permute.xlu0 %7427
    %v7430 = vlaneseq
    %v7431 = vshrl.u32 %v7430, 7
    %v7432 = vsub.s32 0, %v7431
    %v7433 = vrot.slane %v7413, %v7432
    %v7434 = vadd.f32 %v7423, %v7433
    %v7435 = vadd.f32 %v7428, %v7433
    %v7436 = vstv %s7416
    %v7437 = vmul.f32 %v7436, %v465
    %v7438 = vmul.f32 %v7436, %v466
    %v7439 = vadd.f32 %v7434, %v7437
    %v7440 = vadd.f32 %v7435, %v7438
    %v7441 = vmul.f32 %v7439, 0.2
    %v7442 = vmul.f32 %v7440, 0.2
    %v7443 = vmax.f32 %v7439, %v7441
    %v7444 = vmax.f32 %v7440, %v7442
    %v7445 = vadd.f32 %v7443, %v469
    %v7446 = vadd.f32 %v7444, %v470
    %v7447 = vsel %vm1281, %v7445, -inf
    %7448 = vmax.xlane.f32.xlu0 %v7447
    %v7449 = vpop.xlane.xlu0 %7448
    %v7450 = vsel %vm1281, %v7446, -inf
    %7451 = vmax.xlane.f32.xlu0 %v7450
    %v7452 = vpop.xlane.xlu0 %7451
    %v7453 = vsub.f32 %v7445, %v7449
    %v7454 = vsub.f32 %v7446, %v7452
    %v7455 = vmul.f32 %v7453, 1.442695
    %v7456 = vpow.pop %v7455
    %v7457 = vmul.f32 %v7454, 1.442695
    %v7458 = vpow.pop %v7457
    %v7459 = vsel %vm1281, %v7456, 0.0
    %7460 = vadd.xlane.f32.xlu0 %v7459
    %v7461 = vpop.xlane.xlu0 %7460
    %v7462 = vsel %vm1281, %v7458, 0.0
    %7463 = vadd.xlane.f32.xlu0 %v7462
    %v7464 = vpop.xlane.xlu0 %7463
    %v7466 = vsel %vm1281, %v7456, 0
    %v7469 = vsel %vm1281, %v7458, 0
    %7471 = vmatprep.subr.mxu0 0.0
    %7472 = vmatpush1.msra.mxu0 0.0
    %7473 = vmatprep.subr.mxu0 0.0
    %7474 = vmatpush1.msra.mxu0 0.0
    %7475 = vmatprep.subr.mxu0 0.0
    %7476 = vmatpush1.msra.mxu0 0.0
    %7477 = vmatprep.subr.mxu0 0.0
    %7478 = vmatpush1.msra.mxu0 0.0
    %7479 = vmatprep.subr.mxu0 0.0
    %7480 = vmatpush1.msra.mxu0 0.0
    %7481 = vmatprep.subr.mxu0 0.0
    %7482 = vmatpush1.msra.mxu0 0.0
    %7483 = vmatprep.subr.mxu0 0.0
    %7484 = vmatpush1.msra.mxu0 0.0
    %7485 = vmatprep.subr.mxu0 0.0
    %7486 = vmatpush1.msra.mxu0 0.0
    %7487 = vmatprep.subr.mxu0 0.0
    %7488 = vmatpush1.msra.mxu0 0.0
    %7489 = vmatprep.subr.mxu0 0.0
    %7490 = vmatpush1.msra.mxu0 0.0
    %7491 = vmatprep.subr.mxu0 0.0
    %7492 = vmatpush1.msra.mxu0 0.0
    %7493 = vmatprep.subr.mxu0 0.0
    %7494 = vmatpush1.msra.mxu0 0.0
    %7495 = vmatprep.subr.mxu0 0.0
    %7496 = vmatpush1.msra.mxu0 0.0
    %7497 = vmatprep.subr.mxu0 0.0
    %7498 = vmatpush1.msra.mxu0 0.0
    %7499 = vmatprep.subr.mxu0 0.0
    %7500 = vmatpush1.msra.mxu0 %v6896
    %7501 = vmatprep.subr.mxu0 0.0
    %7502 = vmatpush1.msra.mxu0 %v6890
    %7503 = vmatprep.subr.mxu0 0.0
    %7504 = vmatpush2.msra.mxu0 0.0
    %7505 = vmatprep.subr.mxu0 0.0
    %7506 = vmatpush2.msra.mxu0 0.0
    %7507 = vmatprep.subr.mxu0 0.0
    %7508 = vmatpush2.msra.mxu0 0.0
    %7509 = vmatprep.subr.mxu0 0.0
    %7510 = vmatpush2.msra.mxu0 0.0
    %7511 = vmatprep.subr.mxu0 0.0
    %7512 = vmatpush2.msra.mxu0 0.0
    %7513 = vmatprep.subr.mxu0 0.0
    %7514 = vmatpush2.msra.mxu0 0.0
    %7515 = vmatprep.subr.mxu0 0.0
    %7516 = vmatpush2.msra.mxu0 0.0
    %7517 = vmatprep.subr.mxu0 0.0
    %7518 = vmatpush2.msra.mxu0 0.0
    %7519 = vmatprep.subr.mxu0 0.0
    %7520 = vmatpush2.msra.mxu0 0.0
    %7521 = vmatprep.subr.mxu0 0.0
    %7522 = vmatpush2.msra.mxu0 0.0
    %7523 = vmatprep.subr.mxu0 0.0
    %7524 = vmatpush2.msra.mxu0 0.0
    %7525 = vmatprep.subr.mxu0 0.0
    %7526 = vmatpush2.msra.mxu0 0.0
    %7527 = vmatprep.subr.mxu0 0.0
    %7528 = vmatpush2.msra.mxu0 0.0
    %7529 = vmatprep.subr.mxu0 0.0
    %7530 = vmatpush2.msra.mxu0 0.0
    %7531 = vmatprep.subr.mxu0 0.0
    %7532 = vmatpush2.msra.mxu0 0.0
    %7533 = vmatprep.subr.mxu0 0.0
    %7534 = vmatpush2.msra.mxu0 0.0
    %7535 = vmatprep.mubr.f32.mxu0 0.0
    %7536 = vmatmul.mubr.f32.gmra.mxu0 %v7466
    %v7537 = vpop.f32.mrf.mxu0
    %v7538 = vadd.f32 0.0, %v7537
    %v7539 = vpop.f32.mrf.mxu0
    %7540 = vmatprep.mubr.f32.mxu0 0.0
    %7541 = vmatmul.mubr.f32.gmra.mxu0 %v7469
    %v7542 = vpop.f32.mrf.mxu0
    %v7543 = vadd.f32 0.0, %v7542
    %v7544 = vpop.f32.mrf.mxu0
    %7545 = vdwg.mxu0
    %v7546 = vrcp.pop %v7461
    %v7547 = vrcp.pop %v7464
    %v7548 = vmul.f32 %v7538, %v7546
    %v7549 = vmul.f32 %v7543, %v7547
    %7550 = vset.pattern.permute.xlu0 1
    %7551 = vperm.xlu0 %7550, %v7260
    %v7552 = vpop.permute.xlu0 %7551
    %7554 = vset.pattern.permute.xlu0 1
    %7555 = vperm.xlu0 %7554, %v7265
    %v7556 = vpop.permute.xlu0 %7555
    %v7558 = vlaneseq
    %v7559 = vshrl.u32 %v7558, 7
    %v7560 = vsub.s32 1, %v7559
    %v7561 = vrot.slane %v7413, %v7560
    %v7562 = vadd.f32 %v7552, %v7561
    %v7563 = vadd.f32 %v7556, %v7561
    %v7564 = vstv %s7417
    %v7565 = vmul.f32 %v7564, %v465
    %v7566 = vmul.f32 %v7564, %v466
    %v7567 = vadd.f32 %v7562, %v7565
    %v7568 = vadd.f32 %v7563, %v7566
    %v7569 = vmul.f32 %v7567, 0.2
    %v7570 = vmul.f32 %v7568, 0.2
    %v7571 = vmax.f32 %v7567, %v7569
    %v7572 = vmax.f32 %v7568, %v7570
    %v7573 = vadd.f32 %v7571, %v469
    %v7574 = vadd.f32 %v7572, %v470
    %v7575 = vsel %vm1281, %v7573, -inf
    %7576 = vmax.xlane.f32.xlu0 %v7575
    %v7577 = vpop.xlane.xlu0 %7576
    %v7578 = vsel %vm1281, %v7574, -inf
    %7579 = vmax.xlane.f32.xlu0 %v7578
    %v7580 = vpop.xlane.xlu0 %7579
    %v7581 = vsub.f32 %v7573, %v7577
    %v7582 = vsub.f32 %v7574, %v7580
    %v7583 = vmul.f32 %v7581, 1.442695
    %v7584 = vpow.pop %v7583
    %v7585 = vmul.f32 %v7582, 1.442695
    %v7586 = vpow.pop %v7585
    %v7587 = vsel %vm1281, %v7584, 0.0
    %7588 = vadd.xlane.f32.xlu0 %v7587
    %v7589 = vpop.xlane.xlu0 %7588
    %v7590 = vsel %vm1281, %v7586, 0.0
    %7591 = vadd.xlane.f32.xlu0 %v7590
    %v7592 = vpop.xlane.xlu0 %7591
    %v7594 = vsel %vm1281, %v7584, 0
    %v7597 = vsel %vm1281, %v7586, 0
    %7599 = vmatprep.subr.mxu0 0.0
    %7600 = vmatpush1.msra.mxu0 0.0
    %7601 = vmatprep.subr.mxu0 0.0
    %7602 = vmatpush1.msra.mxu0 0.0
    %7603 = vmatprep.subr.mxu0 0.0
    %7604 = vmatpush1.msra.mxu0 0.0
    %7605 = vmatprep.subr.mxu0 0.0
    %7606 = vmatpush1.msra.mxu0 0.0
    %7607 = vmatprep.subr.mxu0 0.0
    %7608 = vmatpush1.msra.mxu0 0.0
    %7609 = vmatprep.subr.mxu0 0.0
    %7610 = vmatpush1.msra.mxu0 0.0
    %7611 = vmatprep.subr.mxu0 0.0
    %7612 = vmatpush1.msra.mxu0 0.0
    %7613 = vmatprep.subr.mxu0 0.0
    %7614 = vmatpush1.msra.mxu0 0.0
    %7615 = vmatprep.subr.mxu0 0.0
    %7616 = vmatpush1.msra.mxu0 0.0
    %7617 = vmatprep.subr.mxu0 0.0
    %7618 = vmatpush1.msra.mxu0 0.0
    %7619 = vmatprep.subr.mxu0 0.0
    %7620 = vmatpush1.msra.mxu0 0.0
    %7621 = vmatprep.subr.mxu0 0.0
    %7622 = vmatpush1.msra.mxu0 0.0
    %7623 = vmatprep.subr.mxu0 0.0
    %7624 = vmatpush1.msra.mxu0 0.0
    %7625 = vmatprep.subr.mxu0 0.0
    %7626 = vmatpush1.msra.mxu0 0.0
    %7627 = vmatprep.subr.mxu0 0.0
    %7628 = vmatpush1.msra.mxu0 %v6898
    %7629 = vmatprep.subr.mxu0 0.0
    %7630 = vmatpush1.msra.mxu0 %v6892
    %7631 = vmatprep.subr.mxu0 0.0
    %7632 = vmatpush2.msra.mxu0 0.0
    %7633 = vmatprep.subr.mxu0 0.0
    %7634 = vmatpush2.msra.mxu0 0.0
    %7635 = vmatprep.subr.mxu0 0.0
    %7636 = vmatpush2.msra.mxu0 0.0
    %7637 = vmatprep.subr.mxu0 0.0
    %7638 = vmatpush2.msra.mxu0 0.0
    %7639 = vmatprep.subr.mxu0 0.0
    %7640 = vmatpush2.msra.mxu0 0.0
    %7641 = vmatprep.subr.mxu0 0.0
    %7642 = vmatpush2.msra.mxu0 0.0
    %7643 = vmatprep.subr.mxu0 0.0
    %7644 = vmatpush2.msra.mxu0 0.0
    %7645 = vmatprep.subr.mxu0 0.0
    %7646 = vmatpush2.msra.mxu0 0.0
    %7647 = vmatprep.subr.mxu0 0.0
    %7648 = vmatpush2.msra.mxu0 0.0
    %7649 = vmatprep.subr.mxu0 0.0
    %7650 = vmatpush2.msra.mxu0 0.0
    %7651 = vmatprep.subr.mxu0 0.0
    %7652 = vmatpush2.msra.mxu0 0.0
    %7653 = vmatprep.subr.mxu0 0.0
    %7654 = vmatpush2.msra.mxu0 0.0
    %7655 = vmatprep.subr.mxu0 0.0
    %7656 = vmatpush2.msra.mxu0 0.0
    %7657 = vmatprep.subr.mxu0 0.0
    %7658 = vmatpush2.msra.mxu0 0.0
    %7659 = vmatprep.subr.mxu0 0.0
    %7660 = vmatpush2.msra.mxu0 0.0
    %7661 = vmatprep.subr.mxu0 0.0
    %7662 = vmatpush2.msra.mxu0 0.0
    %7663 = vmatprep.mubr.f32.mxu0 0.0
    %7664 = vmatmul.mubr.f32.gmra.mxu0 %v7594
    %v7665 = vpop.f32.mrf.mxu0
    %v7666 = vadd.f32 0.0, %v7665
    %v7667 = vpop.f32.mrf.mxu0
    %7668 = vmatprep.mubr.f32.mxu0 0.0
    %7669 = vmatmul.mubr.f32.gmra.mxu0 %v7597
    %v7670 = vpop.f32.mrf.mxu0
    %v7671 = vadd.f32 0.0, %v7670
    %v7672 = vpop.f32.mrf.mxu0
    %7673 = vdwg.mxu0
    %v7674 = vrcp.pop %v7589
    %v7675 = vrcp.pop %v7592
    %v7676 = vmul.f32 %v7666, %v7674
    %v7677 = vmul.f32 %v7671, %v7675
    %7678 = vset.pattern.permute.xlu0 2
    %7679 = vperm.xlu0 %7678, %v7260
    %v7680 = vpop.permute.xlu0 %7679
    %7682 = vset.pattern.permute.xlu0 2
    %7683 = vperm.xlu0 %7682, %v7265
    %v7684 = vpop.permute.xlu0 %7683
    %v7686 = vlaneseq
    %v7687 = vshrl.u32 %v7686, 7
    %v7688 = vsub.s32 2, %v7687
    %v7689 = vrot.slane %v7413, %v7688
    %v7690 = vadd.f32 %v7680, %v7689
    %v7691 = vadd.f32 %v7684, %v7689
    %v7692 = vstv %s7418
    %v7693 = vmul.f32 %v7692, %v465
    %v7694 = vmul.f32 %v7692, %v466
    %v7695 = vadd.f32 %v7690, %v7693
    %v7696 = vadd.f32 %v7691, %v7694
    %v7697 = vmul.f32 %v7695, 0.2
    %v7698 = vmul.f32 %v7696, 0.2
    %v7699 = vmax.f32 %v7695, %v7697
    %v7700 = vmax.f32 %v7696, %v7698
    %v7701 = vadd.f32 %v7699, %v469
    %v7702 = vadd.f32 %v7700, %v470
    %v7703 = vsel %vm1281, %v7701, -inf
    %7704 = vmax.xlane.f32.xlu0 %v7703
    %v7705 = vpop.xlane.xlu0 %7704
    %v7706 = vsel %vm1281, %v7702, -inf
    %7707 = vmax.xlane.f32.xlu0 %v7706
    %v7708 = vpop.xlane.xlu0 %7707
    %v7709 = vsub.f32 %v7701, %v7705
    %v7710 = vsub.f32 %v7702, %v7708
    %v7711 = vmul.f32 %v7709, 1.442695
    %v7712 = vpow.pop %v7711
    %v7713 = vmul.f32 %v7710, 1.442695
    %v7714 = vpow.pop %v7713
    %v7715 = vsel %vm1281, %v7712, 0.0
    %7716 = vadd.xlane.f32.xlu0 %v7715
    %v7717 = vpop.xlane.xlu0 %7716
    %v7718 = vsel %vm1281, %v7714, 0.0
    %7719 = vadd.xlane.f32.xlu0 %v7718
    %v7720 = vpop.xlane.xlu0 %7719
    %v7722 = vsel %vm1281, %v7712, 0
    %v7725 = vsel %vm1281, %v7714, 0
    %7727 = vmatprep.subr.mxu0 0.0
    %7728 = vmatpush1.msra.mxu0 0.0
    %7729 = vmatprep.subr.mxu0 0.0
    %7730 = vmatpush1.msra.mxu0 0.0
    %7731 = vmatprep.subr.mxu0 0.0
    %7732 = vmatpush1.msra.mxu0 0.0
    %7733 = vmatprep.subr.mxu0 0.0
    %7734 = vmatpush1.msra.mxu0 0.0
    %7735 = vmatprep.subr.mxu0 0.0
    %7736 = vmatpush1.msra.mxu0 0.0
    %7737 = vmatprep.subr.mxu0 0.0
    %7738 = vmatpush1.msra.mxu0 0.0
    %7739 = vmatprep.subr.mxu0 0.0
    %7740 = vmatpush1.msra.mxu0 0.0
    %7741 = vmatprep.subr.mxu0 0.0
    %7742 = vmatpush1.msra.mxu0 0.0
    %7743 = vmatprep.subr.mxu0 0.0
    %7744 = vmatpush1.msra.mxu0 0.0
    %7745 = vmatprep.subr.mxu0 0.0
    %7746 = vmatpush1.msra.mxu0 0.0
    %7747 = vmatprep.subr.mxu0 0.0
    %7748 = vmatpush1.msra.mxu0 0.0
    %7749 = vmatprep.subr.mxu0 0.0
    %7750 = vmatpush1.msra.mxu0 0.0
    %7751 = vmatprep.subr.mxu0 0.0
    %7752 = vmatpush1.msra.mxu0 0.0
    %7753 = vmatprep.subr.mxu0 0.0
    %7754 = vmatpush1.msra.mxu0 0.0
    %7755 = vmatprep.subr.mxu0 0.0
    %7756 = vmatpush1.msra.mxu0 %v7050
    %7757 = vmatprep.subr.mxu0 0.0
    %7758 = vmatpush1.msra.mxu0 %v7044
    %7759 = vmatprep.subr.mxu0 0.0
    %7760 = vmatpush2.msra.mxu0 0.0
    %7761 = vmatprep.subr.mxu0 0.0
    %7762 = vmatpush2.msra.mxu0 0.0
    %7763 = vmatprep.subr.mxu0 0.0
    %7764 = vmatpush2.msra.mxu0 0.0
    %7765 = vmatprep.subr.mxu0 0.0
    %7766 = vmatpush2.msra.mxu0 0.0
    %7767 = vmatprep.subr.mxu0 0.0
    %7768 = vmatpush2.msra.mxu0 0.0
    %7769 = vmatprep.subr.mxu0 0.0
    %7770 = vmatpush2.msra.mxu0 0.0
    %7771 = vmatprep.subr.mxu0 0.0
    %7772 = vmatpush2.msra.mxu0 0.0
    %7773 = vmatprep.subr.mxu0 0.0
    %7774 = vmatpush2.msra.mxu0 0.0
    %7775 = vmatprep.subr.mxu0 0.0
    %7776 = vmatpush2.msra.mxu0 0.0
    %7777 = vmatprep.subr.mxu0 0.0
    %7778 = vmatpush2.msra.mxu0 0.0
    %7779 = vmatprep.subr.mxu0 0.0
    %7780 = vmatpush2.msra.mxu0 0.0
    %7781 = vmatprep.subr.mxu0 0.0
    %7782 = vmatpush2.msra.mxu0 0.0
    %7783 = vmatprep.subr.mxu0 0.0
    %7784 = vmatpush2.msra.mxu0 0.0
    %7785 = vmatprep.subr.mxu0 0.0
    %7786 = vmatpush2.msra.mxu0 0.0
    %7787 = vmatprep.subr.mxu0 0.0
    %7788 = vmatpush2.msra.mxu0 0.0
    %7789 = vmatprep.subr.mxu0 0.0
    %7790 = vmatpush2.msra.mxu0 0.0
    %7791 = vmatprep.mubr.f32.mxu0 0.0
    %7792 = vmatmul.mubr.f32.gmra.mxu0 %v7722
    %v7793 = vpop.f32.mrf.mxu0
    %v7794 = vadd.f32 0.0, %v7793
    %v7795 = vpop.f32.mrf.mxu0
    %7796 = vmatprep.mubr.f32.mxu0 0.0
    %7797 = vmatmul.mubr.f32.gmra.mxu0 %v7725
    %v7798 = vpop.f32.mrf.mxu0
    %v7799 = vadd.f32 0.0, %v7798
    %v7800 = vpop.f32.mrf.mxu0
    %7801 = vdwg.mxu0
    %v7802 = vrcp.pop %v7717
    %v7803 = vrcp.pop %v7720
    %v7804 = vmul.f32 %v7794, %v7802
    %v7805 = vmul.f32 %v7799, %v7803
    %7806 = vset.pattern.permute.xlu0 3
    %7807 = vperm.xlu0 %7806, %v7260
    %v7808 = vpop.permute.xlu0 %7807
    %7810 = vset.pattern.permute.xlu0 3
    %7811 = vperm.xlu0 %7810, %v7265
    %v7812 = vpop.permute.xlu0 %7811
    %v7814 = vlaneseq
    %v7815 = vshrl.u32 %v7814, 7
    %v7816 = vsub.s32 3, %v7815
    %v7817 = vrot.slane %v7413, %v7816
    %v7818 = vadd.f32 %v7808, %v7817
    %v7819 = vadd.f32 %v7812, %v7817
    %v7820 = vstv %s7419
    %v7821 = vmul.f32 %v7820, %v465
    %v7822 = vmul.f32 %v7820, %v466
    %v7823 = vadd.f32 %v7818, %v7821
    %v7824 = vadd.f32 %v7819, %v7822
    %v7825 = vmul.f32 %v7823, 0.2
    %v7826 = vmul.f32 %v7824, 0.2
    %v7827 = vmax.f32 %v7823, %v7825
    %v7828 = vmax.f32 %v7824, %v7826
    %v7829 = vadd.f32 %v7827, %v469
    %v7830 = vadd.f32 %v7828, %v470
    %v7831 = vsel %vm1281, %v7829, -inf
    %7832 = vmax.xlane.f32.xlu0 %v7831
    %v7833 = vpop.xlane.xlu0 %7832
    %v7834 = vsel %vm1281, %v7830, -inf
    %7835 = vmax.xlane.f32.xlu0 %v7834
    %v7836 = vpop.xlane.xlu0 %7835
    %v7837 = vsub.f32 %v7829, %v7833
    %v7838 = vsub.f32 %v7830, %v7836
    %v7839 = vmul.f32 %v7837, 1.442695
    %v7840 = vpow.pop %v7839
    %v7841 = vmul.f32 %v7838, 1.442695
    %v7842 = vpow.pop %v7841
    %v7843 = vsel %vm1281, %v7840, 0.0
    %7844 = vadd.xlane.f32.xlu0 %v7843
    %v7845 = vpop.xlane.xlu0 %7844
    %v7846 = vsel %vm1281, %v7842, 0.0
    %7847 = vadd.xlane.f32.xlu0 %v7846
    %v7848 = vpop.xlane.xlu0 %7847
    %v7850 = vsel %vm1281, %v7840, 0
    %v7853 = vsel %vm1281, %v7842, 0
    %7855 = vmatprep.subr.mxu0 0.0
    %7856 = vmatpush1.msra.mxu0 0.0
    %7857 = vmatprep.subr.mxu0 0.0
    %7858 = vmatpush1.msra.mxu0 0.0
    %7859 = vmatprep.subr.mxu0 0.0
    %7860 = vmatpush1.msra.mxu0 0.0
    %7861 = vmatprep.subr.mxu0 0.0
    %7862 = vmatpush1.msra.mxu0 0.0
    %7863 = vmatprep.subr.mxu0 0.0
    %7864 = vmatpush1.msra.mxu0 0.0
    %7865 = vmatprep.subr.mxu0 0.0
    %7866 = vmatpush1.msra.mxu0 0.0
    %7867 = vmatprep.subr.mxu0 0.0
    %7868 = vmatpush1.msra.mxu0 0.0
    %7869 = vmatprep.subr.mxu0 0.0
    %7870 = vmatpush1.msra.mxu0 0.0
    %7871 = vmatprep.subr.mxu0 0.0
    %7872 = vmatpush1.msra.mxu0 0.0
    %7873 = vmatprep.subr.mxu0 0.0
    %7874 = vmatpush1.msra.mxu0 0.0
    %7875 = vmatprep.subr.mxu0 0.0
    %7876 = vmatpush1.msra.mxu0 0.0
    %7877 = vmatprep.subr.mxu0 0.0
    %7878 = vmatpush1.msra.mxu0 0.0
    %7879 = vmatprep.subr.mxu0 0.0
    %7880 = vmatpush1.msra.mxu0 0.0
    %7881 = vmatprep.subr.mxu0 0.0
    %7882 = vmatpush1.msra.mxu0 0.0
    %7883 = vmatprep.subr.mxu0 0.0
    %7884 = vmatpush1.msra.mxu0 %v7052
    %7885 = vmatprep.subr.mxu0 0.0
    %7886 = vmatpush1.msra.mxu0 %v7046
    %7887 = vmatprep.subr.mxu0 0.0
    %7888 = vmatpush2.msra.mxu0 0.0
    %7889 = vmatprep.subr.mxu0 0.0
    %7890 = vmatpush2.msra.mxu0 0.0
    %7891 = vmatprep.subr.mxu0 0.0
    %7892 = vmatpush2.msra.mxu0 0.0
    %7893 = vmatprep.subr.mxu0 0.0
    %7894 = vmatpush2.msra.mxu0 0.0
    %7895 = vmatprep.subr.mxu0 0.0
    %7896 = vmatpush2.msra.mxu0 0.0
    %7897 = vmatprep.subr.mxu0 0.0
    %7898 = vmatpush2.msra.mxu0 0.0
    %7899 = vmatprep.subr.mxu0 0.0
    %7900 = vmatpush2.msra.mxu0 0.0
    %7901 = vmatprep.subr.mxu0 0.0
    %7902 = vmatpush2.msra.mxu0 0.0
    %7903 = vmatprep.subr.mxu0 0.0
    %7904 = vmatpush2.msra.mxu0 0.0
    %7905 = vmatprep.subr.mxu0 0.0
    %7906 = vmatpush2.msra.mxu0 0.0
    %7907 = vmatprep.subr.mxu0 0.0
    %7908 = vmatpush2.msra.mxu0 0.0
    %7909 = vmatprep.subr.mxu0 0.0
    %7910 = vmatpush2.msra.mxu0 0.0
    %7911 = vmatprep.subr.mxu0 0.0
    %7912 = vmatpush2.msra.mxu0 0.0
    %7913 = vmatprep.subr.mxu0 0.0
    %7914 = vmatpush2.msra.mxu0 0.0
    %7915 = vmatprep.subr.mxu0 0.0
    %7916 = vmatpush2.msra.mxu0 0.0
    %7917 = vmatprep.subr.mxu0 0.0
    %7918 = vmatpush2.msra.mxu0 0.0
    %7919 = vmatprep.mubr.f32.mxu0 0.0
    %7920 = vmatmul.mubr.f32.gmra.mxu0 %v7850
    %v7921 = vpop.f32.mrf.mxu0
    %v7922 = vadd.f32 0.0, %v7921
    %v7923 = vpop.f32.mrf.mxu0
    %7924 = vmatprep.mubr.f32.mxu0 0.0
    %7925 = vmatmul.mubr.f32.gmra.mxu0 %v7853
    %v7926 = vpop.f32.mrf.mxu0
    %v7927 = vadd.f32 0.0, %v7926
    %v7928 = vpop.f32.mrf.mxu0
    %7929 = vdwg.mxu0
    %v7930 = vrcp.pop %v7845
    %v7931 = vrcp.pop %v7848
    %v7932 = vmul.f32 %v7922, %v7930
    %v7933 = vmul.f32 %v7927, %v7931
    %v7934 = vld [vmem:[#allocation29] sm:$0xf]
    %v7936 = vlaneseq
    %v7937 = vshrl.u32 %v7936, 7
    %v7938 = vsub.s32 0, %v7937
    %v7939 = vrot.slane %v7934, %v7938
    %v7940 = vlaneseq
    %v7941 = vshrl.u32 %v7940, 7
    %v7942 = vsub.s32 1, %v7941
    %v7943 = vrot.slane %v7934, %v7942
    %v7944 = vlaneseq
    %v7945 = vshrl.u32 %v7944, 7
    %v7946 = vsub.s32 2, %v7945
    %v7947 = vrot.slane %v7934, %v7946
    %v7948 = vlaneseq
    %v7949 = vshrl.u32 %v7948, 7
    %v7950 = vsub.s32 3, %v7949
    %v7951 = vrot.slane %v7934, %v7950
    %v7956 = vadd.f32 %v7548, %v7939
    %v7957 = vadd.f32 %v7676, %v7943
    %v7958 = vadd.f32 %v7804, %v7947
    %v7959 = vadd.f32 %v7932, %v7951
    %v7960 = vadd.f32 %v7549, %v7939
    %v7961 = vadd.f32 %v7677, %v7943
    %v7962 = vadd.f32 %v7805, %v7947
    %v7963 = vadd.f32 %v7933, %v7951
    %v7964 = vmax.f32 %v7956, 0.0
    %v7965 = vmax.f32 %v7957, 0.0
    %v7966 = vmax.f32 %v7958, 0.0
    %v7967 = vmax.f32 %v7959, 0.0
    %v7968 = vmax.f32 %v7960, 0.0
    %v7969 = vmax.f32 %v7961, 0.0
    %v7970 = vmax.f32 %v7962, 0.0
    %v7971 = vmax.f32 %v7963, 0.0
    %v7972 = vld [vmem:[#allocation33] sm:$0xff]
    %v7973 = vld [vmem:[#allocation33 + $0x8] sm:$0xff]
    %v7974 = vld [vmem:[#allocation33 + $0x10] sm:$0xff]
    %v7975 = vld [vmem:[#allocation33 + $0x18] sm:$0xff]
    %v7976 = vld [vmem:[#allocation33 + $0x20] sm:$0xff]
    %v7977 = vld [vmem:[#allocation33 + $0x28] sm:$0xff]
    %v7978 = vld [vmem:[#allocation33 + $0x30] sm:$0xff]
    %v7979 = vld [vmem:[#allocation33 + $0x38] sm:$0xff]
    %v7980 = vld [vmem:[#allocation33 + $0x40] sm:$0xff]
    %v7981 = vld [vmem:[#allocation33 + $0x48] sm:$0xff]
    %v7982 = vld [vmem:[#allocation33 + $0x50] sm:$0xff]
    %v7983 = vld [vmem:[#allocation33 + $0x58] sm:$0xff]
    %v7984 = vld [vmem:[#allocation33 + $0x60] sm:$0xff]
    %v7985 = vld [vmem:[#allocation33 + $0x68] sm:$0xff]
    %v7986 = vld [vmem:[#allocation33 + $0x70] sm:$0xff]
    %v7987 = vld [vmem:[#allocation33 + $0x78] sm:$0xff]
    %v7988 = vld [vmem:[#allocation33 + $0x80] sm:$0xff]
    %v7989 = vld [vmem:[#allocation33 + $0x88] sm:$0xff]
    %v7990 = vld [vmem:[#allocation33 + $0x90] sm:$0xff]
    %v7991 = vld [vmem:[#allocation33 + $0x98] sm:$0xff]
    %v7992 = vld [vmem:[#allocation33 + $0xa0] sm:$0xff]
    %v7993 = vld [vmem:[#allocation33 + $0xa8] sm:$0xff]
    %v7994 = vld [vmem:[#allocation33 + $0xb0] sm:$0xff]
    %v7995 = vld [vmem:[#allocation33 + $0xb8] sm:$0xff]
    %v7996 = vld [vmem:[#allocation33 + $0xc0] sm:$0xff]
    %v7997 = vld [vmem:[#allocation33 + $0xc8] sm:$0xff]
    %v7998 = vld [vmem:[#allocation33 + $0xd0] sm:$0xff]
    %v7999 = vld [vmem:[#allocation33 + $0xd8] sm:$0xff]
    %v8000 = vld [vmem:[#allocation33 + $0xe0] sm:$0xff]
    %v8001 = vld [vmem:[#allocation33 + $0xe8] sm:$0xff]
    %v8002 = vld [vmem:[#allocation33 + $0xf0] sm:$0xff]
    %v8003 = vld [vmem:[#allocation33 + $0xf8] sm:$0xff]
    %v8004 = vld [vmem:[#allocation33 + $0x100] sm:$0xff]
    %v8005 = vld [vmem:[#allocation33 + $0x108] sm:$0xff]
    %v8006 = vld [vmem:[#allocation33 + $0x110] sm:$0xff]
    %v8007 = vld [vmem:[#allocation33 + $0x118] sm:$0xff]
    %v8008 = vld [vmem:[#allocation33 + $0x120] sm:$0xff]
    %v8009 = vld [vmem:[#allocation33 + $0x128] sm:$0xff]
    %v8010 = vld [vmem:[#allocation33 + $0x130] sm:$0xff]
    %v8011 = vld [vmem:[#allocation33 + $0x138] sm:$0xff]
    %v8012 = vld [vmem:[#allocation33 + $0x140] sm:$0xff]
    %v8013 = vld [vmem:[#allocation33 + $0x148] sm:$0xff]
    %v8014 = vld [vmem:[#allocation33 + $0x150] sm:$0xff]
    %v8015 = vld [vmem:[#allocation33 + $0x158] sm:$0xff]
    %v8016 = vld [vmem:[#allocation33 + $0x160] sm:$0xff]
    %v8017 = vld [vmem:[#allocation33 + $0x168] sm:$0xff]
    %v8018 = vld [vmem:[#allocation33 + $0x170] sm:$0xff]
    %v8019 = vld [vmem:[#allocation33 + $0x178] sm:$0xff]
    %v8020 = vld [vmem:[#allocation33 + $0x180] sm:$0xff]
    %v8021 = vld [vmem:[#allocation33 + $0x188] sm:$0xff]
    %v8022 = vld [vmem:[#allocation33 + $0x190] sm:$0xff]
    %v8023 = vld [vmem:[#allocation33 + $0x198] sm:$0xff]
    %v8024 = vld [vmem:[#allocation33 + $0x1a0] sm:$0xff]
    %v8025 = vld [vmem:[#allocation33 + $0x1a8] sm:$0xff]
    %v8026 = vld [vmem:[#allocation33 + $0x1b0] sm:$0xff]
    %v8027 = vld [vmem:[#allocation33 + $0x1b8] sm:$0xff]
    %v8028 = vld [vmem:[#allocation33 + $0x1c0] sm:$0xff]
    %v8029 = vld [vmem:[#allocation33 + $0x1c8] sm:$0xff]
    %v8030 = vld [vmem:[#allocation33 + $0x1d0] sm:$0xff]
    %v8031 = vld [vmem:[#allocation33 + $0x1d8] sm:$0xff]
    %v8032 = vld [vmem:[#allocation33 + $0x1e0] sm:$0xff]
    %v8033 = vld [vmem:[#allocation33 + $0x1e8] sm:$0xff]
    %v8034 = vld [vmem:[#allocation33 + $0x1f0] sm:$0xff]
    %v8035 = vld [vmem:[#allocation33 + $0x1f8] sm:$0xff]
    %8036 = vmatprep.subr.mxu0 0.0
    %8037 = vmatpush1.msra.mxu0 %v7987
    %8038 = vmatprep.subr.mxu0 0.0
    %8039 = vmatpush1.msra.mxu0 %v7986
    %8040 = vmatprep.subr.mxu0 0.0
    %8041 = vmatpush1.msra.mxu0 %v7985
    %8042 = vmatprep.subr.mxu0 0.0
    %8043 = vmatpush1.msra.mxu0 %v7984
    %8044 = vmatprep.subr.mxu0 0.0
    %8045 = vmatpush1.msra.mxu0 %v7983
    %8046 = vmatprep.subr.mxu0 0.0
    %8047 = vmatpush1.msra.mxu0 %v7982
    %8048 = vmatprep.subr.mxu0 0.0
    %8049 = vmatpush1.msra.mxu0 %v7981
    %8050 = vmatprep.subr.mxu0 0.0
    %8051 = vmatpush1.msra.mxu0 %v7980
    %8052 = vmatprep.subr.mxu0 0.0
    %8053 = vmatpush1.msra.mxu0 %v7979
    %8054 = vmatprep.subr.mxu0 0.0
    %8055 = vmatpush1.msra.mxu0 %v7978
    %8056 = vmatprep.subr.mxu0 0.0
    %8057 = vmatpush1.msra.mxu0 %v7977
    %8058 = vmatprep.subr.mxu0 0.0
    %8059 = vmatpush1.msra.mxu0 %v7976
    %8060 = vmatprep.subr.mxu0 0.0
    %8061 = vmatpush1.msra.mxu0 %v7975
    %8062 = vmatprep.subr.mxu0 0.0
    %8063 = vmatpush1.msra.mxu0 %v7974
    %8064 = vmatprep.subr.mxu0 0.0
    %8065 = vmatpush1.msra.mxu0 %v7973
    %8066 = vmatprep.subr.mxu0 0.0
    %8067 = vmatpush1.msra.mxu0 %v7972
    %8068 = vmatprep.subr.mxu0 0.0
    %8069 = vmatpush2.msra.mxu0 %v8003
    %8070 = vmatprep.subr.mxu0 0.0
    %8071 = vmatpush2.msra.mxu0 %v8002
    %8072 = vmatprep.subr.mxu0 0.0
    %8073 = vmatpush2.msra.mxu0 %v8001
    %8074 = vmatprep.subr.mxu0 0.0
    %8075 = vmatpush2.msra.mxu0 %v8000
    %8076 = vmatprep.subr.mxu0 0.0
    %8077 = vmatpush2.msra.mxu0 %v7999
    %8078 = vmatprep.subr.mxu0 0.0
    %8079 = vmatpush2.msra.mxu0 %v7998
    %8080 = vmatprep.subr.mxu0 0.0
    %8081 = vmatpush2.msra.mxu0 %v7997
    %8082 = vmatprep.subr.mxu0 0.0
    %8083 = vmatpush2.msra.mxu0 %v7996
    %8084 = vmatprep.subr.mxu0 0.0
    %8085 = vmatpush2.msra.mxu0 %v7995
    %8086 = vmatprep.subr.mxu0 0.0
    %8087 = vmatpush2.msra.mxu0 %v7994
    %8088 = vmatprep.subr.mxu0 0.0
    %8089 = vmatpush2.msra.mxu0 %v7993
    %8090 = vmatprep.subr.mxu0 0.0
    %8091 = vmatpush2.msra.mxu0 %v7992
    %8092 = vmatprep.subr.mxu0 0.0
    %8093 = vmatpush2.msra.mxu0 %v7991
    %8094 = vmatprep.subr.mxu0 0.0
    %8095 = vmatpush2.msra.mxu0 %v7990
    %8096 = vmatprep.subr.mxu0 0.0
    %8097 = vmatpush2.msra.mxu0 %v7989
    %8098 = vmatprep.subr.mxu0 0.0
    %8099 = vmatpush2.msra.mxu0 %v7988
    %8100 = vmatprep.mubr.f32.mxu0 %v7965
    %8101 = vmatmul.mubr.f32.gmra.mxu0 %v7964
    %v8102 = vpop.f32.mrf.mxu0
    %v8103 = vadd.f32 0.0, %v8102
    %v8104 = vpop.f32.mrf.mxu0
    %8105 = vmatprep.mubr.f32.mxu0 %v7969
    %8106 = vmatmul.mubr.f32.gmra.mxu0 %v7968
    %v8107 = vpop.f32.mrf.mxu0
    %v8108 = vadd.f32 0.0, %v8107
    %v8109 = vpop.f32.mrf.mxu0
    %8110 = vdwg.mxu0
    %8111 = vmatprep.subr.mxu0 0.0
    %8112 = vmatpush1.msra.mxu0 %v8019
    %8113 = vmatprep.subr.mxu0 0.0
    %8114 = vmatpush1.msra.mxu0 %v8018
    %8115 = vmatprep.subr.mxu0 0.0
    %8116 = vmatpush1.msra.mxu0 %v8017
    %8117 = vmatprep.subr.mxu0 0.0
    %8118 = vmatpush1.msra.mxu0 %v8016
    %8119 = vmatprep.subr.mxu0 0.0
    %8120 = vmatpush1.msra.mxu0 %v8015
    %8121 = vmatprep.subr.mxu0 0.0
    %8122 = vmatpush1.msra.mxu0 %v8014
    %8123 = vmatprep.subr.mxu0 0.0
    %8124 = vmatpush1.msra.mxu0 %v8013
    %8125 = vmatprep.subr.mxu0 0.0
    %8126 = vmatpush1.msra.mxu0 %v8012
    %8127 = vmatprep.subr.mxu0 0.0
    %8128 = vmatpush1.msra.mxu0 %v8011
    %8129 = vmatprep.subr.mxu0 0.0
    %8130 = vmatpush1.msra.mxu0 %v8010
    %8131 = vmatprep.subr.mxu0 0.0
    %8132 = vmatpush1.msra.mxu0 %v8009
    %8133 = vmatprep.subr.mxu0 0.0
    %8134 = vmatpush1.msra.mxu0 %v8008
    %8135 = vmatprep.subr.mxu0 0.0
    %8136 = vmatpush1.msra.mxu0 %v8007
    %8137 = vmatprep.subr.mxu0 0.0
    %8138 = vmatpush1.msra.mxu0 %v8006
    %8139 = vmatprep.subr.mxu0 0.0
    %8140 = vmatpush1.msra.mxu0 %v8005
    %8141 = vmatprep.subr.mxu0 0.0
    %8142 = vmatpush1.msra.mxu0 %v8004
    %8143 = vmatprep.subr.mxu0 0.0
    %8144 = vmatpush2.msra.mxu0 %v8035
    %8145 = vmatprep.subr.mxu0 0.0
    %8146 = vmatpush2.msra.mxu0 %v8034
    %8147 = vmatprep.subr.mxu0 0.0
    %8148 = vmatpush2.msra.mxu0 %v8033
    %8149 = vmatprep.subr.mxu0 0.0
    %8150 = vmatpush2.msra.mxu0 %v8032
    %8151 = vmatprep.subr.mxu0 0.0
    %8152 = vmatpush2.msra.mxu0 %v8031
    %8153 = vmatprep.subr.mxu0 0.0
    %8154 = vmatpush2.msra.mxu0 %v8030
    %8155 = vmatprep.subr.mxu0 0.0
    %8156 = vmatpush2.msra.mxu0 %v8029
    %8157 = vmatprep.subr.mxu0 0.0
    %8158 = vmatpush2.msra.mxu0 %v8028
    %8159 = vmatprep.subr.mxu0 0.0
    %8160 = vmatpush2.msra.mxu0 %v8027
    %8161 = vmatprep.subr.mxu0 0.0
    %8162 = vmatpush2.msra.mxu0 %v8026
    %8163 = vmatprep.subr.mxu0 0.0
    %8164 = vmatpush2.msra.mxu0 %v8025
    %8165 = vmatprep.subr.mxu0 0.0
    %8166 = vmatpush2.msra.mxu0 %v8024
    %8167 = vmatprep.subr.mxu0 0.0
    %8168 = vmatpush2.msra.mxu0 %v8023
    %8169 = vmatprep.subr.mxu0 0.0
    %8170 = vmatpush2.msra.mxu0 %v8022
    %8171 = vmatprep.subr.mxu0 0.0
    %8172 = vmatpush2.msra.mxu0 %v8021
    %8173 = vmatprep.subr.mxu0 0.0
    %8174 = vmatpush2.msra.mxu0 %v8020
    %8175 = vmatprep.mubr.f32.mxu0 %v7967
    %8176 = vmatmul.mubr.f32.gmra.mxu0 %v7966
    %v8177 = vpop.f32.mrf.mxu0
    %v8178 = vadd.f32 %v8103, %v8177
    %v8179 = vpop.f32.mrf.mxu0
    %8180 = vmatprep.mubr.f32.mxu0 %v7971
    %8181 = vmatmul.mubr.f32.gmra.mxu0 %v7970
    %v8182 = vpop.f32.mrf.mxu0
    %v8183 = vadd.f32 %v8108, %v8182
    %v8184 = vpop.f32.mrf.mxu0
    %8185 = vdwg.mxu0
    %v8186 = vld [vmem:[%s51] sm:$0xff]
    %v8187 = vld [vmem:[%s51 + $0x8] sm:$0xff]
    %v8188 = vld [vmem:[%s51 + $0x10] sm:$0xff]
    %v8189 = vld [vmem:[%s51 + $0x18] sm:$0xff]
    %v8190 = vld [vmem:[%s51 + $0x20] sm:$0xff]
    %v8191 = vld [vmem:[%s51 + $0x28] sm:$0xff]
    %v8192 = vld [vmem:[%s51 + $0x30] sm:$0xff]
    %v8193 = vld [vmem:[%s51 + $0x38] sm:$0xff]
    %v8194 = vld [vmem:[%s51 + $0x40] sm:$0xff]
    %v8195 = vld [vmem:[%s51 + $0x48] sm:$0xff]
    %v8196 = vld [vmem:[%s51 + $0x50] sm:$0xff]
    %v8197 = vld [vmem:[%s51 + $0x58] sm:$0xff]
    %v8198 = vld [vmem:[%s51 + $0x60] sm:$0xff]
    %v8199 = vld [vmem:[%s51 + $0x68] sm:$0xff]
    %v8200 = vld [vmem:[%s51 + $0x70] sm:$0xff]
    %v8201 = vld [vmem:[%s51 + $0x78] sm:$0xff]
    %8202 = vmatprep.subr.mxu0 0.0
    %8203 = vmatpush1.msra.mxu0 %v8201
    %8204 = vmatprep.subr.mxu0 0.0
    %8205 = vmatpush1.msra.mxu0 %v8200
    %8206 = vmatprep.subr.mxu0 0.0
    %8207 = vmatpush1.msra.mxu0 %v8199
    %8208 = vmatprep.subr.mxu0 0.0
    %8209 = vmatpush1.msra.mxu0 %v8198
    %8210 = vmatprep.subr.mxu0 0.0
    %8211 = vmatpush1.msra.mxu0 %v8197
    %8212 = vmatprep.subr.mxu0 0.0
    %8213 = vmatpush1.msra.mxu0 %v8196
    %8214 = vmatprep.subr.mxu0 0.0
    %8215 = vmatpush1.msra.mxu0 %v8195
    %8216 = vmatprep.subr.mxu0 0.0
    %8217 = vmatpush1.msra.mxu0 %v8194
    %8218 = vmatprep.subr.mxu0 0.0
    %8219 = vmatpush1.msra.mxu0 %v8193
    %8220 = vmatprep.subr.mxu0 0.0
    %8221 = vmatpush1.msra.mxu0 %v8192
    %8222 = vmatprep.subr.mxu0 0.0
    %8223 = vmatpush1.msra.mxu0 %v8191
    %8224 = vmatprep.subr.mxu0 0.0
    %8225 = vmatpush1.msra.mxu0 %v8190
    %8226 = vmatprep.subr.mxu0 0.0
    %8227 = vmatpush1.msra.mxu0 %v8189
    %8228 = vmatprep.subr.mxu0 0.0
    %8229 = vmatpush1.msra.mxu0 %v8188
    %8230 = vmatprep.subr.mxu0 0.0
    %8231 = vmatpush1.msra.mxu0 %v8187
    %8232 = vmatprep.subr.mxu0 0.0
    %8233 = vmatpush1.msra.mxu0 %v8186
    %8234 = vmatprep.subr.mxu0 0.0
    %8235 = vmatpush2.msra.mxu0 0.0
    %8236 = vmatprep.subr.mxu0 0.0
    %8237 = vmatpush2.msra.mxu0 0.0
    %8238 = vmatprep.subr.mxu0 0.0
    %8239 = vmatpush2.msra.mxu0 0.0
    %8240 = vmatprep.subr.mxu0 0.0
    %8241 = vmatpush2.msra.mxu0 0.0
    %8242 = vmatprep.subr.mxu0 0.0
    %8243 = vmatpush2.msra.mxu0 0.0
    %8244 = vmatprep.subr.mxu0 0.0
    %8245 = vmatpush2.msra.mxu0 0.0
    %8246 = vmatprep.subr.mxu0 0.0
    %8247 = vmatpush2.msra.mxu0 0.0
    %8248 = vmatprep.subr.mxu0 0.0
    %8249 = vmatpush2.msra.mxu0 0.0
    %8250 = vmatprep.subr.mxu0 0.0
    %8251 = vmatpush2.msra.mxu0 0.0
    %8252 = vmatprep.subr.mxu0 0.0
    %8253 = vmatpush2.msra.mxu0 0.0
    %8254 = vmatprep.subr.mxu0 0.0
    %8255 = vmatpush2.msra.mxu0 0.0
    %8256 = vmatprep.subr.mxu0 0.0
    %8257 = vmatpush2.msra.mxu0 0.0
    %8258 = vmatprep.subr.mxu0 0.0
    %8259 = vmatpush2.msra.mxu0 0.0
    %8260 = vmatprep.subr.mxu0 0.0
    %8261 = vmatpush2.msra.mxu0 0.0
    %8262 = vmatprep.subr.mxu0 0.0
    %8263 = vmatpush2.msra.mxu0 0.0
    %8264 = vmatprep.subr.mxu0 0.0
    %8265 = vmatpush2.msra.mxu0 0.0
    %8266 = vmatprep.mubr.f32.mxu0 0.0
    %8267 = vmatmul.mubr.f32.gmra.mxu0 %v8178
    %v8268 = vpop.f32.mrf.mxu0
    %v8269 = vadd.f32 0.0, %v8268
    %v8270 = vpop.f32.mrf.mxu0
    %8271 = vmatprep.mubr.f32.mxu0 0.0
    %8272 = vmatmul.mubr.f32.gmra.mxu0 %v8183
    %v8273 = vpop.f32.mrf.mxu0
    %v8274 = vadd.f32 0.0, %v8273
    %v8275 = vpop.f32.mrf.mxu0
    %8276 = vdwg.mxu0
    %v8277 = vld [vmem:[#allocation34] sm:$0x1]
    %8278 = vmatprep.subr.mxu0 0.0
    %8279 = vmatpush1.xpose.msra.mxu0 0.0
    %8280 = vmatprep.subr.mxu0 0.0
    %8281 = vmatpush1.xpose.msra.mxu0 0.0
    %8282 = vmatprep.subr.mxu0 0.0
    %8283 = vmatpush1.xpose.msra.mxu0 0.0
    %8284 = vmatprep.subr.mxu0 0.0
    %8285 = vmatpush1.xpose.msra.mxu0 0.0
    %8286 = vmatprep.subr.mxu0 0.0
    %8287 = vmatpush1.xpose.msra.mxu0 0.0
    %8288 = vmatprep.subr.mxu0 0.0
    %8289 = vmatpush1.xpose.msra.mxu0 0.0
    %8290 = vmatprep.subr.mxu0 0.0
    %8291 = vmatpush1.xpose.msra.mxu0 0.0
    %8292 = vmatprep.subr.mxu0 0.0
    %8293 = vmatpush1.xpose.msra.mxu0 0.0
    %8294 = vmatprep.subr.mxu0 0.0
    %8295 = vmatpush1.xpose.msra.mxu0 0.0
    %8296 = vmatprep.subr.mxu0 0.0
    %8297 = vmatpush1.xpose.msra.mxu0 0.0
    %8298 = vmatprep.subr.mxu0 0.0
    %8299 = vmatpush1.xpose.msra.mxu0 0.0
    %8300 = vmatprep.subr.mxu0 0.0
    %8301 = vmatpush1.xpose.msra.mxu0 0.0
    %8302 = vmatprep.subr.mxu0 0.0
    %8303 = vmatpush1.xpose.msra.mxu0 0.0
    %8304 = vmatprep.subr.mxu0 0.0
    %8305 = vmatpush1.xpose.msra.mxu0 0.0
    %8306 = vmatprep.subr.mxu0 0.0
    %8307 = vmatpush1.xpose.msra.mxu0 %v8183
    %8308 = vmatprep.subr.mxu0 0.0
    %8309 = vmatpush1.xpose.msra.mxu0 %v8178
    %8310 = vmatprep.subr.mxu0 0.0
    %8311 = vmatpush2.xpose.msra.mxu0 0.0
    %8312 = vmatprep.subr.mxu0 0.0
    %8313 = vmatpush2.xpose.msra.mxu0 0.0
    %8314 = vmatprep.subr.mxu0 0.0
    %8315 = vmatpush2.xpose.msra.mxu0 0.0
    %8316 = vmatprep.subr.mxu0 0.0
    %8317 = vmatpush2.xpose.msra.mxu0 0.0
    %8318 = vmatprep.subr.mxu0 0.0
    %8319 = vmatpush2.xpose.msra.mxu0 0.0
    %8320 = vmatprep.subr.mxu0 0.0
    %8321 = vmatpush2.xpose.msra.mxu0 0.0
    %8322 = vmatprep.subr.mxu0 0.0
    %8323 = vmatpush2.xpose.msra.mxu0 0.0
    %8324 = vmatprep.subr.mxu0 0.0
    %8325 = vmatpush2.xpose.msra.mxu0 0.0
    %8326 = vmatprep.subr.mxu0 0.0
    %8327 = vmatpush2.xpose.msra.mxu0 0.0
    %8328 = vmatprep.subr.mxu0 0.0
    %8329 = vmatpush2.xpose.msra.mxu0 0.0
    %8330 = vmatprep.subr.mxu0 0.0
    %8331 = vmatpush2.xpose.msra.mxu0 0.0
    %8332 = vmatprep.subr.mxu0 0.0
    %8333 = vmatpush2.xpose.msra.mxu0 0.0
    %8334 = vmatprep.subr.mxu0 0.0
    %8335 = vmatpush2.xpose.msra.mxu0 0.0
    %8336 = vmatprep.subr.mxu0 0.0
    %8337 = vmatpush2.xpose.msra.mxu0 0.0
    %8338 = vmatprep.subr.mxu0 0.0
    %8339 = vmatpush2.xpose.msra.mxu0 0.0
    %8340 = vmatprep.subr.mxu0 0.0
    %8341 = vmatpush2.xpose.msra.mxu0 0.0
    %8342 = vmatprep.mubr.f32.mxu0 0.0
    %8343 = vmatmul.mubr.f32.gmra.mxu0 %v8277
    %v8344 = vpop.f32.mrf.mxu0
    %v8345 = vadd.f32 0.0, %v8344
    %v8346 = vpop.f32.mrf.mxu0
    %8347 = vdwg.mxu0
    %s8348 = sld [smem:[#allocation2]]
    %8350 = vset.pattern.permute.xlu0 0
    %8351 = vperm.xlu0 %8350, %v8269
    %v8352 = vpop.permute.xlu0 %8351
    %8355 = vset.pattern.permute.xlu0 0
    %8356 = vperm.xlu0 %8355, %v8274
    %v8357 = vpop.permute.xlu0 %8356
    %v8359 = vlaneseq
    %v8360 = vshrl.u32 %v8359, 7
    %v8361 = vsub.s32 0, %v8360
    %v8362 = vrot.slane %v8345, %v8361
    %v8363 = vadd.f32 %v8352, %v8362
    %v8364 = vadd.f32 %v8357, %v8362
    %v8365 = vstv %s8348
    %v8366 = vmul.f32 %v8365, %v465
    %v8367 = vmul.f32 %v8365, %v466
    %v8368 = vadd.f32 %v8363, %v8366
    %v8369 = vadd.f32 %v8364, %v8367
    %v8370 = vmul.f32 %v8368, 0.2
    %v8371 = vmul.f32 %v8369, 0.2
    %v8372 = vmax.f32 %v8368, %v8370
    %v8373 = vmax.f32 %v8369, %v8371
    %v8374 = vadd.f32 %v8372, %v469
    %v8375 = vadd.f32 %v8373, %v470
    %v8376 = vsel %vm1281, %v8374, -inf
    %8377 = vmax.xlane.f32.xlu0 %v8376
    %v8378 = vpop.xlane.xlu0 %8377
    %v8379 = vsel %vm1281, %v8375, -inf
    %8380 = vmax.xlane.f32.xlu0 %v8379
    %v8381 = vpop.xlane.xlu0 %8380
    %v8382 = vsub.f32 %v8374, %v8378
    %v8383 = vsub.f32 %v8375, %v8381
    %v8384 = vmul.f32 %v8382, 1.442695
    %v8385 = vpow.pop %v8384
    %v8386 = vmul.f32 %v8383, 1.442695
    %v8387 = vpow.pop %v8386
    %v8388 = vsel %vm1281, %v8385, 0.0
    %8389 = vadd.xlane.f32.xlu0 %v8388
    %v8390 = vpop.xlane.xlu0 %8389
    %v8391 = vsel %vm1281, %v8387, 0.0
    %8392 = vadd.xlane.f32.xlu0 %v8391
    %v8393 = vpop.xlane.xlu0 %8392
    %v8395 = vsel %vm1281, %v8385, 0
    %v8398 = vsel %vm1281, %v8387, 0
    %8400 = vmatprep.subr.mxu0 0.0
    %8401 = vmatpush1.msra.mxu0 0.0
    %8402 = vmatprep.subr.mxu0 0.0
    %8403 = vmatpush1.msra.mxu0 0.0
    %8404 = vmatprep.subr.mxu0 0.0
    %8405 = vmatpush1.msra.mxu0 0.0
    %8406 = vmatprep.subr.mxu0 0.0
    %8407 = vmatpush1.msra.mxu0 0.0
    %8408 = vmatprep.subr.mxu0 0.0
    %8409 = vmatpush1.msra.mxu0 0.0
    %8410 = vmatprep.subr.mxu0 0.0
    %8411 = vmatpush1.msra.mxu0 0.0
    %8412 = vmatprep.subr.mxu0 0.0
    %8413 = vmatpush1.msra.mxu0 0.0
    %8414 = vmatprep.subr.mxu0 0.0
    %8415 = vmatpush1.msra.mxu0 0.0
    %8416 = vmatprep.subr.mxu0 0.0
    %8417 = vmatpush1.msra.mxu0 0.0
    %8418 = vmatprep.subr.mxu0 0.0
    %8419 = vmatpush1.msra.mxu0 0.0
    %8420 = vmatprep.subr.mxu0 0.0
    %8421 = vmatpush1.msra.mxu0 0.0
    %8422 = vmatprep.subr.mxu0 0.0
    %8423 = vmatpush1.msra.mxu0 0.0
    %8424 = vmatprep.subr.mxu0 0.0
    %8425 = vmatpush1.msra.mxu0 0.0
    %8426 = vmatprep.subr.mxu0 0.0
    %8427 = vmatpush1.msra.mxu0 0.0
    %8428 = vmatprep.subr.mxu0 0.0
    %8429 = vmatpush1.msra.mxu0 %v8183
    %8430 = vmatprep.subr.mxu0 0.0
    %8431 = vmatpush1.msra.mxu0 %v8178
    %8432 = vmatprep.subr.mxu0 0.0
    %8433 = vmatpush2.msra.mxu0 0.0
    %8434 = vmatprep.subr.mxu0 0.0
    %8435 = vmatpush2.msra.mxu0 0.0
    %8436 = vmatprep.subr.mxu0 0.0
    %8437 = vmatpush2.msra.mxu0 0.0
    %8438 = vmatprep.subr.mxu0 0.0
    %8439 = vmatpush2.msra.mxu0 0.0
    %8440 = vmatprep.subr.mxu0 0.0
    %8441 = vmatpush2.msra.mxu0 0.0
    %8442 = vmatprep.subr.mxu0 0.0
    %8443 = vmatpush2.msra.mxu0 0.0
    %8444 = vmatprep.subr.mxu0 0.0
    %8445 = vmatpush2.msra.mxu0 0.0
    %8446 = vmatprep.subr.mxu0 0.0
    %8447 = vmatpush2.msra.mxu0 0.0
    %8448 = vmatprep.subr.mxu0 0.0
    %8449 = vmatpush2.msra.mxu0 0.0
    %8450 = vmatprep.subr.mxu0 0.0
    %8451 = vmatpush2.msra.mxu0 0.0
    %8452 = vmatprep.subr.mxu0 0.0
    %8453 = vmatpush2.msra.mxu0 0.0
    %8454 = vmatprep.subr.mxu0 0.0
    %8455 = vmatpush2.msra.mxu0 0.0
    %8456 = vmatprep.subr.mxu0 0.0
    %8457 = vmatpush2.msra.mxu0 0.0
    %8458 = vmatprep.subr.mxu0 0.0
    %8459 = vmatpush2.msra.mxu0 0.0
    %8460 = vmatprep.subr.mxu0 0.0
    %8461 = vmatpush2.msra.mxu0 0.0
    %8462 = vmatprep.subr.mxu0 0.0
    %8463 = vmatpush2.msra.mxu0 0.0
    %8464 = vmatprep.mubr.f32.mxu0 0.0
    %8465 = vmatmul.mubr.f32.gmra.mxu0 %v8395
    %v8466 = vpop.f32.mrf.mxu0
    %v8467 = vadd.f32 0.0, %v8466
    %v8468 = vpop.f32.mrf.mxu0
    %8469 = vmatprep.mubr.f32.mxu0 0.0
    %8470 = vmatmul.mubr.f32.gmra.mxu0 %v8398
    %v8471 = vpop.f32.mrf.mxu0
    %v8472 = vadd.f32 0.0, %v8471
    %v8473 = vpop.f32.mrf.mxu0
    %8474 = vdwg.mxu0
    %v8475 = vrcp.pop %v8390
    %v8476 = vrcp.pop %v8393
    %v8477 = vmul.f32 %v8467, %v8475
    %v8478 = vmul.f32 %v8472, %v8476
    %v8479 = vld [vmem:[#allocation36] sm:$0x1]
    %v8481 = vlaneseq
    %v8482 = vshrl.u32 %v8481, 7
    %v8483 = vsub.s32 0, %v8482
    %v8484 = vrot.slane %v8479, %v8483
    %v8486 = vadd.f32 %v8477, %v8484
    %v8487 = vadd.f32 %v8478, %v8484
    %8488 = vst [vmem:[#allocation46] sm:$0xff] %v8486
    %8489 = vst [vmem:[#allocation46 + $0x8] sm:$0xff] %v8487
    // Predicated region
    $region246: #{tpu_custom_call.1} parent=1 // pred_check
      _
    $region247: #{tpu_custom_call.1} parent=1 // pred_check_branch
      %8491 = sbr.rel (0) target = $region249
    $region248: #{tpu_custom_call.1} parent=1 // pred_region
      %s8493 = ssub.s32 256, 256
      %8494 = vsyncadd [#allocation5], %s8493
      %s8495 = sshll.u32 [#allocation46], 4
      %s8496 = int_to_ptr.vmem [resolvable:$true] %s8495
      %8501 = dma.vmem_to_hbm [thread:$0]  %s8496, 256, %s69, [#allocation5], 128, 128, 8
    $region249: #{tpu_custom_call.1} parent=1 // pred_fallthru
      _
    // Predicated region
    $region250: #{tpu_custom_call.1} parent=1 // pred_check
      _
    $region251: #{tpu_custom_call.1} parent=1 // pred_check_branch
      %8503 = sbr.rel (0) target = $region253
    $region252: #{tpu_custom_call.1} parent=1 // pred_region
      %8504 = dma.done [#allocation5], 256
    $region253: #{tpu_custom_call.1} parent=1 // pred_fallthru
      _
    %8505 = vsyncpa [#allocation4], 1
    %8506 = vsyncpa [#allocation8], 1
    %8507 = vsyncpa [#allocation11], 1
    %8508 = vsyncpa [#allocation14], 1
    %8509 = vsyncpa [#allocation18], 1
    %8510 = vsyncpa [#allocation23], 1
    %8511 = vsyncpa [#allocation27], 1
    %8512 = vsyncpa [#allocation30], 1
    %8513 = vsyncpa [#allocation35], 1
    %8514 = vsyncpa [#allocation38], 1
    %8515 = vsyncpa [#allocation41], 1
    %8516 = vsyncpa [#allocation44], 1
    %8517 = vsyncpa [#allocation5], 1
    %8518 = vsyncpa [#allocation6], 1
    %8519 = vsyncpa [#allocation21], 1
    %8520 = vsyncpa [#allocation32], 1

</llo_original>
